<compile_context>
chip_gen: v7x
topology: tpu7x:2x2x1
jax: 0.10.0
libtpu: 0.0.40
codegen_flags: <defaults>
</compile_context>

<pallas_src>
import jax
import jax.numpy as jnp
from jax.experimental import pallas as pl
from jax.experimental.pallas import tpu as pltpu

HID = 10           # hidden_dim
N_PART = 6         # cls_p - 1
N_HALF = 2         # cls_h - 1
BN_EPS = 1e-5

# MLP block indices (Conv1x1+BN+ReLU, Conv1x1+BN+ReLU)
MLP_FULL_COMP = 0      # Full_Graph.comp_h.conv_ch
MLP_HALF_DEC = 1       # Half_Graph.decomp_fh_list.conv_fh
MLP_COMP_U = 2         # Half_Graph.comp_u.conv_ch
MLP_COMP_L = 3         # Half_Graph.comp_l.conv_ch
MLP_PART_DEC_U = 4     # Part_Graph.decomp_hpu_list.conv_fh
MLP_PART_DEC_L = 5     # Part_Graph.decomp_hpl_list.conv_fh

# ConvGRU cell indices
GRU_FULL = 0
GRU_HALF_U = 1
GRU_HALF_L = 2
GRU_PART0 = 3          # node_update_list[0..5] -> 3..8

# Stage-1 packed-output row offsets (rows of the 631x90 stacked weight).
SEC_F = 0      # driven by xf    : FC_a(20) | HD_a(20) | GRU_full_h(20) | awf(3)
SEC_U = 63     # driven by xh[0] : FC_b | HD_b | CU_a | PU_a | GRU_hu_h | awu(5)
SEC_L = 168    # driven by xh[1] : FC_b | HD_b | CL_a | PL_a | GRU_hl_h | awl(3)
SEC_P = 271    # driven by xp[i] : per part 60 rows = Comp_b | Dec_b | GRU_pi_h
R1_ROWS = SEC_P + 60 * N_PART      # 631


# ------------------------------ Pallas kernel ------------------------------ #
def _gnn_kernel(x_ref, hatt_ref, patt_ref,
                w1_ref, w2_ref, gw_ref, cw_ref,
                b1_ref, b2_ref, bg_ref, abf_ref, abu_ref, abl_ref,
                xp0_ref, xp1_ref, xp2_ref, xp3_ref, xp4_ref, xp5_ref,
                xhu_ref, xhl_ref, xfn_ref, fh_ref, up_ref, lp_ref):
    x = x_ref[...]                       # (90, TP)  [xf | xh0 | xh1 | xp0..xp5]
    hatt = hatt_ref[...]                 # (3, TP)
    patt = patt_ref[...]                 # (7, TP)

    def dot(a, b):
        return jnp.dot(a, b, preferred_element_type=jnp.float32)

    def sigmoid(v):                      # exact sigmoid via EUP tanh (no divide)
        return 0.5 * (jnp.tanh(0.5 * v) + 1.0)

    def softmax_ch(v):                   # softmax over the small channel axis
        v = v - jnp.max(v, axis=0, keepdims=True)
        e = jnp.exp(v)
        return e / jnp.sum(e, axis=0, keepdims=True)

    # ---------------- stage 1: one packed matmul over all raw inputs --------
    s1 = dot(w1_ref[...], x)                                   # (631, TP)
    sF = s1[SEC_F:SEC_U]
    sU = s1[SEC_U:SEC_L]
    sL = s1[SEC_L:SEC_P]
    sP = [s1[SEC_P + 60 * i: SEC_P + 60 * (i + 1)] for i in range(N_PART)]

    f_logits = sF[60:63] + abf_ref[...]                        # (3, TP)
    u_logits = sU[100:105] + abu_ref[...]                      # (5, TP)
    l_logits = sL[100:103] + abl_ref[...]                      # (3, TP)
    f_att = softmax_ch(f_logits)
    u_att = softmax_ch(u_logits)
    l_att = softmax_ch(l_logits)

    com_att_h = hatt[1:2] + hatt[2:3]
    com_att_u = patt[1:2] + patt[2:3] + patt[3:4] + patt[4:5]
    com_att_l = patt[5:6] + patt[6:7]

    # ---------------- stage 2: 16 layer-1 pre-activations (att hoisted) -----
    pieces = [sF[0:20] + com_att_h * sU[0:20],                  # full comp, half 0
              sF[0:20] + com_att_h * sL[0:20],                  # full comp, half 1
              f_att[1:2] * sF[20:40] + sU[20:40],               # half decomp 0
              f_att[2:3] * sF[20:40] + sL[20:40]]               # half decomp 1
    pieces += [sU[40:60] + com_att_u * sP[j][0:20] for j in range(4)]       # comp_u
    pieces += [sL[40:60] + com_att_l * sP[4 + j][0:20] for j in range(2)]   # comp_l
    pieces += [u_att[j + 1:j + 2] * sU[60:80] + sP[j][20:40] for j in range(4)]      # dec_pu
    pieces += [l_att[j + 1:j + 2] * sL[60:80] + sP[4 + j][20:40] for j in range(2)]  # dec_pl
    h1 = jnp.maximum(jnp.concatenate(pieces, axis=0) + b1_ref[...], 0.0)    # (320, TP)

    # ---------------- stage 3: all 16 second-layer convs, block-diagonal ----
    m2 = jnp.maximum(dot(w2_ref[...], h1) + b2_ref[...], 0.0)               # (160, TP)
    comp_h = m2[0:10] + m2[10:20]
    dec_fh0, dec_fh1 = m2[20:30], m2[30:40]
    comp_u = m2[40:50] + m2[50:60] + m2[60:70] + m2[70:80]
    comp_l = m2[80:90] + m2[90:100]
    dec_p = [m2[100 + 10 * j: 110 + 10 * j] for j in range(N_PART)]

    msgs = [comp_h, dec_fh0 + comp_u, dec_fh1 + comp_l] + dec_p             # 9 x (10, TP)
    hs = [x[0:10], x[10:20], x[20:30]] + \
         [x[30 + 10 * i: 40 + 10 * i] for i in range(N_PART)]
    ghs = [sF[40:60], sU[80:100], sL[80:100]] + \
          [sP[i][40:60] for i in range(N_PART)]

    # ---------------- stage 4: all 9 ConvGRU cells, packed matmuls ----------
    g = dot(gw_ref[...], jnp.concatenate(msgs, axis=0)) + bg_ref[...]       # (270, TP)
    zs, rh = [], []
    for k in range(9):
        gate = g[30 * k: 30 * k + 20] + ghs[k]
        zs.append(sigmoid(gate[10:20]))
        rh.append(sigmoid(gate[0:10]) * hs[k])
    ch = dot(cw_ref[...], jnp.concatenate(rh, axis=0))                      # (90, TP)
    new = []
    for k in range(9):
        cand = jnp.tanh(g[30 * k + 20: 30 * k + 30] + ch[10 * k: 10 * k + 10])
        new.append((1.0 - zs[k]) * hs[k] + zs[k] * cand)

    # ---------------- lane-dense full-block stores ---------------------------
    xfn_ref[...] = new[0]
    xhu_ref[...] = new[1]
    xhl_ref[...] = new[2]
    for ref, val in zip((xp0_ref, xp1_ref, xp2_ref, xp3_ref, xp4_ref, xp5_ref),
                        new[3:]):
        ref[...] = val
    fh_ref[...] = f_logits
    up_ref[...] = u_logits
    lp_ref[...] = l_logits


# --------------------------------- wrapper --------------------------------- #
def gnn_forward(params, xp_list, xh_list, xf, xp, f_att_list, h_att_list, p_att_list):
    """Mirrors GNN.forward(xp_list, xh_list, xf, xp, f_att_list, h_att_list, p_att_list)."""
    del xp, f_att_list      # unused by the PyTorch module's forward as well
    B, _, H, W = xf.shape
    HW = H * W

    flat = lambda t: t.reshape(B, t.shape[1], HW)    # NCHW -> (B, C, H*W): reshape only
    x_all = jnp.concatenate([flat(xf)] + [flat(t) for t in xh_list]
                            + [flat(t) for t in xp_list], axis=1)        # (B, 90, HW)
    hatt = jnp.concatenate([flat(t) for t in h_att_list], axis=1)        # (B, 3, HW)
    patt = jnp.concatenate([flat(t) for t in p_att_list], axis=1)        # (B, 7, HW)

    HWp = pl.cdiv(HW, 128) * 128
    if HWp != HW:
        padp = lambda a: jnp.pad(a, ((0, 0), (0, 0), (0, HWp - HW)))
        x_all, hatt, patt = padp(x_all), padp(hatt), padp(patt)
    TP = next(c for c in (1024, 512, 256, 128) if HWp % c == 0)
    grid = (B, HWp // TP)                    # >= 2 steps (B=2) -> feeds both v7x TCs

    def pix_spec(c):
        return pl.BlockSpec((None, c, TP), lambda b, t: (b, 0, t))

    def const_spec(a):
        return pl.BlockSpec(a.shape, lambda b, t, nd=a.ndim: (0,) * nd)

    w = params
    weights = (w['w1'], w['w2'], w['gw'], w['cw'], w['b1'], w['b2'], w['bg'],
               w['abf'], w['abu'], w['abl'])

    sds = lambda c: jax.ShapeDtypeStruct((B, c, HWp), jnp.float32)
    out_shape = tuple([sds(HID)] * 9 + [sds(3), sds(5), sds(3)])
    out_specs = tuple([pix_spec(HID)] * 9 + [pix_spec(3), pix_spec(5), pix_spec(3)])

    outs = pl.pallas_call(
        _gnn_kernel,
        out_shape=out_shape,
        grid=grid,
        in_specs=[pix_spec(9 * HID), pix_spec(3), pix_spec(7)]
                 + [const_spec(a) for a in weights],
        out_specs=out_specs,
        compiler_params=pltpu.CompilerParams(
            dimension_semantics=("parallel", "parallel"),
            vmem_limit_bytes=32 * 1024 * 1024),
    )(x_all, hatt, patt, *weights)

    unflat = lambda a: a[:, :, :HW].reshape(B, a.shape[1], H, W)
    xp_new = [unflat(outs[i]) for i in range(N_PART)]
    xh_new = [unflat(outs[6]), unflat(outs[7])]
    xf_new = unflat(outs[8])
    fh_map, up_map, lp_map = unflat(outs[9]), unflat(outs[10]), unflat(outs[11])
    return xp_new, xh_new, xf_new, fh_map, up_map, lp_map


# ------------------------- deterministic parameters ------------------------ #
def make_raw_params(key):
    """Parameters in PyTorch layout: 1x1 conv weights (Cout, Cin, 1, 1) + BN stats."""
    keys = iter(jax.random.split(key, 128))
    nk = lambda: next(keys)

    def conv_w(cout, cin):
        return jax.random.normal(nk(), (cout, cin, 1, 1), jnp.float32) * (1.0 / cin) ** 0.5

    def bn(c):
        return dict(gamma=1.0 + 0.1 * jax.random.normal(nk(), (c,), jnp.float32),
                    beta=0.1 * jax.random.normal(nk(), (c,), jnp.float32),
                    mean=0.1 * jax.random.normal(nk(), (c,), jnp.float32),
                    var=jax.random.uniform(nk(), (c,), jnp.float32, minval=0.5, maxval=1.5))

    def mlp_block():
        return dict(w1=conv_w(2 * HID, 2 * HID), bn1=bn(2 * HID),
                    w2=conv_w(HID, 2 * HID), bn2=bn(HID))

    def gru_cell():
        return dict(wg=conv_w(2 * HID, 2 * HID),
                    bg=0.1 * jax.random.normal(nk(), (2 * HID,), jnp.float32),
                    wc=conv_w(HID, 2 * HID),
                    bc=0.1 * jax.random.normal(nk(), (HID,), jnp.float32))

    def att(parts):
        return dict(w=conv_w(parts + 1, HID),
                    b=0.1 * jax.random.normal(nk(), (parts + 1,), jnp.float32))

    return dict(mlp=[mlp_block() for _ in range(6)],
                gru=[gru_cell() for _ in range(9)],
                att_f=att(2), att_u=att(4), att_l=att(2))


def pack_params(raw):
    """Fold BN into conv weights and build the packed / block-diagonal matrices."""
    def fold(conv_w, bnp):
        w = conv_w[:, :, 0, 0]                                   # (Cout, Cin)
        s = bnp['gamma'] / jnp.sqrt(bnp['var'] + BN_EPS)
        return w * s[:, None], bnp['beta'] - bnp['mean'] * s

    W1, B1, W2, B2 = [], [], [], []
    for blk in raw['mlp']:
        w1, b1 = fold(blk['w1'], blk['bn1'])                     # (20,20), (20,)
        w2, b2 = fold(blk['w2'], blk['bn2'])                     # (10,20), (10,)
        W1.append(w1); B1.append(b1); W2.append(w2); B2.append(b2)

    wg = [c['wg'][:, :, 0, 0] for c in raw['gru']]               # (20,20), in=[m|h]
    bg = [c['bg'] for c in raw['gru']]
    wc = [c['wc'][:, :, 0, 0] for c in raw['gru']]               # (10,20), in=[m|r*h]
    bc = [c['bc'] for c in raw['gru']]

    awf, abf = raw['att_f']['w'][:, :, 0, 0], raw['att_f']['b']
    awu, abu = raw['att_u']['w'][:, :, 0, 0], raw['att_u']['b']
    awl, abl = raw['att_l']['w'][:, :, 0, 0], raw['att_l']['b']

    def place(dst, row, col, blk):
        return dst.at[row:row + blk.shape[0], col:col + blk.shape[1]].set(blk)

    FC, HD, CU, CL, PU, PL = (MLP_FULL_COMP, MLP_HALF_DEC, MLP_COMP_U,
                              MLP_COMP_L, MLP_PART_DEC_U, MLP_PART_DEC_L)

    # ---- stage-1 stacked weight: rows = packed outputs, cols = [xf|xh0|xh1|xp0..5]
    w1_big = jnp.zeros((R1_ROWS, 9 * HID), jnp.float32)
    # section F (input xf, cols 0:10)
    w1_big = place(w1_big, SEC_F + 0, 0, W1[FC][:, :HID])
    w1_big = place(w1_big, SEC_F + 20, 0, W1[HD][:, :HID])
    w1_big = place(w1_big, SEC_F + 40, 0, wg[GRU_FULL][:, HID:])
    w1_big = place(w1_big, SEC_F + 60, 0, awf)
    # section U (input xh[0], cols 10:20)
    w1_big = place(w1_big, SEC_U + 0, 10, W1[FC][:, HID:])
    w1_big = place(w1_big, SEC_U + 20, 10, W1[HD][:, HID:])
    w1_big = place(w1_big, SEC_U + 40, 10, W1[CU][:, :HID])
    w1_big = place(w1_big, SEC_U + 60, 10, W1[PU][:, :HID])
    w1_big = place(w1_big, SEC_U + 80, 10, wg[GRU_HALF_U][:, HID:])
    w1_big = place(w1_big, SEC_U + 100, 10, awu)
    # section L (input xh[1], cols 20:30)
    w1_big = place(w1_big, SEC_L + 0, 20, W1[FC][:, HID:])
    w1_big = place(w1_big, SEC_L + 20, 20, W1[HD][:, HID:])
    w1_big = place(w1_big, SEC_L + 40, 20, W1[CL][:, :HID])
    w1_big = place(w1_big, SEC_L + 60, 20, W1[PL][:, :HID])
    w1_big = place(w1_big, SEC_L + 80, 20, wg[GRU_HALF_L][:, HID:])
    w1_big = place(w1_big, SEC_L + 100, 20, awl)
    # sections P_i (input xp[i], cols 30+10i:40+10i)
    for i in range(N_PART):
        base, col = SEC_P + 60 * i, 30 + 10 * i
        comp = CU if i < 4 else CL
        dec = PU if i < 4 else PL
        w1_big = place(w1_big, base + 0, col, W1[comp][:, HID:])
        w1_big = place(w1_big, base + 20, col, W1[dec][:, HID:])
        w1_big = place(w1_big, base + 40, col, wg[GRU_PART0 + i][:, HID:])

    # ---- layer-1/layer-2 instance order (must match the kernel's `pieces`) ----
    inst = [FC, FC, HD, HD, CU, CU, CU, CU, CL, CL, PU, PU, PU, PU, PL, PL]
    b1_all = jnp.concatenate([B1[i] for i in inst])[:, None]                 # (320,1)
    w2_bd = jnp.zeros((16 * HID, 16 * 2 * HID), jnp.float32)                 # (160,320)
    for j, i in enumerate(inst):
        w2_bd = place(w2_bd, 10 * j, 20 * j, W2[i])
    b2_all = jnp.concatenate([B2[i] for i in inst])[:, None]                 # (160,1)

    # ---- GRU packed weights (order: full, half_u, half_l, part0..5) ----------
    gw_bd = jnp.zeros((9 * 30, 9 * HID), jnp.float32)                        # (270,90)
    cw_bd = jnp.zeros((9 * HID, 9 * HID), jnp.float32)                       # (90,90)
    bg_all = []
    for k in range(9):
        gw_bd = place(gw_bd, 30 * k, 10 * k, wg[k][:, :HID])                 # gates, m-side
        gw_bd = place(gw_bd, 30 * k + 20, 10 * k, wc[k][:, :HID])            # cand,  m-side
        cw_bd = place(cw_bd, 10 * k, 10 * k, wc[k][:, HID:])                 # cand, (r*h)-side
        bg_all.append(jnp.concatenate([bg[k], bc[k]]))
    bg_all = jnp.concatenate(bg_all)[:, None]                                # (270,1)

    return dict(w1=w1_big, w2=w2_bd, gw=gw_bd, cw=cw_bd,
                b1=b1_all, b2=b2_all, bg=bg_all,
                abf=abf[:, None], abu=abu[:, None], abl=abl[:, None])


# --------------------------------- reference -------------------------------- #
def _ref_conv1x1(x, w, b=None):
    y = jnp.einsum('bchw,oc->bohw', x, w[:, :, 0, 0])
    if b is not None:
        y = y + b[None, :, None, None]
    return y


def _ref_bn(x, p):
    s = p['gamma'] / jnp.sqrt(p['var'] + BN_EPS)
    return x * s[None, :, None, None] + (p['beta'] - p['mean'] * s)[None, :, None, None]


def _ref_mlp(x, p):
    y = jnp.maximum(_ref_bn(_ref_conv1x1(x, p['w1']), p['bn1']), 0.0)
    return jnp.maximum(_ref_bn(_ref_conv1x1(y, p['w2']), p['bn2']), 0.0)


def _ref_gru(h, m, p):
    g = jax.nn.sigmoid(_ref_conv1x1(jnp.concatenate([m, h], axis=1), p['wg'], p['bg']))
    r, z = g[:, :HID], g[:, HID:]
    c = jnp.tanh(_ref_conv1x1(jnp.concatenate([m, r * h], axis=1), p['wc'], p['bc']))
    return (1.0 - z) * h + z * c


def _ref_composition(xh, xp_list, att_list, p):
    com_att = sum(att_list)
    return sum(_ref_mlp(jnp.concatenate([xh, x * com_att], axis=1), p) for x in xp_list)


def _ref_decomposition(xf, xh_list, mlp_p, att_p):
    logits = _ref_conv1x1(xf, att_p['w'], att_p['b'])
    att = jax.nn.softmax(logits, axis=1)
    outs = [_ref_mlp(jnp.concatenate([xf * att[:, i + 1:i + 2], xh_list[i]], axis=1), mlp_p)
            for i in range(len(xh_list))]
    return outs, logits


def reference_gnn(raw, xp_list, xh_list, xf, xp, f_att_list, h_att_list, p_att_list):
    del xp, f_att_list
    mlp, gru = raw['mlp'], raw['gru']
    # Full graph
    comp_h = _ref_composition(xf, xh_list, h_att_list[1:3], mlp[MLP_FULL_COMP])
    xf_new = _ref_gru(xf, comp_h, gru[GRU_FULL])
    # Half graph
    dec_fh, fh_map = _ref_decomposition(xf, xh_list, mlp[MLP_HALF_DEC], raw['att_f'])
    upper = [xp_list[i] for i in range(4)]
    lower = [xp_list[i] for i in range(4, 6)]
    comp_u = _ref_composition(xh_list[0], upper, [p_att_list[i] for i in (1, 2, 3, 4)],
                              mlp[MLP_COMP_U])
    xh_u = _ref_gru(xh_list[0], dec_fh[0] + comp_u, gru[GRU_HALF_U])
    comp_l = _ref_composition(xh_list[1], lower, [p_att_list[i] for i in (5, 6)],
                              mlp[MLP_COMP_L])
    xh_l = _ref_gru(xh_list[1], dec_fh[1] + comp_l, gru[GRU_HALF_L])
    # Part graph
    dec_pu, up_map = _ref_decomposition(xh_list[0], upper, mlp[MLP_PART_DEC_U], raw['att_u'])
    dec_pl, lp_map = _ref_decomposition(xh_list[1], lower, mlp[MLP_PART_DEC_L], raw['att_l'])
    xp_new = []
    for i in range(6):
        msg = dec_pu[i] if i < 4 else dec_pl[i - 4]
        xp_new.append(_ref_gru(xp_list[i], msg, gru[GRU_PART0 + i]))
    return xp_new, [xh_u, xh_l], xf_new, fh_map, up_map, lp_map


# ----------------------------------- main ----------------------------------- #
if __name__ == "__main__":
    key = jax.random.PRNGKey(0)
    k_in, k_par = jax.random.split(key)
    B, H, W = 2, 16, 16
    cls_p, cls_h, cls_f = 7, 3, 2

    ks = iter(jax.random.split(k_in, 32))
    rnd = lambda shape: jax.random.normal(next(ks), shape, jnp.float32)

    xp_list = [rnd((B, HID, H, W)) for _ in range(cls_p - 1)]
    xh_list = [rnd((B, HID, H, W)) for _ in range(cls_h - 1)]
    xf = rnd((B, HID, H, W))
    xp_feat = rnd((B, cls_p, H, W))                               # unused by forward
    f_att_list = [rnd((B, 1, H, W)) for _ in range(cls_f)]        # unused by forward
    h_att = jax.nn.softmax(rnd((B, cls_h, H, W)), axis=1)
    h_att_list = [h_att[:, i:i + 1] for i in range(cls_h)]
    p_att = jax.nn.softmax(rnd((B, cls_p, H, W)), axis=1)
    p_att_list = [p_att[:, i:i + 1] for i in range(cls_p)]

    raw = make_raw_params(k_par)
    packed = pack_params(raw)

    fwd = jax.jit(gnn_forward)
    outs = fwd(packed, xp_list, xh_list, xf, xp_feat, f_att_list, h_att_list, p_att_list)
    outs = jax.block_until_ready(outs)

    assert outs[2].shape == (B, HID, H, W), outs[2].shape
    assert outs[3].shape == (B, 3, H, W) and outs[4].shape == (B, 5, H, W)

    refs = reference_gnn(raw, xp_list, xh_list, xf, xp_feat, f_att_list, h_att_list, p_att_list)
    flat_o = jax.tree_util.tree_leaves(outs)
    flat_r = jax.tree_util.tree_leaves(refs)
    err = max(float(jnp.max(jnp.abs(a - b))) for a, b in zip(flat_o, flat_r))
    assert err < 2e-3, f"max abs err vs reference: {err}"

    print("KERNEL_OK")
</pallas_src>

<mosaic_0001>
module attributes {stable_mosaic.version = 11 : i64} {
  func.func @_gnn_kernel(%arg0: i32, %arg1: i32, %arg2: memref<1x90x256xf32, #tpu.memory_space<vmem>>, %arg3: memref<1x3x256xf32, #tpu.memory_space<vmem>>, %arg4: memref<1x7x256xf32, #tpu.memory_space<vmem>>, %arg5: memref<631x90xf32, #tpu.memory_space<vmem>>, %arg6: memref<160x320xf32, #tpu.memory_space<vmem>>, %arg7: memref<270x90xf32, #tpu.memory_space<vmem>>, %arg8: memref<90x90xf32, #tpu.memory_space<vmem>>, %arg9: memref<320x1xf32, #tpu.memory_space<vmem>>, %arg10: memref<160x1xf32, #tpu.memory_space<vmem>>, %arg11: memref<270x1xf32, #tpu.memory_space<vmem>>, %arg12: memref<3x1xf32, #tpu.memory_space<vmem>>, %arg13: memref<5x1xf32, #tpu.memory_space<vmem>>, %arg14: memref<3x1xf32, #tpu.memory_space<vmem>>, %arg15: memref<1x10x256xf32, #tpu.memory_space<vmem>>, %arg16: memref<1x10x256xf32, #tpu.memory_space<vmem>>, %arg17: memref<1x10x256xf32, #tpu.memory_space<vmem>>, %arg18: memref<1x10x256xf32, #tpu.memory_space<vmem>>, %arg19: memref<1x10x256xf32, #tpu.memory_space<vmem>>, %arg20: memref<1x10x256xf32, #tpu.memory_space<vmem>>, %arg21: memref<1x10x256xf32, #tpu.memory_space<vmem>>, %arg22: memref<1x10x256xf32, #tpu.memory_space<vmem>>, %arg23: memref<1x10x256xf32, #tpu.memory_space<vmem>>, %arg24: memref<1x3x256xf32, #tpu.memory_space<vmem>>, %arg25: memref<1x5x256xf32, #tpu.memory_space<vmem>>, %arg26: memref<1x3x256xf32, #tpu.memory_space<vmem>>) attributes {dimension_semantics = [#tpu.dimension_semantics<parallel>, #tpu.dimension_semantics<parallel>], iteration_bounds = array<i64: 2, 1>, scalar_prefetch = 0 : i64, scratch_operands = 0 : i64, tpu.core_type = #tpu.core_type<tc>, window_params = [{transform_indices = @transform_0, window_bounds = array<i64: 1, 90, 256>}, {transform_indices = @transform_1, window_bounds = array<i64: 1, 3, 256>}, {transform_indices = @transform_2, window_bounds = array<i64: 1, 7, 256>}, {pipeline_mode = #tpu.pipeline_mode<synchronous>, transform_indices = @transform_3, window_bounds = array<i64: 631, 90>}, {pipeline_mode = #tpu.pipeline_mode<synchronous>, transform_indices = @transform_4, window_bounds = array<i64: 160, 320>}, {pipeline_mode = #tpu.pipeline_mode<synchronous>, transform_indices = @transform_5, window_bounds = array<i64: 270, 90>}, {pipeline_mode = #tpu.pipeline_mode<synchronous>, transform_indices = @transform_6, window_bounds = array<i64: 90, 90>}, {pipeline_mode = #tpu.pipeline_mode<synchronous>, transform_indices = @transform_7, window_bounds = array<i64: 320, 1>}, {pipeline_mode = #tpu.pipeline_mode<synchronous>, transform_indices = @transform_8, window_bounds = array<i64: 160, 1>}, {pipeline_mode = #tpu.pipeline_mode<synchronous>, transform_indices = @transform_9, window_bounds = array<i64: 270, 1>}, {pipeline_mode = #tpu.pipeline_mode<synchronous>, transform_indices = @transform_10, window_bounds = array<i64: 3, 1>}, {pipeline_mode = #tpu.pipeline_mode<synchronous>, transform_indices = @transform_11, window_bounds = array<i64: 5, 1>}, {pipeline_mode = #tpu.pipeline_mode<synchronous>, transform_indices = @transform_12, window_bounds = array<i64: 3, 1>}, {transform_indices = @transform_13, window_bounds = array<i64: 1, 10, 256>}, {transform_indices = @transform_14, window_bounds = array<i64: 1, 10, 256>}, {transform_indices = @transform_15, window_bounds = array<i64: 1, 10, 256>}, {transform_indices = @transform_16, window_bounds = array<i64: 1, 10, 256>}, {transform_indices = @transform_17, window_bounds = array<i64: 1, 10, 256>}, {transform_indices = @transform_18, window_bounds = array<i64: 1, 10, 256>}, {transform_indices = @transform_19, window_bounds = array<i64: 1, 10, 256>}, {transform_indices = @transform_20, window_bounds = array<i64: 1, 10, 256>}, {transform_indices = @transform_21, window_bounds = array<i64: 1, 10, 256>}, {transform_indices = @transform_22, window_bounds = array<i64: 1, 3, 256>}, {transform_indices = @transform_23, window_bounds = array<i64: 1, 5, 256>}, {transform_indices = @transform_24, window_bounds = array<i64: 1, 3, 256>}]} {
    %c0 = arith.constant 0 : index
    %c0_0 = arith.constant 0 : index
    %c0_1 = arith.constant 0 : index
    %0 = vector.load %arg2[%c0, %c0_0, %c0_1] : memref<1x90x256xf32, #tpu.memory_space<vmem>>, vector<1x90x256xf32>
    %1 = vector.shape_cast %0 : vector<1x90x256xf32> to vector<90x256xf32>
    %c0_2 = arith.constant 0 : index
    %c0_3 = arith.constant 0 : index
    %c0_4 = arith.constant 0 : index
    %2 = vector.load %arg3[%c0_2, %c0_3, %c0_4] : memref<1x3x256xf32, #tpu.memory_space<vmem>>, vector<1x3x256xf32>
    %3 = vector.shape_cast %2 : vector<1x3x256xf32> to vector<3x256xf32>
    %c0_5 = arith.constant 0 : index
    %c0_6 = arith.constant 0 : index
    %c0_7 = arith.constant 0 : index
    %4 = vector.load %arg4[%c0_5, %c0_6, %c0_7] : memref<1x7x256xf32, #tpu.memory_space<vmem>>, vector<1x7x256xf32>
    %5 = vector.shape_cast %4 : vector<1x7x256xf32> to vector<7x256xf32>
    %c0_8 = arith.constant 0 : index
    %c0_9 = arith.constant 0 : index
    %6 = vector.load %arg5[%c0_8, %c0_9] : memref<631x90xf32, #tpu.memory_space<vmem>>, vector<631x90xf32>
    %cst = arith.constant dense<0.000000e+00> : vector<631x256xf32>
    %7 = tpu.matmul %6, %1, %cst {dimension_numbers = #tpu.dot_dimension_numbers<[1], [0], [0], [1], [0, 0, 1, 1], [], []>} : vector<631x90xf32>, vector<90x256xf32>, vector<631x256xf32> -> vector<631x256xf32>
    %8 = vector.extract_strided_slice %7 {offsets = [0, 0], sizes = [63, 256], strides = [1, 1]} : vector<631x256xf32> to vector<63x256xf32>
    %9 = vector.extract_strided_slice %7 {offsets = [63, 0], sizes = [105, 256], strides = [1, 1]} : vector<631x256xf32> to vector<105x256xf32>
    %10 = vector.extract_strided_slice %7 {offsets = [168, 0], sizes = [103, 256], strides = [1, 1]} : vector<631x256xf32> to vector<103x256xf32>
    %11 = vector.extract_strided_slice %7 {offsets = [271, 0], sizes = [60, 256], strides = [1, 1]} : vector<631x256xf32> to vector<60x256xf32>
    %12 = vector.extract_strided_slice %7 {offsets = [331, 0], sizes = [60, 256], strides = [1, 1]} : vector<631x256xf32> to vector<60x256xf32>
    %13 = vector.extract_strided_slice %7 {offsets = [391, 0], sizes = [60, 256], strides = [1, 1]} : vector<631x256xf32> to vector<60x256xf32>
    %14 = vector.extract_strided_slice %7 {offsets = [451, 0], sizes = [60, 256], strides = [1, 1]} : vector<631x256xf32> to vector<60x256xf32>
    %15 = vector.extract_strided_slice %7 {offsets = [511, 0], sizes = [60, 256], strides = [1, 1]} : vector<631x256xf32> to vector<60x256xf32>
    %16 = vector.extract_strided_slice %7 {offsets = [571, 0], sizes = [60, 256], strides = [1, 1]} : vector<631x256xf32> to vector<60x256xf32>
    %17 = vector.extract_strided_slice %8 {offsets = [60, 0], sizes = [3, 256], strides = [1, 1]} : vector<63x256xf32> to vector<3x256xf32>
    %c0_10 = arith.constant 0 : index
    %c0_11 = arith.constant 0 : index
    %18 = vector.load %arg12[%c0_10, %c0_11] : memref<3x1xf32, #tpu.memory_space<vmem>>, vector<3x1xf32>
    %19 = vector.broadcast %18 : vector<3x1xf32> to vector<3x256xf32>
    %20 = arith.addf %17, %19 : vector<3x256xf32>
    %21 = vector.extract_strided_slice %9 {offsets = [100, 0], sizes = [5, 256], strides = [1, 1]} : vector<105x256xf32> to vector<5x256xf32>
    %c0_12 = arith.constant 0 : index
    %c0_13 = arith.constant 0 : index
    %22 = vector.load %arg13[%c0_12, %c0_13] : memref<5x1xf32, #tpu.memory_space<vmem>>, vector<5x1xf32>
    %23 = vector.broadcast %22 : vector<5x1xf32> to vector<5x256xf32>
    %24 = arith.addf %21, %23 : vector<5x256xf32>
    %25 = vector.extract_strided_slice %10 {offsets = [100, 0], sizes = [3, 256], strides = [1, 1]} : vector<103x256xf32> to vector<3x256xf32>
    %c0_14 = arith.constant 0 : index
    %c0_15 = arith.constant 0 : index
    %26 = vector.load %arg14[%c0_14, %c0_15] : memref<3x1xf32, #tpu.memory_space<vmem>>, vector<3x1xf32>
    %27 = vector.broadcast %26 : vector<3x1xf32> to vector<3x256xf32>
    %28 = arith.addf %25, %27 : vector<3x256xf32>
    %cst_16 = arith.constant dense<0xFF800000> : vector<256xf32>
    %29 = vector.multi_reduction <maximumf>, %20, %cst_16 [0] : vector<3x256xf32> to vector<256xf32>
    %30 = vector.shape_cast %29 : vector<256xf32> to vector<1x256xf32>
    %31 = vector.broadcast %30 : vector<1x256xf32> to vector<3x256xf32>
    %32 = arith.subf %20, %31 : vector<3x256xf32>
    %33 = math.exp %32 : vector<3x256xf32>
    %cst_17 = arith.constant dense<0.000000e+00> : vector<256xf32>
    %34 = vector.multi_reduction <add>, %33, %cst_17 [0] : vector<3x256xf32> to vector<256xf32>
    %35 = vector.shape_cast %34 : vector<256xf32> to vector<1x256xf32>
    %36 = vector.broadcast %35 : vector<1x256xf32> to vector<3x256xf32>
    %37 = arith.divf %33, %36 : vector<3x256xf32>
    %cst_18 = arith.constant dense<0xFF800000> : vector<256xf32>
    %38 = vector.multi_reduction <maximumf>, %24, %cst_18 [0] : vector<5x256xf32> to vector<256xf32>
    %39 = vector.shape_cast %38 : vector<256xf32> to vector<1x256xf32>
    %40 = vector.broadcast %39 : vector<1x256xf32> to vector<5x256xf32>
    %41 = arith.subf %24, %40 : vector<5x256xf32>
    %42 = math.exp %41 : vector<5x256xf32>
    %cst_19 = arith.constant dense<0.000000e+00> : vector<256xf32>
    %43 = vector.multi_reduction <add>, %42, %cst_19 [0] : vector<5x256xf32> to vector<256xf32>
    %44 = vector.shape_cast %43 : vector<256xf32> to vector<1x256xf32>
    %45 = vector.broadcast %44 : vector<1x256xf32> to vector<5x256xf32>
    %46 = arith.divf %42, %45 : vector<5x256xf32>
    %cst_20 = arith.constant dense<0xFF800000> : vector<256xf32>
    %47 = vector.multi_reduction <maximumf>, %28, %cst_20 [0] : vector<3x256xf32> to vector<256xf32>
    %48 = vector.shape_cast %47 : vector<256xf32> to vector<1x256xf32>
    %49 = vector.broadcast %48 : vector<1x256xf32> to vector<3x256xf32>
    %50 = arith.subf %28, %49 : vector<3x256xf32>
    %51 = math.exp %50 : vector<3x256xf32>
    %cst_21 = arith.constant dense<0.000000e+00> : vector<256xf32>
    %52 = vector.multi_reduction <add>, %51, %cst_21 [0] : vector<3x256xf32> to vector<256xf32>
    %53 = vector.shape_cast %52 : vector<256xf32> to vector<1x256xf32>
    %54 = vector.broadcast %53 : vector<1x256xf32> to vector<3x256xf32>
    %55 = arith.divf %51, %54 : vector<3x256xf32>
    %56 = vector.extract_strided_slice %3 {offsets = [1, 0], sizes = [1, 256], strides = [1, 1]} : vector<3x256xf32> to vector<1x256xf32>
    %57 = vector.extract_strided_slice %3 {offsets = [2, 0], sizes = [1, 256], strides = [1, 1]} : vector<3x256xf32> to vector<1x256xf32>
    %58 = arith.addf %56, %57 : vector<1x256xf32>
    %59 = vector.extract_strided_slice %5 {offsets = [1, 0], sizes = [1, 256], strides = [1, 1]} : vector<7x256xf32> to vector<1x256xf32>
    %60 = vector.extract_strided_slice %5 {offsets = [2, 0], sizes = [1, 256], strides = [1, 1]} : vector<7x256xf32> to vector<1x256xf32>
    %61 = arith.addf %59, %60 : vector<1x256xf32>
    %62 = vector.extract_strided_slice %5 {offsets = [3, 0], sizes = [1, 256], strides = [1, 1]} : vector<7x256xf32> to vector<1x256xf32>
    %63 = arith.addf %61, %62 : vector<1x256xf32>
    %64 = vector.extract_strided_slice %5 {offsets = [4, 0], sizes = [1, 256], strides = [1, 1]} : vector<7x256xf32> to vector<1x256xf32>
    %65 = arith.addf %63, %64 : vector<1x256xf32>
    %66 = vector.extract_strided_slice %5 {offsets = [5, 0], sizes = [1, 256], strides = [1, 1]} : vector<7x256xf32> to vector<1x256xf32>
    %67 = vector.extract_strided_slice %5 {offsets = [6, 0], sizes = [1, 256], strides = [1, 1]} : vector<7x256xf32> to vector<1x256xf32>
    %68 = arith.addf %66, %67 : vector<1x256xf32>
    %69 = vector.extract_strided_slice %8 {offsets = [0, 0], sizes = [20, 256], strides = [1, 1]} : vector<63x256xf32> to vector<20x256xf32>
    %70 = vector.extract_strided_slice %9 {offsets = [0, 0], sizes = [20, 256], strides = [1, 1]} : vector<105x256xf32> to vector<20x256xf32>
    %71 = vector.broadcast %58 : vector<1x256xf32> to vector<20x256xf32>
    %72 = arith.mulf %71, %70 : vector<20x256xf32>
    %73 = arith.addf %69, %72 : vector<20x256xf32>
    %74 = vector.extract_strided_slice %8 {offsets = [0, 0], sizes = [20, 256], strides = [1, 1]} : vector<63x256xf32> to vector<20x256xf32>
    %75 = vector.extract_strided_slice %10 {offsets = [0, 0], sizes = [20, 256], strides = [1, 1]} : vector<103x256xf32> to vector<20x256xf32>
    %76 = vector.broadcast %58 : vector<1x256xf32> to vector<20x256xf32>
    %77 = arith.mulf %76, %75 : vector<20x256xf32>
    %78 = arith.addf %74, %77 : vector<20x256xf32>
    %79 = vector.extract_strided_slice %37 {offsets = [1, 0], sizes = [1, 256], strides = [1, 1]} : vector<3x256xf32> to vector<1x256xf32>
    %80 = vector.extract_strided_slice %8 {offsets = [20, 0], sizes = [20, 256], strides = [1, 1]} : vector<63x256xf32> to vector<20x256xf32>
    %81 = vector.broadcast %79 : vector<1x256xf32> to vector<20x256xf32>
    %82 = arith.mulf %81, %80 : vector<20x256xf32>
    %83 = vector.extract_strided_slice %9 {offsets = [20, 0], sizes = [20, 256], strides = [1, 1]} : vector<105x256xf32> to vector<20x256xf32>
    %84 = arith.addf %82, %83 : vector<20x256xf32>
    %85 = vector.extract_strided_slice %37 {offsets = [2, 0], sizes = [1, 256], strides = [1, 1]} : vector<3x256xf32> to vector<1x256xf32>
    %86 = vector.extract_strided_slice %8 {offsets = [20, 0], sizes = [20, 256], strides = [1, 1]} : vector<63x256xf32> to vector<20x256xf32>
    %87 = vector.broadcast %85 : vector<1x256xf32> to vector<20x256xf32>
    %88 = arith.mulf %87, %86 : vector<20x256xf32>
    %89 = vector.extract_strided_slice %10 {offsets = [20, 0], sizes = [20, 256], strides = [1, 1]} : vector<103x256xf32> to vector<20x256xf32>
    %90 = arith.addf %88, %89 : vector<20x256xf32>
    %91 = vector.extract_strided_slice %9 {offsets = [40, 0], sizes = [20, 256], strides = [1, 1]} : vector<105x256xf32> to vector<20x256xf32>
    %92 = vector.extract_strided_slice %11 {offsets = [0, 0], sizes = [20, 256], strides = [1, 1]} : vector<60x256xf32> to vector<20x256xf32>
    %93 = vector.broadcast %65 : vector<1x256xf32> to vector<20x256xf32>
    %94 = arith.mulf %93, %92 : vector<20x256xf32>
    %95 = arith.addf %91, %94 : vector<20x256xf32>
    %96 = vector.extract_strided_slice %9 {offsets = [40, 0], sizes = [20, 256], strides = [1, 1]} : vector<105x256xf32> to vector<20x256xf32>
    %97 = vector.extract_strided_slice %12 {offsets = [0, 0], sizes = [20, 256], strides = [1, 1]} : vector<60x256xf32> to vector<20x256xf32>
    %98 = vector.broadcast %65 : vector<1x256xf32> to vector<20x256xf32>
    %99 = arith.mulf %98, %97 : vector<20x256xf32>
    %100 = arith.addf %96, %99 : vector<20x256xf32>
    %101 = vector.extract_strided_slice %9 {offsets = [40, 0], sizes = [20, 256], strides = [1, 1]} : vector<105x256xf32> to vector<20x256xf32>
    %102 = vector.extract_strided_slice %13 {offsets = [0, 0], sizes = [20, 256], strides = [1, 1]} : vector<60x256xf32> to vector<20x256xf32>
    %103 = vector.broadcast %65 : vector<1x256xf32> to vector<20x256xf32>
    %104 = arith.mulf %103, %102 : vector<20x256xf32>
    %105 = arith.addf %101, %104 : vector<20x256xf32>
    %106 = vector.extract_strided_slice %9 {offsets = [40, 0], sizes = [20, 256], strides = [1, 1]} : vector<105x256xf32> to vector<20x256xf32>
    %107 = vector.extract_strided_slice %14 {offsets = [0, 0], sizes = [20, 256], strides = [1, 1]} : vector<60x256xf32> to vector<20x256xf32>
    %108 = vector.broadcast %65 : vector<1x256xf32> to vector<20x256xf32>
    %109 = arith.mulf %108, %107 : vector<20x256xf32>
    %110 = arith.addf %106, %109 : vector<20x256xf32>
    %111 = vector.extract_strided_slice %10 {offsets = [40, 0], sizes = [20, 256], strides = [1, 1]} : vector<103x256xf32> to vector<20x256xf32>
    %112 = vector.extract_strided_slice %15 {offsets = [0, 0], sizes = [20, 256], strides = [1, 1]} : vector<60x256xf32> to vector<20x256xf32>
    %113 = vector.broadcast %68 : vector<1x256xf32> to vector<20x256xf32>
    %114 = arith.mulf %113, %112 : vector<20x256xf32>
    %115 = arith.addf %111, %114 : vector<20x256xf32>
    %116 = vector.extract_strided_slice %10 {offsets = [40, 0], sizes = [20, 256], strides = [1, 1]} : vector<103x256xf32> to vector<20x256xf32>
    %117 = vector.extract_strided_slice %16 {offsets = [0, 0], sizes = [20, 256], strides = [1, 1]} : vector<60x256xf32> to vector<20x256xf32>
    %118 = vector.broadcast %68 : vector<1x256xf32> to vector<20x256xf32>
    %119 = arith.mulf %118, %117 : vector<20x256xf32>
    %120 = arith.addf %116, %119 : vector<20x256xf32>
    %121 = vector.extract_strided_slice %46 {offsets = [1, 0], sizes = [1, 256], strides = [1, 1]} : vector<5x256xf32> to vector<1x256xf32>
    %122 = vector.extract_strided_slice %9 {offsets = [60, 0], sizes = [20, 256], strides = [1, 1]} : vector<105x256xf32> to vector<20x256xf32>
    %123 = vector.broadcast %121 : vector<1x256xf32> to vector<20x256xf32>
    %124 = arith.mulf %123, %122 : vector<20x256xf32>
    %125 = vector.extract_strided_slice %11 {offsets = [20, 0], sizes = [20, 256], strides = [1, 1]} : vector<60x256xf32> to vector<20x256xf32>
    %126 = arith.addf %124, %125 : vector<20x256xf32>
    %127 = vector.extract_strided_slice %46 {offsets = [2, 0], sizes = [1, 256], strides = [1, 1]} : vector<5x256xf32> to vector<1x256xf32>
    %128 = vector.extract_strided_slice %9 {offsets = [60, 0], sizes = [20, 256], strides = [1, 1]} : vector<105x256xf32> to vector<20x256xf32>
    %129 = vector.broadcast %127 : vector<1x256xf32> to vector<20x256xf32>
    %130 = arith.mulf %129, %128 : vector<20x256xf32>
    %131 = vector.extract_strided_slice %12 {offsets = [20, 0], sizes = [20, 256], strides = [1, 1]} : vector<60x256xf32> to vector<20x256xf32>
    %132 = arith.addf %130, %131 : vector<20x256xf32>
    %133 = vector.extract_strided_slice %46 {offsets = [3, 0], sizes = [1, 256], strides = [1, 1]} : vector<5x256xf32> to vector<1x256xf32>
    %134 = vector.extract_strided_slice %9 {offsets = [60, 0], sizes = [20, 256], strides = [1, 1]} : vector<105x256xf32> to vector<20x256xf32>
    %135 = vector.broadcast %133 : vector<1x256xf32> to vector<20x256xf32>
    %136 = arith.mulf %135, %134 : vector<20x256xf32>
    %137 = vector.extract_strided_slice %13 {offsets = [20, 0], sizes = [20, 256], strides = [1, 1]} : vector<60x256xf32> to vector<20x256xf32>
    %138 = arith.addf %136, %137 : vector<20x256xf32>
    %139 = vector.extract_strided_slice %46 {offsets = [4, 0], sizes = [1, 256], strides = [1, 1]} : vector<5x256xf32> to vector<1x256xf32>
    %140 = vector.extract_strided_slice %9 {offsets = [60, 0], sizes = [20, 256], strides = [1, 1]} : vector<105x256xf32> to vector<20x256xf32>
    %141 = vector.broadcast %139 : vector<1x256xf32> to vector<20x256xf32>
    %142 = arith.mulf %141, %140 : vector<20x256xf32>
    %143 = vector.extract_strided_slice %14 {offsets = [20, 0], sizes = [20, 256], strides = [1, 1]} : vector<60x256xf32> to vector<20x256xf32>
    %144 = arith.addf %142, %143 : vector<20x256xf32>
    %145 = vector.extract_strided_slice %55 {offsets = [1, 0], sizes = [1, 256], strides = [1, 1]} : vector<3x256xf32> to vector<1x256xf32>
    %146 = vector.extract_strided_slice %10 {offsets = [60, 0], sizes = [20, 256], strides = [1, 1]} : vector<103x256xf32> to vector<20x256xf32>
    %147 = vector.broadcast %145 : vector<1x256xf32> to vector<20x256xf32>
    %148 = arith.mulf %147, %146 : vector<20x256xf32>
    %149 = vector.extract_strided_slice %15 {offsets = [20, 0], sizes = [20, 256], strides = [1, 1]} : vector<60x256xf32> to vector<20x256xf32>
    %150 = arith.addf %148, %149 : vector<20x256xf32>
    %151 = vector.extract_strided_slice %55 {offsets = [2, 0], sizes = [1, 256], strides = [1, 1]} : vector<3x256xf32> to vector<1x256xf32>
    %152 = vector.extract_strided_slice %10 {offsets = [60, 0], sizes = [20, 256], strides = [1, 1]} : vector<103x256xf32> to vector<20x256xf32>
    %153 = vector.broadcast %151 : vector<1x256xf32> to vector<20x256xf32>
    %154 = arith.mulf %153, %152 : vector<20x256xf32>
    %155 = vector.extract_strided_slice %16 {offsets = [20, 0], sizes = [20, 256], strides = [1, 1]} : vector<60x256xf32> to vector<20x256xf32>
    %156 = arith.addf %154, %155 : vector<20x256xf32>
    %157 = tpu.concatenate %73, %78, %84, %90, %95, %100, %105, %110, %115, %120, %126, %132, %138, %144, %150, %156 in 0 : vector<20x256xf32>, vector<20x256xf32>, vector<20x256xf32>, vector<20x256xf32>, vector<20x256xf32>, vector<20x256xf32>, vector<20x256xf32>, vector<20x256xf32>, vector<20x256xf32>, vector<20x256xf32>, vector<20x256xf32>, vector<20x256xf32>, vector<20x256xf32>, vector<20x256xf32>, vector<20x256xf32>, vector<20x256xf32> -> vector<320x256xf32>
    %c0_22 = arith.constant 0 : index
    %c0_23 = arith.constant 0 : index
    %158 = vector.load %arg9[%c0_22, %c0_23] : memref<320x1xf32, #tpu.memory_space<vmem>>, vector<320x1xf32>
    %159 = vector.broadcast %158 : vector<320x1xf32> to vector<320x256xf32>
    %160 = arith.addf %157, %159 : vector<320x256xf32>
    %cst_24 = arith.constant 0.000000e+00 : f32
    %161 = vector.broadcast %cst_24 : f32 to vector<320x256xf32>
    %162 = arith.maximumf %160, %161 : vector<320x256xf32>
    %c0_25 = arith.constant 0 : index
    %c0_26 = arith.constant 0 : index
    %163 = vector.load %arg6[%c0_25, %c0_26] : memref<160x320xf32, #tpu.memory_space<vmem>>, vector<160x320xf32>
    %cst_27 = arith.constant dense<0.000000e+00> : vector<160x256xf32>
    %164 = tpu.matmul %163, %162, %cst_27 {dimension_numbers = #tpu.dot_dimension_numbers<[1], [0], [0], [1], [0, 0, 1, 1], [], []>} : vector<160x320xf32>, vector<320x256xf32>, vector<160x256xf32> -> vector<160x256xf32>
    %c0_28 = arith.constant 0 : index
    %c0_29 = arith.constant 0 : index
    %165 = vector.load %arg10[%c0_28, %c0_29] : memref<160x1xf32, #tpu.memory_space<vmem>>, vector<160x1xf32>
    %166 = vector.broadcast %165 : vector<160x1xf32> to vector<160x256xf32>
    %167 = arith.addf %164, %166 : vector<160x256xf32>
    %cst_30 = arith.constant 0.000000e+00 : f32
    %168 = vector.broadcast %cst_30 : f32 to vector<160x256xf32>
    %169 = arith.maximumf %167, %168 : vector<160x256xf32>
    %170 = vector.extract_strided_slice %169 {offsets = [0, 0], sizes = [10, 256], strides = [1, 1]} : vector<160x256xf32> to vector<10x256xf32>
    %171 = vector.extract_strided_slice %169 {offsets = [10, 0], sizes = [10, 256], strides = [1, 1]} : vector<160x256xf32> to vector<10x256xf32>
    %172 = arith.addf %170, %171 : vector<10x256xf32>
    %173 = vector.extract_strided_slice %169 {offsets = [20, 0], sizes = [10, 256], strides = [1, 1]} : vector<160x256xf32> to vector<10x256xf32>
    %174 = vector.extract_strided_slice %169 {offsets = [30, 0], sizes = [10, 256], strides = [1, 1]} : vector<160x256xf32> to vector<10x256xf32>
    %175 = vector.extract_strided_slice %169 {offsets = [40, 0], sizes = [10, 256], strides = [1, 1]} : vector<160x256xf32> to vector<10x256xf32>
    %176 = vector.extract_strided_slice %169 {offsets = [50, 0], sizes = [10, 256], strides = [1, 1]} : vector<160x256xf32> to vector<10x256xf32>
    %177 = arith.addf %175, %176 : vector<10x256xf32>
    %178 = vector.extract_strided_slice %169 {offsets = [60, 0], sizes = [10, 256], strides = [1, 1]} : vector<160x256xf32> to vector<10x256xf32>
    %179 = arith.addf %177, %178 : vector<10x256xf32>
    %180 = vector.extract_strided_slice %169 {offsets = [70, 0], sizes = [10, 256], strides = [1, 1]} : vector<160x256xf32> to vector<10x256xf32>
    %181 = arith.addf %179, %180 : vector<10x256xf32>
    %182 = vector.extract_strided_slice %169 {offsets = [80, 0], sizes = [10, 256], strides = [1, 1]} : vector<160x256xf32> to vector<10x256xf32>
    %183 = vector.extract_strided_slice %169 {offsets = [90, 0], sizes = [10, 256], strides = [1, 1]} : vector<160x256xf32> to vector<10x256xf32>
    %184 = arith.addf %182, %183 : vector<10x256xf32>
    %185 = vector.extract_strided_slice %169 {offsets = [100, 0], sizes = [10, 256], strides = [1, 1]} : vector<160x256xf32> to vector<10x256xf32>
    %186 = vector.extract_strided_slice %169 {offsets = [110, 0], sizes = [10, 256], strides = [1, 1]} : vector<160x256xf32> to vector<10x256xf32>
    %187 = vector.extract_strided_slice %169 {offsets = [120, 0], sizes = [10, 256], strides = [1, 1]} : vector<160x256xf32> to vector<10x256xf32>
    %188 = vector.extract_strided_slice %169 {offsets = [130, 0], sizes = [10, 256], strides = [1, 1]} : vector<160x256xf32> to vector<10x256xf32>
    %189 = vector.extract_strided_slice %169 {offsets = [140, 0], sizes = [10, 256], strides = [1, 1]} : vector<160x256xf32> to vector<10x256xf32>
    %190 = vector.extract_strided_slice %169 {offsets = [150, 0], sizes = [10, 256], strides = [1, 1]} : vector<160x256xf32> to vector<10x256xf32>
    %191 = arith.addf %173, %181 : vector<10x256xf32>
    %192 = arith.addf %174, %184 : vector<10x256xf32>
    %193 = vector.extract_strided_slice %1 {offsets = [0, 0], sizes = [10, 256], strides = [1, 1]} : vector<90x256xf32> to vector<10x256xf32>
    %194 = vector.extract_strided_slice %1 {offsets = [10, 0], sizes = [10, 256], strides = [1, 1]} : vector<90x256xf32> to vector<10x256xf32>
    %195 = vector.extract_strided_slice %1 {offsets = [20, 0], sizes = [10, 256], strides = [1, 1]} : vector<90x256xf32> to vector<10x256xf32>
    %196 = vector.extract_strided_slice %1 {offsets = [30, 0], sizes = [10, 256], strides = [1, 1]} : vector<90x256xf32> to vector<10x256xf32>
    %197 = vector.extract_strided_slice %1 {offsets = [40, 0], sizes = [10, 256], strides = [1, 1]} : vector<90x256xf32> to vector<10x256xf32>
    %198 = vector.extract_strided_slice %1 {offsets = [50, 0], sizes = [10, 256], strides = [1, 1]} : vector<90x256xf32> to vector<10x256xf32>
    %199 = vector.extract_strided_slice %1 {offsets = [60, 0], sizes = [10, 256], strides = [1, 1]} : vector<90x256xf32> to vector<10x256xf32>
    %200 = vector.extract_strided_slice %1 {offsets = [70, 0], sizes = [10, 256], strides = [1, 1]} : vector<90x256xf32> to vector<10x256xf32>
    %201 = vector.extract_strided_slice %1 {offsets = [80, 0], sizes = [10, 256], strides = [1, 1]} : vector<90x256xf32> to vector<10x256xf32>
    %202 = vector.extract_strided_slice %8 {offsets = [40, 0], sizes = [20, 256], strides = [1, 1]} : vector<63x256xf32> to vector<20x256xf32>
    %203 = vector.extract_strided_slice %9 {offsets = [80, 0], sizes = [20, 256], strides = [1, 1]} : vector<105x256xf32> to vector<20x256xf32>
    %204 = vector.extract_strided_slice %10 {offsets = [80, 0], sizes = [20, 256], strides = [1, 1]} : vector<103x256xf32> to vector<20x256xf32>
    %205 = vector.extract_strided_slice %11 {offsets = [40, 0], sizes = [20, 256], strides = [1, 1]} : vector<60x256xf32> to vector<20x256xf32>
    %206 = vector.extract_strided_slice %12 {offsets = [40, 0], sizes = [20, 256], strides = [1, 1]} : vector<60x256xf32> to vector<20x256xf32>
    %207 = vector.extract_strided_slice %13 {offsets = [40, 0], sizes = [20, 256], strides = [1, 1]} : vector<60x256xf32> to vector<20x256xf32>
    %208 = vector.extract_strided_slice %14 {offsets = [40, 0], sizes = [20, 256], strides = [1, 1]} : vector<60x256xf32> to vector<20x256xf32>
    %209 = vector.extract_strided_slice %15 {offsets = [40, 0], sizes = [20, 256], strides = [1, 1]} : vector<60x256xf32> to vector<20x256xf32>
    %210 = vector.extract_strided_slice %16 {offsets = [40, 0], sizes = [20, 256], strides = [1, 1]} : vector<60x256xf32> to vector<20x256xf32>
    %c0_31 = arith.constant 0 : index
    %c0_32 = arith.constant 0 : index
    %211 = vector.load %arg7[%c0_31, %c0_32] : memref<270x90xf32, #tpu.memory_space<vmem>>, vector<270x90xf32>
    %212 = tpu.concatenate %172, %191, %192, %185, %186, %187, %188, %189, %190 in 0 : vector<10x256xf32>, vector<10x256xf32>, vector<10x256xf32>, vector<10x256xf32>, vector<10x256xf32>, vector<10x256xf32>, vector<10x256xf32>, vector<10x256xf32>, vector<10x256xf32> -> vector<90x256xf32>
    %cst_33 = arith.constant dense<0.000000e+00> : vector<270x256xf32>
    %213 = tpu.matmul %211, %212, %cst_33 {dimension_numbers = #tpu.dot_dimension_numbers<[1], [0], [0], [1], [0, 0, 1, 1], [], []>} : vector<270x90xf32>, vector<90x256xf32>, vector<270x256xf32> -> vector<270x256xf32>
    %c0_34 = arith.constant 0 : index
    %c0_35 = arith.constant 0 : index
    %214 = vector.load %arg11[%c0_34, %c0_35] : memref<270x1xf32, #tpu.memory_space<vmem>>, vector<270x1xf32>
    %215 = vector.broadcast %214 : vector<270x1xf32> to vector<270x256xf32>
    %216 = arith.addf %213, %215 : vector<270x256xf32>
    %217 = vector.extract_strided_slice %216 {offsets = [0, 0], sizes = [20, 256], strides = [1, 1]} : vector<270x256xf32> to vector<20x256xf32>
    %218 = arith.addf %217, %202 : vector<20x256xf32>
    %219 = vector.extract_strided_slice %218 {offsets = [10, 0], sizes = [10, 256], strides = [1, 1]} : vector<20x256xf32> to vector<10x256xf32>
    %cst_36 = arith.constant 5.000000e-01 : f32
    %220 = vector.broadcast %cst_36 : f32 to vector<10x256xf32>
    %221 = arith.mulf %220, %219 : vector<10x256xf32>
    %222 = math.tanh %221 : vector<10x256xf32>
    %cst_37 = arith.constant 1.000000e+00 : f32
    %223 = vector.broadcast %cst_37 : f32 to vector<10x256xf32>
    %224 = arith.addf %222, %223 : vector<10x256xf32>
    %cst_38 = arith.constant 5.000000e-01 : f32
    %225 = vector.broadcast %cst_38 : f32 to vector<10x256xf32>
    %226 = arith.mulf %225, %224 : vector<10x256xf32>
    %227 = vector.extract_strided_slice %218 {offsets = [0, 0], sizes = [10, 256], strides = [1, 1]} : vector<20x256xf32> to vector<10x256xf32>
    %cst_39 = arith.constant 5.000000e-01 : f32
    %228 = vector.broadcast %cst_39 : f32 to vector<10x256xf32>
    %229 = arith.mulf %228, %227 : vector<10x256xf32>
    %230 = math.tanh %229 : vector<10x256xf32>
    %cst_40 = arith.constant 1.000000e+00 : f32
    %231 = vector.broadcast %cst_40 : f32 to vector<10x256xf32>
    %232 = arith.addf %230, %231 : vector<10x256xf32>
    %cst_41 = arith.constant 5.000000e-01 : f32
    %233 = vector.broadcast %cst_41 : f32 to vector<10x256xf32>
    %234 = arith.mulf %233, %232 : vector<10x256xf32>
    %235 = arith.mulf %234, %193 : vector<10x256xf32>
    %236 = vector.extract_strided_slice %216 {offsets = [30, 0], sizes = [20, 256], strides = [1, 1]} : vector<270x256xf32> to vector<20x256xf32>
    %237 = arith.addf %236, %203 : vector<20x256xf32>
    %238 = vector.extract_strided_slice %237 {offsets = [10, 0], sizes = [10, 256], strides = [1, 1]} : vector<20x256xf32> to vector<10x256xf32>
    %cst_42 = arith.constant 5.000000e-01 : f32
    %239 = vector.broadcast %cst_42 : f32 to vector<10x256xf32>
    %240 = arith.mulf %239, %238 : vector<10x256xf32>
    %241 = math.tanh %240 : vector<10x256xf32>
    %cst_43 = arith.constant 1.000000e+00 : f32
    %242 = vector.broadcast %cst_43 : f32 to vector<10x256xf32>
    %243 = arith.addf %241, %242 : vector<10x256xf32>
    %cst_44 = arith.constant 5.000000e-01 : f32
    %244 = vector.broadcast %cst_44 : f32 to vector<10x256xf32>
    %245 = arith.mulf %244, %243 : vector<10x256xf32>
    %246 = vector.extract_strided_slice %237 {offsets = [0, 0], sizes = [10, 256], strides = [1, 1]} : vector<20x256xf32> to vector<10x256xf32>
    %cst_45 = arith.constant 5.000000e-01 : f32
    %247 = vector.broadcast %cst_45 : f32 to vector<10x256xf32>
    %248 = arith.mulf %247, %246 : vector<10x256xf32>
    %249 = math.tanh %248 : vector<10x256xf32>
    %cst_46 = arith.constant 1.000000e+00 : f32
    %250 = vector.broadcast %cst_46 : f32 to vector<10x256xf32>
    %251 = arith.addf %249, %250 : vector<10x256xf32>
    %cst_47 = arith.constant 5.000000e-01 : f32
    %252 = vector.broadcast %cst_47 : f32 to vector<10x256xf32>
    %253 = arith.mulf %252, %251 : vector<10x256xf32>
    %254 = arith.mulf %253, %194 : vector<10x256xf32>
    %255 = vector.extract_strided_slice %216 {offsets = [60, 0], sizes = [20, 256], strides = [1, 1]} : vector<270x256xf32> to vector<20x256xf32>
    %256 = arith.addf %255, %204 : vector<20x256xf32>
    %257 = vector.extract_strided_slice %256 {offsets = [10, 0], sizes = [10, 256], strides = [1, 1]} : vector<20x256xf32> to vector<10x256xf32>
    %cst_48 = arith.constant 5.000000e-01 : f32
    %258 = vector.broadcast %cst_48 : f32 to vector<10x256xf32>
    %259 = arith.mulf %258, %257 : vector<10x256xf32>
    %260 = math.tanh %259 : vector<10x256xf32>
    %cst_49 = arith.constant 1.000000e+00 : f32
    %261 = vector.broadcast %cst_49 : f32 to vector<10x256xf32>
    %262 = arith.addf %260, %261 : vector<10x256xf32>
    %cst_50 = arith.constant 5.000000e-01 : f32
    %263 = vector.broadcast %cst_50 : f32 to vector<10x256xf32>
    %264 = arith.mulf %263, %262 : vector<10x256xf32>
    %265 = vector.extract_strided_slice %256 {offsets = [0, 0], sizes = [10, 256], strides = [1, 1]} : vector<20x256xf32> to vector<10x256xf32>
    %cst_51 = arith.constant 5.000000e-01 : f32
    %266 = vector.broadcast %cst_51 : f32 to vector<10x256xf32>
    %267 = arith.mulf %266, %265 : vector<10x256xf32>
    %268 = math.tanh %267 : vector<10x256xf32>
    %cst_52 = arith.constant 1.000000e+00 : f32
    %269 = vector.broadcast %cst_52 : f32 to vector<10x256xf32>
    %270 = arith.addf %268, %269 : vector<10x256xf32>
    %cst_53 = arith.constant 5.000000e-01 : f32
    %271 = vector.broadcast %cst_53 : f32 to vector<10x256xf32>
    %272 = arith.mulf %271, %270 : vector<10x256xf32>
    %273 = arith.mulf %272, %195 : vector<10x256xf32>
    %274 = vector.extract_strided_slice %216 {offsets = [90, 0], sizes = [20, 256], strides = [1, 1]} : vector<270x256xf32> to vector<20x256xf32>
    %275 = arith.addf %274, %205 : vector<20x256xf32>
    %276 = vector.extract_strided_slice %275 {offsets = [10, 0], sizes = [10, 256], strides = [1, 1]} : vector<20x256xf32> to vector<10x256xf32>
    %cst_54 = arith.constant 5.000000e-01 : f32
    %277 = vector.broadcast %cst_54 : f32 to vector<10x256xf32>
    %278 = arith.mulf %277, %276 : vector<10x256xf32>
    %279 = math.tanh %278 : vector<10x256xf32>
    %cst_55 = arith.constant 1.000000e+00 : f32
    %280 = vector.broadcast %cst_55 : f32 to vector<10x256xf32>
    %281 = arith.addf %279, %280 : vector<10x256xf32>
    %cst_56 = arith.constant 5.000000e-01 : f32
    %282 = vector.broadcast %cst_56 : f32 to vector<10x256xf32>
    %283 = arith.mulf %282, %281 : vector<10x256xf32>
    %284 = vector.extract_strided_slice %275 {offsets = [0, 0], sizes = [10, 256], strides = [1, 1]} : vector<20x256xf32> to vector<10x256xf32>
    %cst_57 = arith.constant 5.000000e-01 : f32
    %285 = vector.broadcast %cst_57 : f32 to vector<10x256xf32>
    %286 = arith.mulf %285, %284 : vector<10x256xf32>
    %287 = math.tanh %286 : vector<10x256xf32>
    %cst_58 = arith.constant 1.000000e+00 : f32
    %288 = vector.broadcast %cst_58 : f32 to vector<10x256xf32>
    %289 = arith.addf %287, %288 : vector<10x256xf32>
    %cst_59 = arith.constant 5.000000e-01 : f32
    %290 = vector.broadcast %cst_59 : f32 to vector<10x256xf32>
    %291 = arith.mulf %290, %289 : vector<10x256xf32>
    %292 = arith.mulf %291, %196 : vector<10x256xf32>
    %293 = vector.extract_strided_slice %216 {offsets = [120, 0], sizes = [20, 256], strides = [1, 1]} : vector<270x256xf32> to vector<20x256xf32>
    %294 = arith.addf %293, %206 : vector<20x256xf32>
    %295 = vector.extract_strided_slice %294 {offsets = [10, 0], sizes = [10, 256], strides = [1, 1]} : vector<20x256xf32> to vector<10x256xf32>
    %cst_60 = arith.constant 5.000000e-01 : f32
    %296 = vector.broadcast %cst_60 : f32 to vector<10x256xf32>
    %297 = arith.mulf %296, %295 : vector<10x256xf32>
    %298 = math.tanh %297 : vector<10x256xf32>
    %cst_61 = arith.constant 1.000000e+00 : f32
    %299 = vector.broadcast %cst_61 : f32 to vector<10x256xf32>
    %300 = arith.addf %298, %299 : vector<10x256xf32>
    %cst_62 = arith.constant 5.000000e-01 : f32
    %301 = vector.broadcast %cst_62 : f32 to vector<10x256xf32>
    %302 = arith.mulf %301, %300 : vector<10x256xf32>
    %303 = vector.extract_strided_slice %294 {offsets = [0, 0], sizes = [10, 256], strides = [1, 1]} : vector<20x256xf32> to vector<10x256xf32>
    %cst_63 = arith.constant 5.000000e-01 : f32
    %304 = vector.broadcast %cst_63 : f32 to vector<10x256xf32>
    %305 = arith.mulf %304, %303 : vector<10x256xf32>
    %306 = math.tanh %305 : vector<10x256xf32>
    %cst_64 = arith.constant 1.000000e+00 : f32
    %307 = vector.broadcast %cst_64 : f32 to vector<10x256xf32>
    %308 = arith.addf %306, %307 : vector<10x256xf32>
    %cst_65 = arith.constant 5.000000e-01 : f32
    %309 = vector.broadcast %cst_65 : f32 to vector<10x256xf32>
    %310 = arith.mulf %309, %308 : vector<10x256xf32>
    %311 = arith.mulf %310, %197 : vector<10x256xf32>
    %312 = vector.extract_strided_slice %216 {offsets = [150, 0], sizes = [20, 256], strides = [1, 1]} : vector<270x256xf32> to vector<20x256xf32>
    %313 = arith.addf %312, %207 : vector<20x256xf32>
    %314 = vector.extract_strided_slice %313 {offsets = [10, 0], sizes = [10, 256], strides = [1, 1]} : vector<20x256xf32> to vector<10x256xf32>
    %cst_66 = arith.constant 5.000000e-01 : f32
    %315 = vector.broadcast %cst_66 : f32 to vector<10x256xf32>
    %316 = arith.mulf %315, %314 : vector<10x256xf32>
    %317 = math.tanh %316 : vector<10x256xf32>
    %cst_67 = arith.constant 1.000000e+00 : f32
    %318 = vector.broadcast %cst_67 : f32 to vector<10x256xf32>
    %319 = arith.addf %317, %318 : vector<10x256xf32>
    %cst_68 = arith.constant 5.000000e-01 : f32
    %320 = vector.broadcast %cst_68 : f32 to vector<10x256xf32>
    %321 = arith.mulf %320, %319 : vector<10x256xf32>
    %322 = vector.extract_strided_slice %313 {offsets = [0, 0], sizes = [10, 256], strides = [1, 1]} : vector<20x256xf32> to vector<10x256xf32>
    %cst_69 = arith.constant 5.000000e-01 : f32
    %323 = vector.broadcast %cst_69 : f32 to vector<10x256xf32>
    %324 = arith.mulf %323, %322 : vector<10x256xf32>
    %325 = math.tanh %324 : vector<10x256xf32>
    %cst_70 = arith.constant 1.000000e+00 : f32
    %326 = vector.broadcast %cst_70 : f32 to vector<10x256xf32>
    %327 = arith.addf %325, %326 : vector<10x256xf32>
    %cst_71 = arith.constant 5.000000e-01 : f32
    %328 = vector.broadcast %cst_71 : f32 to vector<10x256xf32>
    %329 = arith.mulf %328, %327 : vector<10x256xf32>
    %330 = arith.mulf %329, %198 : vector<10x256xf32>
    %331 = vector.extract_strided_slice %216 {offsets = [180, 0], sizes = [20, 256], strides = [1, 1]} : vector<270x256xf32> to vector<20x256xf32>
    %332 = arith.addf %331, %208 : vector<20x256xf32>
    %333 = vector.extract_strided_slice %332 {offsets = [10, 0], sizes = [10, 256], strides = [1, 1]} : vector<20x256xf32> to vector<10x256xf32>
    %cst_72 = arith.constant 5.000000e-01 : f32
    %334 = vector.broadcast %cst_72 : f32 to vector<10x256xf32>
    %335 = arith.mulf %334, %333 : vector<10x256xf32>
    %336 = math.tanh %335 : vector<10x256xf32>
    %cst_73 = arith.constant 1.000000e+00 : f32
    %337 = vector.broadcast %cst_73 : f32 to vector<10x256xf32>
    %338 = arith.addf %336, %337 : vector<10x256xf32>
    %cst_74 = arith.constant 5.000000e-01 : f32
    %339 = vector.broadcast %cst_74 : f32 to vector<10x256xf32>
    %340 = arith.mulf %339, %338 : vector<10x256xf32>
    %341 = vector.extract_strided_slice %332 {offsets = [0, 0], sizes = [10, 256], strides = [1, 1]} : vector<20x256xf32> to vector<10x256xf32>
    %cst_75 = arith.constant 5.000000e-01 : f32
    %342 = vector.broadcast %cst_75 : f32 to vector<10x256xf32>
    %343 = arith.mulf %342, %341 : vector<10x256xf32>
    %344 = math.tanh %343 : vector<10x256xf32>
    %cst_76 = arith.constant 1.000000e+00 : f32
    %345 = vector.broadcast %cst_76 : f32 to vector<10x256xf32>
    %346 = arith.addf %344, %345 : vector<10x256xf32>
    %cst_77 = arith.constant 5.000000e-01 : f32
    %347 = vector.broadcast %cst_77 : f32 to vector<10x256xf32>
    %348 = arith.mulf %347, %346 : vector<10x256xf32>
    %349 = arith.mulf %348, %199 : vector<10x256xf32>
    %350 = vector.extract_strided_slice %216 {offsets = [210, 0], sizes = [20, 256], strides = [1, 1]} : vector<270x256xf32> to vector<20x256xf32>
    %351 = arith.addf %350, %209 : vector<20x256xf32>
    %352 = vector.extract_strided_slice %351 {offsets = [10, 0], sizes = [10, 256], strides = [1, 1]} : vector<20x256xf32> to vector<10x256xf32>
    %cst_78 = arith.constant 5.000000e-01 : f32
    %353 = vector.broadcast %cst_78 : f32 to vector<10x256xf32>
    %354 = arith.mulf %353, %352 : vector<10x256xf32>
    %355 = math.tanh %354 : vector<10x256xf32>
    %cst_79 = arith.constant 1.000000e+00 : f32
    %356 = vector.broadcast %cst_79 : f32 to vector<10x256xf32>
    %357 = arith.addf %355, %356 : vector<10x256xf32>
    %cst_80 = arith.constant 5.000000e-01 : f32
    %358 = vector.broadcast %cst_80 : f32 to vector<10x256xf32>
    %359 = arith.mulf %358, %357 : vector<10x256xf32>
    %360 = vector.extract_strided_slice %351 {offsets = [0, 0], sizes = [10, 256], strides = [1, 1]} : vector<20x256xf32> to vector<10x256xf32>
    %cst_81 = arith.constant 5.000000e-01 : f32
    %361 = vector.broadcast %cst_81 : f32 to vector<10x256xf32>
    %362 = arith.mulf %361, %360 : vector<10x256xf32>
    %363 = math.tanh %362 : vector<10x256xf32>
    %cst_82 = arith.constant 1.000000e+00 : f32
    %364 = vector.broadcast %cst_82 : f32 to vector<10x256xf32>
    %365 = arith.addf %363, %364 : vector<10x256xf32>
    %cst_83 = arith.constant 5.000000e-01 : f32
    %366 = vector.broadcast %cst_83 : f32 to vector<10x256xf32>
    %367 = arith.mulf %366, %365 : vector<10x256xf32>
    %368 = arith.mulf %367, %200 : vector<10x256xf32>
    %369 = vector.extract_strided_slice %216 {offsets = [240, 0], sizes = [20, 256], strides = [1, 1]} : vector<270x256xf32> to vector<20x256xf32>
    %370 = arith.addf %369, %210 : vector<20x256xf32>
    %371 = vector.extract_strided_slice %370 {offsets = [10, 0], sizes = [10, 256], strides = [1, 1]} : vector<20x256xf32> to vector<10x256xf32>
    %cst_84 = arith.constant 5.000000e-01 : f32
    %372 = vector.broadcast %cst_84 : f32 to vector<10x256xf32>
    %373 = arith.mulf %372, %371 : vector<10x256xf32>
    %374 = math.tanh %373 : vector<10x256xf32>
    %cst_85 = arith.constant 1.000000e+00 : f32
    %375 = vector.broadcast %cst_85 : f32 to vector<10x256xf32>
    %376 = arith.addf %374, %375 : vector<10x256xf32>
    %cst_86 = arith.constant 5.000000e-01 : f32
    %377 = vector.broadcast %cst_86 : f32 to vector<10x256xf32>
    %378 = arith.mulf %377, %376 : vector<10x256xf32>
    %379 = vector.extract_strided_slice %370 {offsets = [0, 0], sizes = [10, 256], strides = [1, 1]} : vector<20x256xf32> to vector<10x256xf32>
    %cst_87 = arith.constant 5.000000e-01 : f32
    %380 = vector.broadcast %cst_87 : f32 to vector<10x256xf32>
    %381 = arith.mulf %380, %379 : vector<10x256xf32>
    %382 = math.tanh %381 : vector<10x256xf32>
    %cst_88 = arith.constant 1.000000e+00 : f32
    %383 = vector.broadcast %cst_88 : f32 to vector<10x256xf32>
    %384 = arith.addf %382, %383 : vector<10x256xf32>
    %cst_89 = arith.constant 5.000000e-01 : f32
    %385 = vector.broadcast %cst_89 : f32 to vector<10x256xf32>
    %386 = arith.mulf %385, %384 : vector<10x256xf32>
    %387 = arith.mulf %386, %201 : vector<10x256xf32>
    %c0_90 = arith.constant 0 : index
    %c0_91 = arith.constant 0 : index
    %388 = vector.load %arg8[%c0_90, %c0_91] : memref<90x90xf32, #tpu.memory_space<vmem>>, vector<90x90xf32>
    %389 = tpu.concatenate %235, %254, %273, %292, %311, %330, %349, %368, %387 in 0 : vector<10x256xf32>, vector<10x256xf32>, vector<10x256xf32>, vector<10x256xf32>, vector<10x256xf32>, vector<10x256xf32>, vector<10x256xf32>, vector<10x256xf32>, vector<10x256xf32> -> vector<90x256xf32>
    %cst_92 = arith.constant dense<0.000000e+00> : vector<90x256xf32>
    %390 = tpu.matmul %388, %389, %cst_92 {dimension_numbers = #tpu.dot_dimension_numbers<[1], [0], [0], [1], [0, 0, 1, 1], [], []>} : vector<90x90xf32>, vector<90x256xf32>, vector<90x256xf32> -> vector<90x256xf32>
    %391 = vector.extract_strided_slice %216 {offsets = [20, 0], sizes = [10, 256], strides = [1, 1]} : vector<270x256xf32> to vector<10x256xf32>
    %392 = vector.extract_strided_slice %390 {offsets = [0, 0], sizes = [10, 256], strides = [1, 1]} : vector<90x256xf32> to vector<10x256xf32>
    %393 = arith.addf %391, %392 : vector<10x256xf32>
    %394 = math.tanh %393 : vector<10x256xf32>
    %cst_93 = arith.constant 1.000000e+00 : f32
    %395 = vector.broadcast %cst_93 : f32 to vector<10x256xf32>
    %396 = arith.subf %395, %226 : vector<10x256xf32>
    %397 = arith.mulf %396, %193 : vector<10x256xf32>
    %398 = arith.mulf %226, %394 : vector<10x256xf32>
    %399 = arith.addf %397, %398 : vector<10x256xf32>
    %400 = vector.extract_strided_slice %216 {offsets = [50, 0], sizes = [10, 256], strides = [1, 1]} : vector<270x256xf32> to vector<10x256xf32>
    %401 = vector.extract_strided_slice %390 {offsets = [10, 0], sizes = [10, 256], strides = [1, 1]} : vector<90x256xf32> to vector<10x256xf32>
    %402 = arith.addf %400, %401 : vector<10x256xf32>
    %403 = math.tanh %402 : vector<10x256xf32>
    %cst_94 = arith.constant 1.000000e+00 : f32
    %404 = vector.broadcast %cst_94 : f32 to vector<10x256xf32>
    %405 = arith.subf %404, %245 : vector<10x256xf32>
    %406 = arith.mulf %405, %194 : vector<10x256xf32>
    %407 = arith.mulf %245, %403 : vector<10x256xf32>
    %408 = arith.addf %406, %407 : vector<10x256xf32>
    %409 = vector.extract_strided_slice %216 {offsets = [80, 0], sizes = [10, 256], strides = [1, 1]} : vector<270x256xf32> to vector<10x256xf32>
    %410 = vector.extract_strided_slice %390 {offsets = [20, 0], sizes = [10, 256], strides = [1, 1]} : vector<90x256xf32> to vector<10x256xf32>
    %411 = arith.addf %409, %410 : vector<10x256xf32>
    %412 = math.tanh %411 : vector<10x256xf32>
    %cst_95 = arith.constant 1.000000e+00 : f32
    %413 = vector.broadcast %cst_95 : f32 to vector<10x256xf32>
    %414 = arith.subf %413, %264 : vector<10x256xf32>
    %415 = arith.mulf %414, %195 : vector<10x256xf32>
    %416 = arith.mulf %264, %412 : vector<10x256xf32>
    %417 = arith.addf %415, %416 : vector<10x256xf32>
    %418 = vector.extract_strided_slice %216 {offsets = [110, 0], sizes = [10, 256], strides = [1, 1]} : vector<270x256xf32> to vector<10x256xf32>
    %419 = vector.extract_strided_slice %390 {offsets = [30, 0], sizes = [10, 256], strides = [1, 1]} : vector<90x256xf32> to vector<10x256xf32>
    %420 = arith.addf %418, %419 : vector<10x256xf32>
    %421 = math.tanh %420 : vector<10x256xf32>
    %cst_96 = arith.constant 1.000000e+00 : f32
    %422 = vector.broadcast %cst_96 : f32 to vector<10x256xf32>
    %423 = arith.subf %422, %283 : vector<10x256xf32>
    %424 = arith.mulf %423, %196 : vector<10x256xf32>
    %425 = arith.mulf %283, %421 : vector<10x256xf32>
    %426 = arith.addf %424, %425 : vector<10x256xf32>
    %427 = vector.extract_strided_slice %216 {offsets = [140, 0], sizes = [10, 256], strides = [1, 1]} : vector<270x256xf32> to vector<10x256xf32>
    %428 = vector.extract_strided_slice %390 {offsets = [40, 0], sizes = [10, 256], strides = [1, 1]} : vector<90x256xf32> to vector<10x256xf32>
    %429 = arith.addf %427, %428 : vector<10x256xf32>
    %430 = math.tanh %429 : vector<10x256xf32>
    %cst_97 = arith.constant 1.000000e+00 : f32
    %431 = vector.broadcast %cst_97 : f32 to vector<10x256xf32>
    %432 = arith.subf %431, %302 : vector<10x256xf32>
    %433 = arith.mulf %432, %197 : vector<10x256xf32>
    %434 = arith.mulf %302, %430 : vector<10x256xf32>
    %435 = arith.addf %433, %434 : vector<10x256xf32>
    %436 = vector.extract_strided_slice %216 {offsets = [170, 0], sizes = [10, 256], strides = [1, 1]} : vector<270x256xf32> to vector<10x256xf32>
    %437 = vector.extract_strided_slice %390 {offsets = [50, 0], sizes = [10, 256], strides = [1, 1]} : vector<90x256xf32> to vector<10x256xf32>
    %438 = arith.addf %436, %437 : vector<10x256xf32>
    %439 = math.tanh %438 : vector<10x256xf32>
    %cst_98 = arith.constant 1.000000e+00 : f32
    %440 = vector.broadcast %cst_98 : f32 to vector<10x256xf32>
    %441 = arith.subf %440, %321 : vector<10x256xf32>
    %442 = arith.mulf %441, %198 : vector<10x256xf32>
    %443 = arith.mulf %321, %439 : vector<10x256xf32>
    %444 = arith.addf %442, %443 : vector<10x256xf32>
    %445 = vector.extract_strided_slice %216 {offsets = [200, 0], sizes = [10, 256], strides = [1, 1]} : vector<270x256xf32> to vector<10x256xf32>
    %446 = vector.extract_strided_slice %390 {offsets = [60, 0], sizes = [10, 256], strides = [1, 1]} : vector<90x256xf32> to vector<10x256xf32>
    %447 = arith.addf %445, %446 : vector<10x256xf32>
    %448 = math.tanh %447 : vector<10x256xf32>
    %cst_99 = arith.constant 1.000000e+00 : f32
    %449 = vector.broadcast %cst_99 : f32 to vector<10x256xf32>
    %450 = arith.subf %449, %340 : vector<10x256xf32>
    %451 = arith.mulf %450, %199 : vector<10x256xf32>
    %452 = arith.mulf %340, %448 : vector<10x256xf32>
    %453 = arith.addf %451, %452 : vector<10x256xf32>
    %454 = vector.extract_strided_slice %216 {offsets = [230, 0], sizes = [10, 256], strides = [1, 1]} : vector<270x256xf32> to vector<10x256xf32>
    %455 = vector.extract_strided_slice %390 {offsets = [70, 0], sizes = [10, 256], strides = [1, 1]} : vector<90x256xf32> to vector<10x256xf32>
    %456 = arith.addf %454, %455 : vector<10x256xf32>
    %457 = math.tanh %456 : vector<10x256xf32>
    %cst_100 = arith.constant 1.000000e+00 : f32
    %458 = vector.broadcast %cst_100 : f32 to vector<10x256xf32>
    %459 = arith.subf %458, %359 : vector<10x256xf32>
    %460 = arith.mulf %459, %200 : vector<10x256xf32>
    %461 = arith.mulf %359, %457 : vector<10x256xf32>
    %462 = arith.addf %460, %461 : vector<10x256xf32>
    %463 = vector.extract_strided_slice %216 {offsets = [260, 0], sizes = [10, 256], strides = [1, 1]} : vector<270x256xf32> to vector<10x256xf32>
    %464 = vector.extract_strided_slice %390 {offsets = [80, 0], sizes = [10, 256], strides = [1, 1]} : vector<90x256xf32> to vector<10x256xf32>
    %465 = arith.addf %463, %464 : vector<10x256xf32>
    %466 = math.tanh %465 : vector<10x256xf32>
    %cst_101 = arith.constant 1.000000e+00 : f32
    %467 = vector.broadcast %cst_101 : f32 to vector<10x256xf32>
    %468 = arith.subf %467, %378 : vector<10x256xf32>
    %469 = arith.mulf %468, %201 : vector<10x256xf32>
    %470 = arith.mulf %378, %466 : vector<10x256xf32>
    %471 = arith.addf %469, %470 : vector<10x256xf32>
    %c0_102 = arith.constant 0 : index
    %c0_103 = arith.constant 0 : index
    %c0_104 = arith.constant 0 : index
    %472 = vector.load %arg23[%c0_102, %c0_103, %c0_104] : memref<1x10x256xf32, #tpu.memory_space<vmem>>, vector<1x10x256xf32>
    %473 = vector.shape_cast %472 : vector<1x10x256xf32> to vector<10x256xf32>
    %474 = vector.shape_cast %399 : vector<10x256xf32> to vector<1x10x256xf32>
    tpu.vector_store %arg23[%c0_102, %c0_103, %c0_104], %474 {strides = array<i32>} : memref<1x10x256xf32, #tpu.memory_space<vmem>>, vector<1x10x256xf32>,
    %c0_105 = arith.constant 0 : index
    %c0_106 = arith.constant 0 : index
    %c0_107 = arith.constant 0 : index
    %475 = vector.load %arg21[%c0_105, %c0_106, %c0_107] : memref<1x10x256xf32, #tpu.memory_space<vmem>>, vector<1x10x256xf32>
    %476 = vector.shape_cast %475 : vector<1x10x256xf32> to vector<10x256xf32>
    %477 = vector.shape_cast %408 : vector<10x256xf32> to vector<1x10x256xf32>
    tpu.vector_store %arg21[%c0_105, %c0_106, %c0_107], %477 {strides = array<i32>} : memref<1x10x256xf32, #tpu.memory_space<vmem>>, vector<1x10x256xf32>,
    %c0_108 = arith.constant 0 : index
    %c0_109 = arith.constant 0 : index
    %c0_110 = arith.constant 0 : index
    %478 = vector.load %arg22[%c0_108, %c0_109, %c0_110] : memref<1x10x256xf32, #tpu.memory_space<vmem>>, vector<1x10x256xf32>
    %479 = vector.shape_cast %478 : vector<1x10x256xf32> to vector<10x256xf32>
    %480 = vector.shape_cast %417 : vector<10x256xf32> to vector<1x10x256xf32>
    tpu.vector_store %arg22[%c0_108, %c0_109, %c0_110], %480 {strides = array<i32>} : memref<1x10x256xf32, #tpu.memory_space<vmem>>, vector<1x10x256xf32>,
    %c0_111 = arith.constant 0 : index
    %c0_112 = arith.constant 0 : index
    %c0_113 = arith.constant 0 : index
    %481 = vector.load %arg15[%c0_111, %c0_112, %c0_113] : memref<1x10x256xf32, #tpu.memory_space<vmem>>, vector<1x10x256xf32>
    %482 = vector.shape_cast %481 : vector<1x10x256xf32> to vector<10x256xf32>
    %483 = vector.shape_cast %426 : vector<10x256xf32> to vector<1x10x256xf32>
    tpu.vector_store %arg15[%c0_111, %c0_112, %c0_113], %483 {strides = array<i32>} : memref<1x10x256xf32, #tpu.memory_space<vmem>>, vector<1x10x256xf32>,
    %c0_114 = arith.constant 0 : index
    %c0_115 = arith.constant 0 : index
    %c0_116 = arith.constant 0 : index
    %484 = vector.load %arg16[%c0_114, %c0_115, %c0_116] : memref<1x10x256xf32, #tpu.memory_space<vmem>>, vector<1x10x256xf32>
    %485 = vector.shape_cast %484 : vector<1x10x256xf32> to vector<10x256xf32>
    %486 = vector.shape_cast %435 : vector<10x256xf32> to vector<1x10x256xf32>
    tpu.vector_store %arg16[%c0_114, %c0_115, %c0_116], %486 {strides = array<i32>} : memref<1x10x256xf32, #tpu.memory_space<vmem>>, vector<1x10x256xf32>,
    %c0_117 = arith.constant 0 : index
    %c0_118 = arith.constant 0 : index
    %c0_119 = arith.constant 0 : index
    %487 = vector.load %arg17[%c0_117, %c0_118, %c0_119] : memref<1x10x256xf32, #tpu.memory_space<vmem>>, vector<1x10x256xf32>
    %488 = vector.shape_cast %487 : vector<1x10x256xf32> to vector<10x256xf32>
    %489 = vector.shape_cast %444 : vector<10x256xf32> to vector<1x10x256xf32>
    tpu.vector_store %arg17[%c0_117, %c0_118, %c0_119], %489 {strides = array<i32>} : memref<1x10x256xf32, #tpu.memory_space<vmem>>, vector<1x10x256xf32>,
    %c0_120 = arith.constant 0 : index
    %c0_121 = arith.constant 0 : index
    %c0_122 = arith.constant 0 : index
    %490 = vector.load %arg18[%c0_120, %c0_121, %c0_122] : memref<1x10x256xf32, #tpu.memory_space<vmem>>, vector<1x10x256xf32>
    %491 = vector.shape_cast %490 : vector<1x10x256xf32> to vector<10x256xf32>
    %492 = vector.shape_cast %453 : vector<10x256xf32> to vector<1x10x256xf32>
    tpu.vector_store %arg18[%c0_120, %c0_121, %c0_122], %492 {strides = array<i32>} : memref<1x10x256xf32, #tpu.memory_space<vmem>>, vector<1x10x256xf32>,
    %c0_123 = arith.constant 0 : index
    %c0_124 = arith.constant 0 : index
    %c0_125 = arith.constant 0 : index
    %493 = vector.load %arg19[%c0_123, %c0_124, %c0_125] : memref<1x10x256xf32, #tpu.memory_space<vmem>>, vector<1x10x256xf32>
    %494 = vector.shape_cast %493 : vector<1x10x256xf32> to vector<10x256xf32>
    %495 = vector.shape_cast %462 : vector<10x256xf32> to vector<1x10x256xf32>
    tpu.vector_store %arg19[%c0_123, %c0_124, %c0_125], %495 {strides = array<i32>} : memref<1x10x256xf32, #tpu.memory_space<vmem>>, vector<1x10x256xf32>,
    %c0_126 = arith.constant 0 : index
    %c0_127 = arith.constant 0 : index
    %c0_128 = arith.constant 0 : index
    %496 = vector.load %arg20[%c0_126, %c0_127, %c0_128] : memref<1x10x256xf32, #tpu.memory_space<vmem>>, vector<1x10x256xf32>
    %497 = vector.shape_cast %496 : vector<1x10x256xf32> to vector<10x256xf32>
    %498 = vector.shape_cast %471 : vector<10x256xf32> to vector<1x10x256xf32>
    tpu.vector_store %arg20[%c0_126, %c0_127, %c0_128], %498 {strides = array<i32>} : memref<1x10x256xf32, #tpu.memory_space<vmem>>, vector<1x10x256xf32>,
    %c0_129 = arith.constant 0 : index
    %c0_130 = arith.constant 0 : index
    %c0_131 = arith.constant 0 : index
    %499 = vector.load %arg24[%c0_129, %c0_130, %c0_131] : memref<1x3x256xf32, #tpu.memory_space<vmem>>, vector<1x3x256xf32>
    %500 = vector.shape_cast %499 : vector<1x3x256xf32> to vector<3x256xf32>
    %501 = vector.shape_cast %20 : vector<3x256xf32> to vector<1x3x256xf32>
    tpu.vector_store %arg24[%c0_129, %c0_130, %c0_131], %501 {strides = array<i32>} : memref<1x3x256xf32, #tpu.memory_space<vmem>>, vector<1x3x256xf32>,
    %c0_132 = arith.constant 0 : index
    %c0_133 = arith.constant 0 : index
    %c0_134 = arith.constant 0 : index
    %502 = vector.load %arg25[%c0_132, %c0_133, %c0_134] : memref<1x5x256xf32, #tpu.memory_space<vmem>>, vector<1x5x256xf32>
    %503 = vector.shape_cast %502 : vector<1x5x256xf32> to vector<5x256xf32>
    %504 = vector.shape_cast %24 : vector<5x256xf32> to vector<1x5x256xf32>
    tpu.vector_store %arg25[%c0_132, %c0_133, %c0_134], %504 {strides = array<i32>} : memref<1x5x256xf32, #tpu.memory_space<vmem>>, vector<1x5x256xf32>,
    %c0_135 = arith.constant 0 : index
    %c0_136 = arith.constant 0 : index
    %c0_137 = arith.constant 0 : index
    %505 = vector.load %arg26[%c0_135, %c0_136, %c0_137] : memref<1x3x256xf32, #tpu.memory_space<vmem>>, vector<1x3x256xf32>
    %506 = vector.shape_cast %505 : vector<1x3x256xf32> to vector<3x256xf32>
    %507 = vector.shape_cast %28 : vector<3x256xf32> to vector<1x3x256xf32>
    tpu.vector_store %arg26[%c0_135, %c0_136, %c0_137], %507 {strides = array<i32>} : memref<1x3x256xf32, #tpu.memory_space<vmem>>, vector<1x3x256xf32>,
    return
  }
  func.func @transform_0(%arg0: i32, %arg1: i32) -> (i32, i32, i32) {
    %c0_i32 = arith.constant 0 : i32
    %c0_i32_0 = arith.constant 0 : i32
    return %arg0, %c0_i32, %arg1 : i32, i32, i32
  }
  func.func @transform_1(%arg0: i32, %arg1: i32) -> (i32, i32, i32) {
    %c0_i32 = arith.constant 0 : i32
    %c0_i32_0 = arith.constant 0 : i32
    return %arg0, %c0_i32, %arg1 : i32, i32, i32
  }
  func.func @transform_2(%arg0: i32, %arg1: i32) -> (i32, i32, i32) {
    %c0_i32 = arith.constant 0 : i32
    %c0_i32_0 = arith.constant 0 : i32
    return %arg0, %c0_i32, %arg1 : i32, i32, i32
  }
  func.func @transform_3(%arg0: i32, %arg1: i32) -> (i32, i32) {
    %c0_i32 = arith.constant 0 : i32
    %c0_i32_0 = arith.constant 0 : i32
    %c0_i32_1 = arith.constant 0 : i32
    return %c0_i32, %c0_i32_0 : i32, i32
  }
  func.func @transform_4(%arg0: i32, %arg1: i32) -> (i32, i32) {
    %c0_i32 = arith.constant 0 : i32
    %c0_i32_0 = arith.constant 0 : i32
    %c0_i32_1 = arith.constant 0 : i32
    return %c0_i32, %c0_i32_0 : i32, i32
  }
  func.func @transform_5(%arg0: i32, %arg1: i32) -> (i32, i32) {
    %c0_i32 = arith.constant 0 : i32
    %c0_i32_0 = arith.constant 0 : i32
    %c0_i32_1 = arith.constant 0 : i32
    return %c0_i32, %c0_i32_0 : i32, i32
  }
  func.func @transform_6(%arg0: i32, %arg1: i32) -> (i32, i32) {
    %c0_i32 = arith.constant 0 : i32
    %c0_i32_0 = arith.constant 0 : i32
    %c0_i32_1 = arith.constant 0 : i32
    return %c0_i32, %c0_i32_0 : i32, i32
  }
  func.func @transform_7(%arg0: i32, %arg1: i32) -> (i32, i32) {
    %c0_i32 = arith.constant 0 : i32
    %c0_i32_0 = arith.constant 0 : i32
    %c0_i32_1 = arith.constant 0 : i32
    return %c0_i32, %c0_i32_0 : i32, i32
  }
  func.func @transform_8(%arg0: i32, %arg1: i32) -> (i32, i32) {
    %c0_i32 = arith.constant 0 : i32
    %c0_i32_0 = arith.constant 0 : i32
    %c0_i32_1 = arith.constant 0 : i32
    return %c0_i32, %c0_i32_0 : i32, i32
  }
  func.func @transform_9(%arg0: i32, %arg1: i32) -> (i32, i32) {
    %c0_i32 = arith.constant 0 : i32
    %c0_i32_0 = arith.constant 0 : i32
    %c0_i32_1 = arith.constant 0 : i32
    return %c0_i32, %c0_i32_0 : i32, i32
  }
  func.func @transform_10(%arg0: i32, %arg1: i32) -> (i32, i32) {
    %c0_i32 = arith.constant 0 : i32
    %c0_i32_0 = arith.constant 0 : i32
    %c0_i32_1 = arith.constant 0 : i32
    return %c0_i32, %c0_i32_0 : i32, i32
  }
  func.func @transform_11(%arg0: i32, %arg1: i32) -> (i32, i32) {
    %c0_i32 = arith.constant 0 : i32
    %c0_i32_0 = arith.constant 0 : i32
    %c0_i32_1 = arith.constant 0 : i32
    return %c0_i32, %c0_i32_0 : i32, i32
  }
  func.func @transform_12(%arg0: i32, %arg1: i32) -> (i32, i32) {
    %c0_i32 = arith.constant 0 : i32
    %c0_i32_0 = arith.constant 0 : i32
    %c0_i32_1 = arith.constant 0 : i32
    return %c0_i32, %c0_i32_0 : i32, i32
  }
  func.func @transform_13(%arg0: i32, %arg1: i32) -> (i32, i32, i32) {
    %c0_i32 = arith.constant 0 : i32
    %c0_i32_0 = arith.constant 0 : i32
    return %arg0, %c0_i32, %arg1 : i32, i32, i32
  }
  func.func @transform_14(%arg0: i32, %arg1: i32) -> (i32, i32, i32) {
    %c0_i32 = arith.constant 0 : i32
    %c0_i32_0 = arith.constant 0 : i32
    return %arg0, %c0_i32, %arg1 : i32, i32, i32
  }
  func.func @transform_15(%arg0: i32, %arg1: i32) -> (i32, i32, i32) {
    %c0_i32 = arith.constant 0 : i32
    %c0_i32_0 = arith.constant 0 : i32
    return %arg0, %c0_i32, %arg1 : i32, i32, i32
  }
  func.func @transform_16(%arg0: i32, %arg1: i32) -> (i32, i32, i32) {
    %c0_i32 = arith.constant 0 : i32
    %c0_i32_0 = arith.constant 0 : i32
    return %arg0, %c0_i32, %arg1 : i32, i32, i32
  }
  func.func @transform_17(%arg0: i32, %arg1: i32) -> (i32, i32, i32) {
    %c0_i32 = arith.constant 0 : i32
    %c0_i32_0 = arith.constant 0 : i32
    return %arg0, %c0_i32, %arg1 : i32, i32, i32
  }
  func.func @transform_18(%arg0: i32, %arg1: i32) -> (i32, i32, i32) {
    %c0_i32 = arith.constant 0 : i32
    %c0_i32_0 = arith.constant 0 : i32
    return %arg0, %c0_i32, %arg1 : i32, i32, i32
  }
  func.func @transform_19(%arg0: i32, %arg1: i32) -> (i32, i32, i32) {
    %c0_i32 = arith.constant 0 : i32
    %c0_i32_0 = arith.constant 0 : i32
    return %arg0, %c0_i32, %arg1 : i32, i32, i32
  }
  func.func @transform_20(%arg0: i32, %arg1: i32) -> (i32, i32, i32) {
    %c0_i32 = arith.constant 0 : i32
    %c0_i32_0 = arith.constant 0 : i32
    return %arg0, %c0_i32, %arg1 : i32, i32, i32
  }
  func.func @transform_21(%arg0: i32, %arg1: i32) -> (i32, i32, i32) {
    %c0_i32 = arith.constant 0 : i32
    %c0_i32_0 = arith.constant 0 : i32
    return %arg0, %c0_i32, %arg1 : i32, i32, i32
  }
  func.func @transform_22(%arg0: i32, %arg1: i32) -> (i32, i32, i32) {
    %c0_i32 = arith.constant 0 : i32
    %c0_i32_0 = arith.constant 0 : i32
    return %arg0, %c0_i32, %arg1 : i32, i32, i32
  }
  func.func @transform_23(%arg0: i32, %arg1: i32) -> (i32, i32, i32) {
    %c0_i32 = arith.constant 0 : i32
    %c0_i32_0 = arith.constant 0 : i32
    return %arg0, %c0_i32, %arg1 : i32, i32, i32
  }
  func.func @transform_24(%arg0: i32, %arg1: i32) -> (i32, i32, i32) {
    %c0_i32 = arith.constant 0 : i32
    %c0_i32_0 = arith.constant 0 : i32
    return %arg0, %c0_i32, %arg1 : i32, i32, i32
  }
}

</mosaic_0001>

<llo_original>
// kernel: gnn_forward.1
$region0: #{gnn_forward.1}
  #allocation0 [shape = 'u32[]', space=smem, size = 0x4, offset = 0x4, fixed_abs, tag = 'smem constant byte address 0x4 - core index']
  #allocation1 [shape = 'u32[144,128]{1,0:T(1,128)}', space=vmem, size = 0x12000, scoped, tag = 'internal scratch']
  %s0 = inlined_call_operand.vmem [shape: f32[2,90,256], index: 0, kind: input, shape index: {}]
  %s1 = inlined_call_operand.vmem [shape: f32[2,3,256], index: 1, kind: input, shape index: {}]
  %s2 = inlined_call_operand.vmem [shape: f32[2,7,256], index: 2, kind: input, shape index: {}]
  %s3 = inlined_call_operand.vmem [shape: f32[631,90], index: 3, kind: input, shape index: {}]
  %s4 = inlined_call_operand.vmem [shape: f32[160,320], index: 4, kind: input, shape index: {}]
  %s5 = inlined_call_operand.vmem [shape: f32[270,90], index: 5, kind: input, shape index: {}]
  %s6 = inlined_call_operand.vmem [shape: f32[90,90], index: 6, kind: input, shape index: {}]
  %s7 = inlined_call_operand.vmem [shape: f32[320,1], index: 7, kind: input, shape index: {}]
  %s8 = inlined_call_operand.vmem [shape: f32[160,1], index: 8, kind: input, shape index: {}]
  %s9 = inlined_call_operand.vmem [shape: f32[270,1], index: 9, kind: input, shape index: {}]
  %s10 = inlined_call_operand.vmem [shape: f32[3,1], index: 10, kind: input, shape index: {}]
  %s11 = inlined_call_operand.vmem [shape: f32[5,1], index: 11, kind: input, shape index: {}]
  %s12 = inlined_call_operand.vmem [shape: f32[3,1], index: 12, kind: input, shape index: {}]
  %s13 = inlined_call_operand.vmem [shape: f32[2,10,256], index: 13, kind: output, shape index: {0}]
  %s14 = inlined_call_operand.vmem [shape: f32[2,10,256], index: 14, kind: output, shape index: {1}]
  %s15 = inlined_call_operand.vmem [shape: f32[2,10,256], index: 15, kind: output, shape index: {2}]
  %s16 = inlined_call_operand.vmem [shape: f32[2,10,256], index: 16, kind: output, shape index: {3}]
  %s17 = inlined_call_operand.vmem [shape: f32[2,10,256], index: 17, kind: output, shape index: {4}]
  %s18 = inlined_call_operand.vmem [shape: f32[2,10,256], index: 18, kind: output, shape index: {5}]
  %s19 = inlined_call_operand.vmem [shape: f32[2,10,256], index: 19, kind: output, shape index: {6}]
  %s20 = inlined_call_operand.vmem [shape: f32[2,10,256], index: 20, kind: output, shape index: {7}]
  %s21 = inlined_call_operand.vmem [shape: f32[2,10,256], index: 21, kind: output, shape index: {8}]
  %s22 = inlined_call_operand.vmem [shape: f32[2,3,256], index: 22, kind: output, shape index: {9}]
  %s23 = inlined_call_operand.vmem [shape: f32[2,5,256], index: 23, kind: output, shape index: {10}]
  %s24 = inlined_call_operand.vmem [shape: f32[2,3,256], index: 24, kind: output, shape index: {11}]
  %25 = xla_tuple %s13, %s14, %s15, %s16, %s17, %s18, %s19, %s20, %s21, %s22, %s23, %s24
  %s26 = sld [smem:[#allocation0]]
  $region173: #{gnn_forward.1} parent=0
    _
  %s28 = ssub.s32 1, %s26
  %s29 = scalar_select 0, %s28, %s26
  loop: start=0, step=1, limit=4
  $region2: #{gnn_forward.1} parent=0 // loop_pre_header
    _
  $region3: #{gnn_forward.1} parent=0 // loop_header
    %s31 = sphi 0, %s35
    %p32 = scmp.ge.s32.totalorder %s31, 4
    %s38 = sphi 0, %s50
    %s39 = sphi 0, %s46
    %s40 = sphi 0, %s38
    %s41 = sphi 0, %s39
    %s42 = sphi 0, %s40
    %s43 = sphi 0, %s41
    %s55 = sphi 0, %s57
    %s58 = sphi 0, %s55
    %s59 = sphi 0, %s58
    %s75 = sphi 0, %s59
    %s83 = sphi 0, %s85
    %s86 = sphi 0, %s83
    %s87 = sphi 0, %s86
    %s103 = sphi 0, %s87
    %s111 = sphi 0, %s113
    %s114 = sphi 0, %s111
    %s115 = sphi 0, %s114
    %s131 = sphi 0, %s115
    %s135 = sphi 0, %s135
    %s137 = sphi 0, %s135
    %s138 = sphi 0, %s137
    %s152 = sphi 0, %s138
    %s156 = sphi 0, %s156
    %s158 = sphi 0, %s156
    %s159 = sphi 0, %s158
    %s173 = sphi 0, %s159
    %s177 = sphi 0, %s177
    %s179 = sphi 0, %s177
    %s180 = sphi 0, %s179
    %s194 = sphi 0, %s180
    %s198 = sphi 0, %s198
    %s200 = sphi 0, %s198
    %s201 = sphi 0, %s200
    %s215 = sphi 0, %s201
    %s219 = sphi 0, %s219
    %s221 = sphi 0, %s219
    %s222 = sphi 0, %s221
    %s236 = sphi 0, %s222
    %s240 = sphi 0, %s240
    %s242 = sphi 0, %s240
    %s243 = sphi 0, %s242
    %s257 = sphi 0, %s243
    %s261 = sphi 0, %s261
    %s263 = sphi 0, %s261
    %s264 = sphi 0, %s263
    %s278 = sphi 0, %s264
    %s282 = sphi 0, %s282
    %s284 = sphi 0, %s282
    %s285 = sphi 0, %s284
    %s299 = sphi 0, %s285
    %s303 = sphi 0, %s303
    %s305 = sphi 0, %s303
    %s306 = sphi 0, %s305
    %s320 = sphi 0, %s306
    %s324 = sphi 0, %s324
    %s326 = sphi 0, %s324
    %s327 = sphi 0, %s326
    %s341 = sphi 0, %s327
    %s349 = sphi 0, %s351
    %s352 = sphi 0, %s349
    %s353 = sphi 0, %s352
    %s369 = sphi 0, %s353
    %s377 = sphi 0, %s379
    %s380 = sphi 0, %s377
    %s381 = sphi 0, %s380
    %s397 = sphi 0, %s381
    %s405 = sphi 0, %s407
    %s408 = sphi 0, %s405
    %s409 = sphi 0, %s408
    %s425 = sphi 0, %s409
    %s433 = sphi 0, %s435
    %s436 = sphi 0, %s433
    %s437 = sphi 0, %s436
    %s453 = sphi 0, %s437
    %s461 = sphi 0, %s463
    %s464 = sphi 0, %s461
    %s465 = sphi 0, %s464
    %s481 = sphi 0, %s465
    %s489 = sphi 0, %s491
    %s492 = sphi 0, %s489
    %s493 = sphi 0, %s492
    %s509 = sphi 0, %s493
    %s517 = sphi 0, %s519
    %s520 = sphi 0, %s517
    %s521 = sphi 0, %s520
    %s537 = sphi 0, %s521
    %s545 = sphi 0, %s547
    %s548 = sphi 0, %s545
    %s549 = sphi 0, %s548
    %s565 = sphi 0, %s549
    %s573 = sphi 0, %s575
    %s576 = sphi 0, %s573
    %s577 = sphi 0, %s576
    %s593 = sphi 0, %s577
    %s601 = sphi 0, %s603
    %s604 = sphi 0, %s601
    %s605 = sphi 0, %s604
    %s621 = sphi 0, %s605
    %s629 = sphi 0, %s631
    %s632 = sphi 0, %s629
    %s633 = sphi 0, %s632
    %s649 = sphi 0, %s633
    %s657 = sphi 0, %s659
    %s660 = sphi 0, %s657
    %s661 = sphi 0, %s660
    %s677 = sphi 0, %s661
  $region4: #{gnn_forward.1} parent=0 // loop_header_branch
    %34 = sbr.rel (%p32) target = $region8
  $region5: #{gnn_forward.1} parent=0 // loop_body
    %s36 = ssub.s32 %s31, 1
    %s37 = ssub.s32 %s31, 2
    %s44 = sadd.s32 1, %s39
    %p45 = scmp.ge.s32.totalorder %s44, 1
    %s46 = scalar_select %p45, 0, %s44
    %s47 = sadd.s32 1, %s38
    %s48 = scalar_select %p45, %s47, %s38
    %p49 = scmp.ge.s32.totalorder %s48, 2
    %s50 = scalar_select %p49, 0, %s48
    %s51 = ssub.s32 %s38, %s50
    %s52 = ssub.s32 %s39, %s46
    %s53 = sor.u32 %s51, %s52
    %p54 = scmp.eq.s32.totalorder %s53, 0
    %s56 = sadd.s32 %s55, 1
    %s57 = scalar_select %p54, %s55, %s56
    %p60 = pneg %p54
    %p61 = scmp.eq.s32.totalorder %s31, 1
    %p62 = por %p60, %p61
    %p63 = scmp.ne.s32.totalorder %s55, %s58
    %p64 = scmp.eq.s32.totalorder %s31, 0
    %p65 = por %p63, %p64
    %p66 = scmp.ne.s32.totalorder %s55, %s58
    %p67 = scmp.eq.s32.totalorder %s36, 1
    %p68 = por %p66, %p67
    %p69 = scmp.ne.s32.totalorder %s58, %s59
    %p70 = scmp.eq.s32.totalorder %s36, 0
    %p71 = por %p69, %p70
    %p72 = scmp.ne.s32.totalorder %s58, %s59
    %p73 = scmp.eq.s32.totalorder %s37, 1
    %p74 = por %p72, %p73
    %p76 = scmp.ne.s32.totalorder %s59, %s75
    %p77 = scmp.eq.s32.totalorder %s37, 0
    %p78 = por %p76, %p77
    %s79 = ssub.s32 %s38, %s50
    %s80 = ssub.s32 %s39, %s46
    %s81 = sor.u32 %s79, %s80
    %p82 = scmp.eq.s32.totalorder %s81, 0
    %s84 = sadd.s32 %s83, 1
    %s85 = scalar_select %p82, %s83, %s84
    %p88 = pneg %p82
    %p89 = scmp.eq.s32.totalorder %s31, 1
    %p90 = por %p88, %p89
    %p91 = scmp.ne.s32.totalorder %s83, %s86
    %p92 = scmp.eq.s32.totalorder %s31, 0
    %p93 = por %p91, %p92
    %p94 = scmp.ne.s32.totalorder %s83, %s86
    %p95 = scmp.eq.s32.totalorder %s36, 1
    %p96 = por %p94, %p95
    %p97 = scmp.ne.s32.totalorder %s86, %s87
    %p98 = scmp.eq.s32.totalorder %s36, 0
    %p99 = por %p97, %p98
    %p100 = scmp.ne.s32.totalorder %s86, %s87
    %p101 = scmp.eq.s32.totalorder %s37, 1
    %p102 = por %p100, %p101
    %p104 = scmp.ne.s32.totalorder %s87, %s103
    %p105 = scmp.eq.s32.totalorder %s37, 0
    %p106 = por %p104, %p105
    %s107 = ssub.s32 %s38, %s50
    %s108 = ssub.s32 %s39, %s46
    %s109 = sor.u32 %s107, %s108
    %p110 = scmp.eq.s32.totalorder %s109, 0
    %s112 = sadd.s32 %s111, 1
    %s113 = scalar_select %p110, %s111, %s112
    %p116 = pneg %p110
    %p117 = scmp.eq.s32.totalorder %s31, 1
    %p118 = por %p116, %p117
    %p119 = scmp.ne.s32.totalorder %s111, %s114
    %p120 = scmp.eq.s32.totalorder %s31, 0
    %p121 = por %p119, %p120
    %p122 = scmp.ne.s32.totalorder %s111, %s114
    %p123 = scmp.eq.s32.totalorder %s36, 1
    %p124 = por %p122, %p123
    %p125 = scmp.ne.s32.totalorder %s114, %s115
    %p126 = scmp.eq.s32.totalorder %s36, 0
    %p127 = por %p125, %p126
    %p128 = scmp.ne.s32.totalorder %s114, %s115
    %p129 = scmp.eq.s32.totalorder %s37, 1
    %p130 = por %p128, %p129
    %p132 = scmp.ne.s32.totalorder %s115, %s131
    %p133 = scmp.eq.s32.totalorder %s37, 0
    %p134 = por %p132, %p133
    %s136 = sadd.s32 %s135, 1
    %p139 = scmp.eq.s32.totalorder %s31, 1
    %p140 = scmp.ne.s32.totalorder %s135, %s137
    %p141 = scmp.eq.s32.totalorder %s31, 0
    %p142 = por %p140, %p141
    %p143 = scmp.ne.s32.totalorder %s135, %s137
    %p144 = scmp.eq.s32.totalorder %s36, 1
    %p145 = por %p143, %p144
    %p146 = scmp.ne.s32.totalorder %s137, %s138
    %p147 = scmp.eq.s32.totalorder %s36, 0
    %p148 = por %p146, %p147
    %p149 = scmp.ne.s32.totalorder %s137, %s138
    %p150 = scmp.eq.s32.totalorder %s37, 1
    %p151 = por %p149, %p150
    %p153 = scmp.ne.s32.totalorder %s138, %s152
    %p154 = scmp.eq.s32.totalorder %s37, 0
    %p155 = por %p153, %p154
    %s157 = sadd.s32 %s156, 1
    %p160 = scmp.eq.s32.totalorder %s31, 1
    %p161 = scmp.ne.s32.totalorder %s156, %s158
    %p162 = scmp.eq.s32.totalorder %s31, 0
    %p163 = por %p161, %p162
    %p164 = scmp.ne.s32.totalorder %s156, %s158
    %p165 = scmp.eq.s32.totalorder %s36, 1
    %p166 = por %p164, %p165
    %p167 = scmp.ne.s32.totalorder %s158, %s159
    %p168 = scmp.eq.s32.totalorder %s36, 0
    %p169 = por %p167, %p168
    %p170 = scmp.ne.s32.totalorder %s158, %s159
    %p171 = scmp.eq.s32.totalorder %s37, 1
    %p172 = por %p170, %p171
    %p174 = scmp.ne.s32.totalorder %s159, %s173
    %p175 = scmp.eq.s32.totalorder %s37, 0
    %p176 = por %p174, %p175
    %s178 = sadd.s32 %s177, 1
    %p181 = scmp.eq.s32.totalorder %s31, 1
    %p182 = scmp.ne.s32.totalorder %s177, %s179
    %p183 = scmp.eq.s32.totalorder %s31, 0
    %p184 = por %p182, %p183
    %p185 = scmp.ne.s32.totalorder %s177, %s179
    %p186 = scmp.eq.s32.totalorder %s36, 1
    %p187 = por %p185, %p186
    %p188 = scmp.ne.s32.totalorder %s179, %s180
    %p189 = scmp.eq.s32.totalorder %s36, 0
    %p190 = por %p188, %p189
    %p191 = scmp.ne.s32.totalorder %s179, %s180
    %p192 = scmp.eq.s32.totalorder %s37, 1
    %p193 = por %p191, %p192
    %p195 = scmp.ne.s32.totalorder %s180, %s194
    %p196 = scmp.eq.s32.totalorder %s37, 0
    %p197 = por %p195, %p196
    %s199 = sadd.s32 %s198, 1
    %p202 = scmp.eq.s32.totalorder %s31, 1
    %p203 = scmp.ne.s32.totalorder %s198, %s200
    %p204 = scmp.eq.s32.totalorder %s31, 0
    %p205 = por %p203, %p204
    %p206 = scmp.ne.s32.totalorder %s198, %s200
    %p207 = scmp.eq.s32.totalorder %s36, 1
    %p208 = por %p206, %p207
    %p209 = scmp.ne.s32.totalorder %s200, %s201
    %p210 = scmp.eq.s32.totalorder %s36, 0
    %p211 = por %p209, %p210
    %p212 = scmp.ne.s32.totalorder %s200, %s201
    %p213 = scmp.eq.s32.totalorder %s37, 1
    %p214 = por %p212, %p213
    %p216 = scmp.ne.s32.totalorder %s201, %s215
    %p217 = scmp.eq.s32.totalorder %s37, 0
    %p218 = por %p216, %p217
    %s220 = sadd.s32 %s219, 1
    %p223 = scmp.eq.s32.totalorder %s31, 1
    %p224 = scmp.ne.s32.totalorder %s219, %s221
    %p225 = scmp.eq.s32.totalorder %s31, 0
    %p226 = por %p224, %p225
    %p227 = scmp.ne.s32.totalorder %s219, %s221
    %p228 = scmp.eq.s32.totalorder %s36, 1
    %p229 = por %p227, %p228
    %p230 = scmp.ne.s32.totalorder %s221, %s222
    %p231 = scmp.eq.s32.totalorder %s36, 0
    %p232 = por %p230, %p231
    %p233 = scmp.ne.s32.totalorder %s221, %s222
    %p234 = scmp.eq.s32.totalorder %s37, 1
    %p235 = por %p233, %p234
    %p237 = scmp.ne.s32.totalorder %s222, %s236
    %p238 = scmp.eq.s32.totalorder %s37, 0
    %p239 = por %p237, %p238
    %s241 = sadd.s32 %s240, 1
    %p244 = scmp.eq.s32.totalorder %s31, 1
    %p245 = scmp.ne.s32.totalorder %s240, %s242
    %p246 = scmp.eq.s32.totalorder %s31, 0
    %p247 = por %p245, %p246
    %p248 = scmp.ne.s32.totalorder %s240, %s242
    %p249 = scmp.eq.s32.totalorder %s36, 1
    %p250 = por %p248, %p249
    %p251 = scmp.ne.s32.totalorder %s242, %s243
    %p252 = scmp.eq.s32.totalorder %s36, 0
    %p253 = por %p251, %p252
    %p254 = scmp.ne.s32.totalorder %s242, %s243
    %p255 = scmp.eq.s32.totalorder %s37, 1
    %p256 = por %p254, %p255
    %p258 = scmp.ne.s32.totalorder %s243, %s257
    %p259 = scmp.eq.s32.totalorder %s37, 0
    %p260 = por %p258, %p259
    %s262 = sadd.s32 %s261, 1
    %p265 = scmp.eq.s32.totalorder %s31, 1
    %p266 = scmp.ne.s32.totalorder %s261, %s263
    %p267 = scmp.eq.s32.totalorder %s31, 0
    %p268 = por %p266, %p267
    %p269 = scmp.ne.s32.totalorder %s261, %s263
    %p270 = scmp.eq.s32.totalorder %s36, 1
    %p271 = por %p269, %p270
    %p272 = scmp.ne.s32.totalorder %s263, %s264
    %p273 = scmp.eq.s32.totalorder %s36, 0
    %p274 = por %p272, %p273
    %p275 = scmp.ne.s32.totalorder %s263, %s264
    %p276 = scmp.eq.s32.totalorder %s37, 1
    %p277 = por %p275, %p276
    %p279 = scmp.ne.s32.totalorder %s264, %s278
    %p280 = scmp.eq.s32.totalorder %s37, 0
    %p281 = por %p279, %p280
    %s283 = sadd.s32 %s282, 1
    %p286 = scmp.eq.s32.totalorder %s31, 1
    %p287 = scmp.ne.s32.totalorder %s282, %s284
    %p288 = scmp.eq.s32.totalorder %s31, 0
    %p289 = por %p287, %p288
    %p290 = scmp.ne.s32.totalorder %s282, %s284
    %p291 = scmp.eq.s32.totalorder %s36, 1
    %p292 = por %p290, %p291
    %p293 = scmp.ne.s32.totalorder %s284, %s285
    %p294 = scmp.eq.s32.totalorder %s36, 0
    %p295 = por %p293, %p294
    %p296 = scmp.ne.s32.totalorder %s284, %s285
    %p297 = scmp.eq.s32.totalorder %s37, 1
    %p298 = por %p296, %p297
    %p300 = scmp.ne.s32.totalorder %s285, %s299
    %p301 = scmp.eq.s32.totalorder %s37, 0
    %p302 = por %p300, %p301
    %s304 = sadd.s32 %s303, 1
    %p307 = scmp.eq.s32.totalorder %s31, 1
    %p308 = scmp.ne.s32.totalorder %s303, %s305
    %p309 = scmp.eq.s32.totalorder %s31, 0
    %p310 = por %p308, %p309
    %p311 = scmp.ne.s32.totalorder %s303, %s305
    %p312 = scmp.eq.s32.totalorder %s36, 1
    %p313 = por %p311, %p312
    %p314 = scmp.ne.s32.totalorder %s305, %s306
    %p315 = scmp.eq.s32.totalorder %s36, 0
    %p316 = por %p314, %p315
    %p317 = scmp.ne.s32.totalorder %s305, %s306
    %p318 = scmp.eq.s32.totalorder %s37, 1
    %p319 = por %p317, %p318
    %p321 = scmp.ne.s32.totalorder %s306, %s320
    %p322 = scmp.eq.s32.totalorder %s37, 0
    %p323 = por %p321, %p322
    %s325 = sadd.s32 %s324, 1
    %p328 = scmp.eq.s32.totalorder %s31, 1
    %p329 = scmp.ne.s32.totalorder %s324, %s326
    %p330 = scmp.eq.s32.totalorder %s31, 0
    %p331 = por %p329, %p330
    %p332 = scmp.ne.s32.totalorder %s324, %s326
    %p333 = scmp.eq.s32.totalorder %s36, 1
    %p334 = por %p332, %p333
    %p335 = scmp.ne.s32.totalorder %s326, %s327
    %p336 = scmp.eq.s32.totalorder %s36, 0
    %p337 = por %p335, %p336
    %p338 = scmp.ne.s32.totalorder %s326, %s327
    %p339 = scmp.eq.s32.totalorder %s37, 1
    %p340 = por %p338, %p339
    %p342 = scmp.ne.s32.totalorder %s327, %s341
    %p343 = scmp.eq.s32.totalorder %s37, 0
    %p344 = por %p342, %p343
    %s345 = ssub.s32 %s38, %s50
    %s346 = ssub.s32 %s39, %s46
    %s347 = sor.u32 %s345, %s346
    %p348 = scmp.eq.s32.totalorder %s347, 0
    %s350 = sadd.s32 %s349, 1
    %s351 = scalar_select %p348, %s349, %s350
    %p354 = pneg %p348
    %p355 = scmp.eq.s32.totalorder %s31, 1
    %p356 = por %p354, %p355
    %p357 = scmp.ne.s32.totalorder %s349, %s352
    %p358 = scmp.eq.s32.totalorder %s31, 0
    %p359 = por %p357, %p358
    %p360 = scmp.ne.s32.totalorder %s349, %s352
    %p361 = scmp.eq.s32.totalorder %s36, 1
    %p362 = por %p360, %p361
    %p363 = scmp.ne.s32.totalorder %s352, %s353
    %p364 = scmp.eq.s32.totalorder %s36, 0
    %p365 = por %p363, %p364
    %p366 = scmp.ne.s32.totalorder %s352, %s353
    %p367 = scmp.eq.s32.totalorder %s37, 1
    %p368 = por %p366, %p367
    %p370 = scmp.ne.s32.totalorder %s353, %s369
    %p371 = scmp.eq.s32.totalorder %s37, 0
    %p372 = por %p370, %p371
    %s373 = ssub.s32 %s38, %s50
    %s374 = ssub.s32 %s39, %s46
    %s375 = sor.u32 %s373, %s374
    %p376 = scmp.eq.s32.totalorder %s375, 0
    %s378 = sadd.s32 %s377, 1
    %s379 = scalar_select %p376, %s377, %s378
    %p382 = pneg %p376
    %p383 = scmp.eq.s32.totalorder %s31, 1
    %p384 = por %p382, %p383
    %p385 = scmp.ne.s32.totalorder %s377, %s380
    %p386 = scmp.eq.s32.totalorder %s31, 0
    %p387 = por %p385, %p386
    %p388 = scmp.ne.s32.totalorder %s377, %s380
    %p389 = scmp.eq.s32.totalorder %s36, 1
    %p390 = por %p388, %p389
    %p391 = scmp.ne.s32.totalorder %s380, %s381
    %p392 = scmp.eq.s32.totalorder %s36, 0
    %p393 = por %p391, %p392
    %p394 = scmp.ne.s32.totalorder %s380, %s381
    %p395 = scmp.eq.s32.totalorder %s37, 1
    %p396 = por %p394, %p395
    %p398 = scmp.ne.s32.totalorder %s381, %s397
    %p399 = scmp.eq.s32.totalorder %s37, 0
    %p400 = por %p398, %p399
    %s401 = ssub.s32 %s38, %s50
    %s402 = ssub.s32 %s39, %s46
    %s403 = sor.u32 %s401, %s402
    %p404 = scmp.eq.s32.totalorder %s403, 0
    %s406 = sadd.s32 %s405, 1
    %s407 = scalar_select %p404, %s405, %s406
    %p410 = pneg %p404
    %p411 = scmp.eq.s32.totalorder %s31, 1
    %p412 = por %p410, %p411
    %p413 = scmp.ne.s32.totalorder %s405, %s408
    %p414 = scmp.eq.s32.totalorder %s31, 0
    %p415 = por %p413, %p414
    %p416 = scmp.ne.s32.totalorder %s405, %s408
    %p417 = scmp.eq.s32.totalorder %s36, 1
    %p418 = por %p416, %p417
    %p419 = scmp.ne.s32.totalorder %s408, %s409
    %p420 = scmp.eq.s32.totalorder %s36, 0
    %p421 = por %p419, %p420
    %p422 = scmp.ne.s32.totalorder %s408, %s409
    %p423 = scmp.eq.s32.totalorder %s37, 1
    %p424 = por %p422, %p423
    %p426 = scmp.ne.s32.totalorder %s409, %s425
    %p427 = scmp.eq.s32.totalorder %s37, 0
    %p428 = por %p426, %p427
    %s429 = ssub.s32 %s38, %s50
    %s430 = ssub.s32 %s39, %s46
    %s431 = sor.u32 %s429, %s430
    %p432 = scmp.eq.s32.totalorder %s431, 0
    %s434 = sadd.s32 %s433, 1
    %s435 = scalar_select %p432, %s433, %s434
    %p438 = pneg %p432
    %p439 = scmp.eq.s32.totalorder %s31, 1
    %p440 = por %p438, %p439
    %p441 = scmp.ne.s32.totalorder %s433, %s436
    %p442 = scmp.eq.s32.totalorder %s31, 0
    %p443 = por %p441, %p442
    %p444 = scmp.ne.s32.totalorder %s433, %s436
    %p445 = scmp.eq.s32.totalorder %s36, 1
    %p446 = por %p444, %p445
    %p447 = scmp.ne.s32.totalorder %s436, %s437
    %p448 = scmp.eq.s32.totalorder %s36, 0
    %p449 = por %p447, %p448
    %p450 = scmp.ne.s32.totalorder %s436, %s437
    %p451 = scmp.eq.s32.totalorder %s37, 1
    %p452 = por %p450, %p451
    %p454 = scmp.ne.s32.totalorder %s437, %s453
    %p455 = scmp.eq.s32.totalorder %s37, 0
    %p456 = por %p454, %p455
    %s457 = ssub.s32 %s38, %s50
    %s458 = ssub.s32 %s39, %s46
    %s459 = sor.u32 %s457, %s458
    %p460 = scmp.eq.s32.totalorder %s459, 0
    %s462 = sadd.s32 %s461, 1
    %s463 = scalar_select %p460, %s461, %s462
    %p466 = pneg %p460
    %p467 = scmp.eq.s32.totalorder %s31, 1
    %p468 = por %p466, %p467
    %p469 = scmp.ne.s32.totalorder %s461, %s464
    %p470 = scmp.eq.s32.totalorder %s31, 0
    %p471 = por %p469, %p470
    %p472 = scmp.ne.s32.totalorder %s461, %s464
    %p473 = scmp.eq.s32.totalorder %s36, 1
    %p474 = por %p472, %p473
    %p475 = scmp.ne.s32.totalorder %s464, %s465
    %p476 = scmp.eq.s32.totalorder %s36, 0
    %p477 = por %p475, %p476
    %p478 = scmp.ne.s32.totalorder %s464, %s465
    %p479 = scmp.eq.s32.totalorder %s37, 1
    %p480 = por %p478, %p479
    %p482 = scmp.ne.s32.totalorder %s465, %s481
    %p483 = scmp.eq.s32.totalorder %s37, 0
    %p484 = por %p482, %p483
    %s485 = ssub.s32 %s38, %s50
    %s486 = ssub.s32 %s39, %s46
    %s487 = sor.u32 %s485, %s486
    %p488 = scmp.eq.s32.totalorder %s487, 0
    %s490 = sadd.s32 %s489, 1
    %s491 = scalar_select %p488, %s489, %s490
    %p494 = pneg %p488
    %p495 = scmp.eq.s32.totalorder %s31, 1
    %p496 = por %p494, %p495
    %p497 = scmp.ne.s32.totalorder %s489, %s492
    %p498 = scmp.eq.s32.totalorder %s31, 0
    %p499 = por %p497, %p498
    %p500 = scmp.ne.s32.totalorder %s489, %s492
    %p501 = scmp.eq.s32.totalorder %s36, 1
    %p502 = por %p500, %p501
    %p503 = scmp.ne.s32.totalorder %s492, %s493
    %p504 = scmp.eq.s32.totalorder %s36, 0
    %p505 = por %p503, %p504
    %p506 = scmp.ne.s32.totalorder %s492, %s493
    %p507 = scmp.eq.s32.totalorder %s37, 1
    %p508 = por %p506, %p507
    %p510 = scmp.ne.s32.totalorder %s493, %s509
    %p511 = scmp.eq.s32.totalorder %s37, 0
    %p512 = por %p510, %p511
    %s513 = ssub.s32 %s38, %s50
    %s514 = ssub.s32 %s39, %s46
    %s515 = sor.u32 %s513, %s514
    %p516 = scmp.eq.s32.totalorder %s515, 0
    %s518 = sadd.s32 %s517, 1
    %s519 = scalar_select %p516, %s517, %s518
    %p522 = pneg %p516
    %p523 = scmp.eq.s32.totalorder %s31, 1
    %p524 = por %p522, %p523
    %p525 = scmp.ne.s32.totalorder %s517, %s520
    %p526 = scmp.eq.s32.totalorder %s31, 0
    %p527 = por %p525, %p526
    %p528 = scmp.ne.s32.totalorder %s517, %s520
    %p529 = scmp.eq.s32.totalorder %s36, 1
    %p530 = por %p528, %p529
    %p531 = scmp.ne.s32.totalorder %s520, %s521
    %p532 = scmp.eq.s32.totalorder %s36, 0
    %p533 = por %p531, %p532
    %p534 = scmp.ne.s32.totalorder %s520, %s521
    %p535 = scmp.eq.s32.totalorder %s37, 1
    %p536 = por %p534, %p535
    %p538 = scmp.ne.s32.totalorder %s521, %s537
    %p539 = scmp.eq.s32.totalorder %s37, 0
    %p540 = por %p538, %p539
    %s541 = ssub.s32 %s38, %s50
    %s542 = ssub.s32 %s39, %s46
    %s543 = sor.u32 %s541, %s542
    %p544 = scmp.eq.s32.totalorder %s543, 0
    %s546 = sadd.s32 %s545, 1
    %s547 = scalar_select %p544, %s545, %s546
    %p550 = pneg %p544
    %p551 = scmp.eq.s32.totalorder %s31, 1
    %p552 = por %p550, %p551
    %p553 = scmp.ne.s32.totalorder %s545, %s548
    %p554 = scmp.eq.s32.totalorder %s31, 0
    %p555 = por %p553, %p554
    %p556 = scmp.ne.s32.totalorder %s545, %s548
    %p557 = scmp.eq.s32.totalorder %s36, 1
    %p558 = por %p556, %p557
    %p559 = scmp.ne.s32.totalorder %s548, %s549
    %p560 = scmp.eq.s32.totalorder %s36, 0
    %p561 = por %p559, %p560
    %p562 = scmp.ne.s32.totalorder %s548, %s549
    %p563 = scmp.eq.s32.totalorder %s37, 1
    %p564 = por %p562, %p563
    %p566 = scmp.ne.s32.totalorder %s549, %s565
    %p567 = scmp.eq.s32.totalorder %s37, 0
    %p568 = por %p566, %p567
    %s569 = ssub.s32 %s38, %s50
    %s570 = ssub.s32 %s39, %s46
    %s571 = sor.u32 %s569, %s570
    %p572 = scmp.eq.s32.totalorder %s571, 0
    %s574 = sadd.s32 %s573, 1
    %s575 = scalar_select %p572, %s573, %s574
    %p578 = pneg %p572
    %p579 = scmp.eq.s32.totalorder %s31, 1
    %p580 = por %p578, %p579
    %p581 = scmp.ne.s32.totalorder %s573, %s576
    %p582 = scmp.eq.s32.totalorder %s31, 0
    %p583 = por %p581, %p582
    %p584 = scmp.ne.s32.totalorder %s573, %s576
    %p585 = scmp.eq.s32.totalorder %s36, 1
    %p586 = por %p584, %p585
    %p587 = scmp.ne.s32.totalorder %s576, %s577
    %p588 = scmp.eq.s32.totalorder %s36, 0
    %p589 = por %p587, %p588
    %p590 = scmp.ne.s32.totalorder %s576, %s577
    %p591 = scmp.eq.s32.totalorder %s37, 1
    %p592 = por %p590, %p591
    %p594 = scmp.ne.s32.totalorder %s577, %s593
    %p595 = scmp.eq.s32.totalorder %s37, 0
    %p596 = por %p594, %p595
    %s597 = ssub.s32 %s38, %s50
    %s598 = ssub.s32 %s39, %s46
    %s599 = sor.u32 %s597, %s598
    %p600 = scmp.eq.s32.totalorder %s599, 0
    %s602 = sadd.s32 %s601, 1
    %s603 = scalar_select %p600, %s601, %s602
    %p606 = pneg %p600
    %p607 = scmp.eq.s32.totalorder %s31, 1
    %p608 = por %p606, %p607
    %p609 = scmp.ne.s32.totalorder %s601, %s604
    %p610 = scmp.eq.s32.totalorder %s31, 0
    %p611 = por %p609, %p610
    %p612 = scmp.ne.s32.totalorder %s601, %s604
    %p613 = scmp.eq.s32.totalorder %s36, 1
    %p614 = por %p612, %p613
    %p615 = scmp.ne.s32.totalorder %s604, %s605
    %p616 = scmp.eq.s32.totalorder %s36, 0
    %p617 = por %p615, %p616
    %p618 = scmp.ne.s32.totalorder %s604, %s605
    %p619 = scmp.eq.s32.totalorder %s37, 1
    %p620 = por %p618, %p619
    %p622 = scmp.ne.s32.totalorder %s605, %s621
    %p623 = scmp.eq.s32.totalorder %s37, 0
    %p624 = por %p622, %p623
    %s625 = ssub.s32 %s38, %s50
    %s626 = ssub.s32 %s39, %s46
    %s627 = sor.u32 %s625, %s626
    %p628 = scmp.eq.s32.totalorder %s627, 0
    %s630 = sadd.s32 %s629, 1
    %s631 = scalar_select %p628, %s629, %s630
    %p634 = pneg %p628
    %p635 = scmp.eq.s32.totalorder %s31, 1
    %p636 = por %p634, %p635
    %p637 = scmp.ne.s32.totalorder %s629, %s632
    %p638 = scmp.eq.s32.totalorder %s31, 0
    %p639 = por %p637, %p638
    %p640 = scmp.ne.s32.totalorder %s629, %s632
    %p641 = scmp.eq.s32.totalorder %s36, 1
    %p642 = por %p640, %p641
    %p643 = scmp.ne.s32.totalorder %s632, %s633
    %p644 = scmp.eq.s32.totalorder %s36, 0
    %p645 = por %p643, %p644
    %p646 = scmp.ne.s32.totalorder %s632, %s633
    %p647 = scmp.eq.s32.totalorder %s37, 1
    %p648 = por %p646, %p647
    %p650 = scmp.ne.s32.totalorder %s633, %s649
    %p651 = scmp.eq.s32.totalorder %s37, 0
    %p652 = por %p650, %p651
    %s653 = ssub.s32 %s38, %s50
    %s654 = ssub.s32 %s39, %s46
    %s655 = sor.u32 %s653, %s654
    %p656 = scmp.eq.s32.totalorder %s655, 0
    %s658 = sadd.s32 %s657, 1
    %s659 = scalar_select %p656, %s657, %s658
    %p662 = pneg %p656
    %p663 = scmp.eq.s32.totalorder %s31, 1
    %p664 = por %p662, %p663
    %p665 = scmp.ne.s32.totalorder %s657, %s660
    %p666 = scmp.eq.s32.totalorder %s31, 0
    %p667 = por %p665, %p666
    %p668 = scmp.ne.s32.totalorder %s657, %s660
    %p669 = scmp.eq.s32.totalorder %s36, 1
    %p670 = por %p668, %p669
    %p671 = scmp.ne.s32.totalorder %s660, %s661
    %p672 = scmp.eq.s32.totalorder %s36, 0
    %p673 = por %p671, %p672
    %p674 = scmp.ne.s32.totalorder %s660, %s661
    %p675 = scmp.eq.s32.totalorder %s37, 1
    %p676 = por %p674, %p675
    %p678 = scmp.ne.s32.totalorder %s661, %s677
    %p679 = scmp.eq.s32.totalorder %s37, 0
    %p680 = por %p678, %p679
    %p681 = scmp.le.s32.totalorder 1, %s31
    %p682 = scmp.lt.s32.totalorder %s31, 3
    %p683 = pnand %p681, %p682
    %p684 = pneg %p683
    // Predicated region
    $region9: #{gnn_forward.1} parent=5 // pred_check
      _
    $region10: #{gnn_forward.1} parent=5 // pred_check_branch
      %686 = sbr.rel (%p683) target = $region12
    $region11: #{gnn_forward.1} parent=5 // pred_region
      %s687 = ssub.s32 %s31, 1
      // Predicated region
      $region13: #{gnn_forward.1} parent=11 // pred_check
        %p688 = pneg %p148
      $region14: #{gnn_forward.1} parent=11 // pred_check_branch
        %690 = sbr.rel (%p688) target = $region16
      $region15: #{gnn_forward.1} parent=11 // pred_region
        _
      $region16: #{gnn_forward.1} parent=11 // pred_fallthru
        _
      // Predicated region
      $region17: #{gnn_forward.1} parent=11 // pred_check
        %p691 = pneg %p169
      $region18: #{gnn_forward.1} parent=11 // pred_check_branch
        %693 = sbr.rel (%p691) target = $region20
      $region19: #{gnn_forward.1} parent=11 // pred_region
        _
      $region20: #{gnn_forward.1} parent=11 // pred_fallthru
        _
      // Predicated region
      $region21: #{gnn_forward.1} parent=11 // pred_check
        %p694 = pneg %p190
      $region22: #{gnn_forward.1} parent=11 // pred_check_branch
        %696 = sbr.rel (%p694) target = $region24
      $region23: #{gnn_forward.1} parent=11 // pred_region
        _
      $region24: #{gnn_forward.1} parent=11 // pred_fallthru
        _
      // Predicated region
      $region25: #{gnn_forward.1} parent=11 // pred_check
        %p697 = pneg %p211
      $region26: #{gnn_forward.1} parent=11 // pred_check_branch
        %699 = sbr.rel (%p697) target = $region28
      $region27: #{gnn_forward.1} parent=11 // pred_region
        _
      $region28: #{gnn_forward.1} parent=11 // pred_fallthru
        _
      // Predicated region
      $region29: #{gnn_forward.1} parent=11 // pred_check
        %p700 = pneg %p232
      $region30: #{gnn_forward.1} parent=11 // pred_check_branch
        %702 = sbr.rel (%p700) target = $region32
      $region31: #{gnn_forward.1} parent=11 // pred_region
        _
      $region32: #{gnn_forward.1} parent=11 // pred_fallthru
        _
      // Predicated region
      $region33: #{gnn_forward.1} parent=11 // pred_check
        %p703 = pneg %p253
      $region34: #{gnn_forward.1} parent=11 // pred_check_branch
        %705 = sbr.rel (%p703) target = $region36
      $region35: #{gnn_forward.1} parent=11 // pred_region
        _
      $region36: #{gnn_forward.1} parent=11 // pred_fallthru
        _
      // Predicated region
      $region37: #{gnn_forward.1} parent=11 // pred_check
        %p706 = pneg %p274
      $region38: #{gnn_forward.1} parent=11 // pred_check_branch
        %708 = sbr.rel (%p706) target = $region40
      $region39: #{gnn_forward.1} parent=11 // pred_region
        _
      $region40: #{gnn_forward.1} parent=11 // pred_fallthru
        _
      // Predicated region
      $region41: #{gnn_forward.1} parent=11 // pred_check
        %p709 = pneg %p295
      $region42: #{gnn_forward.1} parent=11 // pred_check_branch
        %711 = sbr.rel (%p709) target = $region44
      $region43: #{gnn_forward.1} parent=11 // pred_region
        _
      $region44: #{gnn_forward.1} parent=11 // pred_fallthru
        _
      // Predicated region
      $region45: #{gnn_forward.1} parent=11 // pred_check
        %p712 = pneg %p316
      $region46: #{gnn_forward.1} parent=11 // pred_check_branch
        %714 = sbr.rel (%p712) target = $region48
      $region47: #{gnn_forward.1} parent=11 // pred_region
        _
      $region48: #{gnn_forward.1} parent=11 // pred_fallthru
        _
      // Predicated region
      $region49: #{gnn_forward.1} parent=11 // pred_check
        %p715 = pneg %p337
      $region50: #{gnn_forward.1} parent=11 // pred_check_branch
        %717 = sbr.rel (%p715) target = $region52
      $region51: #{gnn_forward.1} parent=11 // pred_region
        _
      $region52: #{gnn_forward.1} parent=11 // pred_fallthru
        _
    $region12: #{gnn_forward.1} parent=5 // pred_fallthru
      _
    %p718 = scmp.lt.s32.totalorder %s31, 2
    // Predicated region
    $region53: #{gnn_forward.1} parent=5 // pred_check
      %p719 = pneg %p718
    $region54: #{gnn_forward.1} parent=5 // pred_check_branch
      %721 = sbr.rel (%p719) target = $region56
    $region55: #{gnn_forward.1} parent=5 // pred_region
      // Predicated region
      $region57: #{gnn_forward.1} parent=55 // pred_check
        %p722 = pneg %p65
      $region58: #{gnn_forward.1} parent=55 // pred_check_branch
        %724 = sbr.rel (%p722) target = $region60
      $region59: #{gnn_forward.1} parent=55 // pred_region
        %s725 = smul.u32 2, %s39
        %p726 = scmp.lt.s32.totalorder %s38, 1
        %s727 = scalar_select %p726, %s38, 1
        %p728 = scmp.lt.s32.totalorder %s725, 1
        %s729 = scalar_select %p728, %s725, 1
        %s730 = smul.addr %s727, 24
        %s731 = sadd.s32 %s729, %s730
        %s732 = smul.addr %s731, 8
        %s733 = scalar_lea.vmem %s0, %s732
        %s734 = smul.u32 2, %s39
      $region60: #{gnn_forward.1} parent=55 // pred_fallthru
        _
      // Predicated region
      $region61: #{gnn_forward.1} parent=55 // pred_check
        %p735 = pneg %p93
      $region62: #{gnn_forward.1} parent=55 // pred_check_branch
        %737 = sbr.rel (%p735) target = $region64
      $region63: #{gnn_forward.1} parent=55 // pred_region
        %s738 = smul.u32 2, %s39
        %p739 = scmp.lt.s32.totalorder %s38, 1
        %s740 = scalar_select %p739, %s38, 1
        %p741 = scmp.lt.s32.totalorder %s738, 1
        %s742 = scalar_select %p741, %s738, 1
        %s743 = smul.addr %s740, 2
        %s744 = sadd.s32 %s742, %s743
        %s745 = smul.addr %s744, 4
        %s746 = scalar_lea.vmem %s1, %s745
        %s747 = smul.u32 2, %s39
      $region64: #{gnn_forward.1} parent=55 // pred_fallthru
        _
      // Predicated region
      $region65: #{gnn_forward.1} parent=55 // pred_check
        %p748 = pneg %p121
      $region66: #{gnn_forward.1} parent=55 // pred_check_branch
        %750 = sbr.rel (%p748) target = $region68
      $region67: #{gnn_forward.1} parent=55 // pred_region
        %s751 = smul.u32 2, %s39
        %p752 = scmp.lt.s32.totalorder %s38, 1
        %s753 = scalar_select %p752, %s38, 1
        %p754 = scmp.lt.s32.totalorder %s751, 1
        %s755 = scalar_select %p754, %s751, 1
        %s756 = smul.addr %s753, 2
        %s757 = sadd.s32 %s755, %s756
        %s758 = smul.addr %s757, 8
        %s759 = scalar_lea.vmem %s2, %s758
        %s760 = smul.u32 2, %s39
      $region68: #{gnn_forward.1} parent=55 // pred_fallthru
        _
    $region56: #{gnn_forward.1} parent=5 // pred_fallthru
      _
    %p761 = scmp.le.s32.totalorder 1, %s31
    %p762 = scmp.lt.s32.totalorder %s31, 3
    %p763 = pnand %p761, %p762
    %p764 = pneg %p763
    // Predicated region
    $region69: #{gnn_forward.1} parent=5 // pred_check
      _
    $region70: #{gnn_forward.1} parent=5 // pred_check_branch
      %766 = sbr.rel (%p763) target = $region72
    $region71: #{gnn_forward.1} parent=5 // pred_region
      %s767 = ssub.s32 %s31, 1
      %s768 = smul.u32 2, %s41
      %p769 = scmp.lt.s32.totalorder %s40, 1
      %s770 = scalar_select %p769, %s40, 1
      %p771 = scmp.lt.s32.totalorder %s768, 1
      %s772 = scalar_select %p771, %s768, 1
      %s773 = smul.addr %s770, 24
      %s774 = sadd.s32 %s772, %s773
      %s775 = smul.addr %s774, 8
      %s776 = scalar_lea.vmem %s0, %s775
      %p777 = pneg %p71
      %p778 = pneg %p68
      %s779 = smul.u32 2, %s41
      %p780 = scmp.lt.s32.totalorder %s40, 1
      %s781 = scalar_select %p780, %s40, 1
      %p782 = scmp.lt.s32.totalorder %s779, 1
      %s783 = scalar_select %p782, %s779, 1
      %s784 = smul.addr %s781, 2
      %s785 = sadd.s32 %s783, %s784
      %s786 = smul.addr %s785, 4
      %s787 = scalar_lea.vmem %s1, %s786
      %p788 = pneg %p99
      %p789 = pneg %p96
      %s790 = smul.u32 2, %s41
      %p791 = scmp.lt.s32.totalorder %s40, 1
      %s792 = scalar_select %p791, %s40, 1
      %p793 = scmp.lt.s32.totalorder %s790, 1
      %s794 = scalar_select %p793, %s790, 1
      %s795 = smul.addr %s792, 2
      %s796 = sadd.s32 %s794, %s795
      %s797 = smul.addr %s796, 8
      %s798 = scalar_lea.vmem %s2, %s797
      %p799 = pneg %p127
      %p800 = pneg %p124
      %p801 = pneg %p148
      %p802 = pneg %p145
      %p803 = pneg %p169
      %p804 = pneg %p166
      %p805 = pneg %p190
      %p806 = pneg %p187
      %p807 = pneg %p211
      %p808 = pneg %p208
      %p809 = pneg %p232
      %p810 = pneg %p229
      %p811 = pneg %p253
      %p812 = pneg %p250
      %p813 = pneg %p274
      %p814 = pneg %p271
      %p815 = pneg %p295
      %p816 = pneg %p292
      %p817 = pneg %p316
      %p818 = pneg %p313
      %p819 = pneg %p337
      %p820 = pneg %p334
      %p821 = pneg %p365
      %p822 = pneg %p362
      %s823 = smul.u32 2, %s41
      %p824 = scmp.lt.s32.totalorder %s40, 1
      %s825 = scalar_select %p824, %s40, 1
      %p826 = scmp.lt.s32.totalorder %s823, 1
      %s827 = scalar_select %p826, %s823, 1
      %s828 = smul.addr %s825, 4
      %s829 = sadd.s32 %s827, %s828
      %s830 = smul.addr %s829, 8
      %s831 = scalar_lea.vmem %s13, %s830
      %p832 = pneg %p393
      %p833 = pneg %p390
      %s834 = smul.u32 2, %s41
      %p835 = scmp.lt.s32.totalorder %s40, 1
      %s836 = scalar_select %p835, %s40, 1
      %p837 = scmp.lt.s32.totalorder %s834, 1
      %s838 = scalar_select %p837, %s834, 1
      %s839 = smul.addr %s836, 4
      %s840 = sadd.s32 %s838, %s839
      %s841 = smul.addr %s840, 8
      %s842 = scalar_lea.vmem %s14, %s841
      %p843 = pneg %p421
      %p844 = pneg %p418
      %s845 = smul.u32 2, %s41
      %p846 = scmp.lt.s32.totalorder %s40, 1
      %s847 = scalar_select %p846, %s40, 1
      %p848 = scmp.lt.s32.totalorder %s845, 1
      %s849 = scalar_select %p848, %s845, 1
      %s850 = smul.addr %s847, 4
      %s851 = sadd.s32 %s849, %s850
      %s852 = smul.addr %s851, 8
      %s853 = scalar_lea.vmem %s15, %s852
      %p854 = pneg %p449
      %p855 = pneg %p446
      %s856 = smul.u32 2, %s41
      %p857 = scmp.lt.s32.totalorder %s40, 1
      %s858 = scalar_select %p857, %s40, 1
      %p859 = scmp.lt.s32.totalorder %s856, 1
      %s860 = scalar_select %p859, %s856, 1
      %s861 = smul.addr %s858, 4
      %s862 = sadd.s32 %s860, %s861
      %s863 = smul.addr %s862, 8
      %s864 = scalar_lea.vmem %s16, %s863
      %p865 = pneg %p477
      %p866 = pneg %p474
      %s867 = smul.u32 2, %s41
      %p868 = scmp.lt.s32.totalorder %s40, 1
      %s869 = scalar_select %p868, %s40, 1
      %p870 = scmp.lt.s32.totalorder %s867, 1
      %s871 = scalar_select %p870, %s867, 1
      %s872 = smul.addr %s869, 4
      %s873 = sadd.s32 %s871, %s872
      %s874 = smul.addr %s873, 8
      %s875 = scalar_lea.vmem %s17, %s874
      %p876 = pneg %p505
      %p877 = pneg %p502
      %s878 = smul.u32 2, %s41
      %p879 = scmp.lt.s32.totalorder %s40, 1
      %s880 = scalar_select %p879, %s40, 1
      %p881 = scmp.lt.s32.totalorder %s878, 1
      %s882 = scalar_select %p881, %s878, 1
      %s883 = smul.addr %s880, 4
      %s884 = sadd.s32 %s882, %s883
      %s885 = smul.addr %s884, 8
      %s886 = scalar_lea.vmem %s18, %s885
      %p887 = pneg %p533
      %p888 = pneg %p530
      %s889 = smul.u32 2, %s41
      %p890 = scmp.lt.s32.totalorder %s40, 1
      %s891 = scalar_select %p890, %s40, 1
      %p892 = scmp.lt.s32.totalorder %s889, 1
      %s893 = scalar_select %p892, %s889, 1
      %s894 = smul.addr %s891, 4
      %s895 = sadd.s32 %s893, %s894
      %s896 = smul.addr %s895, 8
      %s897 = scalar_lea.vmem %s19, %s896
      %p898 = pneg %p561
      %p899 = pneg %p558
      %s900 = smul.u32 2, %s41
      %p901 = scmp.lt.s32.totalorder %s40, 1
      %s902 = scalar_select %p901, %s40, 1
      %p903 = scmp.lt.s32.totalorder %s900, 1
      %s904 = scalar_select %p903, %s900, 1
      %s905 = smul.addr %s902, 4
      %s906 = sadd.s32 %s904, %s905
      %s907 = smul.addr %s906, 8
      %s908 = scalar_lea.vmem %s20, %s907
      %p909 = pneg %p589
      %p910 = pneg %p586
      %s911 = smul.u32 2, %s41
      %p912 = scmp.lt.s32.totalorder %s40, 1
      %s913 = scalar_select %p912, %s40, 1
      %p914 = scmp.lt.s32.totalorder %s911, 1
      %s915 = scalar_select %p914, %s911, 1
      %s916 = smul.addr %s913, 4
      %s917 = sadd.s32 %s915, %s916
      %s918 = smul.addr %s917, 8
      %s919 = scalar_lea.vmem %s21, %s918
      %p920 = pneg %p617
      %p921 = pneg %p614
      %s922 = smul.u32 2, %s41
      %p923 = scmp.lt.s32.totalorder %s40, 1
      %s924 = scalar_select %p923, %s40, 1
      %p925 = scmp.lt.s32.totalorder %s922, 1
      %s926 = scalar_select %p925, %s922, 1
      %s927 = smul.addr %s924, 2
      %s928 = sadd.s32 %s926, %s927
      %s929 = smul.addr %s928, 4
      %s930 = scalar_lea.vmem %s22, %s929
      %p931 = pneg %p645
      %p932 = pneg %p642
      %s933 = smul.u32 2, %s41
      %p934 = scmp.lt.s32.totalorder %s40, 1
      %s935 = scalar_select %p934, %s40, 1
      %p936 = scmp.lt.s32.totalorder %s933, 1
      %s937 = scalar_select %p936, %s933, 1
      %s938 = smul.addr %s935, 2
      %s939 = sadd.s32 %s937, %s938
      %s940 = smul.addr %s939, 8
      %s941 = scalar_lea.vmem %s23, %s940
      %p942 = pneg %p673
      %p943 = pneg %p670
      %s944 = smul.u32 2, %s41
      %p945 = scmp.lt.s32.totalorder %s40, 1
      %s946 = scalar_select %p945, %s40, 1
      %p947 = scmp.lt.s32.totalorder %s944, 1
      %s948 = scalar_select %p947, %s944, 1
      %s949 = smul.addr %s946, 2
      %s950 = sadd.s32 %s948, %s949
      %s951 = smul.addr %s950, 4
      %s952 = scalar_lea.vmem %s24, %s951
      %s953 = smul.u32 2, %s41
      %p954 = scmp.lt.s32.totalorder %s40, 1
      %s955 = scalar_select %p954, %s40, 1
      %p956 = scmp.lt.s32.totalorder %s953, 1
      %s957 = scalar_select %p956, %s953, 1
      %s958 = smul.addr %s955, 24
      %s959 = sadd.s32 %s957, %s958
      %s960 = smul.addr %s959, 8
      %s961 = scalar_lea.vmem %s0, %s960
      %s962 = smul.u32 2, %s41
      %s963 = smul.u32 2, %s41
      %p964 = scmp.lt.s32.totalorder %s40, 1
      %s965 = scalar_select %p964, %s40, 1
      %p966 = scmp.lt.s32.totalorder %s963, 1
      %s967 = scalar_select %p966, %s963, 1
      %s968 = smul.addr %s965, 2
      %s969 = sadd.s32 %s967, %s968
      %s970 = smul.addr %s969, 4
      %s971 = scalar_lea.vmem %s1, %s970
      %s972 = smul.u32 2, %s41
      %s973 = smul.u32 2, %s41
      %p974 = scmp.lt.s32.totalorder %s40, 1
      %s975 = scalar_select %p974, %s40, 1
      %p976 = scmp.lt.s32.totalorder %s973, 1
      %s977 = scalar_select %p976, %s973, 1
      %s978 = smul.addr %s975, 2
      %s979 = sadd.s32 %s977, %s978
      %s980 = smul.addr %s979, 8
      %s981 = scalar_lea.vmem %s2, %s980
      %s982 = smul.u32 2, %s41
      %s983 = smul.u32 2, %s41
      %p984 = scmp.lt.s32.totalorder %s40, 1
      %s985 = scalar_select %p984, %s40, 1
      %p986 = scmp.lt.s32.totalorder %s983, 1
      %s987 = scalar_select %p986, %s983, 1
      %s988 = smul.addr %s985, 4
      %s989 = sadd.s32 %s987, %s988
      %s990 = smul.addr %s989, 8
      %s991 = scalar_lea.vmem %s13, %s990
      %s992 = smul.u32 2, %s41
      %s993 = smul.u32 2, %s41
      %p994 = scmp.lt.s32.totalorder %s40, 1
      %s995 = scalar_select %p994, %s40, 1
      %p996 = scmp.lt.s32.totalorder %s993, 1
      %s997 = scalar_select %p996, %s993, 1
      %s998 = smul.addr %s995, 4
      %s999 = sadd.s32 %s997, %s998
      %s1000 = smul.addr %s999, 8
      %s1001 = scalar_lea.vmem %s14, %s1000
      %s1002 = smul.u32 2, %s41
      %s1003 = smul.u32 2, %s41
      %p1004 = scmp.lt.s32.totalorder %s40, 1
      %s1005 = scalar_select %p1004, %s40, 1
      %p1006 = scmp.lt.s32.totalorder %s1003, 1
      %s1007 = scalar_select %p1006, %s1003, 1
      %s1008 = smul.addr %s1005, 4
      %s1009 = sadd.s32 %s1007, %s1008
      %s1010 = smul.addr %s1009, 8
      %s1011 = scalar_lea.vmem %s15, %s1010
      %s1012 = smul.u32 2, %s41
      %s1013 = smul.u32 2, %s41
      %p1014 = scmp.lt.s32.totalorder %s40, 1
      %s1015 = scalar_select %p1014, %s40, 1
      %p1016 = scmp.lt.s32.totalorder %s1013, 1
      %s1017 = scalar_select %p1016, %s1013, 1
      %s1018 = smul.addr %s1015, 4
      %s1019 = sadd.s32 %s1017, %s1018
      %s1020 = smul.addr %s1019, 8
      %s1021 = scalar_lea.vmem %s16, %s1020
      %s1022 = smul.u32 2, %s41
      %s1023 = smul.u32 2, %s41
      %p1024 = scmp.lt.s32.totalorder %s40, 1
      %s1025 = scalar_select %p1024, %s40, 1
      %p1026 = scmp.lt.s32.totalorder %s1023, 1
      %s1027 = scalar_select %p1026, %s1023, 1
      %s1028 = smul.addr %s1025, 4
      %s1029 = sadd.s32 %s1027, %s1028
      %s1030 = smul.addr %s1029, 8
      %s1031 = scalar_lea.vmem %s17, %s1030
      %s1032 = smul.u32 2, %s41
      %s1033 = smul.u32 2, %s41
      %p1034 = scmp.lt.s32.totalorder %s40, 1
      %s1035 = scalar_select %p1034, %s40, 1
      %p1036 = scmp.lt.s32.totalorder %s1033, 1
      %s1037 = scalar_select %p1036, %s1033, 1
      %s1038 = smul.addr %s1035, 4
      %s1039 = sadd.s32 %s1037, %s1038
      %s1040 = smul.addr %s1039, 8
      %s1041 = scalar_lea.vmem %s18, %s1040
      %s1042 = smul.u32 2, %s41
      %s1043 = smul.u32 2, %s41
      %p1044 = scmp.lt.s32.totalorder %s40, 1
      %s1045 = scalar_select %p1044, %s40, 1
      %p1046 = scmp.lt.s32.totalorder %s1043, 1
      %s1047 = scalar_select %p1046, %s1043, 1
      %s1048 = smul.addr %s1045, 4
      %s1049 = sadd.s32 %s1047, %s1048
      %s1050 = smul.addr %s1049, 8
      %s1051 = scalar_lea.vmem %s19, %s1050
      %s1052 = smul.u32 2, %s41
      %s1053 = smul.u32 2, %s41
      %p1054 = scmp.lt.s32.totalorder %s40, 1
      %s1055 = scalar_select %p1054, %s40, 1
      %p1056 = scmp.lt.s32.totalorder %s1053, 1
      %s1057 = scalar_select %p1056, %s1053, 1
      %s1058 = smul.addr %s1055, 4
      %s1059 = sadd.s32 %s1057, %s1058
      %s1060 = smul.addr %s1059, 8
      %s1061 = scalar_lea.vmem %s20, %s1060
      %s1062 = smul.u32 2, %s41
      %s1063 = smul.u32 2, %s41
      %p1064 = scmp.lt.s32.totalorder %s40, 1
      %s1065 = scalar_select %p1064, %s40, 1
      %p1066 = scmp.lt.s32.totalorder %s1063, 1
      %s1067 = scalar_select %p1066, %s1063, 1
      %s1068 = smul.addr %s1065, 4
      %s1069 = sadd.s32 %s1067, %s1068
      %s1070 = smul.addr %s1069, 8
      %s1071 = scalar_lea.vmem %s21, %s1070
      %s1072 = smul.u32 2, %s41
      %s1073 = smul.u32 2, %s41
      %p1074 = scmp.lt.s32.totalorder %s40, 1
      %s1075 = scalar_select %p1074, %s40, 1
      %p1076 = scmp.lt.s32.totalorder %s1073, 1
      %s1077 = scalar_select %p1076, %s1073, 1
      %s1078 = smul.addr %s1075, 2
      %s1079 = sadd.s32 %s1077, %s1078
      %s1080 = smul.addr %s1079, 4
      %s1081 = scalar_lea.vmem %s22, %s1080
      %s1082 = smul.u32 2, %s41
      %s1083 = smul.u32 2, %s41
      %p1084 = scmp.lt.s32.totalorder %s40, 1
      %s1085 = scalar_select %p1084, %s40, 1
      %p1086 = scmp.lt.s32.totalorder %s1083, 1
      %s1087 = scalar_select %p1086, %s1083, 1
      %s1088 = smul.addr %s1085, 2
      %s1089 = sadd.s32 %s1087, %s1088
      %s1090 = smul.addr %s1089, 8
      %s1091 = scalar_lea.vmem %s23, %s1090
      %s1092 = smul.u32 2, %s41
      %s1093 = smul.u32 2, %s41
      %p1094 = scmp.lt.s32.totalorder %s40, 1
      %s1095 = scalar_select %p1094, %s40, 1
      %p1096 = scmp.lt.s32.totalorder %s1093, 1
      %s1097 = scalar_select %p1096, %s1093, 1
      %s1098 = smul.addr %s1095, 2
      %s1099 = sadd.s32 %s1097, %s1098
      %s1100 = smul.addr %s1099, 4
      %s1101 = scalar_lea.vmem %s24, %s1100
      %s1102 = smul.u32 2, %s41
      %v1103 = vld [vmem:[%s961] sm:$0xff]
      %v1104 = vld [vmem:[%s961 + $0x8] sm:$0xff]
      %v1105 = vld [vmem:[%s961 + $0x10] sm:$0xff]
      %v1106 = vld [vmem:[%s961 + $0x18] sm:$0xff]
      %v1107 = vld [vmem:[%s961 + $0x20] sm:$0xff]
      %v1108 = vld [vmem:[%s961 + $0x28] sm:$0xff]
      %v1109 = vld [vmem:[%s961 + $0x30] sm:$0xff]
      %v1110 = vld [vmem:[%s961 + $0x38] sm:$0xff]
      %v1111 = vld [vmem:[%s961 + $0x40] sm:$0xff]
      %v1112 = vld [vmem:[%s961 + $0x48] sm:$0xff]
      %v1113 = vld [vmem:[%s961 + $0x50] sm:$0xff]
      %v1114 = vld [vmem:[%s961 + $0x58] sm:$0xff]
      %v1115 = vld [vmem:[%s961 + $0x60] sm:$0xff]
      %v1116 = vld [vmem:[%s961 + $0x68] sm:$0xff]
      %v1117 = vld [vmem:[%s961 + $0x70] sm:$0xff]
      %v1118 = vld [vmem:[%s961 + $0x78] sm:$0xff]
      %v1119 = vld [vmem:[%s961 + $0x80] sm:$0xff]
      %v1120 = vld [vmem:[%s961 + $0x88] sm:$0xff]
      %v1121 = vld [vmem:[%s961 + $0x90] sm:$0xff]
      %v1122 = vld [vmem:[%s961 + $0x98] sm:$0xff]
      %v1123 = vld [vmem:[%s961 + $0xa0] sm:$0xff]
      %v1124 = vld [vmem:[%s961 + $0xa8] sm:$0xff]
      %v1125 = vld [vmem:[%s961 + $0xb0] sm:$0x3]
      %v1126 = vld [vmem:[%s961 + $0xb8] sm:$0x3]
      %v1127 = vld [vmem:[%s971] sm:$0x77]
      %v1128 = vld [vmem:[%s981] sm:$0x7f]
      %v1129 = vld [vmem:[%s981 + $0x8] sm:$0x7f]
      %v1130 = vld [vmem:[%s3] sm:$0xff]
      %v1131 = vld [vmem:[%s3 + $0x8] sm:$0xff]
      %v1132 = vld [vmem:[%s3 + $0x10] sm:$0xff]
      %v1133 = vld [vmem:[%s3 + $0x18] sm:$0xff]
      %v1134 = vld [vmem:[%s3 + $0x20] sm:$0xff]
      %v1135 = vld [vmem:[%s3 + $0x28] sm:$0xff]
      %v1136 = vld [vmem:[%s3 + $0x30] sm:$0xff]
      %v1137 = vld [vmem:[%s3 + $0x38] sm:$0xff]
      %v1138 = vld [vmem:[%s3 + $0x40] sm:$0xff]
      %v1139 = vld [vmem:[%s3 + $0x48] sm:$0xff]
      %v1140 = vld [vmem:[%s3 + $0x50] sm:$0xff]
      %v1141 = vld [vmem:[%s3 + $0x58] sm:$0xff]
      %v1142 = vld [vmem:[%s3 + $0x60] sm:$0xff]
      %v1143 = vld [vmem:[%s3 + $0x68] sm:$0xff]
      %v1144 = vld [vmem:[%s3 + $0x70] sm:$0xff]
      %v1145 = vld [vmem:[%s3 + $0x78] sm:$0xff]
      %v1146 = vld [vmem:[%s3 + $0x80] sm:$0xff]
      %v1147 = vld [vmem:[%s3 + $0x88] sm:$0xff]
      %v1148 = vld [vmem:[%s3 + $0x90] sm:$0xff]
      %v1149 = vld [vmem:[%s3 + $0x98] sm:$0xff]
      %v1150 = vld [vmem:[%s3 + $0xa0] sm:$0xff]
      %v1151 = vld [vmem:[%s3 + $0xa8] sm:$0xff]
      %v1152 = vld [vmem:[%s3 + $0xb0] sm:$0xff]
      %v1153 = vld [vmem:[%s3 + $0xb8] sm:$0xff]
      %v1154 = vld [vmem:[%s3 + $0xc0] sm:$0xff]
      %v1155 = vld [vmem:[%s3 + $0xc8] sm:$0xff]
      %v1156 = vld [vmem:[%s3 + $0xd0] sm:$0xff]
      %v1157 = vld [vmem:[%s3 + $0xd8] sm:$0xff]
      %v1158 = vld [vmem:[%s3 + $0xe0] sm:$0xff]
      %v1159 = vld [vmem:[%s3 + $0xe8] sm:$0xff]
      %v1160 = vld [vmem:[%s3 + $0xf0] sm:$0xff]
      %v1161 = vld [vmem:[%s3 + $0xf8] sm:$0xff]
      %v1162 = vld [vmem:[%s3 + $0x100] sm:$0xff]
      %v1163 = vld [vmem:[%s3 + $0x108] sm:$0xff]
      %v1164 = vld [vmem:[%s3 + $0x110] sm:$0xff]
      %v1165 = vld [vmem:[%s3 + $0x118] sm:$0xff]
      %v1166 = vld [vmem:[%s3 + $0x120] sm:$0xff]
      %v1167 = vld [vmem:[%s3 + $0x128] sm:$0xff]
      %v1168 = vld [vmem:[%s3 + $0x130] sm:$0xff]
      %v1169 = vld [vmem:[%s3 + $0x138] sm:$0xff]
      %v1170 = vld [vmem:[%s3 + $0x140] sm:$0xff]
      %v1171 = vld [vmem:[%s3 + $0x148] sm:$0xff]
      %v1172 = vld [vmem:[%s3 + $0x150] sm:$0xff]
      %v1173 = vld [vmem:[%s3 + $0x158] sm:$0xff]
      %v1174 = vld [vmem:[%s3 + $0x160] sm:$0xff]
      %v1175 = vld [vmem:[%s3 + $0x168] sm:$0xff]
      %v1176 = vld [vmem:[%s3 + $0x170] sm:$0xff]
      %v1177 = vld [vmem:[%s3 + $0x178] sm:$0xff]
      %v1178 = vld [vmem:[%s3 + $0x180] sm:$0xff]
      %v1179 = vld [vmem:[%s3 + $0x188] sm:$0xff]
      %v1180 = vld [vmem:[%s3 + $0x190] sm:$0xff]
      %v1181 = vld [vmem:[%s3 + $0x198] sm:$0xff]
      %v1182 = vld [vmem:[%s3 + $0x1a0] sm:$0xff]
      %v1183 = vld [vmem:[%s3 + $0x1a8] sm:$0xff]
      %v1184 = vld [vmem:[%s3 + $0x1b0] sm:$0xff]
      %v1185 = vld [vmem:[%s3 + $0x1b8] sm:$0xff]
      %v1186 = vld [vmem:[%s3 + $0x1c0] sm:$0xff]
      %v1187 = vld [vmem:[%s3 + $0x1c8] sm:$0xff]
      %v1188 = vld [vmem:[%s3 + $0x1d0] sm:$0xff]
      %v1189 = vld [vmem:[%s3 + $0x1d8] sm:$0xff]
      %v1190 = vld [vmem:[%s3 + $0x1e0] sm:$0xff]
      %v1191 = vld [vmem:[%s3 + $0x1e8] sm:$0xff]
      %v1192 = vld [vmem:[%s3 + $0x1f0] sm:$0xff]
      %v1193 = vld [vmem:[%s3 + $0x1f8] sm:$0xff]
      %v1194 = vld [vmem:[%s3 + $0x200] sm:$0xff]
      %v1195 = vld [vmem:[%s3 + $0x208] sm:$0xff]
      %v1196 = vld [vmem:[%s3 + $0x210] sm:$0xff]
      %v1197 = vld [vmem:[%s3 + $0x218] sm:$0xff]
      %v1198 = vld [vmem:[%s3 + $0x220] sm:$0xff]
      %v1199 = vld [vmem:[%s3 + $0x228] sm:$0xff]
      %v1200 = vld [vmem:[%s3 + $0x230] sm:$0xff]
      %v1201 = vld [vmem:[%s3 + $0x238] sm:$0xff]
      %v1202 = vld [vmem:[%s3 + $0x240] sm:$0xff]
      %v1203 = vld [vmem:[%s3 + $0x248] sm:$0xff]
      %v1204 = vld [vmem:[%s3 + $0x250] sm:$0xff]
      %v1205 = vld [vmem:[%s3 + $0x258] sm:$0xff]
      %v1206 = vld [vmem:[%s3 + $0x260] sm:$0xff]
      %v1207 = vld [vmem:[%s3 + $0x268] sm:$0xff]
      %v1208 = vld [vmem:[%s3 + $0x270] sm:$0x7f]
      %vm1209 = vcmask 736256
      %v1211 = vsel %vm1209, %v1130, 0
      %v1214 = vsel %vm1209, %v1131, 0
      %v1217 = vsel %vm1209, %v1132, 0
      %v1220 = vsel %vm1209, %v1133, 0
      %v1223 = vsel %vm1209, %v1134, 0
      %v1226 = vsel %vm1209, %v1135, 0
      %v1229 = vsel %vm1209, %v1136, 0
      %v1232 = vsel %vm1209, %v1137, 0
      %v1235 = vsel %vm1209, %v1138, 0
      %v1238 = vsel %vm1209, %v1139, 0
      %v1241 = vsel %vm1209, %v1140, 0
      %v1244 = vsel %vm1209, %v1141, 0
      %v1247 = vsel %vm1209, %v1142, 0
      %v1250 = vsel %vm1209, %v1143, 0
      %v1253 = vsel %vm1209, %v1144, 0
      %v1256 = vsel %vm1209, %v1145, 0
      %v1259 = vsel %vm1209, %v1146, 0
      %v1262 = vsel %vm1209, %v1147, 0
      %v1265 = vsel %vm1209, %v1148, 0
      %v1268 = vsel %vm1209, %v1149, 0
      %v1271 = vsel %vm1209, %v1150, 0
      %v1274 = vsel %vm1209, %v1151, 0
      %v1277 = vsel %vm1209, %v1152, 0
      %v1280 = vsel %vm1209, %v1153, 0
      %v1283 = vsel %vm1209, %v1154, 0
      %v1286 = vsel %vm1209, %v1155, 0
      %v1289 = vsel %vm1209, %v1156, 0
      %v1292 = vsel %vm1209, %v1157, 0
      %v1295 = vsel %vm1209, %v1158, 0
      %v1298 = vsel %vm1209, %v1159, 0
      %v1301 = vsel %vm1209, %v1160, 0
      %v1304 = vsel %vm1209, %v1161, 0
      %v1307 = vsel %vm1209, %v1162, 0
      %v1310 = vsel %vm1209, %v1163, 0
      %v1313 = vsel %vm1209, %v1164, 0
      %v1316 = vsel %vm1209, %v1165, 0
      %v1319 = vsel %vm1209, %v1166, 0
      %v1322 = vsel %vm1209, %v1167, 0
      %v1325 = vsel %vm1209, %v1168, 0
      %v1328 = vsel %vm1209, %v1169, 0
      %v1331 = vsel %vm1209, %v1170, 0
      %v1334 = vsel %vm1209, %v1171, 0
      %v1337 = vsel %vm1209, %v1172, 0
      %v1340 = vsel %vm1209, %v1173, 0
      %v1343 = vsel %vm1209, %v1174, 0
      %v1346 = vsel %vm1209, %v1175, 0
      %v1349 = vsel %vm1209, %v1176, 0
      %v1352 = vsel %vm1209, %v1177, 0
      %v1355 = vsel %vm1209, %v1178, 0
      %v1358 = vsel %vm1209, %v1179, 0
      %v1361 = vsel %vm1209, %v1180, 0
      %v1364 = vsel %vm1209, %v1181, 0
      %v1367 = vsel %vm1209, %v1182, 0
      %v1370 = vsel %vm1209, %v1183, 0
      %v1373 = vsel %vm1209, %v1184, 0
      %v1376 = vsel %vm1209, %v1185, 0
      %v1379 = vsel %vm1209, %v1186, 0
      %v1382 = vsel %vm1209, %v1187, 0
      %v1385 = vsel %vm1209, %v1188, 0
      %v1388 = vsel %vm1209, %v1189, 0
      %v1391 = vsel %vm1209, %v1190, 0
      %v1394 = vsel %vm1209, %v1191, 0
      %v1397 = vsel %vm1209, %v1192, 0
      %v1400 = vsel %vm1209, %v1193, 0
      %v1403 = vsel %vm1209, %v1194, 0
      %v1406 = vsel %vm1209, %v1195, 0
      %v1409 = vsel %vm1209, %v1196, 0
      %v1412 = vsel %vm1209, %v1197, 0
      %v1415 = vsel %vm1209, %v1198, 0
      %v1418 = vsel %vm1209, %v1199, 0
      %v1421 = vsel %vm1209, %v1200, 0
      %v1424 = vsel %vm1209, %v1201, 0
      %v1427 = vsel %vm1209, %v1202, 0
      %v1430 = vsel %vm1209, %v1203, 0
      %v1433 = vsel %vm1209, %v1204, 0
      %v1436 = vsel %vm1209, %v1205, 0
      %v1439 = vsel %vm1209, %v1206, 0
      %v1442 = vsel %vm1209, %v1207, 0
      %v1445 = vsel %vm1209, %v1208, 0
      %vm1447 = vcmask 1041408
      %v1449 = vsel %vm1447, %v1125, 0
      %v1452 = vsel %vm1447, %v1126, 0
      %1454 = vmatprep.subr.mxu0 %v1104
      %1455 = vmatpush1.msra.mxu0 %v1103
      %1456 = vmatprep.subr.mxu0 %v1106
      %1457 = vmatpush1.msra.mxu0 %v1105
      %1458 = vmatprep.subr.mxu0 %v1108
      %1459 = vmatpush1.msra.mxu0 %v1107
      %1460 = vmatprep.subr.mxu0 %v1110
      %1461 = vmatpush1.msra.mxu0 %v1109
      %1462 = vmatprep.subr.mxu0 %v1112
      %1463 = vmatpush1.msra.mxu0 %v1111
      %1464 = vmatprep.subr.mxu0 %v1114
      %1465 = vmatpush1.msra.mxu0 %v1113
      %1466 = vmatprep.subr.mxu0 %v1116
      %1467 = vmatpush1.msra.mxu0 %v1115
      %1468 = vmatprep.subr.mxu0 %v1118
      %1469 = vmatpush1.msra.mxu0 %v1117
      %1470 = vmatprep.subr.mxu0 %v1120
      %1471 = vmatpush1.msra.mxu0 %v1119
      %1472 = vmatprep.subr.mxu0 %v1122
      %1473 = vmatpush1.msra.mxu0 %v1121
      %1474 = vmatprep.subr.mxu0 %v1124
      %1475 = vmatpush1.msra.mxu0 %v1123
      %1476 = vmatprep.subr.mxu0 %v1452
      %1477 = vmatpush1.msra.mxu0 %v1449
      %1478 = vmatprep.subr.mxu0 0.0
      %1479 = vmatpush1.msra.mxu0 0.0
      %1480 = vmatprep.subr.mxu0 0.0
      %1481 = vmatpush1.msra.mxu0 0.0
      %1482 = vmatprep.subr.mxu0 0.0
      %1483 = vmatpush1.msra.mxu0 0.0
      %1484 = vmatprep.subr.mxu0 0.0
      %1485 = vmatpush1.msra.mxu0 0.0
      %1486 = vmatprep.subr.mxu0 0.0
      %1487 = vmatpush1.msra.mxu0 0.0
      %1488 = vmatprep.subr.mxu0 0.0
      %1489 = vmatpush1.msra.mxu0 0.0
      %1490 = vmatprep.subr.mxu0 0.0
      %1491 = vmatpush1.msra.mxu0 0.0
      %1492 = vmatprep.subr.mxu0 0.0
      %1493 = vmatpush1.msra.mxu0 0.0
      %1494 = vmatprep.subr.mxu0 0.0
      %1495 = vmatpush1.msra.mxu0 0.0
      %1496 = vmatprep.subr.mxu0 0.0
      %1497 = vmatpush1.msra.mxu0 0.0
      %1498 = vmatprep.subr.mxu0 0.0
      %1499 = vmatpush1.msra.mxu0 0.0
      %1500 = vmatprep.subr.mxu0 0.0
      %1501 = vmatpush1.msra.mxu0 0.0
      %1502 = vmatprep.subr.mxu0 0.0
      %1503 = vmatpush1.msra.mxu0 0.0
      %1504 = vmatprep.subr.mxu0 0.0
      %1505 = vmatpush1.msra.mxu0 0.0
      %1506 = vmatprep.subr.mxu0 0.0
      %1507 = vmatpush1.msra.mxu0 0.0
      %1508 = vmatprep.subr.mxu0 0.0
      %1509 = vmatpush1.msra.mxu0 0.0
      %1510 = vmatprep.subr.mxu0 0.0
      %1511 = vmatpush1.msra.mxu0 0.0
      %1512 = vmatprep.subr.mxu0 0.0
      %1513 = vmatpush1.msra.mxu0 0.0
      %1514 = vmatprep.subr.mxu0 0.0
      %1515 = vmatpush1.msra.mxu0 0.0
      %1516 = vmatprep.subr.mxu0 0.0
      %1517 = vmatpush1.msra.mxu0 0.0
      %1518 = vmatprep.mubr.f32.mxu0 0.0
      %1519 = vmatmul.mubr.f32.gmra.mrb[0].mxu0 %v1211
      %v1520 = vpop.f32.mrb[0].mxu0
      %v1521 = vadd.f32 0.0, %v1520
      %v1522 = vpop.f32.mrb[0].mxu0
      %v1523 = vadd.f32 0.0, %v1522
      %1524 = vmatprep.mubr.f32.mxu0 0.0
      %1525 = vmatmul.mubr.f32.gmra.mrb[0].mxu0 %v1214
      %v1526 = vpop.f32.mrb[0].mxu0
      %v1527 = vadd.f32 0.0, %v1526
      %v1528 = vpop.f32.mrb[0].mxu0
      %v1529 = vadd.f32 0.0, %v1528
      %1530 = vmatprep.mubr.f32.mxu0 0.0
      %1531 = vmatmul.mubr.f32.gmra.mrb[0].mxu0 %v1217
      %v1532 = vpop.f32.mrb[0].mxu0
      %v1533 = vadd.f32 0.0, %v1532
      %v1534 = vpop.f32.mrb[0].mxu0
      %v1535 = vadd.f32 0.0, %v1534
      %1536 = vmatprep.mubr.f32.mxu0 0.0
      %1537 = vmatmul.mubr.f32.gmra.mrb[0].mxu0 %v1220
      %v1538 = vpop.f32.mrb[0].mxu0
      %v1539 = vadd.f32 0.0, %v1538
      %v1540 = vpop.f32.mrb[0].mxu0
      %v1541 = vadd.f32 0.0, %v1540
      %1542 = vmatprep.mubr.f32.mxu0 0.0
      %1543 = vmatmul.mubr.f32.gmra.mrb[0].mxu0 %v1223
      %v1544 = vpop.f32.mrb[0].mxu0
      %v1545 = vadd.f32 0.0, %v1544
      %v1546 = vpop.f32.mrb[0].mxu0
      %v1547 = vadd.f32 0.0, %v1546
      %1548 = vmatprep.mubr.f32.mxu0 0.0
      %1549 = vmatmul.mubr.f32.gmra.mrb[0].mxu0 %v1226
      %v1550 = vpop.f32.mrb[0].mxu0
      %v1551 = vadd.f32 0.0, %v1550
      %v1552 = vpop.f32.mrb[0].mxu0
      %v1553 = vadd.f32 0.0, %v1552
      %1554 = vmatprep.mubr.f32.mxu0 0.0
      %1555 = vmatmul.mubr.f32.gmra.mrb[0].mxu0 %v1229
      %v1556 = vpop.f32.mrb[0].mxu0
      %v1557 = vadd.f32 0.0, %v1556
      %v1558 = vpop.f32.mrb[0].mxu0
      %v1559 = vadd.f32 0.0, %v1558
      %1560 = vmatprep.mubr.f32.mxu0 0.0
      %1561 = vmatmul.mubr.f32.gmra.mrb[0].mxu0 %v1232
      %v1562 = vpop.f32.mrb[0].mxu0
      %v1563 = vadd.f32 0.0, %v1562
      %v1564 = vpop.f32.mrb[0].mxu0
      %v1565 = vadd.f32 0.0, %v1564
      %1566 = vmatprep.mubr.f32.mxu0 0.0
      %1567 = vmatmul.mubr.f32.gmra.mrb[0].mxu0 %v1235
      %v1568 = vpop.f32.mrb[0].mxu0
      %v1569 = vadd.f32 0.0, %v1568
      %v1570 = vpop.f32.mrb[0].mxu0
      %v1571 = vadd.f32 0.0, %v1570
      %1572 = vmatprep.mubr.f32.mxu0 0.0
      %1573 = vmatmul.mubr.f32.gmra.mrb[0].mxu0 %v1238
      %v1574 = vpop.f32.mrb[0].mxu0
      %v1575 = vadd.f32 0.0, %v1574
      %v1576 = vpop.f32.mrb[0].mxu0
      %v1577 = vadd.f32 0.0, %v1576
      %1578 = vmatprep.mubr.f32.mxu0 0.0
      %1579 = vmatmul.mubr.f32.gmra.mrb[0].mxu0 %v1241
      %v1580 = vpop.f32.mrb[0].mxu0
      %v1581 = vadd.f32 0.0, %v1580
      %v1582 = vpop.f32.mrb[0].mxu0
      %v1583 = vadd.f32 0.0, %v1582
      %1584 = vmatprep.mubr.f32.mxu0 0.0
      %1585 = vmatmul.mubr.f32.gmra.mrb[0].mxu0 %v1244
      %v1586 = vpop.f32.mrb[0].mxu0
      %v1587 = vadd.f32 0.0, %v1586
      %v1588 = vpop.f32.mrb[0].mxu0
      %v1589 = vadd.f32 0.0, %v1588
      %1590 = vmatprep.mubr.f32.mxu0 0.0
      %1591 = vmatmul.mubr.f32.gmra.mrb[0].mxu0 %v1247
      %v1592 = vpop.f32.mrb[0].mxu0
      %v1593 = vadd.f32 0.0, %v1592
      %v1594 = vpop.f32.mrb[0].mxu0
      %v1595 = vadd.f32 0.0, %v1594
      %1596 = vmatprep.mubr.f32.mxu0 0.0
      %1597 = vmatmul.mubr.f32.gmra.mrb[0].mxu0 %v1250
      %v1598 = vpop.f32.mrb[0].mxu0
      %v1599 = vadd.f32 0.0, %v1598
      %v1600 = vpop.f32.mrb[0].mxu0
      %v1601 = vadd.f32 0.0, %v1600
      %1602 = vmatprep.mubr.f32.mxu0 0.0
      %1603 = vmatmul.mubr.f32.gmra.mrb[0].mxu0 %v1253
      %v1604 = vpop.f32.mrb[0].mxu0
      %v1605 = vadd.f32 0.0, %v1604
      %v1606 = vpop.f32.mrb[0].mxu0
      %v1607 = vadd.f32 0.0, %v1606
      %1608 = vmatprep.mubr.f32.mxu0 0.0
      %1609 = vmatmul.mubr.f32.gmra.mrb[0].mxu0 %v1256
      %v1610 = vpop.f32.mrb[0].mxu0
      %v1611 = vadd.f32 0.0, %v1610
      %v1612 = vpop.f32.mrb[0].mxu0
      %v1613 = vadd.f32 0.0, %v1612
      %1614 = vmatprep.mubr.f32.mxu0 0.0
      %1615 = vmatmul.mubr.f32.gmra.mrb[0].mxu0 %v1259
      %v1616 = vpop.f32.mrb[0].mxu0
      %v1617 = vadd.f32 0.0, %v1616
      %v1618 = vpop.f32.mrb[0].mxu0
      %v1619 = vadd.f32 0.0, %v1618
      %1620 = vmatprep.mubr.f32.mxu0 0.0
      %1621 = vmatmul.mubr.f32.gmra.mrb[0].mxu0 %v1262
      %v1622 = vpop.f32.mrb[0].mxu0
      %v1623 = vadd.f32 0.0, %v1622
      %v1624 = vpop.f32.mrb[0].mxu0
      %v1625 = vadd.f32 0.0, %v1624
      %1626 = vmatprep.mubr.f32.mxu0 0.0
      %1627 = vmatmul.mubr.f32.gmra.mrb[0].mxu0 %v1265
      %v1628 = vpop.f32.mrb[0].mxu0
      %v1629 = vadd.f32 0.0, %v1628
      %v1630 = vpop.f32.mrb[0].mxu0
      %v1631 = vadd.f32 0.0, %v1630
      %1632 = vmatprep.mubr.f32.mxu0 0.0
      %1633 = vmatmul.mubr.f32.gmra.mrb[0].mxu0 %v1268
      %v1634 = vpop.f32.mrb[0].mxu0
      %v1635 = vadd.f32 0.0, %v1634
      %v1636 = vpop.f32.mrb[0].mxu0
      %v1637 = vadd.f32 0.0, %v1636
      %1638 = vmatprep.mubr.f32.mxu0 0.0
      %1639 = vmatmul.mubr.f32.gmra.mrb[0].mxu0 %v1271
      %v1640 = vpop.f32.mrb[0].mxu0
      %v1641 = vadd.f32 0.0, %v1640
      %v1642 = vpop.f32.mrb[0].mxu0
      %v1643 = vadd.f32 0.0, %v1642
      %1644 = vmatprep.mubr.f32.mxu0 0.0
      %1645 = vmatmul.mubr.f32.gmra.mrb[0].mxu0 %v1274
      %v1646 = vpop.f32.mrb[0].mxu0
      %v1647 = vadd.f32 0.0, %v1646
      %v1648 = vpop.f32.mrb[0].mxu0
      %v1649 = vadd.f32 0.0, %v1648
      %1650 = vmatprep.mubr.f32.mxu0 0.0
      %1651 = vmatmul.mubr.f32.gmra.mrb[0].mxu0 %v1277
      %v1652 = vpop.f32.mrb[0].mxu0
      %v1653 = vadd.f32 0.0, %v1652
      %v1654 = vpop.f32.mrb[0].mxu0
      %v1655 = vadd.f32 0.0, %v1654
      %1656 = vmatprep.mubr.f32.mxu0 0.0
      %1657 = vmatmul.mubr.f32.gmra.mrb[0].mxu0 %v1280
      %v1658 = vpop.f32.mrb[0].mxu0
      %v1659 = vadd.f32 0.0, %v1658
      %v1660 = vpop.f32.mrb[0].mxu0
      %v1661 = vadd.f32 0.0, %v1660
      %1662 = vmatprep.mubr.f32.mxu0 0.0
      %1663 = vmatmul.mubr.f32.gmra.mrb[0].mxu0 %v1283
      %v1664 = vpop.f32.mrb[0].mxu0
      %v1665 = vadd.f32 0.0, %v1664
      %v1666 = vpop.f32.mrb[0].mxu0
      %v1667 = vadd.f32 0.0, %v1666
      %1668 = vmatprep.mubr.f32.mxu0 0.0
      %1669 = vmatmul.mubr.f32.gmra.mrb[0].mxu0 %v1286
      %v1670 = vpop.f32.mrb[0].mxu0
      %v1671 = vadd.f32 0.0, %v1670
      %v1672 = vpop.f32.mrb[0].mxu0
      %v1673 = vadd.f32 0.0, %v1672
      %1674 = vmatprep.mubr.f32.mxu0 0.0
      %1675 = vmatmul.mubr.f32.gmra.mrb[0].mxu0 %v1289
      %v1676 = vpop.f32.mrb[0].mxu0
      %v1677 = vadd.f32 0.0, %v1676
      %v1678 = vpop.f32.mrb[0].mxu0
      %v1679 = vadd.f32 0.0, %v1678
      %1680 = vmatprep.mubr.f32.mxu0 0.0
      %1681 = vmatmul.mubr.f32.gmra.mrb[0].mxu0 %v1292
      %v1682 = vpop.f32.mrb[0].mxu0
      %v1683 = vadd.f32 0.0, %v1682
      %v1684 = vpop.f32.mrb[0].mxu0
      %v1685 = vadd.f32 0.0, %v1684
      %1686 = vmatprep.mubr.f32.mxu0 0.0
      %1687 = vmatmul.mubr.f32.gmra.mrb[0].mxu0 %v1295
      %v1688 = vpop.f32.mrb[0].mxu0
      %v1689 = vadd.f32 0.0, %v1688
      %v1690 = vpop.f32.mrb[0].mxu0
      %v1691 = vadd.f32 0.0, %v1690
      %1692 = vmatprep.mubr.f32.mxu0 0.0
      %1693 = vmatmul.mubr.f32.gmra.mrb[0].mxu0 %v1298
      %v1694 = vpop.f32.mrb[0].mxu0
      %v1695 = vadd.f32 0.0, %v1694
      %v1696 = vpop.f32.mrb[0].mxu0
      %v1697 = vadd.f32 0.0, %v1696
      %1698 = vmatprep.mubr.f32.mxu0 0.0
      %1699 = vmatmul.mubr.f32.gmra.mrb[0].mxu0 %v1301
      %v1700 = vpop.f32.mrb[0].mxu0
      %v1701 = vadd.f32 0.0, %v1700
      %v1702 = vpop.f32.mrb[0].mxu0
      %v1703 = vadd.f32 0.0, %v1702
      %1704 = vmatprep.mubr.f32.mxu0 0.0
      %1705 = vmatmul.mubr.f32.gmra.mrb[0].mxu0 %v1304
      %v1706 = vpop.f32.mrb[0].mxu0
      %v1707 = vadd.f32 0.0, %v1706
      %v1708 = vpop.f32.mrb[0].mxu0
      %v1709 = vadd.f32 0.0, %v1708
      %1710 = vmatprep.mubr.f32.mxu0 0.0
      %1711 = vmatmul.mubr.f32.gmra.mrb[0].mxu0 %v1307
      %v1712 = vpop.f32.mrb[0].mxu0
      %v1713 = vadd.f32 0.0, %v1712
      %v1714 = vpop.f32.mrb[0].mxu0
      %v1715 = vadd.f32 0.0, %v1714
      %1716 = vmatprep.mubr.f32.mxu0 0.0
      %1717 = vmatmul.mubr.f32.gmra.mrb[0].mxu0 %v1310
      %v1718 = vpop.f32.mrb[0].mxu0
      %v1719 = vadd.f32 0.0, %v1718
      %v1720 = vpop.f32.mrb[0].mxu0
      %v1721 = vadd.f32 0.0, %v1720
      %1722 = vmatprep.mubr.f32.mxu0 0.0
      %1723 = vmatmul.mubr.f32.gmra.mrb[0].mxu0 %v1313
      %v1724 = vpop.f32.mrb[0].mxu0
      %v1725 = vadd.f32 0.0, %v1724
      %v1726 = vpop.f32.mrb[0].mxu0
      %v1727 = vadd.f32 0.0, %v1726
      %1728 = vmatprep.mubr.f32.mxu0 0.0
      %1729 = vmatmul.mubr.f32.gmra.mrb[0].mxu0 %v1316
      %v1730 = vpop.f32.mrb[0].mxu0
      %v1731 = vadd.f32 0.0, %v1730
      %v1732 = vpop.f32.mrb[0].mxu0
      %v1733 = vadd.f32 0.0, %v1732
      %1734 = vmatprep.mubr.f32.mxu0 0.0
      %1735 = vmatmul.mubr.f32.gmra.mrb[0].mxu0 %v1319
      %v1736 = vpop.f32.mrb[0].mxu0
      %v1737 = vadd.f32 0.0, %v1736
      %v1738 = vpop.f32.mrb[0].mxu0
      %v1739 = vadd.f32 0.0, %v1738
      %1740 = vmatprep.mubr.f32.mxu0 0.0
      %1741 = vmatmul.mubr.f32.gmra.mrb[0].mxu0 %v1322
      %v1742 = vpop.f32.mrb[0].mxu0
      %v1743 = vadd.f32 0.0, %v1742
      %v1744 = vpop.f32.mrb[0].mxu0
      %v1745 = vadd.f32 0.0, %v1744
      %1746 = vmatprep.mubr.f32.mxu0 0.0
      %1747 = vmatmul.mubr.f32.gmra.mrb[0].mxu0 %v1325
      %v1748 = vpop.f32.mrb[0].mxu0
      %v1749 = vadd.f32 0.0, %v1748
      %v1750 = vpop.f32.mrb[0].mxu0
      %v1751 = vadd.f32 0.0, %v1750
      %1752 = vmatprep.mubr.f32.mxu0 0.0
      %1753 = vmatmul.mubr.f32.gmra.mrb[0].mxu0 %v1328
      %v1754 = vpop.f32.mrb[0].mxu0
      %v1755 = vadd.f32 0.0, %v1754
      %v1756 = vpop.f32.mrb[0].mxu0
      %v1757 = vadd.f32 0.0, %v1756
      %1758 = vmatprep.mubr.f32.mxu0 0.0
      %1759 = vmatmul.mubr.f32.gmra.mrb[0].mxu0 %v1331
      %v1760 = vpop.f32.mrb[0].mxu0
      %v1761 = vadd.f32 0.0, %v1760
      %v1762 = vpop.f32.mrb[0].mxu0
      %v1763 = vadd.f32 0.0, %v1762
      %1764 = vmatprep.mubr.f32.mxu0 0.0
      %1765 = vmatmul.mubr.f32.gmra.mrb[0].mxu0 %v1334
      %v1766 = vpop.f32.mrb[0].mxu0
      %v1767 = vadd.f32 0.0, %v1766
      %v1768 = vpop.f32.mrb[0].mxu0
      %v1769 = vadd.f32 0.0, %v1768
      %1770 = vmatprep.mubr.f32.mxu0 0.0
      %1771 = vmatmul.mubr.f32.gmra.mrb[0].mxu0 %v1337
      %v1772 = vpop.f32.mrb[0].mxu0
      %v1773 = vadd.f32 0.0, %v1772
      %v1774 = vpop.f32.mrb[0].mxu0
      %v1775 = vadd.f32 0.0, %v1774
      %1776 = vmatprep.mubr.f32.mxu0 0.0
      %1777 = vmatmul.mubr.f32.gmra.mrb[0].mxu0 %v1340
      %v1778 = vpop.f32.mrb[0].mxu0
      %v1779 = vadd.f32 0.0, %v1778
      %v1780 = vpop.f32.mrb[0].mxu0
      %v1781 = vadd.f32 0.0, %v1780
      %1782 = vmatprep.mubr.f32.mxu0 0.0
      %1783 = vmatmul.mubr.f32.gmra.mrb[0].mxu0 %v1343
      %v1784 = vpop.f32.mrb[0].mxu0
      %v1785 = vadd.f32 0.0, %v1784
      %v1786 = vpop.f32.mrb[0].mxu0
      %v1787 = vadd.f32 0.0, %v1786
      %1788 = vmatprep.mubr.f32.mxu0 0.0
      %1789 = vmatmul.mubr.f32.gmra.mrb[0].mxu0 %v1346
      %v1790 = vpop.f32.mrb[0].mxu0
      %v1791 = vadd.f32 0.0, %v1790
      %v1792 = vpop.f32.mrb[0].mxu0
      %v1793 = vadd.f32 0.0, %v1792
      %1794 = vmatprep.mubr.f32.mxu0 0.0
      %1795 = vmatmul.mubr.f32.gmra.mrb[0].mxu0 %v1349
      %v1796 = vpop.f32.mrb[0].mxu0
      %v1797 = vadd.f32 0.0, %v1796
      %v1798 = vpop.f32.mrb[0].mxu0
      %v1799 = vadd.f32 0.0, %v1798
      %1800 = vmatprep.mubr.f32.mxu0 0.0
      %1801 = vmatmul.mubr.f32.gmra.mrb[0].mxu0 %v1352
      %v1802 = vpop.f32.mrb[0].mxu0
      %v1803 = vadd.f32 0.0, %v1802
      %v1804 = vpop.f32.mrb[0].mxu0
      %v1805 = vadd.f32 0.0, %v1804
      %1806 = vmatprep.mubr.f32.mxu0 0.0
      %1807 = vmatmul.mubr.f32.gmra.mrb[0].mxu0 %v1355
      %v1808 = vpop.f32.mrb[0].mxu0
      %v1809 = vadd.f32 0.0, %v1808
      %v1810 = vpop.f32.mrb[0].mxu0
      %v1811 = vadd.f32 0.0, %v1810
      %1812 = vmatprep.mubr.f32.mxu0 0.0
      %1813 = vmatmul.mubr.f32.gmra.mrb[0].mxu0 %v1358
      %v1814 = vpop.f32.mrb[0].mxu0
      %v1815 = vadd.f32 0.0, %v1814
      %v1816 = vpop.f32.mrb[0].mxu0
      %v1817 = vadd.f32 0.0, %v1816
      %1818 = vmatprep.mubr.f32.mxu0 0.0
      %1819 = vmatmul.mubr.f32.gmra.mrb[0].mxu0 %v1361
      %v1820 = vpop.f32.mrb[0].mxu0
      %v1821 = vadd.f32 0.0, %v1820
      %v1822 = vpop.f32.mrb[0].mxu0
      %v1823 = vadd.f32 0.0, %v1822
      %1824 = vmatprep.mubr.f32.mxu0 0.0
      %1825 = vmatmul.mubr.f32.gmra.mrb[0].mxu0 %v1364
      %v1826 = vpop.f32.mrb[0].mxu0
      %v1827 = vadd.f32 0.0, %v1826
      %v1828 = vpop.f32.mrb[0].mxu0
      %v1829 = vadd.f32 0.0, %v1828
      %1830 = vmatprep.mubr.f32.mxu0 0.0
      %1831 = vmatmul.mubr.f32.gmra.mrb[0].mxu0 %v1367
      %v1832 = vpop.f32.mrb[0].mxu0
      %v1833 = vadd.f32 0.0, %v1832
      %v1834 = vpop.f32.mrb[0].mxu0
      %v1835 = vadd.f32 0.0, %v1834
      %1836 = vmatprep.mubr.f32.mxu0 0.0
      %1837 = vmatmul.mubr.f32.gmra.mrb[0].mxu0 %v1370
      %v1838 = vpop.f32.mrb[0].mxu0
      %v1839 = vadd.f32 0.0, %v1838
      %v1840 = vpop.f32.mrb[0].mxu0
      %v1841 = vadd.f32 0.0, %v1840
      %1842 = vmatprep.mubr.f32.mxu0 0.0
      %1843 = vmatmul.mubr.f32.gmra.mrb[0].mxu0 %v1373
      %v1844 = vpop.f32.mrb[0].mxu0
      %v1845 = vadd.f32 0.0, %v1844
      %v1846 = vpop.f32.mrb[0].mxu0
      %v1847 = vadd.f32 0.0, %v1846
      %1848 = vmatprep.mubr.f32.mxu0 0.0
      %1849 = vmatmul.mubr.f32.gmra.mrb[0].mxu0 %v1376
      %v1850 = vpop.f32.mrb[0].mxu0
      %v1851 = vadd.f32 0.0, %v1850
      %v1852 = vpop.f32.mrb[0].mxu0
      %v1853 = vadd.f32 0.0, %v1852
      %1854 = vmatprep.mubr.f32.mxu0 0.0
      %1855 = vmatmul.mubr.f32.gmra.mrb[0].mxu0 %v1379
      %v1856 = vpop.f32.mrb[0].mxu0
      %v1857 = vadd.f32 0.0, %v1856
      %v1858 = vpop.f32.mrb[0].mxu0
      %v1859 = vadd.f32 0.0, %v1858
      %1860 = vmatprep.mubr.f32.mxu0 0.0
      %1861 = vmatmul.mubr.f32.gmra.mrb[0].mxu0 %v1382
      %v1862 = vpop.f32.mrb[0].mxu0
      %v1863 = vadd.f32 0.0, %v1862
      %v1864 = vpop.f32.mrb[0].mxu0
      %v1865 = vadd.f32 0.0, %v1864
      %1866 = vmatprep.mubr.f32.mxu0 0.0
      %1867 = vmatmul.mubr.f32.gmra.mrb[0].mxu0 %v1385
      %v1868 = vpop.f32.mrb[0].mxu0
      %v1869 = vadd.f32 0.0, %v1868
      %v1870 = vpop.f32.mrb[0].mxu0
      %v1871 = vadd.f32 0.0, %v1870
      %1872 = vmatprep.mubr.f32.mxu0 0.0
      %1873 = vmatmul.mubr.f32.gmra.mrb[0].mxu0 %v1388
      %v1874 = vpop.f32.mrb[0].mxu0
      %v1875 = vadd.f32 0.0, %v1874
      %v1876 = vpop.f32.mrb[0].mxu0
      %v1877 = vadd.f32 0.0, %v1876
      %1878 = vmatprep.mubr.f32.mxu0 0.0
      %1879 = vmatmul.mubr.f32.gmra.mrb[0].mxu0 %v1391
      %v1880 = vpop.f32.mrb[0].mxu0
      %v1881 = vadd.f32 0.0, %v1880
      %v1882 = vpop.f32.mrb[0].mxu0
      %v1883 = vadd.f32 0.0, %v1882
      %1884 = vmatprep.mubr.f32.mxu0 0.0
      %1885 = vmatmul.mubr.f32.gmra.mrb[0].mxu0 %v1394
      %v1886 = vpop.f32.mrb[0].mxu0
      %v1887 = vadd.f32 0.0, %v1886
      %v1888 = vpop.f32.mrb[0].mxu0
      %v1889 = vadd.f32 0.0, %v1888
      %1890 = vmatprep.mubr.f32.mxu0 0.0
      %1891 = vmatmul.mubr.f32.gmra.mrb[0].mxu0 %v1397
      %v1892 = vpop.f32.mrb[0].mxu0
      %v1893 = vadd.f32 0.0, %v1892
      %v1894 = vpop.f32.mrb[0].mxu0
      %v1895 = vadd.f32 0.0, %v1894
      %1896 = vmatprep.mubr.f32.mxu0 0.0
      %1897 = vmatmul.mubr.f32.gmra.mrb[0].mxu0 %v1400
      %v1898 = vpop.f32.mrb[0].mxu0
      %v1899 = vadd.f32 0.0, %v1898
      %v1900 = vpop.f32.mrb[0].mxu0
      %v1901 = vadd.f32 0.0, %v1900
      %1902 = vmatprep.mubr.f32.mxu0 0.0
      %1903 = vmatmul.mubr.f32.gmra.mrb[0].mxu0 %v1403
      %v1904 = vpop.f32.mrb[0].mxu0
      %v1905 = vadd.f32 0.0, %v1904
      %v1906 = vpop.f32.mrb[0].mxu0
      %v1907 = vadd.f32 0.0, %v1906
      %1908 = vmatprep.mubr.f32.mxu0 0.0
      %1909 = vmatmul.mubr.f32.gmra.mrb[0].mxu0 %v1406
      %v1910 = vpop.f32.mrb[0].mxu0
      %v1911 = vadd.f32 0.0, %v1910
      %v1912 = vpop.f32.mrb[0].mxu0
      %v1913 = vadd.f32 0.0, %v1912
      %1914 = vmatprep.mubr.f32.mxu0 0.0
      %1915 = vmatmul.mubr.f32.gmra.mrb[0].mxu0 %v1409
      %v1916 = vpop.f32.mrb[0].mxu0
      %v1917 = vadd.f32 0.0, %v1916
      %v1918 = vpop.f32.mrb[0].mxu0
      %v1919 = vadd.f32 0.0, %v1918
      %1920 = vmatprep.mubr.f32.mxu0 0.0
      %1921 = vmatmul.mubr.f32.gmra.mrb[0].mxu0 %v1412
      %v1922 = vpop.f32.mrb[0].mxu0
      %v1923 = vadd.f32 0.0, %v1922
      %v1924 = vpop.f32.mrb[0].mxu0
      %v1925 = vadd.f32 0.0, %v1924
      %1926 = vmatprep.mubr.f32.mxu0 0.0
      %1927 = vmatmul.mubr.f32.gmra.mrb[0].mxu0 %v1415
      %v1928 = vpop.f32.mrb[0].mxu0
      %v1929 = vadd.f32 0.0, %v1928
      %v1930 = vpop.f32.mrb[0].mxu0
      %v1931 = vadd.f32 0.0, %v1930
      %1932 = vmatprep.mubr.f32.mxu0 0.0
      %1933 = vmatmul.mubr.f32.gmra.mrb[0].mxu0 %v1418
      %v1934 = vpop.f32.mrb[0].mxu0
      %v1935 = vadd.f32 0.0, %v1934
      %v1936 = vpop.f32.mrb[0].mxu0
      %v1937 = vadd.f32 0.0, %v1936
      %1938 = vmatprep.mubr.f32.mxu0 0.0
      %1939 = vmatmul.mubr.f32.gmra.mrb[0].mxu0 %v1421
      %v1940 = vpop.f32.mrb[0].mxu0
      %v1941 = vadd.f32 0.0, %v1940
      %v1942 = vpop.f32.mrb[0].mxu0
      %v1943 = vadd.f32 0.0, %v1942
      %1944 = vmatprep.mubr.f32.mxu0 0.0
      %1945 = vmatmul.mubr.f32.gmra.mrb[0].mxu0 %v1424
      %v1946 = vpop.f32.mrb[0].mxu0
      %v1947 = vadd.f32 0.0, %v1946
      %v1948 = vpop.f32.mrb[0].mxu0
      %v1949 = vadd.f32 0.0, %v1948
      %1950 = vmatprep.mubr.f32.mxu0 0.0
      %1951 = vmatmul.mubr.f32.gmra.mrb[0].mxu0 %v1427
      %v1952 = vpop.f32.mrb[0].mxu0
      %v1953 = vadd.f32 0.0, %v1952
      %v1954 = vpop.f32.mrb[0].mxu0
      %v1955 = vadd.f32 0.0, %v1954
      %1956 = vmatprep.mubr.f32.mxu0 0.0
      %1957 = vmatmul.mubr.f32.gmra.mrb[0].mxu0 %v1430
      %v1958 = vpop.f32.mrb[0].mxu0
      %v1959 = vadd.f32 0.0, %v1958
      %v1960 = vpop.f32.mrb[0].mxu0
      %v1961 = vadd.f32 0.0, %v1960
      %1962 = vmatprep.mubr.f32.mxu0 0.0
      %1963 = vmatmul.mubr.f32.gmra.mrb[0].mxu0 %v1433
      %v1964 = vpop.f32.mrb[0].mxu0
      %v1965 = vadd.f32 0.0, %v1964
      %v1966 = vpop.f32.mrb[0].mxu0
      %v1967 = vadd.f32 0.0, %v1966
      %1968 = vmatprep.mubr.f32.mxu0 0.0
      %1969 = vmatmul.mubr.f32.gmra.mrb[0].mxu0 %v1436
      %v1970 = vpop.f32.mrb[0].mxu0
      %v1971 = vadd.f32 0.0, %v1970
      %v1972 = vpop.f32.mrb[0].mxu0
      %v1973 = vadd.f32 0.0, %v1972
      %1974 = vmatprep.mubr.f32.mxu0 0.0
      %1975 = vmatmul.mubr.f32.gmra.mrb[0].mxu0 %v1439
      %v1976 = vpop.f32.mrb[0].mxu0
      %v1977 = vadd.f32 0.0, %v1976
      %v1978 = vpop.f32.mrb[0].mxu0
      %v1979 = vadd.f32 0.0, %v1978
      %1980 = vmatprep.mubr.f32.mxu0 0.0
      %1981 = vmatmul.mubr.f32.gmra.mrb[0].mxu0 %v1442
      %v1982 = vpop.f32.mrb[0].mxu0
      %v1983 = vadd.f32 0.0, %v1982
      %v1984 = vpop.f32.mrb[0].mxu0
      %v1985 = vadd.f32 0.0, %v1984
      %1986 = vmatprep.mubr.f32.mxu0 0.0
      %1987 = vmatmul.mubr.f32.gmra.mrb[0].mxu0 %v1445
      %v1988 = vpop.f32.mrb[0].mxu0
      %v1989 = vadd.f32 0.0, %v1988
      %v1990 = vpop.f32.mrb[0].mxu0
      %v1991 = vadd.f32 0.0, %v1990
      %1992 = vdwg.mxu0
      %v1993 = vld [vmem:[%s10] sm:$0x7]
      %1995 = vset.pattern.permute.xlu0 0
      %1996 = vperm.xlu0 %1995, %v1993
      %v1997 = vpop.permute.xlu0 %1996
      %v1998 = vrot.slane %v1997, 4
      %v2000 = vadd.f32 %v1563, %v1998
      %v2001 = vadd.f32 %v1565, %v1998
      %v2002 = vld [vmem:[%s11] sm:$0x1f]
      %2004 = vset.pattern.permute.xlu0 0
      %2005 = vperm.xlu0 %2004, %v2002
      %v2006 = vpop.permute.xlu0 %2005
      %v2007 = vrot.slane %v2006, 5
      %v2009 = vadd.f32 %v1641, %v2007
      %v2010 = vadd.f32 %v1643, %v2007
      %v2011 = vld [vmem:[%s12] sm:$0x7]
      %2013 = vset.pattern.permute.xlu0 0
      %2014 = vperm.xlu0 %2013, %v2011
      %v2015 = vpop.permute.xlu0 %2014
      %v2016 = vrot.slane %v2015, 4
      %v2018 = vadd.f32 %v1719, %v2016
      %v2019 = vadd.f32 %v1721, %v2016
      %vm2020 = vcmask 1046532
      %v2021 = vsel %vm2020, %v2000, -inf
      %v2022 = vrot.slane %v2021, 4
      %v2023 = vmax.f32 %v2021, %v2022
      %v2024 = vrot.slane %v2023, 2
      %v2025 = vmax.f32 %v2023, %v2024
      %v2026 = vrot.slane %v2025, 1
      %v2027 = vmax.f32 %v2025, %v2026
      %v2028 = vsel %vm2020, %v2001, -inf
      %v2029 = vrot.slane %v2028, 4
      %v2030 = vmax.f32 %v2028, %v2029
      %v2031 = vrot.slane %v2030, 2
      %v2032 = vmax.f32 %v2030, %v2031
      %v2033 = vrot.slane %v2032, 1
      %v2034 = vmax.f32 %v2032, %v2033
      %v2035 = vsub.f32 %v2000, %v2027
      %v2036 = vsub.f32 %v2001, %v2034
      %v2037 = vmul.f32 %v2035, 1.442695
      %v2038 = vpow.pop %v2037
      %v2039 = vmul.f32 %v2036, 1.442695
      %v2040 = vpow.pop %v2039
      %v2043 = vrot.slane %v2038, 4
      %v2044 = vrot.slane %v2040, 4
      %vm2047 = vcmask 1042432
      %v2048 = vsel %vm2047, %v2043, 0.0
      %v2049 = vrot.slane %v2048, 4
      %v2050 = vadd.f32 %v2048, %v2049
      %v2051 = vrot.slane %v2050, 2
      %v2052 = vadd.f32 %v2050, %v2051
      %v2053 = vrot.slane %v2052, 1
      %v2054 = vadd.f32 %v2052, %v2053
      %v2055 = vsel %vm2047, %v2044, 0.0
      %v2056 = vrot.slane %v2055, 4
      %v2057 = vadd.f32 %v2055, %v2056
      %v2058 = vrot.slane %v2057, 2
      %v2059 = vadd.f32 %v2057, %v2058
      %v2060 = vrot.slane %v2059, 1
      %v2061 = vadd.f32 %v2059, %v2060
      %v2062 = vrcp.pop %v2054
      %v2063 = vmul.f32 %v2038, %v2062
      %v2064 = vrcp.pop %v2061
      %v2065 = vmul.f32 %v2040, %v2064
      %vm2066 = vcmask 1047555
      %v2067 = vsel %vm2066, %v2009, -inf
      %v2068 = vrot.slane %v2067, 4
      %v2069 = vmax.f32 %v2067, %v2068
      %v2070 = vrot.slane %v2069, 2
      %v2071 = vmax.f32 %v2069, %v2070
      %v2072 = vrot.slane %v2071, 1
      %v2073 = vmax.f32 %v2071, %v2072
      %v2074 = vsel %vm2066, %v2010, -inf
      %v2075 = vrot.slane %v2074, 4
      %v2076 = vmax.f32 %v2074, %v2075
      %v2077 = vrot.slane %v2076, 2
      %v2078 = vmax.f32 %v2076, %v2077
      %v2079 = vrot.slane %v2078, 1
      %v2080 = vmax.f32 %v2078, %v2079
      %v2081 = vsub.f32 %v2009, %v2073
      %v2082 = vsub.f32 %v2010, %v2080
      %v2083 = vmul.f32 %v2081, 1.442695
      %v2084 = vpow.pop %v2083
      %v2085 = vmul.f32 %v2082, 1.442695
      %v2086 = vpow.pop %v2085
      %v2089 = vrot.slane %v2084, 3
      %v2090 = vrot.slane %v2086, 3
      %vm2093 = vcmask 1044480
      %v2094 = vsel %vm2093, %v2089, 0.0
      %v2095 = vrot.slane %v2094, 4
      %v2096 = vadd.f32 %v2094, %v2095
      %v2097 = vrot.slane %v2096, 2
      %v2098 = vadd.f32 %v2096, %v2097
      %v2099 = vrot.slane %v2098, 1
      %v2100 = vadd.f32 %v2098, %v2099
      %v2101 = vsel %vm2093, %v2090, 0.0
      %v2102 = vrot.slane %v2101, 4
      %v2103 = vadd.f32 %v2101, %v2102
      %v2104 = vrot.slane %v2103, 2
      %v2105 = vadd.f32 %v2103, %v2104
      %v2106 = vrot.slane %v2105, 1
      %v2107 = vadd.f32 %v2105, %v2106
      %v2108 = vrcp.pop %v2100
      %v2109 = vmul.f32 %v2084, %v2108
      %v2110 = vrcp.pop %v2107
      %v2111 = vmul.f32 %v2086, %v2110
      %v2112 = vsel %vm2020, %v2018, -inf
      %v2113 = vrot.slane %v2112, 4
      %v2114 = vmax.f32 %v2112, %v2113
      %v2115 = vrot.slane %v2114, 2
      %v2116 = vmax.f32 %v2114, %v2115
      %v2117 = vrot.slane %v2116, 1
      %v2118 = vmax.f32 %v2116, %v2117
      %v2119 = vsel %vm2020, %v2019, -inf
      %v2120 = vrot.slane %v2119, 4
      %v2121 = vmax.f32 %v2119, %v2120
      %v2122 = vrot.slane %v2121, 2
      %v2123 = vmax.f32 %v2121, %v2122
      %v2124 = vrot.slane %v2123, 1
      %v2125 = vmax.f32 %v2123, %v2124
      %v2126 = vsub.f32 %v2018, %v2118
      %v2127 = vsub.f32 %v2019, %v2125
      %v2128 = vmul.f32 %v2126, 1.442695
      %v2129 = vpow.pop %v2128
      %v2130 = vmul.f32 %v2127, 1.442695
      %v2131 = vpow.pop %v2130
      %v2134 = vrot.slane %v2129, 4
      %v2135 = vrot.slane %v2131, 4
      %v2138 = vsel %vm2047, %v2134, 0.0
      %v2139 = vrot.slane %v2138, 4
      %v2140 = vadd.f32 %v2138, %v2139
      %v2141 = vrot.slane %v2140, 2
      %v2142 = vadd.f32 %v2140, %v2141
      %v2143 = vrot.slane %v2142, 1
      %v2144 = vadd.f32 %v2142, %v2143
      %v2145 = vsel %vm2047, %v2135, 0.0
      %v2146 = vrot.slane %v2145, 4
      %v2147 = vadd.f32 %v2145, %v2146
      %v2148 = vrot.slane %v2147, 2
      %v2149 = vadd.f32 %v2147, %v2148
      %v2150 = vrot.slane %v2149, 1
      %v2151 = vadd.f32 %v2149, %v2150
      %v2152 = vrcp.pop %v2144
      %v2153 = vmul.f32 %v2129, %v2152
      %v2154 = vrcp.pop %v2151
      %v2155 = vmul.f32 %v2131, %v2154
      %v2157 = vrot.slane %v1127, 5
      %v2158 = vrot.slane %v2157, 4
      %v2160 = vadd.f32 %v1127, %v2158
      %v2163 = vrot.slane %v1128, 1
      %v2164 = vrot.slane %v1129, 1
      %v2167 = vadd.f32 %v1128, %v2163
      %v2168 = vadd.f32 %v1129, %v2164
      %v2169 = vrot.slane %v1128, 2
      %v2170 = vrot.slane %v1129, 2
      %v2173 = vadd.f32 %v2167, %v2169
      %v2174 = vadd.f32 %v2168, %v2170
      %v2175 = vrot.slane %v1128, 3
      %v2176 = vrot.slane %v1129, 3
      %v2179 = vadd.f32 %v2173, %v2175
      %v2180 = vadd.f32 %v2174, %v2176
      %v2182 = vlaneseq
      %v2183 = vshrl.u32 %v2182, 7
      %v2184 = vsub.s32 1, %v2183
      %v2185 = vrot.slane %v2160, %v2184
      %v2186 = vlaneseq
      %v2187 = vshrl.u32 %v2186, 7
      %v2188 = vsub.s32 5, %v2187
      %v2189 = vrot.slane %v2160, %v2188
      %v2192 = vlaneseq
      %v2193 = vshrl.u32 %v2192, 7
      %v2194 = vsub.s32 1, %v2193
      %v2195 = vrot.slane %v2185, %v2194
      %v2196 = vlaneseq
      %v2197 = vshrl.u32 %v2196, 7
      %v2198 = vsub.s32 1, %v2197
      %v2199 = vrot.slane %v2189, %v2198
      %v2200 = vmul.f32 %v2195, %v1563
      %v2201 = vmul.f32 %v2199, %v1565
      %v2202 = vmul.f32 %v2195, %v1569
      %v2203 = vmul.f32 %v2199, %v1571
      %v2204 = vmul.f32 %v2195, %v1575
      %v2205 = vmul.f32 %v2199, %v1577
      %v2206 = vmul.f32 %v2195, %v1581
      %v2207 = vmul.f32 %v2199, %v1583
      %vm2216 = vcmask 1040384
      %v2217 = vrot.slane %v2200, 7
      %v2218 = vrot.slane %v2202, 7
      %v2219 = vsel %vm2216, %v2217, %v2218
      %v2220 = vrot.slane %v2201, 7
      %v2221 = vrot.slane %v2203, 7
      %v2222 = vsel %vm2216, %v2220, %v2221
      %v2223 = vrot.slane %v2204, 7
      %v2224 = vsel %vm2216, %v2218, %v2223
      %v2225 = vrot.slane %v2205, 7
      %v2226 = vsel %vm2216, %v2221, %v2225
      %v2227 = vrot.slane %v2206, 7
      %v2228 = vsel %vm2216, %v2223, %v2227
      %v2229 = vrot.slane %v2207, 7
      %v2230 = vsel %vm2216, %v2225, %v2229
      %v2237 = vadd.f32 %v1521, %v2219
      %v2238 = vadd.f32 %v1523, %v2222
      %v2239 = vadd.f32 %v1527, %v2224
      %v2240 = vadd.f32 %v1529, %v2226
      %v2241 = vadd.f32 %v1533, %v2228
      %v2242 = vadd.f32 %v1535, %v2230
      %v2243 = vmul.f32 %v2195, %v1647
      %v2244 = vmul.f32 %v2199, %v1649
      %v2245 = vmul.f32 %v2195, %v1653
      %v2246 = vmul.f32 %v2199, %v1655
      %v2247 = vmul.f32 %v2195, %v1659
      %v2248 = vmul.f32 %v2199, %v1661
      %v2249 = vadd.f32 %v1521, %v2243
      %v2250 = vadd.f32 %v1523, %v2244
      %v2251 = vadd.f32 %v1527, %v2245
      %v2252 = vadd.f32 %v1529, %v2246
      %v2253 = vadd.f32 %v1533, %v2247
      %v2254 = vadd.f32 %v1535, %v2248
      %v2255 = vlaneseq
      %v2256 = vshrl.u32 %v2255, 7
      %v2257 = vsub.s32 5, %v2256
      %v2258 = vrot.slane %v2063, %v2257
      %v2259 = vlaneseq
      %v2260 = vshrl.u32 %v2259, 7
      %v2261 = vsub.s32 5, %v2260
      %v2262 = vrot.slane %v2065, %v2261
      %v2263 = vmul.f32 %v2258, %v1533
      %v2264 = vmul.f32 %v2262, %v1535
      %v2265 = vmul.f32 %v2258, %v1539
      %v2266 = vmul.f32 %v2262, %v1541
      %v2267 = vmul.f32 %v2258, %v1545
      %v2268 = vmul.f32 %v2262, %v1547
      %v2275 = vrot.slane %v1581, 7
      %v2276 = vrot.slane %v1583, 7
      %v2277 = vrot.slane %v1587, 7
      %v2278 = vsel %vm2216, %v2275, %v2277
      %v2279 = vrot.slane %v1589, 7
      %v2280 = vsel %vm2216, %v2276, %v2279
      %v2281 = vrot.slane %v1593, 7
      %v2282 = vsel %vm2216, %v2277, %v2281
      %v2283 = vrot.slane %v1595, 7
      %v2284 = vsel %vm2216, %v2279, %v2283
      %v2291 = vadd.f32 %v2263, %v2275
      %v2292 = vadd.f32 %v2264, %v2276
      %v2293 = vadd.f32 %v2265, %v2278
      %v2294 = vadd.f32 %v2266, %v2280
      %v2295 = vadd.f32 %v2267, %v2282
      %v2296 = vadd.f32 %v2268, %v2284
      %v2297 = vlaneseq
      %v2298 = vshrl.u32 %v2297, 7
      %v2299 = vsub.s32 6, %v2298
      %v2300 = vrot.slane %v2063, %v2299
      %v2301 = vlaneseq
      %v2302 = vshrl.u32 %v2301, 7
      %v2303 = vsub.s32 6, %v2302
      %v2304 = vrot.slane %v2065, %v2303
      %v2305 = vmul.f32 %v2300, %v1533
      %v2306 = vmul.f32 %v2304, %v1535
      %v2307 = vmul.f32 %v2300, %v1539
      %v2308 = vmul.f32 %v2304, %v1541
      %v2309 = vmul.f32 %v2300, %v1545
      %v2310 = vmul.f32 %v2304, %v1547
      %v2311 = vadd.f32 %v2305, %v1659
      %v2312 = vadd.f32 %v2306, %v1661
      %v2313 = vadd.f32 %v2307, %v1665
      %v2314 = vadd.f32 %v2308, %v1667
      %v2315 = vadd.f32 %v2309, %v1671
      %v2316 = vadd.f32 %v2310, %v1673
      %v2317 = vlaneseq
      %v2318 = vshrl.u32 %v2317, 7
      %v2319 = vsub.s32 1, %v2318
      %v2320 = vrot.slane %v2179, %v2319
      %v2321 = vlaneseq
      %v2322 = vshrl.u32 %v2321, 7
      %v2323 = vsub.s32 1, %v2322
      %v2324 = vrot.slane %v2180, %v2323
      %v2325 = vmul.f32 %v2320, %v1719
      %v2326 = vmul.f32 %v2324, %v1721
      %v2327 = vmul.f32 %v2320, %v1725
      %v2328 = vmul.f32 %v2324, %v1727
      %v2329 = vmul.f32 %v2320, %v1731
      %v2330 = vmul.f32 %v2324, %v1733
      %v2331 = vmul.f32 %v2320, %v1737
      %v2332 = vmul.f32 %v2324, %v1739
      %v2333 = vadd.f32 %v1593, %v2325
      %v2334 = vadd.f32 %v1595, %v2326
      %v2335 = vadd.f32 %v1599, %v2327
      %v2336 = vadd.f32 %v1601, %v2328
      %v2337 = vadd.f32 %v1605, %v2329
      %v2338 = vadd.f32 %v1607, %v2330
      %v2339 = vadd.f32 %v1611, %v2331
      %v2340 = vadd.f32 %v1613, %v2332
      %v2341 = vmul.f32 %v2320, %v1767
      %v2342 = vmul.f32 %v2324, %v1769
      %v2343 = vmul.f32 %v2320, %v1773
      %v2344 = vmul.f32 %v2324, %v1775
      %v2345 = vmul.f32 %v2320, %v1779
      %v2346 = vmul.f32 %v2324, %v1781
      %vm2353 = vcmask 1043456
      %v2354 = vrot.slane %v2341, 4
      %v2355 = vrot.slane %v2342, 4
      %v2356 = vrot.slane %v2343, 4
      %v2357 = vsel %vm2353, %v2354, %v2356
      %v2358 = vrot.slane %v2344, 4
      %v2359 = vsel %vm2353, %v2355, %v2358
      %v2360 = vrot.slane %v2345, 4
      %v2361 = vsel %vm2353, %v2356, %v2360
      %v2362 = vrot.slane %v2346, 4
      %v2363 = vsel %vm2353, %v2358, %v2362
      %v2372 = vadd.f32 %v1593, %v2354
      %v2373 = vadd.f32 %v1595, %v2355
      %v2374 = vadd.f32 %v1599, %v2357
      %v2375 = vadd.f32 %v1601, %v2359
      %v2376 = vadd.f32 %v1605, %v2361
      %v2377 = vadd.f32 %v1607, %v2363
      %v2378 = vadd.f32 %v1611, %v2360
      %v2379 = vadd.f32 %v1613, %v2362
      %v2380 = vmul.f32 %v2320, %v1809
      %v2381 = vmul.f32 %v2324, %v1811
      %v2382 = vmul.f32 %v2320, %v1815
      %v2383 = vmul.f32 %v2324, %v1817
      %v2384 = vmul.f32 %v2320, %v1821
      %v2385 = vmul.f32 %v2324, %v1823
      %v2386 = vmul.f32 %v2320, %v1827
      %v2387 = vmul.f32 %v2324, %v1829
      %v2388 = vadd.f32 %v1593, %v2380
      %v2389 = vadd.f32 %v1595, %v2381
      %v2390 = vadd.f32 %v1599, %v2382
      %v2391 = vadd.f32 %v1601, %v2383
      %v2392 = vadd.f32 %v1605, %v2384
      %v2393 = vadd.f32 %v1607, %v2385
      %v2394 = vadd.f32 %v1611, %v2386
      %v2395 = vadd.f32 %v1613, %v2387
      %v2396 = vmul.f32 %v2320, %v1857
      %v2397 = vmul.f32 %v2324, %v1859
      %v2398 = vmul.f32 %v2320, %v1863
      %v2399 = vmul.f32 %v2324, %v1865
      %v2400 = vmul.f32 %v2320, %v1869
      %v2401 = vmul.f32 %v2324, %v1871
      %v2408 = vrot.slane %v2396, 4
      %v2409 = vrot.slane %v2397, 4
      %v2410 = vrot.slane %v2398, 4
      %v2411 = vsel %vm2353, %v2408, %v2410
      %v2412 = vrot.slane %v2399, 4
      %v2413 = vsel %vm2353, %v2409, %v2412
      %v2414 = vrot.slane %v2400, 4
      %v2415 = vsel %vm2353, %v2410, %v2414
      %v2416 = vrot.slane %v2401, 4
      %v2417 = vsel %vm2353, %v2412, %v2416
      %v2426 = vadd.f32 %v1593, %v2408
      %v2427 = vadd.f32 %v1595, %v2409
      %v2428 = vadd.f32 %v1599, %v2411
      %v2429 = vadd.f32 %v1601, %v2413
      %v2430 = vadd.f32 %v1605, %v2415
      %v2431 = vadd.f32 %v1607, %v2417
      %v2432 = vadd.f32 %v1611, %v2414
      %v2433 = vadd.f32 %v1613, %v2416
      %v2434 = vlaneseq
      %v2435 = vshrl.u32 %v2434, 7
      %v2436 = vsub.s32 5, %v2435
      %v2437 = vrot.slane %v2167, %v2436
      %v2438 = vlaneseq
      %v2439 = vshrl.u32 %v2438, 7
      %v2440 = vsub.s32 5, %v2439
      %v2441 = vrot.slane %v2168, %v2440
      %v2442 = vmul.f32 %v2437, %v1899
      %v2443 = vmul.f32 %v2441, %v1901
      %v2444 = vmul.f32 %v2437, %v1905
      %v2445 = vmul.f32 %v2441, %v1907
      %v2446 = vmul.f32 %v2437, %v1911
      %v2447 = vmul.f32 %v2441, %v1913
      %v2448 = vmul.f32 %v2437, %v1917
      %v2449 = vmul.f32 %v2441, %v1919
      %v2458 = vrot.slane %v2442, 7
      %v2459 = vrot.slane %v2444, 7
      %v2460 = vsel %vm2216, %v2458, %v2459
      %v2461 = vrot.slane %v2443, 7
      %v2462 = vrot.slane %v2445, 7
      %v2463 = vsel %vm2216, %v2461, %v2462
      %v2464 = vrot.slane %v2446, 7
      %v2465 = vsel %vm2216, %v2459, %v2464
      %v2466 = vrot.slane %v2447, 7
      %v2467 = vsel %vm2216, %v2462, %v2466
      %v2468 = vrot.slane %v2448, 7
      %v2469 = vsel %vm2216, %v2464, %v2468
      %v2470 = vrot.slane %v2449, 7
      %v2471 = vsel %vm2216, %v2466, %v2470
      %v2478 = vadd.f32 %v1677, %v2460
      %v2479 = vadd.f32 %v1679, %v2463
      %v2480 = vadd.f32 %v1683, %v2465
      %v2481 = vadd.f32 %v1685, %v2467
      %v2482 = vadd.f32 %v1689, %v2469
      %v2483 = vadd.f32 %v1691, %v2471
      %v2484 = vmul.f32 %v2437, %v1947
      %v2485 = vmul.f32 %v2441, %v1949
      %v2486 = vmul.f32 %v2437, %v1953
      %v2487 = vmul.f32 %v2441, %v1955
      %v2488 = vmul.f32 %v2437, %v1959
      %v2489 = vmul.f32 %v2441, %v1961
      %v2496 = vrot.slane %v2484, 3
      %v2497 = vrot.slane %v2486, 3
      %v2498 = vsel %vm2093, %v2496, %v2497
      %v2499 = vrot.slane %v2485, 3
      %v2500 = vrot.slane %v2487, 3
      %v2501 = vsel %vm2093, %v2499, %v2500
      %v2502 = vrot.slane %v2488, 3
      %v2503 = vsel %vm2093, %v2497, %v2502
      %v2504 = vrot.slane %v2489, 3
      %v2505 = vsel %vm2093, %v2500, %v2504
      %v2512 = vadd.f32 %v1677, %v2498
      %v2513 = vadd.f32 %v1679, %v2501
      %v2514 = vadd.f32 %v1683, %v2503
      %v2515 = vadd.f32 %v1685, %v2505
      %v2516 = vadd.f32 %v1689, %v2502
      %v2517 = vadd.f32 %v1691, %v2504
      %v2518 = vlaneseq
      %v2519 = vshrl.u32 %v2518, 7
      %v2520 = vsub.s32 4, %v2519
      %v2521 = vrot.slane %v2109, %v2520
      %v2522 = vlaneseq
      %v2523 = vshrl.u32 %v2522, 7
      %v2524 = vsub.s32 4, %v2523
      %v2525 = vrot.slane %v2111, %v2524
      %v2526 = vmul.f32 %v2521, %v1611
      %v2527 = vmul.f32 %v2525, %v1613
      %v2528 = vmul.f32 %v2521, %v1617
      %v2529 = vmul.f32 %v2525, %v1619
      %v2530 = vmul.f32 %v2521, %v1623
      %v2531 = vmul.f32 %v2525, %v1625
      %v2532 = vadd.f32 %v2526, %v1737
      %v2533 = vadd.f32 %v2527, %v1739
      %v2534 = vadd.f32 %v2528, %v1743
      %v2535 = vadd.f32 %v2529, %v1745
      %v2536 = vadd.f32 %v2530, %v1749
      %v2537 = vadd.f32 %v2531, %v1751
      %v2538 = vlaneseq
      %v2539 = vshrl.u32 %v2538, 7
      %v2540 = vsub.s32 5, %v2539
      %v2541 = vrot.slane %v2109, %v2540
      %v2542 = vlaneseq
      %v2543 = vshrl.u32 %v2542, 7
      %v2544 = vsub.s32 5, %v2543
      %v2545 = vrot.slane %v2111, %v2544
      %v2546 = vmul.f32 %v2541, %v1611
      %v2547 = vmul.f32 %v2545, %v1613
      %v2548 = vmul.f32 %v2541, %v1617
      %v2549 = vmul.f32 %v2545, %v1619
      %v2550 = vmul.f32 %v2541, %v1623
      %v2551 = vmul.f32 %v2545, %v1625
      %v2560 = vrot.slane %v1779, 4
      %v2561 = vrot.slane %v1785, 4
      %v2562 = vsel %vm2353, %v2560, %v2561
      %v2563 = vrot.slane %v1781, 4
      %v2564 = vrot.slane %v1787, 4
      %v2565 = vsel %vm2353, %v2563, %v2564
      %v2566 = vrot.slane %v1791, 4
      %v2567 = vsel %vm2353, %v2561, %v2566
      %v2568 = vrot.slane %v1793, 4
      %v2569 = vsel %vm2353, %v2564, %v2568
      %v2570 = vrot.slane %v1797, 4
      %v2571 = vsel %vm2353, %v2566, %v2570
      %v2572 = vrot.slane %v1799, 4
      %v2573 = vsel %vm2353, %v2568, %v2572
      %v2580 = vadd.f32 %v2546, %v2562
      %v2581 = vadd.f32 %v2547, %v2565
      %v2582 = vadd.f32 %v2548, %v2567
      %v2583 = vadd.f32 %v2549, %v2569
      %v2584 = vadd.f32 %v2550, %v2571
      %v2585 = vadd.f32 %v2551, %v2573
      %v2586 = vlaneseq
      %v2587 = vshrl.u32 %v2586, 7
      %v2588 = vsub.s32 6, %v2587
      %v2589 = vrot.slane %v2109, %v2588
      %v2590 = vlaneseq
      %v2591 = vshrl.u32 %v2590, 7
      %v2592 = vsub.s32 6, %v2591
      %v2593 = vrot.slane %v2111, %v2592
      %v2594 = vmul.f32 %v2589, %v1611
      %v2595 = vmul.f32 %v2593, %v1613
      %v2596 = vmul.f32 %v2589, %v1617
      %v2597 = vmul.f32 %v2593, %v1619
      %v2598 = vmul.f32 %v2589, %v1623
      %v2599 = vmul.f32 %v2593, %v1625
      %v2600 = vadd.f32 %v2594, %v1827
      %v2601 = vadd.f32 %v2595, %v1829
      %v2602 = vadd.f32 %v2596, %v1833
      %v2603 = vadd.f32 %v2597, %v1835
      %v2604 = vadd.f32 %v2598, %v1839
      %v2605 = vadd.f32 %v2599, %v1841
      %v2606 = vlaneseq
      %v2607 = vshrl.u32 %v2606, 7
      %v2608 = vsub.s32 7, %v2607
      %v2609 = vrot.slane %v2109, %v2608
      %v2610 = vlaneseq
      %v2611 = vshrl.u32 %v2610, 7
      %v2612 = vsub.s32 7, %v2611
      %v2613 = vrot.slane %v2111, %v2612
      %v2614 = vmul.f32 %v2609, %v1611
      %v2615 = vmul.f32 %v2613, %v1613
      %v2616 = vmul.f32 %v2609, %v1617
      %v2617 = vmul.f32 %v2613, %v1619
      %v2618 = vmul.f32 %v2609, %v1623
      %v2619 = vmul.f32 %v2613, %v1625
      %v2628 = vrot.slane %v1869, 4
      %v2629 = vrot.slane %v1875, 4
      %v2630 = vsel %vm2353, %v2628, %v2629
      %v2631 = vrot.slane %v1871, 4
      %v2632 = vrot.slane %v1877, 4
      %v2633 = vsel %vm2353, %v2631, %v2632
      %v2634 = vrot.slane %v1881, 4
      %v2635 = vsel %vm2353, %v2629, %v2634
      %v2636 = vrot.slane %v1883, 4
      %v2637 = vsel %vm2353, %v2632, %v2636
      %v2638 = vrot.slane %v1887, 4
      %v2639 = vsel %vm2353, %v2634, %v2638
      %v2640 = vrot.slane %v1889, 4
      %v2641 = vsel %vm2353, %v2636, %v2640
      %v2648 = vadd.f32 %v2614, %v2630
      %v2649 = vadd.f32 %v2615, %v2633
      %v2650 = vadd.f32 %v2616, %v2635
      %v2651 = vadd.f32 %v2617, %v2637
      %v2652 = vadd.f32 %v2618, %v2639
      %v2653 = vadd.f32 %v2619, %v2641
      %v2654 = vlaneseq
      %v2655 = vshrl.u32 %v2654, 7
      %v2656 = vsub.s32 5, %v2655
      %v2657 = vrot.slane %v2153, %v2656
      %v2658 = vlaneseq
      %v2659 = vshrl.u32 %v2658, 7
      %v2660 = vsub.s32 5, %v2659
      %v2661 = vrot.slane %v2155, %v2660
      %v2662 = vmul.f32 %v2657, %v1689
      %v2663 = vmul.f32 %v2661, %v1691
      %v2664 = vmul.f32 %v2657, %v1695
      %v2665 = vmul.f32 %v2661, %v1697
      %v2666 = vmul.f32 %v2657, %v1701
      %v2667 = vmul.f32 %v2661, %v1703
      %v2674 = vrot.slane %v1917, 7
      %v2675 = vrot.slane %v1919, 7
      %v2676 = vrot.slane %v1923, 7
      %v2677 = vsel %vm2216, %v2674, %v2676
      %v2678 = vrot.slane %v1925, 7
      %v2679 = vsel %vm2216, %v2675, %v2678
      %v2680 = vrot.slane %v1929, 7
      %v2681 = vsel %vm2216, %v2676, %v2680
      %v2682 = vrot.slane %v1931, 7
      %v2683 = vsel %vm2216, %v2678, %v2682
      %v2690 = vadd.f32 %v2662, %v2674
      %v2691 = vadd.f32 %v2663, %v2675
      %v2692 = vadd.f32 %v2664, %v2677
      %v2693 = vadd.f32 %v2665, %v2679
      %v2694 = vadd.f32 %v2666, %v2681
      %v2695 = vadd.f32 %v2667, %v2683
      %v2696 = vlaneseq
      %v2697 = vshrl.u32 %v2696, 7
      %v2698 = vsub.s32 6, %v2697
      %v2699 = vrot.slane %v2153, %v2698
      %v2700 = vlaneseq
      %v2701 = vshrl.u32 %v2700, 7
      %v2702 = vsub.s32 6, %v2701
      %v2703 = vrot.slane %v2155, %v2702
      %v2704 = vmul.f32 %v2699, %v1689
      %v2705 = vmul.f32 %v2703, %v1691
      %v2706 = vmul.f32 %v2699, %v1695
      %v2707 = vmul.f32 %v2703, %v1697
      %v2708 = vmul.f32 %v2699, %v1701
      %v2709 = vmul.f32 %v2703, %v1703
      %v2718 = vrot.slane %v1959, 3
      %v2719 = vrot.slane %v1965, 3
      %v2720 = vsel %vm2093, %v2718, %v2719
      %v2721 = vrot.slane %v1961, 3
      %v2722 = vrot.slane %v1967, 3
      %v2723 = vsel %vm2093, %v2721, %v2722
      %v2724 = vrot.slane %v1971, 3
      %v2725 = vsel %vm2093, %v2719, %v2724
      %v2726 = vrot.slane %v1973, 3
      %v2727 = vsel %vm2093, %v2722, %v2726
      %v2728 = vrot.slane %v1977, 3
      %v2729 = vsel %vm2093, %v2724, %v2728
      %v2730 = vrot.slane %v1979, 3
      %v2731 = vsel %vm2093, %v2726, %v2730
      %v2738 = vadd.f32 %v2704, %v2720
      %v2739 = vadd.f32 %v2705, %v2723
      %v2740 = vadd.f32 %v2706, %v2725
      %v2741 = vadd.f32 %v2707, %v2727
      %v2742 = vadd.f32 %v2708, %v2729
      %v2743 = vadd.f32 %v2709, %v2731
      %v2750 = vrot.slane %v2249, 4
      %v2751 = vrot.slane %v2250, 4
      %v2752 = vrot.slane %v2251, 4
      %v2753 = vsel %vm2353, %v2750, %v2752
      %v2754 = vrot.slane %v2252, 4
      %v2755 = vsel %vm2353, %v2751, %v2754
      %v2756 = vrot.slane %v2253, 4
      %v2757 = vsel %vm2353, %v2752, %v2756
      %v2758 = vrot.slane %v2254, 4
      %v2759 = vsel %vm2353, %v2754, %v2758
      %v2772 = vrot.slane %v2291, 4
      %v2773 = vrot.slane %v2293, 4
      %v2774 = vsel %vm2353, %v2772, %v2773
      %v2775 = vrot.slane %v2292, 4
      %v2776 = vrot.slane %v2294, 4
      %v2777 = vsel %vm2353, %v2775, %v2776
      %v2778 = vrot.slane %v2295, 4
      %v2779 = vsel %vm2353, %v2773, %v2778
      %v2780 = vrot.slane %v2296, 4
      %v2781 = vsel %vm2353, %v2776, %v2780
      %v2796 = vrot.slane %v2333, 7
      %v2797 = vrot.slane %v2335, 7
      %v2798 = vsel %vm2216, %v2796, %v2797
      %v2799 = vrot.slane %v2334, 7
      %v2800 = vrot.slane %v2336, 7
      %v2801 = vsel %vm2216, %v2799, %v2800
      %v2802 = vrot.slane %v2337, 7
      %v2803 = vsel %vm2216, %v2797, %v2802
      %v2804 = vrot.slane %v2338, 7
      %v2805 = vsel %vm2216, %v2800, %v2804
      %v2806 = vrot.slane %v2339, 7
      %v2807 = vsel %vm2216, %v2802, %v2806
      %v2808 = vrot.slane %v2340, 7
      %v2809 = vsel %vm2216, %v2804, %v2808
      %v2824 = vrot.slane %v2372, 3
      %v2825 = vrot.slane %v2374, 3
      %v2826 = vsel %vm2093, %v2824, %v2825
      %v2827 = vrot.slane %v2373, 3
      %v2828 = vrot.slane %v2375, 3
      %v2829 = vsel %vm2093, %v2827, %v2828
      %v2830 = vrot.slane %v2376, 3
      %v2831 = vsel %vm2093, %v2825, %v2830
      %v2832 = vrot.slane %v2377, 3
      %v2833 = vsel %vm2093, %v2828, %v2832
      %v2834 = vrot.slane %v2378, 3
      %v2835 = vsel %vm2093, %v2830, %v2834
      %v2836 = vrot.slane %v2379, 3
      %v2837 = vsel %vm2093, %v2832, %v2836
      %v2852 = vrot.slane %v2388, 7
      %v2853 = vrot.slane %v2390, 7
      %v2854 = vsel %vm2216, %v2852, %v2853
      %v2855 = vrot.slane %v2389, 7
      %v2856 = vrot.slane %v2391, 7
      %v2857 = vsel %vm2216, %v2855, %v2856
      %v2858 = vrot.slane %v2392, 7
      %v2859 = vsel %vm2216, %v2853, %v2858
      %v2860 = vrot.slane %v2393, 7
      %v2861 = vsel %vm2216, %v2856, %v2860
      %v2862 = vrot.slane %v2394, 7
      %v2863 = vsel %vm2216, %v2858, %v2862
      %v2864 = vrot.slane %v2395, 7
      %v2865 = vsel %vm2216, %v2860, %v2864
      %v2880 = vrot.slane %v2426, 3
      %v2881 = vrot.slane %v2428, 3
      %v2882 = vsel %vm2093, %v2880, %v2881
      %v2883 = vrot.slane %v2427, 3
      %v2884 = vrot.slane %v2429, 3
      %v2885 = vsel %vm2093, %v2883, %v2884
      %v2886 = vrot.slane %v2430, 3
      %v2887 = vsel %vm2093, %v2881, %v2886
      %v2888 = vrot.slane %v2431, 3
      %v2889 = vsel %vm2093, %v2884, %v2888
      %v2890 = vrot.slane %v2432, 3
      %v2891 = vsel %vm2093, %v2886, %v2890
      %v2892 = vrot.slane %v2433, 3
      %v2893 = vsel %vm2093, %v2888, %v2892
      %v2906 = vrot.slane %v2512, 4
      %v2907 = vrot.slane %v2513, 4
      %v2908 = vrot.slane %v2514, 4
      %v2909 = vsel %vm2353, %v2906, %v2908
      %v2910 = vrot.slane %v2515, 4
      %v2911 = vsel %vm2353, %v2907, %v2910
      %v2912 = vrot.slane %v2516, 4
      %v2913 = vsel %vm2353, %v2908, %v2912
      %v2914 = vrot.slane %v2517, 4
      %v2915 = vsel %vm2353, %v2910, %v2914
      %v2928 = vrot.slane %v2532, 3
      %v2929 = vrot.slane %v2534, 3
      %v2930 = vsel %vm2093, %v2928, %v2929
      %v2931 = vrot.slane %v2533, 3
      %v2932 = vrot.slane %v2535, 3
      %v2933 = vsel %vm2093, %v2931, %v2932
      %v2934 = vrot.slane %v2536, 3
      %v2935 = vsel %vm2093, %v2929, %v2934
      %v2936 = vrot.slane %v2537, 3
      %v2937 = vsel %vm2093, %v2932, %v2936
      %v2950 = vrot.slane %v2580, 7
      %v2951 = vrot.slane %v2581, 7
      %v2952 = vrot.slane %v2582, 7
      %v2953 = vsel %vm2216, %v2950, %v2952
      %v2954 = vrot.slane %v2583, 7
      %v2955 = vsel %vm2216, %v2951, %v2954
      %v2956 = vrot.slane %v2584, 7
      %v2957 = vsel %vm2216, %v2952, %v2956
      %v2958 = vrot.slane %v2585, 7
      %v2959 = vsel %vm2216, %v2954, %v2958
      %v2972 = vrot.slane %v2600, 3
      %v2973 = vrot.slane %v2602, 3
      %v2974 = vsel %vm2093, %v2972, %v2973
      %v2975 = vrot.slane %v2601, 3
      %v2976 = vrot.slane %v2603, 3
      %v2977 = vsel %vm2093, %v2975, %v2976
      %v2978 = vrot.slane %v2604, 3
      %v2979 = vsel %vm2093, %v2973, %v2978
      %v2980 = vrot.slane %v2605, 3
      %v2981 = vsel %vm2093, %v2976, %v2980
      %v2994 = vrot.slane %v2648, 7
      %v2995 = vrot.slane %v2649, 7
      %v2996 = vrot.slane %v2650, 7
      %v2997 = vsel %vm2216, %v2994, %v2996
      %v2998 = vrot.slane %v2651, 7
      %v2999 = vsel %vm2216, %v2995, %v2998
      %v3000 = vrot.slane %v2652, 7
      %v3001 = vsel %vm2216, %v2996, %v3000
      %v3002 = vrot.slane %v2653, 7
      %v3003 = vsel %vm2216, %v2998, %v3002
      %v3016 = vrot.slane %v2690, 4
      %v3017 = vrot.slane %v2692, 4
      %v3018 = vsel %vm2353, %v3016, %v3017
      %v3019 = vrot.slane %v2691, 4
      %v3020 = vrot.slane %v2693, 4
      %v3021 = vsel %vm2353, %v3019, %v3020
      %v3022 = vrot.slane %v2694, 4
      %v3023 = vsel %vm2353, %v3017, %v3022
      %v3024 = vrot.slane %v2695, 4
      %v3025 = vsel %vm2353, %v3020, %v3024
      %v3032 = vsel %vm2353, %v2241, %v2750
      %v3033 = vsel %vm2353, %v2242, %v2751
      %v3034 = vsel %vm2353, %v2778, %v2311
      %v3035 = vsel %vm2353, %v2780, %v2312
      %v3036 = vsel %vm2353, %v2807, %v2826
      %v3037 = vsel %vm2353, %v2809, %v2829
      %v3038 = vsel %vm2353, %v2863, %v2882
      %v3039 = vsel %vm2353, %v2865, %v2885
      %v3040 = vsel %vm2353, %v2482, %v2906
      %v3041 = vsel %vm2353, %v2483, %v2907
      %v3042 = vsel %vm2353, %v2934, %v2950
      %v3043 = vsel %vm2353, %v2936, %v2951
      %v3044 = vsel %vm2353, %v2978, %v2994
      %v3045 = vsel %vm2353, %v2980, %v2995
      %v3046 = vsel %vm2353, %v3022, %v2738
      %v3047 = vsel %vm2353, %v3024, %v2739
      %v3048 = vld [vmem:[%s7] sm:$0xff]
      %v3049 = vld [vmem:[%s7 + $0x8] sm:$0xff]
      %v3050 = vld [vmem:[%s7 + $0x10] sm:$0xff]
      %v3051 = vld [vmem:[%s7 + $0x18] sm:$0xff]
      %v3052 = vld [vmem:[%s7 + $0x20] sm:$0xff]
      %v3053 = vld [vmem:[%s7 + $0x28] sm:$0xff]
      %v3054 = vld [vmem:[%s7 + $0x30] sm:$0xff]
      %v3055 = vld [vmem:[%s7 + $0x38] sm:$0xff]
      %v3056 = vld [vmem:[%s7 + $0x40] sm:$0xff]
      %v3057 = vld [vmem:[%s7 + $0x48] sm:$0xff]
      %v3058 = vld [vmem:[%s7 + $0x50] sm:$0xff]
      %v3059 = vld [vmem:[%s7 + $0x58] sm:$0xff]
      %v3060 = vld [vmem:[%s7 + $0x60] sm:$0xff]
      %v3061 = vld [vmem:[%s7 + $0x68] sm:$0xff]
      %v3062 = vld [vmem:[%s7 + $0x70] sm:$0xff]
      %v3063 = vld [vmem:[%s7 + $0x78] sm:$0xff]
      %v3064 = vld [vmem:[%s7 + $0x80] sm:$0xff]
      %v3065 = vld [vmem:[%s7 + $0x88] sm:$0xff]
      %v3066 = vld [vmem:[%s7 + $0x90] sm:$0xff]
      %v3067 = vld [vmem:[%s7 + $0x98] sm:$0xff]
      %v3068 = vld [vmem:[%s7 + $0xa0] sm:$0xff]
      %v3069 = vld [vmem:[%s7 + $0xa8] sm:$0xff]
      %v3070 = vld [vmem:[%s7 + $0xb0] sm:$0xff]
      %v3071 = vld [vmem:[%s7 + $0xb8] sm:$0xff]
      %v3072 = vld [vmem:[%s7 + $0xc0] sm:$0xff]
      %v3073 = vld [vmem:[%s7 + $0xc8] sm:$0xff]
      %v3074 = vld [vmem:[%s7 + $0xd0] sm:$0xff]
      %v3075 = vld [vmem:[%s7 + $0xd8] sm:$0xff]
      %v3076 = vld [vmem:[%s7 + $0xe0] sm:$0xff]
      %v3077 = vld [vmem:[%s7 + $0xe8] sm:$0xff]
      %v3078 = vld [vmem:[%s7 + $0xf0] sm:$0xff]
      %v3079 = vld [vmem:[%s7 + $0xf8] sm:$0xff]
      %v3080 = vld [vmem:[%s7 + $0x100] sm:$0xff]
      %v3081 = vld [vmem:[%s7 + $0x108] sm:$0xff]
      %v3082 = vld [vmem:[%s7 + $0x110] sm:$0xff]
      %v3083 = vld [vmem:[%s7 + $0x118] sm:$0xff]
      %v3084 = vld [vmem:[%s7 + $0x120] sm:$0xff]
      %v3085 = vld [vmem:[%s7 + $0x128] sm:$0xff]
      %v3086 = vld [vmem:[%s7 + $0x130] sm:$0xff]
      %v3087 = vld [vmem:[%s7 + $0x138] sm:$0xff]
      %3089 = vset.pattern.permute.xlu0 0
      %3090 = vperm.xlu0 %3089, %v3048
      %v3091 = vpop.permute.xlu0 %3090
      %3094 = vset.pattern.permute.xlu0 0
      %3095 = vperm.xlu0 %3094, %v3049
      %v3096 = vpop.permute.xlu0 %3095
      %3099 = vset.pattern.permute.xlu0 0
      %3100 = vperm.xlu0 %3099, %v3050
      %v3101 = vpop.permute.xlu0 %3100
      %3104 = vset.pattern.permute.xlu0 0
      %3105 = vperm.xlu0 %3104, %v3051
      %v3106 = vpop.permute.xlu0 %3105
      %3109 = vset.pattern.permute.xlu0 0
      %3110 = vperm.xlu0 %3109, %v3052
      %v3111 = vpop.permute.xlu0 %3110
      %3114 = vset.pattern.permute.xlu0 0
      %3115 = vperm.xlu0 %3114, %v3053
      %v3116 = vpop.permute.xlu0 %3115
      %3119 = vset.pattern.permute.xlu0 0
      %3120 = vperm.xlu0 %3119, %v3054
      %v3121 = vpop.permute.xlu0 %3120
      %3124 = vset.pattern.permute.xlu0 0
      %3125 = vperm.xlu0 %3124, %v3055
      %v3126 = vpop.permute.xlu0 %3125
      %3129 = vset.pattern.permute.xlu0 0
      %3130 = vperm.xlu0 %3129, %v3056
      %v3131 = vpop.permute.xlu0 %3130
      %3134 = vset.pattern.permute.xlu0 0
      %3135 = vperm.xlu0 %3134, %v3057
      %v3136 = vpop.permute.xlu0 %3135
      %3139 = vset.pattern.permute.xlu0 0
      %3140 = vperm.xlu0 %3139, %v3058
      %v3141 = vpop.permute.xlu0 %3140
      %3144 = vset.pattern.permute.xlu0 0
      %3145 = vperm.xlu0 %3144, %v3059
      %v3146 = vpop.permute.xlu0 %3145
      %3149 = vset.pattern.permute.xlu0 0
      %3150 = vperm.xlu0 %3149, %v3060
      %v3151 = vpop.permute.xlu0 %3150
      %3154 = vset.pattern.permute.xlu0 0
      %3155 = vperm.xlu0 %3154, %v3061
      %v3156 = vpop.permute.xlu0 %3155
      %3159 = vset.pattern.permute.xlu0 0
      %3160 = vperm.xlu0 %3159, %v3062
      %v3161 = vpop.permute.xlu0 %3160
      %3164 = vset.pattern.permute.xlu0 0
      %3165 = vperm.xlu0 %3164, %v3063
      %v3166 = vpop.permute.xlu0 %3165
      %3169 = vset.pattern.permute.xlu0 0
      %3170 = vperm.xlu0 %3169, %v3064
      %v3171 = vpop.permute.xlu0 %3170
      %3174 = vset.pattern.permute.xlu0 0
      %3175 = vperm.xlu0 %3174, %v3065
      %v3176 = vpop.permute.xlu0 %3175
      %3179 = vset.pattern.permute.xlu0 0
      %3180 = vperm.xlu0 %3179, %v3066
      %v3181 = vpop.permute.xlu0 %3180
      %3184 = vset.pattern.permute.xlu0 0
      %3185 = vperm.xlu0 %3184, %v3067
      %v3186 = vpop.permute.xlu0 %3185
      %3189 = vset.pattern.permute.xlu0 0
      %3190 = vperm.xlu0 %3189, %v3068
      %v3191 = vpop.permute.xlu0 %3190
      %3194 = vset.pattern.permute.xlu0 0
      %3195 = vperm.xlu0 %3194, %v3069
      %v3196 = vpop.permute.xlu0 %3195
      %3199 = vset.pattern.permute.xlu0 0
      %3200 = vperm.xlu0 %3199, %v3070
      %v3201 = vpop.permute.xlu0 %3200
      %3204 = vset.pattern.permute.xlu0 0
      %3205 = vperm.xlu0 %3204, %v3071
      %v3206 = vpop.permute.xlu0 %3205
      %3209 = vset.pattern.permute.xlu0 0
      %3210 = vperm.xlu0 %3209, %v3072
      %v3211 = vpop.permute.xlu0 %3210
      %3214 = vset.pattern.permute.xlu0 0
      %3215 = vperm.xlu0 %3214, %v3073
      %v3216 = vpop.permute.xlu0 %3215
      %3219 = vset.pattern.permute.xlu0 0
      %3220 = vperm.xlu0 %3219, %v3074
      %v3221 = vpop.permute.xlu0 %3220
      %3224 = vset.pattern.permute.xlu0 0
      %3225 = vperm.xlu0 %3224, %v3075
      %v3226 = vpop.permute.xlu0 %3225
      %3229 = vset.pattern.permute.xlu0 0
      %3230 = vperm.xlu0 %3229, %v3076
      %v3231 = vpop.permute.xlu0 %3230
      %3234 = vset.pattern.permute.xlu0 0
      %3235 = vperm.xlu0 %3234, %v3077
      %v3236 = vpop.permute.xlu0 %3235
      %3239 = vset.pattern.permute.xlu0 0
      %3240 = vperm.xlu0 %3239, %v3078
      %v3241 = vpop.permute.xlu0 %3240
      %3244 = vset.pattern.permute.xlu0 0
      %3245 = vperm.xlu0 %3244, %v3079
      %v3246 = vpop.permute.xlu0 %3245
      %3249 = vset.pattern.permute.xlu0 0
      %3250 = vperm.xlu0 %3249, %v3080
      %v3251 = vpop.permute.xlu0 %3250
      %3254 = vset.pattern.permute.xlu0 0
      %3255 = vperm.xlu0 %3254, %v3081
      %v3256 = vpop.permute.xlu0 %3255
      %3259 = vset.pattern.permute.xlu0 0
      %3260 = vperm.xlu0 %3259, %v3082
      %v3261 = vpop.permute.xlu0 %3260
      %3264 = vset.pattern.permute.xlu0 0
      %3265 = vperm.xlu0 %3264, %v3083
      %v3266 = vpop.permute.xlu0 %3265
      %3269 = vset.pattern.permute.xlu0 0
      %3270 = vperm.xlu0 %3269, %v3084
      %v3271 = vpop.permute.xlu0 %3270
      %3274 = vset.pattern.permute.xlu0 0
      %3275 = vperm.xlu0 %3274, %v3085
      %v3276 = vpop.permute.xlu0 %3275
      %3279 = vset.pattern.permute.xlu0 0
      %3280 = vperm.xlu0 %3279, %v3086
      %v3281 = vpop.permute.xlu0 %3280
      %3284 = vset.pattern.permute.xlu0 0
      %3285 = vperm.xlu0 %3284, %v3087
      %v3286 = vpop.permute.xlu0 %3285
      %v3288 = vadd.f32 %v2237, %v3091
      %v3289 = vadd.f32 %v2238, %v3091
      %v3290 = vadd.f32 %v2239, %v3096
      %v3291 = vadd.f32 %v2240, %v3096
      %v3292 = vadd.f32 %v3032, %v3101
      %v3293 = vadd.f32 %v3033, %v3101
      %v3294 = vadd.f32 %v2753, %v3106
      %v3295 = vadd.f32 %v2755, %v3106
      %v3296 = vadd.f32 %v2757, %v3111
      %v3297 = vadd.f32 %v2759, %v3111
      %v3298 = vadd.f32 %v2774, %v3116
      %v3299 = vadd.f32 %v2777, %v3116
      %v3300 = vadd.f32 %v2779, %v3121
      %v3301 = vadd.f32 %v2781, %v3121
      %v3302 = vadd.f32 %v3034, %v3126
      %v3303 = vadd.f32 %v3035, %v3126
      %v3304 = vadd.f32 %v2313, %v3131
      %v3305 = vadd.f32 %v2314, %v3131
      %v3306 = vadd.f32 %v2315, %v3136
      %v3307 = vadd.f32 %v2316, %v3136
      %v3308 = vadd.f32 %v2798, %v3141
      %v3309 = vadd.f32 %v2801, %v3141
      %v3310 = vadd.f32 %v2803, %v3146
      %v3311 = vadd.f32 %v2805, %v3146
      %v3312 = vadd.f32 %v3036, %v3151
      %v3313 = vadd.f32 %v3037, %v3151
      %v3314 = vadd.f32 %v2831, %v3156
      %v3315 = vadd.f32 %v2833, %v3156
      %v3316 = vadd.f32 %v2835, %v3161
      %v3317 = vadd.f32 %v2837, %v3161
      %v3318 = vadd.f32 %v2854, %v3166
      %v3319 = vadd.f32 %v2857, %v3166
      %v3320 = vadd.f32 %v2859, %v3171
      %v3321 = vadd.f32 %v2861, %v3171
      %v3322 = vadd.f32 %v3038, %v3176
      %v3323 = vadd.f32 %v3039, %v3176
      %v3324 = vadd.f32 %v2887, %v3181
      %v3325 = vadd.f32 %v2889, %v3181
      %v3326 = vadd.f32 %v2891, %v3186
      %v3327 = vadd.f32 %v2893, %v3186
      %v3328 = vadd.f32 %v2478, %v3191
      %v3329 = vadd.f32 %v2479, %v3191
      %v3330 = vadd.f32 %v2480, %v3196
      %v3331 = vadd.f32 %v2481, %v3196
      %v3332 = vadd.f32 %v3040, %v3201
      %v3333 = vadd.f32 %v3041, %v3201
      %v3334 = vadd.f32 %v2909, %v3206
      %v3335 = vadd.f32 %v2911, %v3206
      %v3336 = vadd.f32 %v2913, %v3211
      %v3337 = vadd.f32 %v2915, %v3211
      %v3338 = vadd.f32 %v2930, %v3216
      %v3339 = vadd.f32 %v2933, %v3216
      %v3340 = vadd.f32 %v2935, %v3221
      %v3341 = vadd.f32 %v2937, %v3221
      %v3342 = vadd.f32 %v3042, %v3226
      %v3343 = vadd.f32 %v3043, %v3226
      %v3344 = vadd.f32 %v2953, %v3231
      %v3345 = vadd.f32 %v2955, %v3231
      %v3346 = vadd.f32 %v2957, %v3236
      %v3347 = vadd.f32 %v2959, %v3236
      %v3348 = vadd.f32 %v2974, %v3241
      %v3349 = vadd.f32 %v2977, %v3241
      %v3350 = vadd.f32 %v2979, %v3246
      %v3351 = vadd.f32 %v2981, %v3246
      %v3352 = vadd.f32 %v3044, %v3251
      %v3353 = vadd.f32 %v3045, %v3251
      %v3354 = vadd.f32 %v2997, %v3256
      %v3355 = vadd.f32 %v2999, %v3256
      %v3356 = vadd.f32 %v3001, %v3261
      %v3357 = vadd.f32 %v3003, %v3261
      %v3358 = vadd.f32 %v3018, %v3266
      %v3359 = vadd.f32 %v3021, %v3266
      %v3360 = vadd.f32 %v3023, %v3271
      %v3361 = vadd.f32 %v3025, %v3271
      %v3362 = vadd.f32 %v3046, %v3276
      %v3363 = vadd.f32 %v3047, %v3276
      %v3364 = vadd.f32 %v2740, %v3281
      %v3365 = vadd.f32 %v2741, %v3281
      %v3366 = vadd.f32 %v2742, %v3286
      %v3367 = vadd.f32 %v2743, %v3286
      %v3368 = vmax.f32 %v3288, 0.0
      %v3369 = vmax.f32 %v3289, 0.0
      %v3370 = vmax.f32 %v3290, 0.0
      %v3371 = vmax.f32 %v3291, 0.0
      %v3372 = vmax.f32 %v3292, 0.0
      %v3373 = vmax.f32 %v3293, 0.0
      %v3374 = vmax.f32 %v3294, 0.0
      %v3375 = vmax.f32 %v3295, 0.0
      %v3376 = vmax.f32 %v3296, 0.0
      %v3377 = vmax.f32 %v3297, 0.0
      %v3378 = vmax.f32 %v3298, 0.0
      %v3379 = vmax.f32 %v3299, 0.0
      %v3380 = vmax.f32 %v3300, 0.0
      %v3381 = vmax.f32 %v3301, 0.0
      %v3382 = vmax.f32 %v3302, 0.0
      %v3383 = vmax.f32 %v3303, 0.0
      %v3384 = vmax.f32 %v3304, 0.0
      %v3385 = vmax.f32 %v3305, 0.0
      %v3386 = vmax.f32 %v3306, 0.0
      %v3387 = vmax.f32 %v3307, 0.0
      %v3388 = vmax.f32 %v3308, 0.0
      %v3389 = vmax.f32 %v3309, 0.0
      %v3390 = vmax.f32 %v3310, 0.0
      %v3391 = vmax.f32 %v3311, 0.0
      %v3392 = vmax.f32 %v3312, 0.0
      %v3393 = vmax.f32 %v3313, 0.0
      %v3394 = vmax.f32 %v3314, 0.0
      %v3395 = vmax.f32 %v3315, 0.0
      %v3396 = vmax.f32 %v3316, 0.0
      %v3397 = vmax.f32 %v3317, 0.0
      %v3398 = vmax.f32 %v3318, 0.0
      %v3399 = vmax.f32 %v3319, 0.0
      %v3400 = vmax.f32 %v3320, 0.0
      %v3401 = vmax.f32 %v3321, 0.0
      %v3402 = vmax.f32 %v3322, 0.0
      %v3403 = vmax.f32 %v3323, 0.0
      %v3404 = vmax.f32 %v3324, 0.0
      %v3405 = vmax.f32 %v3325, 0.0
      %v3406 = vmax.f32 %v3326, 0.0
      %v3407 = vmax.f32 %v3327, 0.0
      %v3408 = vmax.f32 %v3328, 0.0
      %v3409 = vmax.f32 %v3329, 0.0
      %v3410 = vmax.f32 %v3330, 0.0
      %v3411 = vmax.f32 %v3331, 0.0
      %v3412 = vmax.f32 %v3332, 0.0
      %v3413 = vmax.f32 %v3333, 0.0
      %v3414 = vmax.f32 %v3334, 0.0
      %v3415 = vmax.f32 %v3335, 0.0
      %v3416 = vmax.f32 %v3336, 0.0
      %v3417 = vmax.f32 %v3337, 0.0
      %v3418 = vmax.f32 %v3338, 0.0
      %v3419 = vmax.f32 %v3339, 0.0
      %v3420 = vmax.f32 %v3340, 0.0
      %v3421 = vmax.f32 %v3341, 0.0
      %v3422 = vmax.f32 %v3342, 0.0
      %v3423 = vmax.f32 %v3343, 0.0
      %v3424 = vmax.f32 %v3344, 0.0
      %v3425 = vmax.f32 %v3345, 0.0
      %v3426 = vmax.f32 %v3346, 0.0
      %v3427 = vmax.f32 %v3347, 0.0
      %v3428 = vmax.f32 %v3348, 0.0
      %v3429 = vmax.f32 %v3349, 0.0
      %v3430 = vmax.f32 %v3350, 0.0
      %v3431 = vmax.f32 %v3351, 0.0
      %v3432 = vmax.f32 %v3352, 0.0
      %v3433 = vmax.f32 %v3353, 0.0
      %v3434 = vmax.f32 %v3354, 0.0
      %v3435 = vmax.f32 %v3355, 0.0
      %v3436 = vmax.f32 %v3356, 0.0
      %v3437 = vmax.f32 %v3357, 0.0
      %v3438 = vmax.f32 %v3358, 0.0
      %v3439 = vmax.f32 %v3359, 0.0
      %v3440 = vmax.f32 %v3360, 0.0
      %v3441 = vmax.f32 %v3361, 0.0
      %v3442 = vmax.f32 %v3362, 0.0
      %v3443 = vmax.f32 %v3363, 0.0
      %v3444 = vmax.f32 %v3364, 0.0
      %v3445 = vmax.f32 %v3365, 0.0
      %v3446 = vmax.f32 %v3366, 0.0
      %v3447 = vmax.f32 %v3367, 0.0
      %v3448 = vld [vmem:[%s4] sm:$0xff]
      %v3449 = vld [vmem:[%s4 + $0x8] sm:$0xff]
      %v3450 = vld [vmem:[%s4 + $0x10] sm:$0xff]
      %v3451 = vld [vmem:[%s4 + $0x18] sm:$0xff]
      %v3452 = vld [vmem:[%s4 + $0x20] sm:$0xff]
      %v3453 = vld [vmem:[%s4 + $0x28] sm:$0xff]
      %v3454 = vld [vmem:[%s4 + $0x30] sm:$0xff]
      %v3455 = vld [vmem:[%s4 + $0x38] sm:$0xff]
      %v3456 = vld [vmem:[%s4 + $0x40] sm:$0xff]
      %v3457 = vld [vmem:[%s4 + $0x48] sm:$0xff]
      %v3458 = vld [vmem:[%s4 + $0x50] sm:$0xff]
      %v3459 = vld [vmem:[%s4 + $0x58] sm:$0xff]
      %v3460 = vld [vmem:[%s4 + $0x60] sm:$0xff]
      %v3461 = vld [vmem:[%s4 + $0x68] sm:$0xff]
      %v3462 = vld [vmem:[%s4 + $0x70] sm:$0xff]
      %v3463 = vld [vmem:[%s4 + $0x78] sm:$0xff]
      %v3464 = vld [vmem:[%s4 + $0x80] sm:$0xff]
      %v3465 = vld [vmem:[%s4 + $0x88] sm:$0xff]
      %v3466 = vld [vmem:[%s4 + $0x90] sm:$0xff]
      %v3467 = vld [vmem:[%s4 + $0x98] sm:$0xff]
      %v3468 = vld [vmem:[%s4 + $0xa0] sm:$0xff]
      %v3469 = vld [vmem:[%s4 + $0xa8] sm:$0xff]
      %v3470 = vld [vmem:[%s4 + $0xb0] sm:$0xff]
      %v3471 = vld [vmem:[%s4 + $0xb8] sm:$0xff]
      %v3472 = vld [vmem:[%s4 + $0xc0] sm:$0xff]
      %v3473 = vld [vmem:[%s4 + $0xc8] sm:$0xff]
      %v3474 = vld [vmem:[%s4 + $0xd0] sm:$0xff]
      %v3475 = vld [vmem:[%s4 + $0xd8] sm:$0xff]
      %v3476 = vld [vmem:[%s4 + $0xe0] sm:$0xff]
      %v3477 = vld [vmem:[%s4 + $0xe8] sm:$0xff]
      %v3478 = vld [vmem:[%s4 + $0xf0] sm:$0xff]
      %v3479 = vld [vmem:[%s4 + $0xf8] sm:$0xff]
      %v3480 = vld [vmem:[%s4 + $0x100] sm:$0xff]
      %v3481 = vld [vmem:[%s4 + $0x108] sm:$0xff]
      %v3482 = vld [vmem:[%s4 + $0x110] sm:$0xff]
      %v3483 = vld [vmem:[%s4 + $0x118] sm:$0xff]
      %v3484 = vld [vmem:[%s4 + $0x120] sm:$0xff]
      %v3485 = vld [vmem:[%s4 + $0x128] sm:$0xff]
      %v3486 = vld [vmem:[%s4 + $0x130] sm:$0xff]
      %v3487 = vld [vmem:[%s4 + $0x138] sm:$0xff]
      %v3488 = vld [vmem:[%s4 + $0x140] sm:$0xff]
      %v3489 = vld [vmem:[%s4 + $0x148] sm:$0xff]
      %v3490 = vld [vmem:[%s4 + $0x150] sm:$0xff]
      %v3491 = vld [vmem:[%s4 + $0x158] sm:$0xff]
      %v3492 = vld [vmem:[%s4 + $0x160] sm:$0xff]
      %v3493 = vld [vmem:[%s4 + $0x168] sm:$0xff]
      %v3494 = vld [vmem:[%s4 + $0x170] sm:$0xff]
      %v3495 = vld [vmem:[%s4 + $0x178] sm:$0xff]
      %v3496 = vld [vmem:[%s4 + $0x180] sm:$0xff]
      %v3497 = vld [vmem:[%s4 + $0x188] sm:$0xff]
      %v3498 = vld [vmem:[%s4 + $0x190] sm:$0xff]
      %v3499 = vld [vmem:[%s4 + $0x198] sm:$0xff]
      %v3500 = vld [vmem:[%s4 + $0x1a0] sm:$0xff]
      %v3501 = vld [vmem:[%s4 + $0x1a8] sm:$0xff]
      %v3502 = vld [vmem:[%s4 + $0x1b0] sm:$0xff]
      %v3503 = vld [vmem:[%s4 + $0x1b8] sm:$0xff]
      %v3504 = vld [vmem:[%s4 + $0x1c0] sm:$0xff]
      %v3505 = vld [vmem:[%s4 + $0x1c8] sm:$0xff]
      %v3506 = vld [vmem:[%s4 + $0x1d0] sm:$0xff]
      %v3507 = vld [vmem:[%s4 + $0x1d8] sm:$0xff]
      %v3508 = vld [vmem:[%s8] sm:$0xff]
      %v3509 = vld [vmem:[%s8 + $0x8] sm:$0xff]
      %v3510 = vld [vmem:[%s8 + $0x10] sm:$0xff]
      %v3511 = vld [vmem:[%s8 + $0x18] sm:$0xff]
      %v3512 = vld [vmem:[%s8 + $0x20] sm:$0xff]
      %v3513 = vld [vmem:[%s8 + $0x28] sm:$0xff]
      %v3514 = vld [vmem:[%s8 + $0x30] sm:$0xff]
      %v3515 = vld [vmem:[%s8 + $0x38] sm:$0xff]
      %v3516 = vld [vmem:[%s8 + $0x40] sm:$0xff]
      %v3517 = vld [vmem:[%s8 + $0x48] sm:$0xff]
      %v3518 = vld [vmem:[%s8 + $0x50] sm:$0xff]
      %v3519 = vld [vmem:[%s8 + $0x58] sm:$0xff]
      %v3520 = vld [vmem:[%s8 + $0x60] sm:$0xff]
      %v3521 = vld [vmem:[%s8 + $0x68] sm:$0xff]
      %v3522 = vld [vmem:[%s8 + $0x70] sm:$0xff]
      %v3523 = vld [vmem:[%s8 + $0x78] sm:$0xff]
      %v3524 = vld [vmem:[%s8 + $0x80] sm:$0xff]
      %v3525 = vld [vmem:[%s8 + $0x88] sm:$0xff]
      %v3526 = vld [vmem:[%s8 + $0x90] sm:$0xff]
      %v3527 = vld [vmem:[%s8 + $0x98] sm:$0xff]
      %3529 = vset.pattern.permute.xlu0 0
      %3530 = vperm.xlu0 %3529, %v3508
      %v3531 = vpop.permute.xlu0 %3530
      %3534 = vset.pattern.permute.xlu0 0
      %3535 = vperm.xlu0 %3534, %v3509
      %v3536 = vpop.permute.xlu0 %3535
      %3539 = vset.pattern.permute.xlu0 0
      %3540 = vperm.xlu0 %3539, %v3510
      %v3541 = vpop.permute.xlu0 %3540
      %3544 = vset.pattern.permute.xlu0 0
      %3545 = vperm.xlu0 %3544, %v3511
      %v3546 = vpop.permute.xlu0 %3545
      %3549 = vset.pattern.permute.xlu0 0
      %3550 = vperm.xlu0 %3549, %v3512
      %v3551 = vpop.permute.xlu0 %3550
      %3554 = vset.pattern.permute.xlu0 0
      %3555 = vperm.xlu0 %3554, %v3513
      %v3556 = vpop.permute.xlu0 %3555
      %3559 = vset.pattern.permute.xlu0 0
      %3560 = vperm.xlu0 %3559, %v3514
      %v3561 = vpop.permute.xlu0 %3560
      %3564 = vset.pattern.permute.xlu0 0
      %3565 = vperm.xlu0 %3564, %v3515
      %v3566 = vpop.permute.xlu0 %3565
      %3569 = vset.pattern.permute.xlu0 0
      %3570 = vperm.xlu0 %3569, %v3516
      %v3571 = vpop.permute.xlu0 %3570
      %3574 = vset.pattern.permute.xlu0 0
      %3575 = vperm.xlu0 %3574, %v3517
      %v3576 = vpop.permute.xlu0 %3575
      %3579 = vset.pattern.permute.xlu0 0
      %3580 = vperm.xlu0 %3579, %v3518
      %v3581 = vpop.permute.xlu0 %3580
      %3584 = vset.pattern.permute.xlu0 0
      %3585 = vperm.xlu0 %3584, %v3519
      %v3586 = vpop.permute.xlu0 %3585
      %3589 = vset.pattern.permute.xlu0 0
      %3590 = vperm.xlu0 %3589, %v3520
      %v3591 = vpop.permute.xlu0 %3590
      %3594 = vset.pattern.permute.xlu0 0
      %3595 = vperm.xlu0 %3594, %v3521
      %v3596 = vpop.permute.xlu0 %3595
      %3599 = vset.pattern.permute.xlu0 0
      %3600 = vperm.xlu0 %3599, %v3522
      %v3601 = vpop.permute.xlu0 %3600
      %3604 = vset.pattern.permute.xlu0 0
      %3605 = vperm.xlu0 %3604, %v3523
      %v3606 = vpop.permute.xlu0 %3605
      %3609 = vset.pattern.permute.xlu0 0
      %3610 = vperm.xlu0 %3609, %v3524
      %v3611 = vpop.permute.xlu0 %3610
      %3614 = vset.pattern.permute.xlu0 0
      %3615 = vperm.xlu0 %3614, %v3525
      %v3616 = vpop.permute.xlu0 %3615
      %3619 = vset.pattern.permute.xlu0 0
      %3620 = vperm.xlu0 %3619, %v3526
      %v3621 = vpop.permute.xlu0 %3620
      %3624 = vset.pattern.permute.xlu0 0
      %3625 = vperm.xlu0 %3624, %v3527
      %v3626 = vpop.permute.xlu0 %3625
      %vm3628 = vcmask 523264
      %v3630 = vsel %vm3628, %v3450, 0
      %v3633 = vsel %vm3628, %v3453, 0
      %v3636 = vsel %vm3628, %v3456, 0
      %v3639 = vsel %vm3628, %v3459, 0
      %v3642 = vsel %vm3628, %v3462, 0
      %v3645 = vsel %vm3628, %v3465, 0
      %v3648 = vsel %vm3628, %v3468, 0
      %v3651 = vsel %vm3628, %v3471, 0
      %v3654 = vsel %vm3628, %v3474, 0
      %v3657 = vsel %vm3628, %v3477, 0
      %v3660 = vsel %vm3628, %v3480, 0
      %v3663 = vsel %vm3628, %v3483, 0
      %v3666 = vsel %vm3628, %v3486, 0
      %v3669 = vsel %vm3628, %v3489, 0
      %v3672 = vsel %vm3628, %v3492, 0
      %v3675 = vsel %vm3628, %v3495, 0
      %v3678 = vsel %vm3628, %v3498, 0
      %v3681 = vsel %vm3628, %v3501, 0
      %v3684 = vsel %vm3628, %v3504, 0
      %v3687 = vsel %vm3628, %v3507, 0
      %3689 = vmatprep.subr.mxu0 %v3369
      %3690 = vmatpush1.msra.mxu0 %v3368
      %3691 = vmatprep.subr.mxu0 %v3371
      %3692 = vmatpush1.msra.mxu0 %v3370
      %3693 = vmatprep.subr.mxu0 %v3373
      %3694 = vmatpush1.msra.mxu0 %v3372
      %3695 = vmatprep.subr.mxu0 %v3375
      %3696 = vmatpush1.msra.mxu0 %v3374
      %3697 = vmatprep.subr.mxu0 %v3377
      %3698 = vmatpush1.msra.mxu0 %v3376
      %3699 = vmatprep.subr.mxu0 %v3379
      %3700 = vmatpush1.msra.mxu0 %v3378
      %3701 = vmatprep.subr.mxu0 %v3381
      %3702 = vmatpush1.msra.mxu0 %v3380
      %3703 = vmatprep.subr.mxu0 %v3383
      %3704 = vmatpush1.msra.mxu0 %v3382
      %3705 = vmatprep.subr.mxu0 %v3385
      %3706 = vmatpush1.msra.mxu0 %v3384
      %3707 = vmatprep.subr.mxu0 %v3387
      %3708 = vmatpush1.msra.mxu0 %v3386
      %3709 = vmatprep.subr.mxu0 %v3389
      %3710 = vmatpush1.msra.mxu0 %v3388
      %3711 = vmatprep.subr.mxu0 %v3391
      %3712 = vmatpush1.msra.mxu0 %v3390
      %3713 = vmatprep.subr.mxu0 %v3393
      %3714 = vmatpush1.msra.mxu0 %v3392
      %3715 = vmatprep.subr.mxu0 %v3395
      %3716 = vmatpush1.msra.mxu0 %v3394
      %3717 = vmatprep.subr.mxu0 %v3397
      %3718 = vmatpush1.msra.mxu0 %v3396
      %3719 = vmatprep.subr.mxu0 %v3399
      %3720 = vmatpush1.msra.mxu0 %v3398
      %3721 = vmatprep.subr.mxu0 %v3401
      %3722 = vmatpush1.msra.mxu0 %v3400
      %3723 = vmatprep.subr.mxu0 %v3403
      %3724 = vmatpush1.msra.mxu0 %v3402
      %3725 = vmatprep.subr.mxu0 %v3405
      %3726 = vmatpush1.msra.mxu0 %v3404
      %3727 = vmatprep.subr.mxu0 %v3407
      %3728 = vmatpush1.msra.mxu0 %v3406
      %3729 = vmatprep.subr.mxu0 %v3409
      %3730 = vmatpush1.msra.mxu0 %v3408
      %3731 = vmatprep.subr.mxu0 %v3411
      %3732 = vmatpush1.msra.mxu0 %v3410
      %3733 = vmatprep.subr.mxu0 %v3413
      %3734 = vmatpush1.msra.mxu0 %v3412
      %3735 = vmatprep.subr.mxu0 %v3415
      %3736 = vmatpush1.msra.mxu0 %v3414
      %3737 = vmatprep.subr.mxu0 %v3417
      %3738 = vmatpush1.msra.mxu0 %v3416
      %3739 = vmatprep.subr.mxu0 %v3419
      %3740 = vmatpush1.msra.mxu0 %v3418
      %3741 = vmatprep.subr.mxu0 %v3421
      %3742 = vmatpush1.msra.mxu0 %v3420
      %3743 = vmatprep.subr.mxu0 %v3423
      %3744 = vmatpush1.msra.mxu0 %v3422
      %3745 = vmatprep.subr.mxu0 %v3425
      %3746 = vmatpush1.msra.mxu0 %v3424
      %3747 = vmatprep.subr.mxu0 %v3427
      %3748 = vmatpush1.msra.mxu0 %v3426
      %3749 = vmatprep.subr.mxu0 %v3429
      %3750 = vmatpush1.msra.mxu0 %v3428
      %3751 = vmatprep.subr.mxu0 %v3431
      %3752 = vmatpush1.msra.mxu0 %v3430
      %3753 = vmatprep.mubr.f32.mxu0 %v3449
      %3754 = vmatmul.mubr.f32.gmra.mrb[0].mxu0 %v3448
      %v3755 = vpop.f32.mrb[0].mxu0
      %v3756 = vadd.f32 %v3531, %v3755
      %v3757 = vpop.f32.mrb[0].mxu0
      %v3758 = vadd.f32 %v3531, %v3757
      %3759 = vmatprep.mubr.f32.mxu0 %v3452
      %3760 = vmatmul.mubr.f32.gmra.mrb[0].mxu0 %v3451
      %v3761 = vpop.f32.mrb[0].mxu0
      %v3762 = vadd.f32 %v3536, %v3761
      %v3763 = vpop.f32.mrb[0].mxu0
      %v3764 = vadd.f32 %v3536, %v3763
      %3765 = vmatprep.mubr.f32.mxu0 %v3455
      %3766 = vmatmul.mubr.f32.gmra.mrb[0].mxu0 %v3454
      %v3767 = vpop.f32.mrb[0].mxu0
      %v3768 = vadd.f32 %v3541, %v3767
      %v3769 = vpop.f32.mrb[0].mxu0
      %v3770 = vadd.f32 %v3541, %v3769
      %3771 = vmatprep.mubr.f32.mxu0 %v3458
      %3772 = vmatmul.mubr.f32.gmra.mrb[0].mxu0 %v3457
      %v3773 = vpop.f32.mrb[0].mxu0
      %v3774 = vadd.f32 %v3546, %v3773
      %v3775 = vpop.f32.mrb[0].mxu0
      %v3776 = vadd.f32 %v3546, %v3775
      %3777 = vmatprep.mubr.f32.mxu0 %v3461
      %3778 = vmatmul.mubr.f32.gmra.mrb[0].mxu0 %v3460
      %v3779 = vpop.f32.mrb[0].mxu0
      %v3780 = vadd.f32 %v3551, %v3779
      %v3781 = vpop.f32.mrb[0].mxu0
      %v3782 = vadd.f32 %v3551, %v3781
      %3783 = vmatprep.mubr.f32.mxu0 %v3464
      %3784 = vmatmul.mubr.f32.gmra.mrb[0].mxu0 %v3463
      %v3785 = vpop.f32.mrb[0].mxu0
      %v3786 = vadd.f32 %v3556, %v3785
      %v3787 = vpop.f32.mrb[0].mxu0
      %v3788 = vadd.f32 %v3556, %v3787
      %3789 = vmatprep.mubr.f32.mxu0 %v3467
      %3790 = vmatmul.mubr.f32.gmra.mrb[0].mxu0 %v3466
      %v3791 = vpop.f32.mrb[0].mxu0
      %v3792 = vadd.f32 %v3561, %v3791
      %v3793 = vpop.f32.mrb[0].mxu0
      %v3794 = vadd.f32 %v3561, %v3793
      %3795 = vmatprep.mubr.f32.mxu0 %v3470
      %3796 = vmatmul.mubr.f32.gmra.mrb[0].mxu0 %v3469
      %v3797 = vpop.f32.mrb[0].mxu0
      %v3798 = vadd.f32 %v3566, %v3797
      %v3799 = vpop.f32.mrb[0].mxu0
      %v3800 = vadd.f32 %v3566, %v3799
      %3801 = vmatprep.mubr.f32.mxu0 %v3473
      %3802 = vmatmul.mubr.f32.gmra.mrb[0].mxu0 %v3472
      %v3803 = vpop.f32.mrb[0].mxu0
      %v3804 = vadd.f32 %v3571, %v3803
      %v3805 = vpop.f32.mrb[0].mxu0
      %v3806 = vadd.f32 %v3571, %v3805
      %3807 = vmatprep.mubr.f32.mxu0 %v3476
      %3808 = vmatmul.mubr.f32.gmra.mrb[0].mxu0 %v3475
      %v3809 = vpop.f32.mrb[0].mxu0
      %v3810 = vadd.f32 %v3576, %v3809
      %v3811 = vpop.f32.mrb[0].mxu0
      %v3812 = vadd.f32 %v3576, %v3811
      %3813 = vmatprep.mubr.f32.mxu0 %v3479
      %3814 = vmatmul.mubr.f32.gmra.mrb[0].mxu0 %v3478
      %v3815 = vpop.f32.mrb[0].mxu0
      %v3816 = vadd.f32 %v3581, %v3815
      %v3817 = vpop.f32.mrb[0].mxu0
      %v3818 = vadd.f32 %v3581, %v3817
      %3819 = vmatprep.mubr.f32.mxu0 %v3482
      %3820 = vmatmul.mubr.f32.gmra.mrb[0].mxu0 %v3481
      %v3821 = vpop.f32.mrb[0].mxu0
      %v3822 = vadd.f32 %v3586, %v3821
      %v3823 = vpop.f32.mrb[0].mxu0
      %v3824 = vadd.f32 %v3586, %v3823
      %3825 = vmatprep.mubr.f32.mxu0 %v3485
      %3826 = vmatmul.mubr.f32.gmra.mrb[0].mxu0 %v3484
      %v3827 = vpop.f32.mrb[0].mxu0
      %v3828 = vadd.f32 %v3591, %v3827
      %v3829 = vpop.f32.mrb[0].mxu0
      %v3830 = vadd.f32 %v3591, %v3829
      %3831 = vmatprep.mubr.f32.mxu0 %v3488
      %3832 = vmatmul.mubr.f32.gmra.mrb[0].mxu0 %v3487
      %v3833 = vpop.f32.mrb[0].mxu0
      %v3834 = vadd.f32 %v3596, %v3833
      %v3835 = vpop.f32.mrb[0].mxu0
      %v3836 = vadd.f32 %v3596, %v3835
      %3837 = vmatprep.mubr.f32.mxu0 %v3491
      %3838 = vmatmul.mubr.f32.gmra.mrb[0].mxu0 %v3490
      %v3839 = vpop.f32.mrb[0].mxu0
      %v3840 = vadd.f32 %v3601, %v3839
      %v3841 = vpop.f32.mrb[0].mxu0
      %v3842 = vadd.f32 %v3601, %v3841
      %3843 = vmatprep.mubr.f32.mxu0 %v3494
      %3844 = vmatmul.mubr.f32.gmra.mrb[0].mxu0 %v3493
      %v3845 = vpop.f32.mrb[0].mxu0
      %v3846 = vadd.f32 %v3606, %v3845
      %v3847 = vpop.f32.mrb[0].mxu0
      %v3848 = vadd.f32 %v3606, %v3847
      %3849 = vmatprep.mubr.f32.mxu0 %v3497
      %3850 = vmatmul.mubr.f32.gmra.mrb[0].mxu0 %v3496
      %v3851 = vpop.f32.mrb[0].mxu0
      %v3852 = vadd.f32 %v3611, %v3851
      %v3853 = vpop.f32.mrb[0].mxu0
      %v3854 = vadd.f32 %v3611, %v3853
      %3855 = vmatprep.mubr.f32.mxu0 %v3500
      %3856 = vmatmul.mubr.f32.gmra.mrb[0].mxu0 %v3499
      %v3857 = vpop.f32.mrb[0].mxu0
      %v3858 = vadd.f32 %v3616, %v3857
      %v3859 = vpop.f32.mrb[0].mxu0
      %v3860 = vadd.f32 %v3616, %v3859
      %3861 = vmatprep.mubr.f32.mxu0 %v3503
      %3862 = vmatmul.mubr.f32.gmra.mrb[0].mxu0 %v3502
      %v3863 = vpop.f32.mrb[0].mxu0
      %v3864 = vadd.f32 %v3621, %v3863
      %v3865 = vpop.f32.mrb[0].mxu0
      %v3866 = vadd.f32 %v3621, %v3865
      %3867 = vmatprep.mubr.f32.mxu0 %v3506
      %3868 = vmatmul.mubr.f32.gmra.mrb[0].mxu0 %v3505
      %v3869 = vpop.f32.mrb[0].mxu0
      %v3870 = vadd.f32 %v3626, %v3869
      %v3871 = vpop.f32.mrb[0].mxu0
      %v3872 = vadd.f32 %v3626, %v3871
      %3873 = vdwg.mxu0
      %3874 = vmatprep.subr.mxu0 %v3433
      %3875 = vmatpush1.msra.mxu0 %v3432
      %3876 = vmatprep.subr.mxu0 %v3435
      %3877 = vmatpush1.msra.mxu0 %v3434
      %3878 = vmatprep.subr.mxu0 %v3437
      %3879 = vmatpush1.msra.mxu0 %v3436
      %3880 = vmatprep.subr.mxu0 %v3439
      %3881 = vmatpush1.msra.mxu0 %v3438
      %3882 = vmatprep.subr.mxu0 %v3441
      %3883 = vmatpush1.msra.mxu0 %v3440
      %3884 = vmatprep.subr.mxu0 %v3443
      %3885 = vmatpush1.msra.mxu0 %v3442
      %3886 = vmatprep.subr.mxu0 %v3445
      %3887 = vmatpush1.msra.mxu0 %v3444
      %3888 = vmatprep.subr.mxu0 %v3447
      %3889 = vmatpush1.msra.mxu0 %v3446
      %3890 = vmatprep.subr.mxu0 0.0
      %3891 = vmatpush1.msra.mxu0 0.0
      %3892 = vmatprep.subr.mxu0 0.0
      %3893 = vmatpush1.msra.mxu0 0.0
      %3894 = vmatprep.subr.mxu0 0.0
      %3895 = vmatpush1.msra.mxu0 0.0
      %3896 = vmatprep.subr.mxu0 0.0
      %3897 = vmatpush1.msra.mxu0 0.0
      %3898 = vmatprep.subr.mxu0 0.0
      %3899 = vmatpush1.msra.mxu0 0.0
      %3900 = vmatprep.subr.mxu0 0.0
      %3901 = vmatpush1.msra.mxu0 0.0
      %3902 = vmatprep.subr.mxu0 0.0
      %3903 = vmatpush1.msra.mxu0 0.0
      %3904 = vmatprep.subr.mxu0 0.0
      %3905 = vmatpush1.msra.mxu0 0.0
      %3906 = vmatprep.subr.mxu0 0.0
      %3907 = vmatpush1.msra.mxu0 0.0
      %3908 = vmatprep.subr.mxu0 0.0
      %3909 = vmatpush1.msra.mxu0 0.0
      %3910 = vmatprep.subr.mxu0 0.0
      %3911 = vmatpush1.msra.mxu0 0.0
      %3912 = vmatprep.subr.mxu0 0.0
      %3913 = vmatpush1.msra.mxu0 0.0
      %3914 = vmatprep.subr.mxu0 0.0
      %3915 = vmatpush1.msra.mxu0 0.0
      %3916 = vmatprep.subr.mxu0 0.0
      %3917 = vmatpush1.msra.mxu0 0.0
      %3918 = vmatprep.subr.mxu0 0.0
      %3919 = vmatpush1.msra.mxu0 0.0
      %3920 = vmatprep.subr.mxu0 0.0
      %3921 = vmatpush1.msra.mxu0 0.0
      %3922 = vmatprep.subr.mxu0 0.0
      %3923 = vmatpush1.msra.mxu0 0.0
      %3924 = vmatprep.subr.mxu0 0.0
      %3925 = vmatpush1.msra.mxu0 0.0
      %3926 = vmatprep.subr.mxu0 0.0
      %3927 = vmatpush1.msra.mxu0 0.0
      %3928 = vmatprep.subr.mxu0 0.0
      %3929 = vmatpush1.msra.mxu0 0.0
      %3930 = vmatprep.subr.mxu0 0.0
      %3931 = vmatpush1.msra.mxu0 0.0
      %3932 = vmatprep.subr.mxu0 0.0
      %3933 = vmatpush1.msra.mxu0 0.0
      %3934 = vmatprep.subr.mxu0 0.0
      %3935 = vmatpush1.msra.mxu0 0.0
      %3936 = vmatprep.subr.mxu0 0.0
      %3937 = vmatpush1.msra.mxu0 0.0
      %3938 = vmatprep.mubr.f32.mxu0 0.0
      %3939 = vmatmul.mubr.f32.gmra.mrb[0].mxu0 %v3630
      %v3940 = vpop.f32.mrb[0].mxu0
      %v3941 = vadd.f32 %v3756, %v3940
      %v3942 = vpop.f32.mrb[0].mxu0
      %v3943 = vadd.f32 %v3758, %v3942
      %3944 = vmatprep.mubr.f32.mxu0 0.0
      %3945 = vmatmul.mubr.f32.gmra.mrb[0].mxu0 %v3633
      %v3946 = vpop.f32.mrb[0].mxu0
      %v3947 = vadd.f32 %v3762, %v3946
      %v3948 = vpop.f32.mrb[0].mxu0
      %v3949 = vadd.f32 %v3764, %v3948
      %3950 = vmatprep.mubr.f32.mxu0 0.0
      %3951 = vmatmul.mubr.f32.gmra.mrb[0].mxu0 %v3636
      %v3952 = vpop.f32.mrb[0].mxu0
      %v3953 = vadd.f32 %v3768, %v3952
      %v3954 = vpop.f32.mrb[0].mxu0
      %v3955 = vadd.f32 %v3770, %v3954
      %3956 = vmatprep.mubr.f32.mxu0 0.0
      %3957 = vmatmul.mubr.f32.gmra.mrb[0].mxu0 %v3639
      %v3958 = vpop.f32.mrb[0].mxu0
      %v3959 = vadd.f32 %v3774, %v3958
      %v3960 = vpop.f32.mrb[0].mxu0
      %v3961 = vadd.f32 %v3776, %v3960
      %3962 = vmatprep.mubr.f32.mxu0 0.0
      %3963 = vmatmul.mubr.f32.gmra.mrb[0].mxu0 %v3642
      %v3964 = vpop.f32.mrb[0].mxu0
      %v3965 = vadd.f32 %v3780, %v3964
      %v3966 = vpop.f32.mrb[0].mxu0
      %v3967 = vadd.f32 %v3782, %v3966
      %3968 = vmatprep.mubr.f32.mxu0 0.0
      %3969 = vmatmul.mubr.f32.gmra.mrb[0].mxu0 %v3645
      %v3970 = vpop.f32.mrb[0].mxu0
      %v3971 = vadd.f32 %v3786, %v3970
      %v3972 = vpop.f32.mrb[0].mxu0
      %v3973 = vadd.f32 %v3788, %v3972
      %3974 = vmatprep.mubr.f32.mxu0 0.0
      %3975 = vmatmul.mubr.f32.gmra.mrb[0].mxu0 %v3648
      %v3976 = vpop.f32.mrb[0].mxu0
      %v3977 = vadd.f32 %v3792, %v3976
      %v3978 = vpop.f32.mrb[0].mxu0
      %v3979 = vadd.f32 %v3794, %v3978
      %3980 = vmatprep.mubr.f32.mxu0 0.0
      %3981 = vmatmul.mubr.f32.gmra.mrb[0].mxu0 %v3651
      %v3982 = vpop.f32.mrb[0].mxu0
      %v3983 = vadd.f32 %v3798, %v3982
      %v3984 = vpop.f32.mrb[0].mxu0
      %v3985 = vadd.f32 %v3800, %v3984
      %3986 = vmatprep.mubr.f32.mxu0 0.0
      %3987 = vmatmul.mubr.f32.gmra.mrb[0].mxu0 %v3654
      %v3988 = vpop.f32.mrb[0].mxu0
      %v3989 = vadd.f32 %v3804, %v3988
      %v3990 = vpop.f32.mrb[0].mxu0
      %v3991 = vadd.f32 %v3806, %v3990
      %3992 = vmatprep.mubr.f32.mxu0 0.0
      %3993 = vmatmul.mubr.f32.gmra.mrb[0].mxu0 %v3657
      %v3994 = vpop.f32.mrb[0].mxu0
      %v3995 = vadd.f32 %v3810, %v3994
      %v3996 = vpop.f32.mrb[0].mxu0
      %v3997 = vadd.f32 %v3812, %v3996
      %3998 = vmatprep.mubr.f32.mxu0 0.0
      %3999 = vmatmul.mubr.f32.gmra.mrb[0].mxu0 %v3660
      %v4000 = vpop.f32.mrb[0].mxu0
      %v4001 = vadd.f32 %v3816, %v4000
      %v4002 = vpop.f32.mrb[0].mxu0
      %v4003 = vadd.f32 %v3818, %v4002
      %4004 = vmatprep.mubr.f32.mxu0 0.0
      %4005 = vmatmul.mubr.f32.gmra.mrb[0].mxu0 %v3663
      %v4006 = vpop.f32.mrb[0].mxu0
      %v4007 = vadd.f32 %v3822, %v4006
      %v4008 = vpop.f32.mrb[0].mxu0
      %v4009 = vadd.f32 %v3824, %v4008
      %4010 = vmatprep.mubr.f32.mxu0 0.0
      %4011 = vmatmul.mubr.f32.gmra.mrb[0].mxu0 %v3666
      %v4012 = vpop.f32.mrb[0].mxu0
      %v4013 = vadd.f32 %v3828, %v4012
      %v4014 = vpop.f32.mrb[0].mxu0
      %v4015 = vadd.f32 %v3830, %v4014
      %4016 = vmatprep.mubr.f32.mxu0 0.0
      %4017 = vmatmul.mubr.f32.gmra.mrb[0].mxu0 %v3669
      %v4018 = vpop.f32.mrb[0].mxu0
      %v4019 = vadd.f32 %v3834, %v4018
      %v4020 = vpop.f32.mrb[0].mxu0
      %v4021 = vadd.f32 %v3836, %v4020
      %4022 = vmatprep.mubr.f32.mxu0 0.0
      %4023 = vmatmul.mubr.f32.gmra.mrb[0].mxu0 %v3672
      %v4024 = vpop.f32.mrb[0].mxu0
      %v4025 = vadd.f32 %v3840, %v4024
      %v4026 = vpop.f32.mrb[0].mxu0
      %v4027 = vadd.f32 %v3842, %v4026
      %4028 = vmatprep.mubr.f32.mxu0 0.0
      %4029 = vmatmul.mubr.f32.gmra.mrb[0].mxu0 %v3675
      %v4030 = vpop.f32.mrb[0].mxu0
      %v4031 = vadd.f32 %v3846, %v4030
      %v4032 = vpop.f32.mrb[0].mxu0
      %v4033 = vadd.f32 %v3848, %v4032
      %4034 = vmatprep.mubr.f32.mxu0 0.0
      %4035 = vmatmul.mubr.f32.gmra.mrb[0].mxu0 %v3678
      %v4036 = vpop.f32.mrb[0].mxu0
      %v4037 = vadd.f32 %v3852, %v4036
      %v4038 = vpop.f32.mrb[0].mxu0
      %v4039 = vadd.f32 %v3854, %v4038
      %4040 = vmatprep.mubr.f32.mxu0 0.0
      %4041 = vmatmul.mubr.f32.gmra.mrb[0].mxu0 %v3681
      %v4042 = vpop.f32.mrb[0].mxu0
      %v4043 = vadd.f32 %v3858, %v4042
      %v4044 = vpop.f32.mrb[0].mxu0
      %v4045 = vadd.f32 %v3860, %v4044
      %4046 = vmatprep.mubr.f32.mxu0 0.0
      %4047 = vmatmul.mubr.f32.gmra.mrb[0].mxu0 %v3684
      %v4048 = vpop.f32.mrb[0].mxu0
      %v4049 = vadd.f32 %v3864, %v4048
      %v4050 = vpop.f32.mrb[0].mxu0
      %v4051 = vadd.f32 %v3866, %v4050
      %4052 = vmatprep.mubr.f32.mxu0 0.0
      %4053 = vmatmul.mubr.f32.gmra.mrb[0].mxu0 %v3687
      %v4054 = vpop.f32.mrb[0].mxu0
      %v4055 = vadd.f32 %v3870, %v4054
      %v4056 = vpop.f32.mrb[0].mxu0
      %v4057 = vadd.f32 %v3872, %v4056
      %4058 = vdwg.mxu0
      %v4059 = vmax.f32 %v3941, 0.0
      %v4060 = vmax.f32 %v3943, 0.0
      %v4061 = vmax.f32 %v3947, 0.0
      %v4062 = vmax.f32 %v3949, 0.0
      %v4063 = vmax.f32 %v3953, 0.0
      %v4064 = vmax.f32 %v3955, 0.0
      %v4065 = vmax.f32 %v3959, 0.0
      %v4066 = vmax.f32 %v3961, 0.0
      %v4067 = vmax.f32 %v3965, 0.0
      %v4068 = vmax.f32 %v3967, 0.0
      %v4069 = vmax.f32 %v3971, 0.0
      %v4070 = vmax.f32 %v3973, 0.0
      %v4071 = vmax.f32 %v3977, 0.0
      %v4072 = vmax.f32 %v3979, 0.0
      %v4073 = vmax.f32 %v3983, 0.0
      %v4074 = vmax.f32 %v3985, 0.0
      %v4075 = vmax.f32 %v3989, 0.0
      %v4076 = vmax.f32 %v3991, 0.0
      %v4077 = vmax.f32 %v3995, 0.0
      %v4078 = vmax.f32 %v3997, 0.0
      %v4079 = vmax.f32 %v4001, 0.0
      %v4080 = vmax.f32 %v4003, 0.0
      %v4081 = vmax.f32 %v4007, 0.0
      %v4082 = vmax.f32 %v4009, 0.0
      %v4083 = vmax.f32 %v4013, 0.0
      %v4084 = vmax.f32 %v4015, 0.0
      %v4085 = vmax.f32 %v4019, 0.0
      %v4086 = vmax.f32 %v4021, 0.0
      %v4087 = vmax.f32 %v4025, 0.0
      %v4088 = vmax.f32 %v4027, 0.0
      %v4089 = vmax.f32 %v4031, 0.0
      %v4090 = vmax.f32 %v4033, 0.0
      %v4091 = vmax.f32 %v4037, 0.0
      %v4092 = vmax.f32 %v4039, 0.0
      %v4093 = vmax.f32 %v4043, 0.0
      %v4094 = vmax.f32 %v4045, 0.0
      %v4095 = vmax.f32 %v4049, 0.0
      %v4096 = vmax.f32 %v4051, 0.0
      %v4097 = vmax.f32 %v4055, 0.0
      %v4098 = vmax.f32 %v4057, 0.0
      %vm4103 = vcmask 1045504
      %v4104 = vrot.slane %v4061, 2
      %v4105 = vrot.slane %v4063, 2
      %v4106 = vsel %vm4103, %v4104, %v4105
      %v4107 = vrot.slane %v4062, 2
      %v4108 = vrot.slane %v4064, 2
      %v4109 = vsel %vm4103, %v4107, %v4108
      %v4114 = vadd.f32 %v4059, %v4106
      %v4115 = vadd.f32 %v4060, %v4109
      %v4116 = vadd.f32 %v4061, %v4105
      %v4117 = vadd.f32 %v4062, %v4108
      %v4122 = vrot.slane %v4071, 2
      %v4123 = vrot.slane %v4073, 2
      %v4124 = vsel %vm4103, %v4122, %v4123
      %v4125 = vrot.slane %v4072, 2
      %v4126 = vrot.slane %v4074, 2
      %v4127 = vsel %vm4103, %v4125, %v4126
      %v4132 = vadd.f32 %v4069, %v4124
      %v4133 = vadd.f32 %v4070, %v4127
      %v4134 = vadd.f32 %v4071, %v4123
      %v4135 = vadd.f32 %v4072, %v4126
      %v4138 = vrot.slane %v4073, 4
      %v4139 = vrot.slane %v4075, 4
      %v4140 = vsel %vm2353, %v4138, %v4139
      %v4141 = vrot.slane %v4074, 4
      %v4142 = vrot.slane %v4076, 4
      %v4143 = vsel %vm2353, %v4141, %v4142
      %v4148 = vadd.f32 %v4132, %v4140
      %v4149 = vadd.f32 %v4133, %v4143
      %v4150 = vadd.f32 %v4134, %v4139
      %v4151 = vadd.f32 %v4135, %v4142
      %v4154 = vrot.slane %v4075, 6
      %v4155 = vrot.slane %v4077, 6
      %v4156 = vsel %vm1447, %v4154, %v4155
      %v4157 = vrot.slane %v4076, 6
      %v4158 = vrot.slane %v4078, 6
      %v4159 = vsel %vm1447, %v4157, %v4158
      %v4164 = vadd.f32 %v4148, %v4156
      %v4165 = vadd.f32 %v4149, %v4159
      %v4166 = vadd.f32 %v4150, %v4155
      %v4167 = vadd.f32 %v4151, %v4158
      %v4172 = vrot.slane %v4081, 2
      %v4173 = vrot.slane %v4083, 2
      %v4174 = vsel %vm4103, %v4172, %v4173
      %v4175 = vrot.slane %v4082, 2
      %v4176 = vrot.slane %v4084, 2
      %v4177 = vsel %vm4103, %v4175, %v4176
      %v4182 = vadd.f32 %v4079, %v4174
      %v4183 = vadd.f32 %v4080, %v4177
      %v4184 = vadd.f32 %v4081, %v4173
      %v4185 = vadd.f32 %v4082, %v4176
      %v4190 = vrot.slane %v4164, 4
      %v4191 = vrot.slane %v4165, 4
      %v4192 = vrot.slane %v4166, 4
      %v4193 = vsel %vm2353, %v4190, %v4192
      %v4194 = vrot.slane %v4167, 4
      %v4195 = vsel %vm2353, %v4191, %v4194
      %v4200 = vadd.f32 %v4063, %v4190
      %v4201 = vadd.f32 %v4064, %v4191
      %v4202 = vadd.f32 %v4065, %v4193
      %v4203 = vadd.f32 %v4066, %v4195
      %v4208 = vrot.slane %v4182, 2
      %v4209 = vrot.slane %v4183, 2
      %v4210 = vrot.slane %v4184, 2
      %v4211 = vsel %vm4103, %v4208, %v4210
      %v4212 = vrot.slane %v4185, 2
      %v4213 = vsel %vm4103, %v4209, %v4212
      %v4218 = vadd.f32 %v4065, %v4208
      %v4219 = vadd.f32 %v4066, %v4209
      %v4220 = vadd.f32 %v4067, %v4211
      %v4221 = vadd.f32 %v4068, %v4213
      %v4222 = vld [vmem:[%s5] sm:$0xff]
      %v4223 = vld [vmem:[%s5 + $0x8] sm:$0xff]
      %v4224 = vld [vmem:[%s5 + $0x10] sm:$0xff]
      %v4225 = vld [vmem:[%s5 + $0x18] sm:$0xff]
      %v4226 = vld [vmem:[%s5 + $0x20] sm:$0xff]
      %v4227 = vld [vmem:[%s5 + $0x28] sm:$0xff]
      %v4228 = vld [vmem:[%s5 + $0x30] sm:$0xff]
      %v4229 = vld [vmem:[%s5 + $0x38] sm:$0xff]
      %v4230 = vld [vmem:[%s5 + $0x40] sm:$0xff]
      %v4231 = vld [vmem:[%s5 + $0x48] sm:$0xff]
      %v4232 = vld [vmem:[%s5 + $0x50] sm:$0xff]
      %v4233 = vld [vmem:[%s5 + $0x58] sm:$0xff]
      %v4234 = vld [vmem:[%s5 + $0x60] sm:$0xff]
      %v4235 = vld [vmem:[%s5 + $0x68] sm:$0xff]
      %v4236 = vld [vmem:[%s5 + $0x70] sm:$0xff]
      %v4237 = vld [vmem:[%s5 + $0x78] sm:$0xff]
      %v4238 = vld [vmem:[%s5 + $0x80] sm:$0xff]
      %v4239 = vld [vmem:[%s5 + $0x88] sm:$0xff]
      %v4240 = vld [vmem:[%s5 + $0x90] sm:$0xff]
      %v4241 = vld [vmem:[%s5 + $0x98] sm:$0xff]
      %v4242 = vld [vmem:[%s5 + $0xa0] sm:$0xff]
      %v4243 = vld [vmem:[%s5 + $0xa8] sm:$0xff]
      %v4244 = vld [vmem:[%s5 + $0xb0] sm:$0xff]
      %v4245 = vld [vmem:[%s5 + $0xb8] sm:$0xff]
      %v4246 = vld [vmem:[%s5 + $0xc0] sm:$0xff]
      %v4247 = vld [vmem:[%s5 + $0xc8] sm:$0xff]
      %v4248 = vld [vmem:[%s5 + $0xd0] sm:$0xff]
      %v4249 = vld [vmem:[%s5 + $0xd8] sm:$0xff]
      %v4250 = vld [vmem:[%s5 + $0xe0] sm:$0xff]
      %v4251 = vld [vmem:[%s5 + $0xe8] sm:$0xff]
      %v4252 = vld [vmem:[%s5 + $0xf0] sm:$0xff]
      %v4253 = vld [vmem:[%s5 + $0xf8] sm:$0xff]
      %v4254 = vld [vmem:[%s5 + $0x100] sm:$0xff]
      %v4255 = vld [vmem:[%s5 + $0x108] sm:$0x3f]
      %v4260 = vrot.slane %v4200, 2
      %v4261 = vrot.slane %v4202, 2
      %v4262 = vsel %vm4103, %v4260, %v4261
      %v4263 = vrot.slane %v4201, 2
      %v4264 = vrot.slane %v4203, 2
      %v4265 = vsel %vm4103, %v4263, %v4264
      %v4274 = vrot.slane %v4218, 2
      %v4275 = vrot.slane %v4220, 2
      %v4276 = vsel %vm4103, %v4274, %v4275
      %v4277 = vrot.slane %v4219, 2
      %v4278 = vrot.slane %v4221, 2
      %v4279 = vsel %vm4103, %v4277, %v4278
      %v4286 = vrot.slane %v4083, 6
      %v4287 = vrot.slane %v4084, 6
      %v4288 = vrot.slane %v4085, 6
      %v4289 = vsel %vm1447, %v4286, %v4288
      %v4290 = vrot.slane %v4086, 6
      %v4291 = vsel %vm1447, %v4287, %v4290
      %v4298 = vrot.slane %v4087, 6
      %v4299 = vsel %vm1447, %v4288, %v4298
      %v4300 = vrot.slane %v4088, 6
      %v4301 = vsel %vm1447, %v4290, %v4300
      %v4310 = vrot.slane %v4089, 6
      %v4311 = vrot.slane %v4090, 6
      %v4312 = vrot.slane %v4091, 6
      %v4313 = vsel %vm1447, %v4310, %v4312
      %v4314 = vrot.slane %v4092, 6
      %v4315 = vsel %vm1447, %v4311, %v4314
      %v4322 = vrot.slane %v4093, 6
      %v4323 = vsel %vm1447, %v4312, %v4322
      %v4324 = vrot.slane %v4094, 6
      %v4325 = vsel %vm1447, %v4314, %v4324
      %v4332 = vrot.slane %v4095, 6
      %v4333 = vsel %vm1447, %v4322, %v4332
      %v4334 = vrot.slane %v4096, 6
      %v4335 = vsel %vm1447, %v4324, %v4334
      %v4342 = vrot.slane %v4097, 6
      %v4343 = vsel %vm1447, %v4332, %v4342
      %v4344 = vrot.slane %v4098, 6
      %v4345 = vsel %vm1447, %v4334, %v4344
      %v4348 = vsel %vm1447, %v4116, %v4262
      %v4349 = vsel %vm1447, %v4117, %v4265
      %v4350 = vsel %vm2353, %v4261, %v4276
      %v4351 = vsel %vm2353, %v4264, %v4279
      %v4352 = vsel %vm4103, %v4275, %v4286
      %v4353 = vsel %vm4103, %v4278, %v4287
      %v4354 = vsel %vm1447, %v4298, %v4310
      %v4355 = vsel %vm1447, %v4300, %v4311
      %v4356 = vsel %vm2353, %v4313, %v4312
      %v4357 = vsel %vm2353, %v4315, %v4314
      %v4358 = vsel %vm4103, %v4323, %v4322
      %v4359 = vsel %vm4103, %v4325, %v4324
      %v4360 = vld [vmem:[%s9] sm:$0xff]
      %v4361 = vld [vmem:[%s9 + $0x8] sm:$0xff]
      %v4362 = vld [vmem:[%s9 + $0x10] sm:$0xff]
      %v4363 = vld [vmem:[%s9 + $0x18] sm:$0xff]
      %v4364 = vld [vmem:[%s9 + $0x20] sm:$0xff]
      %v4365 = vld [vmem:[%s9 + $0x28] sm:$0xff]
      %v4366 = vld [vmem:[%s9 + $0x30] sm:$0xff]
      %v4367 = vld [vmem:[%s9 + $0x38] sm:$0xff]
      %v4368 = vld [vmem:[%s9 + $0x40] sm:$0xff]
      %v4369 = vld [vmem:[%s9 + $0x48] sm:$0xff]
      %v4370 = vld [vmem:[%s9 + $0x50] sm:$0xff]
      %v4371 = vld [vmem:[%s9 + $0x58] sm:$0xff]
      %v4372 = vld [vmem:[%s9 + $0x60] sm:$0xff]
      %v4373 = vld [vmem:[%s9 + $0x68] sm:$0xff]
      %v4374 = vld [vmem:[%s9 + $0x70] sm:$0xff]
      %v4375 = vld [vmem:[%s9 + $0x78] sm:$0xff]
      %v4376 = vld [vmem:[%s9 + $0x80] sm:$0xff]
      %v4377 = vld [vmem:[%s9 + $0x88] sm:$0xff]
      %v4378 = vld [vmem:[%s9 + $0x90] sm:$0xff]
      %v4379 = vld [vmem:[%s9 + $0x98] sm:$0xff]
      %v4380 = vld [vmem:[%s9 + $0xa0] sm:$0xff]
      %v4381 = vld [vmem:[%s9 + $0xa8] sm:$0xff]
      %v4382 = vld [vmem:[%s9 + $0xb0] sm:$0xff]
      %v4383 = vld [vmem:[%s9 + $0xb8] sm:$0xff]
      %v4384 = vld [vmem:[%s9 + $0xc0] sm:$0xff]
      %v4385 = vld [vmem:[%s9 + $0xc8] sm:$0xff]
      %v4386 = vld [vmem:[%s9 + $0xd0] sm:$0xff]
      %v4387 = vld [vmem:[%s9 + $0xd8] sm:$0xff]
      %v4388 = vld [vmem:[%s9 + $0xe0] sm:$0xff]
      %v4389 = vld [vmem:[%s9 + $0xe8] sm:$0xff]
      %v4390 = vld [vmem:[%s9 + $0xf0] sm:$0xff]
      %v4391 = vld [vmem:[%s9 + $0xf8] sm:$0xff]
      %v4392 = vld [vmem:[%s9 + $0x100] sm:$0xff]
      %v4393 = vld [vmem:[%s9 + $0x108] sm:$0x3f]
      %4395 = vset.pattern.permute.xlu0 0
      %4396 = vperm.xlu0 %4395, %v4360
      %v4397 = vpop.permute.xlu0 %4396
      %4400 = vset.pattern.permute.xlu0 0
      %4401 = vperm.xlu0 %4400, %v4361
      %v4402 = vpop.permute.xlu0 %4401
      %4405 = vset.pattern.permute.xlu0 0
      %4406 = vperm.xlu0 %4405, %v4362
      %v4407 = vpop.permute.xlu0 %4406
      %4410 = vset.pattern.permute.xlu0 0
      %4411 = vperm.xlu0 %4410, %v4363
      %v4412 = vpop.permute.xlu0 %4411
      %4415 = vset.pattern.permute.xlu0 0
      %4416 = vperm.xlu0 %4415, %v4364
      %v4417 = vpop.permute.xlu0 %4416
      %4420 = vset.pattern.permute.xlu0 0
      %4421 = vperm.xlu0 %4420, %v4365
      %v4422 = vpop.permute.xlu0 %4421
      %4425 = vset.pattern.permute.xlu0 0
      %4426 = vperm.xlu0 %4425, %v4366
      %v4427 = vpop.permute.xlu0 %4426
      %4430 = vset.pattern.permute.xlu0 0
      %4431 = vperm.xlu0 %4430, %v4367
      %v4432 = vpop.permute.xlu0 %4431
      %4435 = vset.pattern.permute.xlu0 0
      %4436 = vperm.xlu0 %4435, %v4368
      %v4437 = vpop.permute.xlu0 %4436
      %4440 = vset.pattern.permute.xlu0 0
      %4441 = vperm.xlu0 %4440, %v4369
      %v4442 = vpop.permute.xlu0 %4441
      %4445 = vset.pattern.permute.xlu0 0
      %4446 = vperm.xlu0 %4445, %v4370
      %v4447 = vpop.permute.xlu0 %4446
      %4450 = vset.pattern.permute.xlu0 0
      %4451 = vperm.xlu0 %4450, %v4371
      %v4452 = vpop.permute.xlu0 %4451
      %4455 = vset.pattern.permute.xlu0 0
      %4456 = vperm.xlu0 %4455, %v4372
      %v4457 = vpop.permute.xlu0 %4456
      %4460 = vset.pattern.permute.xlu0 0
      %4461 = vperm.xlu0 %4460, %v4373
      %v4462 = vpop.permute.xlu0 %4461
      %4465 = vset.pattern.permute.xlu0 0
      %4466 = vperm.xlu0 %4465, %v4374
      %v4467 = vpop.permute.xlu0 %4466
      %4470 = vset.pattern.permute.xlu0 0
      %4471 = vperm.xlu0 %4470, %v4375
      %v4472 = vpop.permute.xlu0 %4471
      %4475 = vset.pattern.permute.xlu0 0
      %4476 = vperm.xlu0 %4475, %v4376
      %v4477 = vpop.permute.xlu0 %4476
      %4480 = vset.pattern.permute.xlu0 0
      %4481 = vperm.xlu0 %4480, %v4377
      %v4482 = vpop.permute.xlu0 %4481
      %4485 = vset.pattern.permute.xlu0 0
      %4486 = vperm.xlu0 %4485, %v4378
      %v4487 = vpop.permute.xlu0 %4486
      %4490 = vset.pattern.permute.xlu0 0
      %4491 = vperm.xlu0 %4490, %v4379
      %v4492 = vpop.permute.xlu0 %4491
      %4495 = vset.pattern.permute.xlu0 0
      %4496 = vperm.xlu0 %4495, %v4380
      %v4497 = vpop.permute.xlu0 %4496
      %4500 = vset.pattern.permute.xlu0 0
      %4501 = vperm.xlu0 %4500, %v4381
      %v4502 = vpop.permute.xlu0 %4501
      %4505 = vset.pattern.permute.xlu0 0
      %4506 = vperm.xlu0 %4505, %v4382
      %v4507 = vpop.permute.xlu0 %4506
      %4510 = vset.pattern.permute.xlu0 0
      %4511 = vperm.xlu0 %4510, %v4383
      %v4512 = vpop.permute.xlu0 %4511
      %4515 = vset.pattern.permute.xlu0 0
      %4516 = vperm.xlu0 %4515, %v4384
      %v4517 = vpop.permute.xlu0 %4516
      %4520 = vset.pattern.permute.xlu0 0
      %4521 = vperm.xlu0 %4520, %v4385
      %v4522 = vpop.permute.xlu0 %4521
      %4525 = vset.pattern.permute.xlu0 0
      %4526 = vperm.xlu0 %4525, %v4386
      %v4527 = vpop.permute.xlu0 %4526
      %4530 = vset.pattern.permute.xlu0 0
      %4531 = vperm.xlu0 %4530, %v4387
      %v4532 = vpop.permute.xlu0 %4531
      %4535 = vset.pattern.permute.xlu0 0
      %4536 = vperm.xlu0 %4535, %v4388
      %v4537 = vpop.permute.xlu0 %4536
      %4540 = vset.pattern.permute.xlu0 0
      %4541 = vperm.xlu0 %4540, %v4389
      %v4542 = vpop.permute.xlu0 %4541
      %4545 = vset.pattern.permute.xlu0 0
      %4546 = vperm.xlu0 %4545, %v4390
      %v4547 = vpop.permute.xlu0 %4546
      %4550 = vset.pattern.permute.xlu0 0
      %4551 = vperm.xlu0 %4550, %v4391
      %v4552 = vpop.permute.xlu0 %4551
      %4555 = vset.pattern.permute.xlu0 0
      %4556 = vperm.xlu0 %4555, %v4392
      %v4557 = vpop.permute.xlu0 %4556
      %4560 = vset.pattern.permute.xlu0 0
      %4561 = vperm.xlu0 %4560, %v4393
      %v4562 = vpop.permute.xlu0 %4561
      %v4565 = vsel %vm1209, %v4222, 0
      %v4568 = vsel %vm1209, %v4223, 0
      %v4571 = vsel %vm1209, %v4224, 0
      %v4574 = vsel %vm1209, %v4225, 0
      %v4577 = vsel %vm1209, %v4226, 0
      %v4580 = vsel %vm1209, %v4227, 0
      %v4583 = vsel %vm1209, %v4228, 0
      %v4586 = vsel %vm1209, %v4229, 0
      %v4589 = vsel %vm1209, %v4230, 0
      %v4592 = vsel %vm1209, %v4231, 0
      %v4595 = vsel %vm1209, %v4232, 0
      %v4598 = vsel %vm1209, %v4233, 0
      %v4601 = vsel %vm1209, %v4234, 0
      %v4604 = vsel %vm1209, %v4235, 0
      %v4607 = vsel %vm1209, %v4236, 0
      %v4610 = vsel %vm1209, %v4237, 0
      %v4613 = vsel %vm1209, %v4238, 0
      %v4616 = vsel %vm1209, %v4239, 0
      %v4619 = vsel %vm1209, %v4240, 0
      %v4622 = vsel %vm1209, %v4241, 0
      %v4625 = vsel %vm1209, %v4242, 0
      %v4628 = vsel %vm1209, %v4243, 0
      %v4631 = vsel %vm1209, %v4244, 0
      %v4634 = vsel %vm1209, %v4245, 0
      %v4637 = vsel %vm1209, %v4246, 0
      %v4640 = vsel %vm1209, %v4247, 0
      %v4643 = vsel %vm1209, %v4248, 0
      %v4646 = vsel %vm1209, %v4249, 0
      %v4649 = vsel %vm1209, %v4250, 0
      %v4652 = vsel %vm1209, %v4251, 0
      %v4655 = vsel %vm1209, %v4252, 0
      %v4658 = vsel %vm1209, %v4253, 0
      %v4661 = vsel %vm1209, %v4254, 0
      %v4664 = vsel %vm1209, %v4255, 0
      %v4666 = vsel %vm1447, %v4342, 0
      %v4668 = vsel %vm1447, %v4344, 0
      %4670 = vmatprep.subr.mxu0 %v4115
      %4671 = vmatpush1.msra.mxu0 %v4114
      %4672 = vmatprep.subr.mxu0 %v4349
      %4673 = vmatpush1.msra.mxu0 %v4348
      %4674 = vmatprep.subr.mxu0 %v4351
      %4675 = vmatpush1.msra.mxu0 %v4350
      %4676 = vmatprep.subr.mxu0 %v4353
      %4677 = vmatpush1.msra.mxu0 %v4352
      %4678 = vmatprep.subr.mxu0 %v4291
      %4679 = vmatpush1.msra.mxu0 %v4289
      %4680 = vmatprep.subr.mxu0 %v4301
      %4681 = vmatpush1.msra.mxu0 %v4299
      %4682 = vmatprep.subr.mxu0 %v4355
      %4683 = vmatpush1.msra.mxu0 %v4354
      %4684 = vmatprep.subr.mxu0 %v4357
      %4685 = vmatpush1.msra.mxu0 %v4356
      %4686 = vmatprep.subr.mxu0 %v4359
      %4687 = vmatpush1.msra.mxu0 %v4358
      %4688 = vmatprep.subr.mxu0 %v4335
      %4689 = vmatpush1.msra.mxu0 %v4333
      %4690 = vmatprep.subr.mxu0 %v4345
      %4691 = vmatpush1.msra.mxu0 %v4343
      %4692 = vmatprep.subr.mxu0 %v4668
      %4693 = vmatpush1.msra.mxu0 %v4666
      %4694 = vmatprep.subr.mxu0 0.0
      %4695 = vmatpush1.msra.mxu0 0.0
      %4696 = vmatprep.subr.mxu0 0.0
      %4697 = vmatpush1.msra.mxu0 0.0
      %4698 = vmatprep.subr.mxu0 0.0
      %4699 = vmatpush1.msra.mxu0 0.0
      %4700 = vmatprep.subr.mxu0 0.0
      %4701 = vmatpush1.msra.mxu0 0.0
      %4702 = vmatprep.subr.mxu0 0.0
      %4703 = vmatpush1.msra.mxu0 0.0
      %4704 = vmatprep.subr.mxu0 0.0
      %4705 = vmatpush1.msra.mxu0 0.0
      %4706 = vmatprep.subr.mxu0 0.0
      %4707 = vmatpush1.msra.mxu0 0.0
      %4708 = vmatprep.subr.mxu0 0.0
      %4709 = vmatpush1.msra.mxu0 0.0
      %4710 = vmatprep.subr.mxu0 0.0
      %4711 = vmatpush1.msra.mxu0 0.0
      %4712 = vmatprep.subr.mxu0 0.0
      %4713 = vmatpush1.msra.mxu0 0.0
      %4714 = vmatprep.subr.mxu0 0.0
      %4715 = vmatpush1.msra.mxu0 0.0
      %4716 = vmatprep.subr.mxu0 0.0
      %4717 = vmatpush1.msra.mxu0 0.0
      %4718 = vmatprep.subr.mxu0 0.0
      %4719 = vmatpush1.msra.mxu0 0.0
      %4720 = vmatprep.subr.mxu0 0.0
      %4721 = vmatpush1.msra.mxu0 0.0
      %4722 = vmatprep.subr.mxu0 0.0
      %4723 = vmatpush1.msra.mxu0 0.0
      %4724 = vmatprep.subr.mxu0 0.0
      %4725 = vmatpush1.msra.mxu0 0.0
      %4726 = vmatprep.subr.mxu0 0.0
      %4727 = vmatpush1.msra.mxu0 0.0
      %4728 = vmatprep.subr.mxu0 0.0
      %4729 = vmatpush1.msra.mxu0 0.0
      %4730 = vmatprep.subr.mxu0 0.0
      %4731 = vmatpush1.msra.mxu0 0.0
      %4732 = vmatprep.subr.mxu0 0.0
      %4733 = vmatpush1.msra.mxu0 0.0
      %4734 = vmatprep.mubr.f32.mxu0 0.0
      %4735 = vmatmul.mubr.f32.gmra.mrb[0].mxu0 %v4565
      %v4736 = vpop.f32.mrb[0].mxu0
      %v4737 = vadd.f32 %v4397, %v4736
      %v4738 = vpop.f32.mrb[0].mxu0
      %v4739 = vadd.f32 %v4397, %v4738
      %4740 = vmatprep.mubr.f32.mxu0 0.0
      %4741 = vmatmul.mubr.f32.gmra.mrb[0].mxu0 %v4568
      %v4742 = vpop.f32.mrb[0].mxu0
      %v4743 = vadd.f32 %v4402, %v4742
      %v4744 = vpop.f32.mrb[0].mxu0
      %v4745 = vadd.f32 %v4402, %v4744
      %4746 = vmatprep.mubr.f32.mxu0 0.0
      %4747 = vmatmul.mubr.f32.gmra.mrb[0].mxu0 %v4571
      %v4748 = vpop.f32.mrb[0].mxu0
      %v4749 = vadd.f32 %v4407, %v4748
      %v4750 = vpop.f32.mrb[0].mxu0
      %v4751 = vadd.f32 %v4407, %v4750
      %4752 = vmatprep.mubr.f32.mxu0 0.0
      %4753 = vmatmul.mubr.f32.gmra.mrb[0].mxu0 %v4574
      %v4754 = vpop.f32.mrb[0].mxu0
      %v4755 = vadd.f32 %v4412, %v4754
      %v4756 = vpop.f32.mrb[0].mxu0
      %v4757 = vadd.f32 %v4412, %v4756
      %4758 = vmatprep.mubr.f32.mxu0 0.0
      %4759 = vmatmul.mubr.f32.gmra.mrb[0].mxu0 %v4577
      %v4760 = vpop.f32.mrb[0].mxu0
      %v4761 = vadd.f32 %v4417, %v4760
      %v4762 = vpop.f32.mrb[0].mxu0
      %v4763 = vadd.f32 %v4417, %v4762
      %4764 = vmatprep.mubr.f32.mxu0 0.0
      %4765 = vmatmul.mubr.f32.gmra.mrb[0].mxu0 %v4580
      %v4766 = vpop.f32.mrb[0].mxu0
      %v4767 = vadd.f32 %v4422, %v4766
      %v4768 = vpop.f32.mrb[0].mxu0
      %v4769 = vadd.f32 %v4422, %v4768
      %4770 = vmatprep.mubr.f32.mxu0 0.0
      %4771 = vmatmul.mubr.f32.gmra.mrb[0].mxu0 %v4583
      %v4772 = vpop.f32.mrb[0].mxu0
      %v4773 = vadd.f32 %v4427, %v4772
      %v4774 = vpop.f32.mrb[0].mxu0
      %v4775 = vadd.f32 %v4427, %v4774
      %4776 = vmatprep.mubr.f32.mxu0 0.0
      %4777 = vmatmul.mubr.f32.gmra.mrb[0].mxu0 %v4586
      %v4778 = vpop.f32.mrb[0].mxu0
      %v4779 = vadd.f32 %v4432, %v4778
      %v4780 = vpop.f32.mrb[0].mxu0
      %v4781 = vadd.f32 %v4432, %v4780
      %4782 = vmatprep.mubr.f32.mxu0 0.0
      %4783 = vmatmul.mubr.f32.gmra.mrb[0].mxu0 %v4589
      %v4784 = vpop.f32.mrb[0].mxu0
      %v4785 = vadd.f32 %v4437, %v4784
      %v4786 = vpop.f32.mrb[0].mxu0
      %v4787 = vadd.f32 %v4437, %v4786
      %4788 = vmatprep.mubr.f32.mxu0 0.0
      %4789 = vmatmul.mubr.f32.gmra.mrb[0].mxu0 %v4592
      %v4790 = vpop.f32.mrb[0].mxu0
      %v4791 = vadd.f32 %v4442, %v4790
      %v4792 = vpop.f32.mrb[0].mxu0
      %v4793 = vadd.f32 %v4442, %v4792
      %4794 = vmatprep.mubr.f32.mxu0 0.0
      %4795 = vmatmul.mubr.f32.gmra.mrb[0].mxu0 %v4595
      %v4796 = vpop.f32.mrb[0].mxu0
      %v4797 = vadd.f32 %v4447, %v4796
      %v4798 = vpop.f32.mrb[0].mxu0
      %v4799 = vadd.f32 %v4447, %v4798
      %4800 = vmatprep.mubr.f32.mxu0 0.0
      %4801 = vmatmul.mubr.f32.gmra.mrb[0].mxu0 %v4598
      %v4802 = vpop.f32.mrb[0].mxu0
      %v4803 = vadd.f32 %v4452, %v4802
      %v4804 = vpop.f32.mrb[0].mxu0
      %v4805 = vadd.f32 %v4452, %v4804
      %4806 = vmatprep.mubr.f32.mxu0 0.0
      %4807 = vmatmul.mubr.f32.gmra.mrb[0].mxu0 %v4601
      %v4808 = vpop.f32.mrb[0].mxu0
      %v4809 = vadd.f32 %v4457, %v4808
      %v4810 = vpop.f32.mrb[0].mxu0
      %v4811 = vadd.f32 %v4457, %v4810
      %4812 = vmatprep.mubr.f32.mxu0 0.0
      %4813 = vmatmul.mubr.f32.gmra.mrb[0].mxu0 %v4604
      %v4814 = vpop.f32.mrb[0].mxu0
      %v4815 = vadd.f32 %v4462, %v4814
      %v4816 = vpop.f32.mrb[0].mxu0
      %v4817 = vadd.f32 %v4462, %v4816
      %4818 = vmatprep.mubr.f32.mxu0 0.0
      %4819 = vmatmul.mubr.f32.gmra.mrb[0].mxu0 %v4607
      %v4820 = vpop.f32.mrb[0].mxu0
      %v4821 = vadd.f32 %v4467, %v4820
      %v4822 = vpop.f32.mrb[0].mxu0
      %v4823 = vadd.f32 %v4467, %v4822
      %4824 = vmatprep.mubr.f32.mxu0 0.0
      %4825 = vmatmul.mubr.f32.gmra.mrb[0].mxu0 %v4610
      %v4826 = vpop.f32.mrb[0].mxu0
      %v4827 = vadd.f32 %v4472, %v4826
      %v4828 = vpop.f32.mrb[0].mxu0
      %v4829 = vadd.f32 %v4472, %v4828
      %4830 = vmatprep.mubr.f32.mxu0 0.0
      %4831 = vmatmul.mubr.f32.gmra.mrb[0].mxu0 %v4613
      %v4832 = vpop.f32.mrb[0].mxu0
      %v4833 = vadd.f32 %v4477, %v4832
      %v4834 = vpop.f32.mrb[0].mxu0
      %v4835 = vadd.f32 %v4477, %v4834
      %4836 = vmatprep.mubr.f32.mxu0 0.0
      %4837 = vmatmul.mubr.f32.gmra.mrb[0].mxu0 %v4616
      %v4838 = vpop.f32.mrb[0].mxu0
      %v4839 = vadd.f32 %v4482, %v4838
      %v4840 = vpop.f32.mrb[0].mxu0
      %v4841 = vadd.f32 %v4482, %v4840
      %4842 = vmatprep.mubr.f32.mxu0 0.0
      %4843 = vmatmul.mubr.f32.gmra.mrb[0].mxu0 %v4619
      %v4844 = vpop.f32.mrb[0].mxu0
      %v4845 = vadd.f32 %v4487, %v4844
      %v4846 = vpop.f32.mrb[0].mxu0
      %v4847 = vadd.f32 %v4487, %v4846
      %4848 = vmatprep.mubr.f32.mxu0 0.0
      %4849 = vmatmul.mubr.f32.gmra.mrb[0].mxu0 %v4622
      %v4850 = vpop.f32.mrb[0].mxu0
      %v4851 = vadd.f32 %v4492, %v4850
      %v4852 = vpop.f32.mrb[0].mxu0
      %v4853 = vadd.f32 %v4492, %v4852
      %4854 = vmatprep.mubr.f32.mxu0 0.0
      %4855 = vmatmul.mubr.f32.gmra.mrb[0].mxu0 %v4625
      %v4856 = vpop.f32.mrb[0].mxu0
      %v4857 = vadd.f32 %v4497, %v4856
      %v4858 = vpop.f32.mrb[0].mxu0
      %v4859 = vadd.f32 %v4497, %v4858
      %4860 = vmatprep.mubr.f32.mxu0 0.0
      %4861 = vmatmul.mubr.f32.gmra.mrb[0].mxu0 %v4628
      %v4862 = vpop.f32.mrb[0].mxu0
      %v4863 = vadd.f32 %v4502, %v4862
      %v4864 = vpop.f32.mrb[0].mxu0
      %v4865 = vadd.f32 %v4502, %v4864
      %4866 = vmatprep.mubr.f32.mxu0 0.0
      %4867 = vmatmul.mubr.f32.gmra.mrb[0].mxu0 %v4631
      %v4868 = vpop.f32.mrb[0].mxu0
      %v4869 = vadd.f32 %v4507, %v4868
      %v4870 = vpop.f32.mrb[0].mxu0
      %v4871 = vadd.f32 %v4507, %v4870
      %4872 = vmatprep.mubr.f32.mxu0 0.0
      %4873 = vmatmul.mubr.f32.gmra.mrb[0].mxu0 %v4634
      %v4874 = vpop.f32.mrb[0].mxu0
      %v4875 = vadd.f32 %v4512, %v4874
      %v4876 = vpop.f32.mrb[0].mxu0
      %v4877 = vadd.f32 %v4512, %v4876
      %4878 = vmatprep.mubr.f32.mxu0 0.0
      %4879 = vmatmul.mubr.f32.gmra.mrb[0].mxu0 %v4637
      %v4880 = vpop.f32.mrb[0].mxu0
      %v4881 = vadd.f32 %v4517, %v4880
      %v4882 = vpop.f32.mrb[0].mxu0
      %v4883 = vadd.f32 %v4517, %v4882
      %4884 = vmatprep.mubr.f32.mxu0 0.0
      %4885 = vmatmul.mubr.f32.gmra.mrb[0].mxu0 %v4640
      %v4886 = vpop.f32.mrb[0].mxu0
      %v4887 = vadd.f32 %v4522, %v4886
      %v4888 = vpop.f32.mrb[0].mxu0
      %v4889 = vadd.f32 %v4522, %v4888
      %4890 = vmatprep.mubr.f32.mxu0 0.0
      %4891 = vmatmul.mubr.f32.gmra.mrb[0].mxu0 %v4643
      %v4892 = vpop.f32.mrb[0].mxu0
      %v4893 = vadd.f32 %v4527, %v4892
      %v4894 = vpop.f32.mrb[0].mxu0
      %v4895 = vadd.f32 %v4527, %v4894
      %4896 = vmatprep.mubr.f32.mxu0 0.0
      %4897 = vmatmul.mubr.f32.gmra.mrb[0].mxu0 %v4646
      %v4898 = vpop.f32.mrb[0].mxu0
      %v4899 = vadd.f32 %v4532, %v4898
      %v4900 = vpop.f32.mrb[0].mxu0
      %v4901 = vadd.f32 %v4532, %v4900
      %4902 = vmatprep.mubr.f32.mxu0 0.0
      %4903 = vmatmul.mubr.f32.gmra.mrb[0].mxu0 %v4649
      %v4904 = vpop.f32.mrb[0].mxu0
      %v4905 = vadd.f32 %v4537, %v4904
      %v4906 = vpop.f32.mrb[0].mxu0
      %v4907 = vadd.f32 %v4537, %v4906
      %4908 = vmatprep.mubr.f32.mxu0 0.0
      %4909 = vmatmul.mubr.f32.gmra.mrb[0].mxu0 %v4652
      %v4910 = vpop.f32.mrb[0].mxu0
      %v4911 = vadd.f32 %v4542, %v4910
      %v4912 = vpop.f32.mrb[0].mxu0
      %v4913 = vadd.f32 %v4542, %v4912
      %4914 = vmatprep.mubr.f32.mxu0 0.0
      %4915 = vmatmul.mubr.f32.gmra.mrb[0].mxu0 %v4655
      %v4916 = vpop.f32.mrb[0].mxu0
      %v4917 = vadd.f32 %v4547, %v4916
      %v4918 = vpop.f32.mrb[0].mxu0
      %v4919 = vadd.f32 %v4547, %v4918
      %4920 = vmatprep.mubr.f32.mxu0 0.0
      %4921 = vmatmul.mubr.f32.gmra.mrb[0].mxu0 %v4658
      %v4922 = vpop.f32.mrb[0].mxu0
      %v4923 = vadd.f32 %v4552, %v4922
      %v4924 = vpop.f32.mrb[0].mxu0
      %v4925 = vadd.f32 %v4552, %v4924
      %4926 = vmatprep.mubr.f32.mxu0 0.0
      %4927 = vmatmul.mubr.f32.gmra.mrb[0].mxu0 %v4661
      %v4928 = vpop.f32.mrb[0].mxu0
      %v4929 = vadd.f32 %v4557, %v4928
      %v4930 = vpop.f32.mrb[0].mxu0
      %v4931 = vadd.f32 %v4557, %v4930
      %4932 = vmatprep.mubr.f32.mxu0 0.0
      %4933 = vmatmul.mubr.f32.gmra.mrb[0].mxu0 %v4664
      %v4934 = vpop.f32.mrb[0].mxu0
      %v4935 = vadd.f32 %v4562, %v4934
      %v4936 = vpop.f32.mrb[0].mxu0
      %v4937 = vadd.f32 %v4562, %v4936
      %4938 = vdwg.mxu0
      %v4939 = vadd.f32 %v4737, %v1551
      %v4940 = vadd.f32 %v4739, %v1553
      %v4941 = vadd.f32 %v4743, %v1557
      %v4942 = vadd.f32 %v4745, %v1559
      %v4943 = vadd.f32 %v4749, %v1563
      %v4944 = vadd.f32 %v4751, %v1565
      %v4945 = vmul.f32 %v4941, 0.5
      %v4946 = vmul.f32 %v4942, 0.5
      %v4947 = vmul.f32 %v4943, 0.5
      %v4948 = vmul.f32 %v4944, 0.5
      %v4949 = vtanh.pop %v4945
      %v4950 = vtanh.pop %v4946
      %v4951 = vtanh.pop %v4947
      %v4952 = vtanh.pop %v4948
      %v4953 = vadd.f32 %v4949, 1.0
      %v4954 = vadd.f32 %v4950, 1.0
      %v4955 = vadd.f32 %v4951, 1.0
      %v4956 = vadd.f32 %v4952, 1.0
      %v4957 = vmul.f32 %v4953, 0.5
      %v4958 = vmul.f32 %v4954, 0.5
      %v4959 = vmul.f32 %v4955, 0.5
      %v4960 = vmul.f32 %v4956, 0.5
      %v4961 = vmul.f32 %v4939, 0.5
      %v4962 = vmul.f32 %v4940, 0.5
      %v4963 = vtanh.pop %v4961
      %v4964 = vtanh.pop %v4962
      %v4965 = vadd.f32 %v4963, 1.0
      %v4966 = vadd.f32 %v4964, 1.0
      %v4967 = vmul.f32 %v4965, 0.5
      %v4968 = vmul.f32 %v4966, 0.5
      %v4969 = vmul.f32 %v4967, %v1103
      %v4970 = vmul.f32 %v4968, %v1104
      %v4971 = vmul.f32 %v4957, %v1105
      %v4972 = vmul.f32 %v4958, %v1106
      %vm4981 = vcmask 1046528
      %v4982 = vrot.slane %v1623, 1
      %v4983 = vrot.slane %v1629, 1
      %v4984 = vsel %vm4981, %v4982, %v4983
      %v4985 = vrot.slane %v1625, 1
      %v4986 = vrot.slane %v1631, 1
      %v4987 = vsel %vm4981, %v4985, %v4986
      %v4988 = vrot.slane %v1635, 1
      %v4989 = vsel %vm4981, %v4983, %v4988
      %v4990 = vrot.slane %v1637, 1
      %v4991 = vsel %vm4981, %v4986, %v4990
      %v4992 = vrot.slane %v1641, 1
      %v4993 = vsel %vm4981, %v4988, %v4992
      %v4994 = vrot.slane %v1643, 1
      %v4995 = vsel %vm4981, %v4990, %v4994
      %v5004 = vadd.f32 %v4755, %v4984
      %v5005 = vadd.f32 %v4757, %v4987
      %v5006 = vadd.f32 %v4761, %v4989
      %v5007 = vadd.f32 %v4763, %v4991
      %v5008 = vadd.f32 %v4767, %v4993
      %v5009 = vadd.f32 %v4769, %v4995
      %v5010 = vadd.f32 %v4773, %v4992
      %v5011 = vadd.f32 %v4775, %v4994
      %v5012 = vmul.f32 %v5008, 0.5
      %v5013 = vmul.f32 %v5009, 0.5
      %v5014 = vmul.f32 %v5010, 0.5
      %v5015 = vmul.f32 %v5011, 0.5
      %v5016 = vtanh.pop %v5012
      %v5017 = vtanh.pop %v5013
      %v5018 = vtanh.pop %v5014
      %v5019 = vtanh.pop %v5015
      %v5020 = vadd.f32 %v5016, 1.0
      %v5021 = vadd.f32 %v5017, 1.0
      %v5022 = vadd.f32 %v5018, 1.0
      %v5023 = vadd.f32 %v5019, 1.0
      %v5024 = vmul.f32 %v5020, 0.5
      %v5025 = vmul.f32 %v5021, 0.5
      %v5026 = vmul.f32 %v5022, 0.5
      %v5027 = vmul.f32 %v5023, 0.5
      %v5028 = vmul.f32 %v5004, 0.5
      %v5029 = vmul.f32 %v5005, 0.5
      %v5030 = vmul.f32 %v5006, 0.5
      %v5031 = vmul.f32 %v5007, 0.5
      %v5032 = vtanh.pop %v5028
      %v5033 = vtanh.pop %v5029
      %v5034 = vtanh.pop %v5030
      %v5035 = vtanh.pop %v5031
      %v5036 = vadd.f32 %v5032, 1.0
      %v5037 = vadd.f32 %v5033, 1.0
      %v5038 = vadd.f32 %v5034, 1.0
      %v5039 = vadd.f32 %v5035, 1.0
      %v5040 = vmul.f32 %v5036, 0.5
      %v5041 = vmul.f32 %v5037, 0.5
      %v5042 = vmul.f32 %v5038, 0.5
      %v5043 = vmul.f32 %v5039, 0.5
      %v5048 = vrot.slane %v1105, 4
      %v5049 = vrot.slane %v1106, 4
      %v5050 = vrot.slane %v1107, 4
      %v5051 = vsel %vm2353, %v5048, %v5050
      %v5052 = vrot.slane %v1108, 4
      %v5053 = vsel %vm2353, %v5049, %v5052
      %v5058 = vmul.f32 %v5040, %v5048
      %v5059 = vmul.f32 %v5041, %v5049
      %v5060 = vmul.f32 %v5042, %v5051
      %v5061 = vmul.f32 %v5043, %v5053
      %v5068 = vrot.slane %v1707, 4
      %v5069 = vrot.slane %v1709, 4
      %v5070 = vrot.slane %v1713, 4
      %v5071 = vsel %vm2353, %v5068, %v5070
      %v5072 = vrot.slane %v1715, 4
      %v5073 = vsel %vm2353, %v5069, %v5072
      %v5074 = vrot.slane %v1719, 4
      %v5075 = vsel %vm2353, %v5070, %v5074
      %v5076 = vrot.slane %v1721, 4
      %v5077 = vsel %vm2353, %v5072, %v5076
      %v5084 = vadd.f32 %v4779, %v5068
      %v5085 = vadd.f32 %v4781, %v5069
      %v5086 = vadd.f32 %v4785, %v5071
      %v5087 = vadd.f32 %v4787, %v5073
      %v5088 = vadd.f32 %v4791, %v5075
      %v5089 = vadd.f32 %v4793, %v5077
      %v5090 = vmul.f32 %v5086, 0.5
      %v5091 = vmul.f32 %v5087, 0.5
      %v5092 = vmul.f32 %v5088, 0.5
      %v5093 = vmul.f32 %v5089, 0.5
      %v5094 = vtanh.pop %v5090
      %v5095 = vtanh.pop %v5091
      %v5096 = vtanh.pop %v5092
      %v5097 = vtanh.pop %v5093
      %v5098 = vadd.f32 %v5094, 1.0
      %v5099 = vadd.f32 %v5095, 1.0
      %v5100 = vadd.f32 %v5096, 1.0
      %v5101 = vadd.f32 %v5097, 1.0
      %v5102 = vmul.f32 %v5098, 0.5
      %v5103 = vmul.f32 %v5099, 0.5
      %v5104 = vmul.f32 %v5100, 0.5
      %v5105 = vmul.f32 %v5101, 0.5
      %v5106 = vmul.f32 %v5084, 0.5
      %v5107 = vmul.f32 %v5085, 0.5
      %v5108 = vtanh.pop %v5106
      %v5109 = vtanh.pop %v5107
      %v5110 = vadd.f32 %v5108, 1.0
      %v5111 = vadd.f32 %v5109, 1.0
      %v5112 = vmul.f32 %v5110, 0.5
      %v5113 = vmul.f32 %v5111, 0.5
      %v5114 = vmul.f32 %v5112, %v1107
      %v5115 = vmul.f32 %v5113, %v1108
      %v5116 = vmul.f32 %v5102, %v1109
      %v5117 = vmul.f32 %v5103, %v1110
      %v5126 = vrot.slane %v1749, 5
      %v5127 = vrot.slane %v1755, 5
      %v5128 = vsel %vm2047, %v5126, %v5127
      %v5129 = vrot.slane %v1751, 5
      %v5130 = vrot.slane %v1757, 5
      %v5131 = vsel %vm2047, %v5129, %v5130
      %v5132 = vrot.slane %v1761, 5
      %v5133 = vsel %vm2047, %v5127, %v5132
      %v5134 = vrot.slane %v1763, 5
      %v5135 = vsel %vm2047, %v5130, %v5134
      %v5136 = vrot.slane %v1767, 5
      %v5137 = vsel %vm2047, %v5132, %v5136
      %v5138 = vrot.slane %v1769, 5
      %v5139 = vsel %vm2047, %v5134, %v5138
      %v5146 = vadd.f32 %v4803, %v5128
      %v5147 = vadd.f32 %v4805, %v5131
      %v5148 = vadd.f32 %v4809, %v5133
      %v5149 = vadd.f32 %v4811, %v5135
      %v5150 = vadd.f32 %v4815, %v5137
      %v5151 = vadd.f32 %v4817, %v5139
      %v5152 = vmul.f32 %v5148, 0.5
      %v5153 = vmul.f32 %v5149, 0.5
      %v5154 = vmul.f32 %v5150, 0.5
      %v5155 = vmul.f32 %v5151, 0.5
      %v5156 = vtanh.pop %v5152
      %v5157 = vtanh.pop %v5153
      %v5158 = vtanh.pop %v5154
      %v5159 = vtanh.pop %v5155
      %v5160 = vadd.f32 %v5156, 1.0
      %v5161 = vadd.f32 %v5157, 1.0
      %v5162 = vadd.f32 %v5158, 1.0
      %v5163 = vadd.f32 %v5159, 1.0
      %v5164 = vmul.f32 %v5160, 0.5
      %v5165 = vmul.f32 %v5161, 0.5
      %v5166 = vmul.f32 %v5162, 0.5
      %v5167 = vmul.f32 %v5163, 0.5
      %v5168 = vmul.f32 %v5146, 0.5
      %v5169 = vmul.f32 %v5147, 0.5
      %v5170 = vtanh.pop %v5168
      %v5171 = vtanh.pop %v5169
      %v5172 = vadd.f32 %v5170, 1.0
      %v5173 = vadd.f32 %v5171, 1.0
      %v5174 = vmul.f32 %v5172, 0.5
      %v5175 = vmul.f32 %v5173, 0.5
      %v5180 = vrot.slane %v1109, 4
      %v5181 = vrot.slane %v1111, 4
      %v5182 = vsel %vm2353, %v5180, %v5181
      %v5183 = vrot.slane %v1110, 4
      %v5184 = vrot.slane %v1112, 4
      %v5185 = vsel %vm2353, %v5183, %v5184
      %v5190 = vmul.f32 %v5174, %v5182
      %v5191 = vmul.f32 %v5175, %v5185
      %v5192 = vmul.f32 %v5164, %v5181
      %v5193 = vmul.f32 %v5165, %v5184
      %v5198 = vrot.slane %v1797, 3
      %v5199 = vrot.slane %v1803, 3
      %v5200 = vsel %vm2093, %v5198, %v5199
      %v5201 = vrot.slane %v1799, 3
      %v5202 = vrot.slane %v1805, 3
      %v5203 = vsel %vm2093, %v5201, %v5202
      %v5204 = vrot.slane %v1809, 3
      %v5205 = vsel %vm2093, %v5199, %v5204
      %v5206 = vrot.slane %v1811, 3
      %v5207 = vsel %vm2093, %v5202, %v5206
      %v5214 = vadd.f32 %v4827, %v5200
      %v5215 = vadd.f32 %v4829, %v5203
      %v5216 = vadd.f32 %v4833, %v5205
      %v5217 = vadd.f32 %v4835, %v5207
      %v5218 = vadd.f32 %v4839, %v5204
      %v5219 = vadd.f32 %v4841, %v5206
      %v5220 = vmul.f32 %v5216, 0.5
      %v5221 = vmul.f32 %v5217, 0.5
      %v5222 = vmul.f32 %v5218, 0.5
      %v5223 = vmul.f32 %v5219, 0.5
      %v5224 = vtanh.pop %v5220
      %v5225 = vtanh.pop %v5221
      %v5226 = vtanh.pop %v5222
      %v5227 = vtanh.pop %v5223
      %v5228 = vadd.f32 %v5224, 1.0
      %v5229 = vadd.f32 %v5225, 1.0
      %v5230 = vadd.f32 %v5226, 1.0
      %v5231 = vadd.f32 %v5227, 1.0
      %v5232 = vmul.f32 %v5228, 0.5
      %v5233 = vmul.f32 %v5229, 0.5
      %v5234 = vmul.f32 %v5230, 0.5
      %v5235 = vmul.f32 %v5231, 0.5
      %v5236 = vmul.f32 %v5214, 0.5
      %v5237 = vmul.f32 %v5215, 0.5
      %v5238 = vtanh.pop %v5236
      %v5239 = vtanh.pop %v5237
      %v5240 = vadd.f32 %v5238, 1.0
      %v5241 = vadd.f32 %v5239, 1.0
      %v5242 = vmul.f32 %v5240, 0.5
      %v5243 = vmul.f32 %v5241, 0.5
      %v5244 = vmul.f32 %v5242, %v1113
      %v5245 = vmul.f32 %v5243, %v1114
      %v5246 = vmul.f32 %v5232, %v1115
      %v5247 = vmul.f32 %v5233, %v1116
      %v5256 = vrot.slane %v1839, 1
      %v5257 = vrot.slane %v1845, 1
      %v5258 = vsel %vm4981, %v5256, %v5257
      %v5259 = vrot.slane %v1841, 1
      %v5260 = vrot.slane %v1847, 1
      %v5261 = vsel %vm4981, %v5259, %v5260
      %v5262 = vrot.slane %v1851, 1
      %v5263 = vsel %vm4981, %v5257, %v5262
      %v5264 = vrot.slane %v1853, 1
      %v5265 = vsel %vm4981, %v5260, %v5264
      %v5266 = vrot.slane %v1857, 1
      %v5267 = vsel %vm4981, %v5262, %v5266
      %v5268 = vrot.slane %v1859, 1
      %v5269 = vsel %vm4981, %v5264, %v5268
      %v5278 = vadd.f32 %v4845, %v5258
      %v5279 = vadd.f32 %v4847, %v5261
      %v5280 = vadd.f32 %v4851, %v5263
      %v5281 = vadd.f32 %v4853, %v5265
      %v5282 = vadd.f32 %v4857, %v5267
      %v5283 = vadd.f32 %v4859, %v5269
      %v5284 = vadd.f32 %v4863, %v5266
      %v5285 = vadd.f32 %v4865, %v5268
      %v5286 = vmul.f32 %v5282, 0.5
      %v5287 = vmul.f32 %v5283, 0.5
      %v5288 = vmul.f32 %v5284, 0.5
      %v5289 = vmul.f32 %v5285, 0.5
      %v5290 = vtanh.pop %v5286
      %v5291 = vtanh.pop %v5287
      %v5292 = vtanh.pop %v5288
      %v5293 = vtanh.pop %v5289
      %v5294 = vadd.f32 %v5290, 1.0
      %v5295 = vadd.f32 %v5291, 1.0
      %v5296 = vadd.f32 %v5292, 1.0
      %v5297 = vadd.f32 %v5293, 1.0
      %v5298 = vmul.f32 %v5294, 0.5
      %v5299 = vmul.f32 %v5295, 0.5
      %v5300 = vmul.f32 %v5296, 0.5
      %v5301 = vmul.f32 %v5297, 0.5
      %v5302 = vmul.f32 %v5278, 0.5
      %v5303 = vmul.f32 %v5279, 0.5
      %v5304 = vmul.f32 %v5280, 0.5
      %v5305 = vmul.f32 %v5281, 0.5
      %v5306 = vtanh.pop %v5302
      %v5307 = vtanh.pop %v5303
      %v5308 = vtanh.pop %v5304
      %v5309 = vtanh.pop %v5305
      %v5310 = vadd.f32 %v5306, 1.0
      %v5311 = vadd.f32 %v5307, 1.0
      %v5312 = vadd.f32 %v5308, 1.0
      %v5313 = vadd.f32 %v5309, 1.0
      %v5314 = vmul.f32 %v5310, 0.5
      %v5315 = vmul.f32 %v5311, 0.5
      %v5316 = vmul.f32 %v5312, 0.5
      %v5317 = vmul.f32 %v5313, 0.5
      %v5322 = vrot.slane %v1115, 4
      %v5323 = vrot.slane %v1116, 4
      %v5324 = vrot.slane %v1117, 4
      %v5325 = vsel %vm2353, %v5322, %v5324
      %v5326 = vrot.slane %v1118, 4
      %v5327 = vsel %vm2353, %v5323, %v5326
      %v5332 = vmul.f32 %v5314, %v5322
      %v5333 = vmul.f32 %v5315, %v5323
      %v5334 = vmul.f32 %v5316, %v5325
      %v5335 = vmul.f32 %v5317, %v5327
      %v5340 = vrot.slane %v1887, 7
      %v5341 = vrot.slane %v1889, 7
      %v5342 = vrot.slane %v1893, 7
      %v5343 = vsel %vm2216, %v5340, %v5342
      %v5344 = vrot.slane %v1895, 7
      %v5345 = vsel %vm2216, %v5341, %v5344
      %v5346 = vrot.slane %v1899, 7
      %v5347 = vsel %vm2216, %v5342, %v5346
      %v5348 = vrot.slane %v1901, 7
      %v5349 = vsel %vm2216, %v5344, %v5348
      %v5356 = vadd.f32 %v4869, %v5340
      %v5357 = vadd.f32 %v4871, %v5341
      %v5358 = vadd.f32 %v4875, %v5343
      %v5359 = vadd.f32 %v4877, %v5345
      %v5360 = vadd.f32 %v4881, %v5347
      %v5361 = vadd.f32 %v4883, %v5349
      %v5362 = vmul.f32 %v5358, 0.5
      %v5363 = vmul.f32 %v5359, 0.5
      %v5364 = vmul.f32 %v5360, 0.5
      %v5365 = vmul.f32 %v5361, 0.5
      %v5366 = vtanh.pop %v5362
      %v5367 = vtanh.pop %v5363
      %v5368 = vtanh.pop %v5364
      %v5369 = vtanh.pop %v5365
      %v5370 = vadd.f32 %v5366, 1.0
      %v5371 = vadd.f32 %v5367, 1.0
      %v5372 = vadd.f32 %v5368, 1.0
      %v5373 = vadd.f32 %v5369, 1.0
      %v5374 = vmul.f32 %v5370, 0.5
      %v5375 = vmul.f32 %v5371, 0.5
      %v5376 = vmul.f32 %v5372, 0.5
      %v5377 = vmul.f32 %v5373, 0.5
      %v5378 = vmul.f32 %v5356, 0.5
      %v5379 = vmul.f32 %v5357, 0.5
      %v5380 = vtanh.pop %v5378
      %v5381 = vtanh.pop %v5379
      %v5382 = vadd.f32 %v5380, 1.0
      %v5383 = vadd.f32 %v5381, 1.0
      %v5384 = vmul.f32 %v5382, 0.5
      %v5385 = vmul.f32 %v5383, 0.5
      %v5386 = vmul.f32 %v5384, %v1117
      %v5387 = vmul.f32 %v5385, %v1118
      %v5388 = vmul.f32 %v5374, %v1119
      %v5389 = vmul.f32 %v5375, %v1120
      %v5396 = vrot.slane %v1929, 5
      %v5397 = vrot.slane %v1935, 5
      %v5398 = vsel %vm2047, %v5396, %v5397
      %v5399 = vrot.slane %v1931, 5
      %v5400 = vrot.slane %v1937, 5
      %v5401 = vsel %vm2047, %v5399, %v5400
      %v5402 = vrot.slane %v1941, 5
      %v5403 = vsel %vm2047, %v5397, %v5402
      %v5404 = vrot.slane %v1943, 5
      %v5405 = vsel %vm2047, %v5400, %v5404
      %v5406 = vrot.slane %v1947, 5
      %v5407 = vsel %vm2047, %v5402, %v5406
      %v5408 = vrot.slane %v1949, 5
      %v5409 = vsel %vm2047, %v5404, %v5408
      %v5416 = vadd.f32 %v4893, %v5398
      %v5417 = vadd.f32 %v4895, %v5401
      %v5418 = vadd.f32 %v4899, %v5403
      %v5419 = vadd.f32 %v4901, %v5405
      %v5420 = vadd.f32 %v4905, %v5407
      %v5421 = vadd.f32 %v4907, %v5409
      %v5422 = vmul.f32 %v5418, 0.5
      %v5423 = vmul.f32 %v5419, 0.5
      %v5424 = vmul.f32 %v5420, 0.5
      %v5425 = vmul.f32 %v5421, 0.5
      %v5426 = vtanh.pop %v5422
      %v5427 = vtanh.pop %v5423
      %v5428 = vtanh.pop %v5424
      %v5429 = vtanh.pop %v5425
      %v5430 = vadd.f32 %v5426, 1.0
      %v5431 = vadd.f32 %v5427, 1.0
      %v5432 = vadd.f32 %v5428, 1.0
      %v5433 = vadd.f32 %v5429, 1.0
      %v5434 = vmul.f32 %v5430, 0.5
      %v5435 = vmul.f32 %v5431, 0.5
      %v5436 = vmul.f32 %v5432, 0.5
      %v5437 = vmul.f32 %v5433, 0.5
      %v5438 = vmul.f32 %v5416, 0.5
      %v5439 = vmul.f32 %v5417, 0.5
      %v5440 = vtanh.pop %v5438
      %v5441 = vtanh.pop %v5439
      %v5442 = vadd.f32 %v5440, 1.0
      %v5443 = vadd.f32 %v5441, 1.0
      %v5444 = vmul.f32 %v5442, 0.5
      %v5445 = vmul.f32 %v5443, 0.5
      %v5450 = vrot.slane %v1119, 4
      %v5451 = vrot.slane %v1121, 4
      %v5452 = vsel %vm2353, %v5450, %v5451
      %v5453 = vrot.slane %v1120, 4
      %v5454 = vrot.slane %v1122, 4
      %v5455 = vsel %vm2353, %v5453, %v5454
      %v5460 = vmul.f32 %v5444, %v5452
      %v5461 = vmul.f32 %v5445, %v5455
      %v5462 = vmul.f32 %v5434, %v5451
      %v5463 = vmul.f32 %v5435, %v5454
      %v5468 = vrot.slane %v1983, 3
      %v5469 = vsel %vm2093, %v2728, %v5468
      %v5470 = vrot.slane %v1985, 3
      %v5471 = vsel %vm2093, %v2730, %v5470
      %v5472 = vrot.slane %v1989, 3
      %v5473 = vsel %vm2093, %v5468, %v5472
      %v5474 = vrot.slane %v1991, 3
      %v5475 = vsel %vm2093, %v5470, %v5474
      %v5482 = vadd.f32 %v4917, %v5469
      %v5483 = vadd.f32 %v4919, %v5471
      %v5484 = vadd.f32 %v4923, %v5473
      %v5485 = vadd.f32 %v4925, %v5475
      %v5486 = vadd.f32 %v4929, %v5472
      %v5487 = vadd.f32 %v4931, %v5474
      %v5488 = vmul.f32 %v5484, 0.5
      %v5489 = vmul.f32 %v5485, 0.5
      %v5490 = vmul.f32 %v5486, 0.5
      %v5491 = vmul.f32 %v5487, 0.5
      %v5492 = vtanh.pop %v5488
      %v5493 = vtanh.pop %v5489
      %v5494 = vtanh.pop %v5490
      %v5495 = vtanh.pop %v5491
      %v5496 = vadd.f32 %v5492, 1.0
      %v5497 = vadd.f32 %v5493, 1.0
      %v5498 = vadd.f32 %v5494, 1.0
      %v5499 = vadd.f32 %v5495, 1.0
      %v5500 = vmul.f32 %v5496, 0.5
      %v5501 = vmul.f32 %v5497, 0.5
      %v5502 = vmul.f32 %v5498, 0.5
      %v5503 = vmul.f32 %v5499, 0.5
      %v5504 = vmul.f32 %v5482, 0.5
      %v5505 = vmul.f32 %v5483, 0.5
      %v5506 = vtanh.pop %v5504
      %v5507 = vtanh.pop %v5505
      %v5508 = vadd.f32 %v5506, 1.0
      %v5509 = vadd.f32 %v5507, 1.0
      %v5510 = vmul.f32 %v5508, 0.5
      %v5511 = vmul.f32 %v5509, 0.5
      %v5512 = vmul.f32 %v5510, %v1123
      %v5513 = vmul.f32 %v5511, %v1124
      %v5514 = vmul.f32 %v5500, %v1125
      %v5515 = vmul.f32 %v5501, %v1126
      %v5516 = vld [vmem:[%s6] sm:$0xff]
      %v5517 = vld [vmem:[%s6 + $0x8] sm:$0xff]
      %v5518 = vld [vmem:[%s6 + $0x10] sm:$0xff]
      %v5519 = vld [vmem:[%s6 + $0x18] sm:$0xff]
      %v5520 = vld [vmem:[%s6 + $0x20] sm:$0xff]
      %v5521 = vld [vmem:[%s6 + $0x28] sm:$0xff]
      %v5522 = vld [vmem:[%s6 + $0x30] sm:$0xff]
      %v5523 = vld [vmem:[%s6 + $0x38] sm:$0xff]
      %v5524 = vld [vmem:[%s6 + $0x40] sm:$0xff]
      %v5525 = vld [vmem:[%s6 + $0x48] sm:$0xff]
      %v5526 = vld [vmem:[%s6 + $0x50] sm:$0xff]
      %v5527 = vld [vmem:[%s6 + $0x58] sm:$0x3]
      %v5532 = vrot.slane %v5058, 4
      %v5533 = vrot.slane %v5060, 4
      %v5534 = vsel %vm2353, %v5532, %v5533
      %v5535 = vrot.slane %v5059, 4
      %v5536 = vrot.slane %v5061, 4
      %v5537 = vsel %vm2353, %v5535, %v5536
      %v5546 = vrot.slane %v5190, 4
      %v5547 = vrot.slane %v5191, 4
      %v5548 = vrot.slane %v5192, 4
      %v5549 = vsel %vm2353, %v5546, %v5548
      %v5550 = vrot.slane %v5193, 4
      %v5551 = vsel %vm2353, %v5547, %v5550
      %v5560 = vrot.slane %v5332, 4
      %v5561 = vrot.slane %v5334, 4
      %v5562 = vsel %vm2353, %v5560, %v5561
      %v5563 = vrot.slane %v5333, 4
      %v5564 = vrot.slane %v5335, 4
      %v5565 = vsel %vm2353, %v5563, %v5564
      %v5574 = vrot.slane %v5460, 4
      %v5575 = vrot.slane %v5461, 4
      %v5576 = vrot.slane %v5462, 4
      %v5577 = vsel %vm2353, %v5574, %v5576
      %v5578 = vrot.slane %v5463, 4
      %v5579 = vsel %vm2353, %v5575, %v5578
      %v5584 = vsel %vm1447, %v4971, %v5534
      %v5585 = vsel %vm1447, %v4972, %v5537
      %v5586 = vsel %vm2353, %v5533, %v5114
      %v5587 = vsel %vm2353, %v5536, %v5115
      %v5588 = vsel %vm4103, %v5116, %v5546
      %v5589 = vsel %vm4103, %v5117, %v5547
      %v5590 = vsel %vm1447, %v5246, %v5562
      %v5591 = vsel %vm1447, %v5247, %v5565
      %v5592 = vsel %vm2353, %v5561, %v5386
      %v5593 = vsel %vm2353, %v5564, %v5387
      %v5594 = vsel %vm4103, %v5388, %v5574
      %v5595 = vsel %vm4103, %v5389, %v5575
      %v5597 = vsel %vm1209, %v5516, 0
      %v5600 = vsel %vm1209, %v5517, 0
      %v5603 = vsel %vm1209, %v5518, 0
      %v5606 = vsel %vm1209, %v5519, 0
      %v5609 = vsel %vm1209, %v5520, 0
      %v5612 = vsel %vm1209, %v5521, 0
      %v5615 = vsel %vm1209, %v5522, 0
      %v5618 = vsel %vm1209, %v5523, 0
      %v5621 = vsel %vm1209, %v5524, 0
      %v5624 = vsel %vm1209, %v5525, 0
      %v5627 = vsel %vm1209, %v5526, 0
      %v5630 = vsel %vm1209, %v5527, 0
      %v5633 = vsel %vm1447, %v5514, 0
      %v5636 = vsel %vm1447, %v5515, 0
      %5638 = vmatprep.subr.mxu0 %v4970
      %5639 = vmatpush1.msra.mxu0 %v4969
      %5640 = vmatprep.subr.mxu0 %v5585
      %5641 = vmatpush1.msra.mxu0 %v5584
      %5642 = vmatprep.subr.mxu0 %v5587
      %5643 = vmatpush1.msra.mxu0 %v5586
      %5644 = vmatprep.subr.mxu0 %v5589
      %5645 = vmatpush1.msra.mxu0 %v5588
      %5646 = vmatprep.subr.mxu0 %v5551
      %5647 = vmatpush1.msra.mxu0 %v5549
      %5648 = vmatprep.subr.mxu0 %v5245
      %5649 = vmatpush1.msra.mxu0 %v5244
      %5650 = vmatprep.subr.mxu0 %v5591
      %5651 = vmatpush1.msra.mxu0 %v5590
      %5652 = vmatprep.subr.mxu0 %v5593
      %5653 = vmatpush1.msra.mxu0 %v5592
      %5654 = vmatprep.subr.mxu0 %v5595
      %5655 = vmatpush1.msra.mxu0 %v5594
      %5656 = vmatprep.subr.mxu0 %v5579
      %5657 = vmatpush1.msra.mxu0 %v5577
      %5658 = vmatprep.subr.mxu0 %v5513
      %5659 = vmatpush1.msra.mxu0 %v5512
      %5660 = vmatprep.subr.mxu0 %v5636
      %5661 = vmatpush1.msra.mxu0 %v5633
      %5662 = vmatprep.subr.mxu0 0.0
      %5663 = vmatpush1.msra.mxu0 0.0
      %5664 = vmatprep.subr.mxu0 0.0
      %5665 = vmatpush1.msra.mxu0 0.0
      %5666 = vmatprep.subr.mxu0 0.0
      %5667 = vmatpush1.msra.mxu0 0.0
      %5668 = vmatprep.subr.mxu0 0.0
      %5669 = vmatpush1.msra.mxu0 0.0
      %5670 = vmatprep.subr.mxu0 0.0
      %5671 = vmatpush1.msra.mxu0 0.0
      %5672 = vmatprep.subr.mxu0 0.0
      %5673 = vmatpush1.msra.mxu0 0.0
      %5674 = vmatprep.subr.mxu0 0.0
      %5675 = vmatpush1.msra.mxu0 0.0
      %5676 = vmatprep.subr.mxu0 0.0
      %5677 = vmatpush1.msra.mxu0 0.0
      %5678 = vmatprep.subr.mxu0 0.0
      %5679 = vmatpush1.msra.mxu0 0.0
      %5680 = vmatprep.subr.mxu0 0.0
      %5681 = vmatpush1.msra.mxu0 0.0
      %5682 = vmatprep.subr.mxu0 0.0
      %5683 = vmatpush1.msra.mxu0 0.0
      %5684 = vmatprep.subr.mxu0 0.0
      %5685 = vmatpush1.msra.mxu0 0.0
      %5686 = vmatprep.subr.mxu0 0.0
      %5687 = vmatpush1.msra.mxu0 0.0
      %5688 = vmatprep.subr.mxu0 0.0
      %5689 = vmatpush1.msra.mxu0 0.0
      %5690 = vmatprep.subr.mxu0 0.0
      %5691 = vmatpush1.msra.mxu0 0.0
      %5692 = vmatprep.subr.mxu0 0.0
      %5693 = vmatpush1.msra.mxu0 0.0
      %5694 = vmatprep.subr.mxu0 0.0
      %5695 = vmatpush1.msra.mxu0 0.0
      %5696 = vmatprep.subr.mxu0 0.0
      %5697 = vmatpush1.msra.mxu0 0.0
      %5698 = vmatprep.subr.mxu0 0.0
      %5699 = vmatpush1.msra.mxu0 0.0
      %5700 = vmatprep.subr.mxu0 0.0
      %5701 = vmatpush1.msra.mxu0 0.0
      %5702 = vmatprep.mubr.f32.mxu0 0.0
      %5703 = vmatmul.mubr.f32.gmra.mrb[0].mxu0 %v5597
      %v5704 = vpop.f32.mrb[0].mxu0
      %v5705 = vadd.f32 0.0, %v5704
      %v5706 = vpop.f32.mrb[0].mxu0
      %v5707 = vadd.f32 0.0, %v5706
      %5708 = vmatprep.mubr.f32.mxu0 0.0
      %5709 = vmatmul.mubr.f32.gmra.mrb[0].mxu0 %v5600
      %v5710 = vpop.f32.mrb[0].mxu0
      %v5711 = vadd.f32 0.0, %v5710
      %v5712 = vpop.f32.mrb[0].mxu0
      %v5713 = vadd.f32 0.0, %v5712
      %5714 = vmatprep.mubr.f32.mxu0 0.0
      %5715 = vmatmul.mubr.f32.gmra.mrb[0].mxu0 %v5603
      %v5716 = vpop.f32.mrb[0].mxu0
      %v5717 = vadd.f32 0.0, %v5716
      %v5718 = vpop.f32.mrb[0].mxu0
      %v5719 = vadd.f32 0.0, %v5718
      %5720 = vmatprep.mubr.f32.mxu0 0.0
      %5721 = vmatmul.mubr.f32.gmra.mrb[0].mxu0 %v5606
      %v5722 = vpop.f32.mrb[0].mxu0
      %v5723 = vadd.f32 0.0, %v5722
      %v5724 = vpop.f32.mrb[0].mxu0
      %v5725 = vadd.f32 0.0, %v5724
      %5726 = vmatprep.mubr.f32.mxu0 0.0
      %5727 = vmatmul.mubr.f32.gmra.mrb[0].mxu0 %v5609
      %v5728 = vpop.f32.mrb[0].mxu0
      %v5729 = vadd.f32 0.0, %v5728
      %v5730 = vpop.f32.mrb[0].mxu0
      %v5731 = vadd.f32 0.0, %v5730
      %5732 = vmatprep.mubr.f32.mxu0 0.0
      %5733 = vmatmul.mubr.f32.gmra.mrb[0].mxu0 %v5612
      %v5734 = vpop.f32.mrb[0].mxu0
      %v5735 = vadd.f32 0.0, %v5734
      %v5736 = vpop.f32.mrb[0].mxu0
      %v5737 = vadd.f32 0.0, %v5736
      %5738 = vmatprep.mubr.f32.mxu0 0.0
      %5739 = vmatmul.mubr.f32.gmra.mrb[0].mxu0 %v5615
      %v5740 = vpop.f32.mrb[0].mxu0
      %v5741 = vadd.f32 0.0, %v5740
      %v5742 = vpop.f32.mrb[0].mxu0
      %v5743 = vadd.f32 0.0, %v5742
      %5744 = vmatprep.mubr.f32.mxu0 0.0
      %5745 = vmatmul.mubr.f32.gmra.mrb[0].mxu0 %v5618
      %v5746 = vpop.f32.mrb[0].mxu0
      %v5747 = vadd.f32 0.0, %v5746
      %v5748 = vpop.f32.mrb[0].mxu0
      %v5749 = vadd.f32 0.0, %v5748
      %5750 = vmatprep.mubr.f32.mxu0 0.0
      %5751 = vmatmul.mubr.f32.gmra.mrb[0].mxu0 %v5621
      %v5752 = vpop.f32.mrb[0].mxu0
      %v5753 = vadd.f32 0.0, %v5752
      %v5754 = vpop.f32.mrb[0].mxu0
      %v5755 = vadd.f32 0.0, %v5754
      %5756 = vmatprep.mubr.f32.mxu0 0.0
      %5757 = vmatmul.mubr.f32.gmra.mrb[0].mxu0 %v5624
      %v5758 = vpop.f32.mrb[0].mxu0
      %v5759 = vadd.f32 0.0, %v5758
      %v5760 = vpop.f32.mrb[0].mxu0
      %v5761 = vadd.f32 0.0, %v5760
      %5762 = vmatprep.mubr.f32.mxu0 0.0
      %5763 = vmatmul.mubr.f32.gmra.mrb[0].mxu0 %v5627
      %v5764 = vpop.f32.mrb[0].mxu0
      %v5765 = vadd.f32 0.0, %v5764
      %v5766 = vpop.f32.mrb[0].mxu0
      %v5767 = vadd.f32 0.0, %v5766
      %5768 = vmatprep.mubr.f32.mxu0 0.0
      %5769 = vmatmul.mubr.f32.gmra.mrb[0].mxu0 %v5630
      %v5770 = vpop.f32.mrb[0].mxu0
      %v5771 = vadd.f32 0.0, %v5770
      %v5772 = vpop.f32.mrb[0].mxu0
      %v5773 = vadd.f32 0.0, %v5772
      %5774 = vdwg.mxu0
      %v5779 = vrot.slane %v5705, 4
      %v5780 = vrot.slane %v5707, 4
      %v5781 = vrot.slane %v5711, 4
      %v5782 = vsel %vm2353, %v5779, %v5781
      %v5783 = vrot.slane %v5713, 4
      %v5784 = vsel %vm2353, %v5780, %v5783
      %v5789 = vadd.f32 %v4749, %v5779
      %v5790 = vadd.f32 %v4751, %v5780
      %v5791 = vadd.f32 %v4755, %v5782
      %v5792 = vadd.f32 %v4757, %v5784
      %v5793 = vtanh.pop %v5789
      %v5794 = vtanh.pop %v5790
      %v5795 = vtanh.pop %v5791
      %v5796 = vtanh.pop %v5792
      %v5797 = vsub.f32 1.0, %v4957
      %v5798 = vsub.f32 1.0, %v4958
      %v5799 = vsub.f32 1.0, %v4959
      %v5800 = vsub.f32 1.0, %v4960
      %v5803 = vrot.slane %v1103, 6
      %v5804 = vrot.slane %v1104, 6
      %v5805 = vrot.slane %v1105, 6
      %v5806 = vsel %vm1447, %v5803, %v5805
      %v5807 = vrot.slane %v1106, 6
      %v5808 = vsel %vm1447, %v5804, %v5807
      %v5813 = vmul.f32 %v5797, %v5803
      %v5814 = vmul.f32 %v5798, %v5804
      %v5815 = vmul.f32 %v5799, %v5806
      %v5816 = vmul.f32 %v5800, %v5808
      %v5821 = vrot.slane %v5793, 2
      %v5822 = vrot.slane %v5795, 2
      %v5823 = vsel %vm4103, %v5821, %v5822
      %v5824 = vrot.slane %v5794, 2
      %v5825 = vrot.slane %v5796, 2
      %v5826 = vsel %vm4103, %v5824, %v5825
      %v5831 = vmul.f32 %v4957, %v5823
      %v5832 = vmul.f32 %v4958, %v5826
      %v5833 = vmul.f32 %v4959, %v5822
      %v5834 = vmul.f32 %v4960, %v5825
      %v5835 = vadd.f32 %v5813, %v5831
      %v5836 = vadd.f32 %v5814, %v5832
      %v5837 = vadd.f32 %v5815, %v5833
      %v5838 = vadd.f32 %v5816, %v5834
      %v5839 = vadd.f32 %v4773, %v5711
      %v5840 = vadd.f32 %v4775, %v5713
      %v5841 = vadd.f32 %v4779, %v5717
      %v5842 = vadd.f32 %v4781, %v5719
      %v5843 = vtanh.pop %v5839
      %v5844 = vtanh.pop %v5840
      %v5845 = vtanh.pop %v5841
      %v5846 = vtanh.pop %v5842
      %v5847 = vsub.f32 1.0, %v5024
      %v5848 = vsub.f32 1.0, %v5025
      %v5849 = vsub.f32 1.0, %v5026
      %v5850 = vsub.f32 1.0, %v5027
      %v5851 = vrot.slane %v1105, 2
      %v5852 = vrot.slane %v1107, 2
      %v5853 = vsel %vm4103, %v5851, %v5852
      %v5854 = vrot.slane %v1106, 2
      %v5855 = vrot.slane %v1108, 2
      %v5856 = vsel %vm4103, %v5854, %v5855
      %v5861 = vmul.f32 %v5847, %v5853
      %v5862 = vmul.f32 %v5848, %v5856
      %v5863 = vmul.f32 %v5849, %v5852
      %v5864 = vmul.f32 %v5850, %v5855
      %v5869 = vrot.slane %v5843, 2
      %v5870 = vrot.slane %v5845, 2
      %v5871 = vsel %vm4103, %v5869, %v5870
      %v5872 = vrot.slane %v5844, 2
      %v5873 = vrot.slane %v5846, 2
      %v5874 = vsel %vm4103, %v5872, %v5873
      %v5879 = vmul.f32 %v5024, %v5871
      %v5880 = vmul.f32 %v5025, %v5874
      %v5881 = vmul.f32 %v5026, %v5870
      %v5882 = vmul.f32 %v5027, %v5873
      %v5883 = vadd.f32 %v5861, %v5879
      %v5884 = vadd.f32 %v5862, %v5880
      %v5885 = vadd.f32 %v5863, %v5881
      %v5886 = vadd.f32 %v5864, %v5882
      %v5891 = vrot.slane %v5717, 4
      %v5892 = vrot.slane %v5723, 4
      %v5893 = vsel %vm2353, %v5891, %v5892
      %v5894 = vrot.slane %v5719, 4
      %v5895 = vrot.slane %v5725, 4
      %v5896 = vsel %vm2353, %v5894, %v5895
      %v5901 = vadd.f32 %v4797, %v5893
      %v5902 = vadd.f32 %v4799, %v5896
      %v5903 = vadd.f32 %v4803, %v5892
      %v5904 = vadd.f32 %v4805, %v5895
      %v5905 = vtanh.pop %v5901
      %v5906 = vtanh.pop %v5902
      %v5907 = vtanh.pop %v5903
      %v5908 = vtanh.pop %v5904
      %v5909 = vsub.f32 1.0, %v5102
      %v5910 = vsub.f32 1.0, %v5103
      %v5911 = vsub.f32 1.0, %v5104
      %v5912 = vsub.f32 1.0, %v5105
      %v5913 = vrot.slane %v1107, 6
      %v5914 = vrot.slane %v1108, 6
      %v5915 = vrot.slane %v1109, 6
      %v5916 = vsel %vm1447, %v5913, %v5915
      %v5917 = vrot.slane %v1110, 6
      %v5918 = vsel %vm1447, %v5914, %v5917
      %v5923 = vmul.f32 %v5909, %v5913
      %v5924 = vmul.f32 %v5910, %v5914
      %v5925 = vmul.f32 %v5911, %v5916
      %v5926 = vmul.f32 %v5912, %v5918
      %v5931 = vrot.slane %v5905, 2
      %v5932 = vrot.slane %v5906, 2
      %v5933 = vrot.slane %v5907, 2
      %v5934 = vsel %vm4103, %v5931, %v5933
      %v5935 = vrot.slane %v5908, 2
      %v5936 = vsel %vm4103, %v5932, %v5935
      %v5941 = vmul.f32 %v5102, %v5931
      %v5942 = vmul.f32 %v5103, %v5932
      %v5943 = vmul.f32 %v5104, %v5934
      %v5944 = vmul.f32 %v5105, %v5936
      %v5945 = vadd.f32 %v5923, %v5941
      %v5946 = vadd.f32 %v5924, %v5942
      %v5947 = vadd.f32 %v5925, %v5943
      %v5948 = vadd.f32 %v5926, %v5944
      %v5949 = vadd.f32 %v4815, %v5723
      %v5950 = vadd.f32 %v4817, %v5725
      %v5951 = vadd.f32 %v4821, %v5729
      %v5952 = vadd.f32 %v4823, %v5731
      %v5953 = vtanh.pop %v5949
      %v5954 = vtanh.pop %v5950
      %v5955 = vtanh.pop %v5951
      %v5956 = vtanh.pop %v5952
      %v5957 = vsub.f32 1.0, %v5164
      %v5958 = vsub.f32 1.0, %v5165
      %v5959 = vsub.f32 1.0, %v5166
      %v5960 = vsub.f32 1.0, %v5167
      %v5961 = vrot.slane %v1109, 2
      %v5962 = vrot.slane %v1111, 2
      %v5963 = vsel %vm4103, %v5961, %v5962
      %v5964 = vrot.slane %v1110, 2
      %v5965 = vrot.slane %v1112, 2
      %v5966 = vsel %vm4103, %v5964, %v5965
      %v5971 = vmul.f32 %v5957, %v5963
      %v5972 = vmul.f32 %v5958, %v5966
      %v5973 = vmul.f32 %v5959, %v5962
      %v5974 = vmul.f32 %v5960, %v5965
      %v5979 = vrot.slane %v5953, 2
      %v5980 = vrot.slane %v5955, 2
      %v5981 = vsel %vm4103, %v5979, %v5980
      %v5982 = vrot.slane %v5954, 2
      %v5983 = vrot.slane %v5956, 2
      %v5984 = vsel %vm4103, %v5982, %v5983
      %v5989 = vmul.f32 %v5164, %v5981
      %v5990 = vmul.f32 %v5165, %v5984
      %v5991 = vmul.f32 %v5166, %v5980
      %v5992 = vmul.f32 %v5167, %v5983
      %v5993 = vadd.f32 %v5971, %v5989
      %v5994 = vadd.f32 %v5972, %v5990
      %v5995 = vadd.f32 %v5973, %v5991
      %v5996 = vadd.f32 %v5974, %v5992
      %v6001 = vrot.slane %v5735, 4
      %v6002 = vrot.slane %v5737, 4
      %v6003 = vrot.slane %v5741, 4
      %v6004 = vsel %vm2353, %v6001, %v6003
      %v6005 = vrot.slane %v5743, 4
      %v6006 = vsel %vm2353, %v6002, %v6005
      %v6011 = vadd.f32 %v4839, %v6001
      %v6012 = vadd.f32 %v4841, %v6002
      %v6013 = vadd.f32 %v4845, %v6004
      %v6014 = vadd.f32 %v4847, %v6006
      %v6015 = vtanh.pop %v6011
      %v6016 = vtanh.pop %v6012
      %v6017 = vtanh.pop %v6013
      %v6018 = vtanh.pop %v6014
      %v6019 = vsub.f32 1.0, %v5232
      %v6020 = vsub.f32 1.0, %v5233
      %v6021 = vsub.f32 1.0, %v5234
      %v6022 = vsub.f32 1.0, %v5235
      %v6025 = vrot.slane %v1113, 6
      %v6026 = vrot.slane %v1114, 6
      %v6027 = vrot.slane %v1115, 6
      %v6028 = vsel %vm1447, %v6025, %v6027
      %v6029 = vrot.slane %v1116, 6
      %v6030 = vsel %vm1447, %v6026, %v6029
      %v6035 = vmul.f32 %v6019, %v6025
      %v6036 = vmul.f32 %v6020, %v6026
      %v6037 = vmul.f32 %v6021, %v6028
      %v6038 = vmul.f32 %v6022, %v6030
      %v6043 = vrot.slane %v6015, 2
      %v6044 = vrot.slane %v6017, 2
      %v6045 = vsel %vm4103, %v6043, %v6044
      %v6046 = vrot.slane %v6016, 2
      %v6047 = vrot.slane %v6018, 2
      %v6048 = vsel %vm4103, %v6046, %v6047
      %v6053 = vmul.f32 %v5232, %v6045
      %v6054 = vmul.f32 %v5233, %v6048
      %v6055 = vmul.f32 %v5234, %v6044
      %v6056 = vmul.f32 %v5235, %v6047
      %v6057 = vadd.f32 %v6035, %v6053
      %v6058 = vadd.f32 %v6036, %v6054
      %v6059 = vadd.f32 %v6037, %v6055
      %v6060 = vadd.f32 %v6038, %v6056
      %v6061 = vadd.f32 %v4863, %v5741
      %v6062 = vadd.f32 %v4865, %v5743
      %v6063 = vadd.f32 %v4869, %v5747
      %v6064 = vadd.f32 %v4871, %v5749
      %v6065 = vtanh.pop %v6061
      %v6066 = vtanh.pop %v6062
      %v6067 = vtanh.pop %v6063
      %v6068 = vtanh.pop %v6064
      %v6069 = vsub.f32 1.0, %v5298
      %v6070 = vsub.f32 1.0, %v5299
      %v6071 = vsub.f32 1.0, %v5300
      %v6072 = vsub.f32 1.0, %v5301
      %v6073 = vrot.slane %v1115, 2
      %v6074 = vrot.slane %v1117, 2
      %v6075 = vsel %vm4103, %v6073, %v6074
      %v6076 = vrot.slane %v1116, 2
      %v6077 = vrot.slane %v1118, 2
      %v6078 = vsel %vm4103, %v6076, %v6077
      %v6083 = vmul.f32 %v6069, %v6075
      %v6084 = vmul.f32 %v6070, %v6078
      %v6085 = vmul.f32 %v6071, %v6074
      %v6086 = vmul.f32 %v6072, %v6077
      %v6091 = vrot.slane %v6065, 2
      %v6092 = vrot.slane %v6067, 2
      %v6093 = vsel %vm4103, %v6091, %v6092
      %v6094 = vrot.slane %v6066, 2
      %v6095 = vrot.slane %v6068, 2
      %v6096 = vsel %vm4103, %v6094, %v6095
      %v6101 = vmul.f32 %v5298, %v6093
      %v6102 = vmul.f32 %v5299, %v6096
      %v6103 = vmul.f32 %v5300, %v6092
      %v6104 = vmul.f32 %v5301, %v6095
      %v6105 = vadd.f32 %v6083, %v6101
      %v6106 = vadd.f32 %v6084, %v6102
      %v6107 = vadd.f32 %v6085, %v6103
      %v6108 = vadd.f32 %v6086, %v6104
      %v6113 = vrot.slane %v5747, 4
      %v6114 = vrot.slane %v5753, 4
      %v6115 = vsel %vm2353, %v6113, %v6114
      %v6116 = vrot.slane %v5749, 4
      %v6117 = vrot.slane %v5755, 4
      %v6118 = vsel %vm2353, %v6116, %v6117
      %v6123 = vadd.f32 %v4887, %v6115
      %v6124 = vadd.f32 %v4889, %v6118
      %v6125 = vadd.f32 %v4893, %v6114
      %v6126 = vadd.f32 %v4895, %v6117
      %v6127 = vtanh.pop %v6123
      %v6128 = vtanh.pop %v6124
      %v6129 = vtanh.pop %v6125
      %v6130 = vtanh.pop %v6126
      %v6131 = vsub.f32 1.0, %v5374
      %v6132 = vsub.f32 1.0, %v5375
      %v6133 = vsub.f32 1.0, %v5376
      %v6134 = vsub.f32 1.0, %v5377
      %v6135 = vrot.slane %v1117, 6
      %v6136 = vrot.slane %v1118, 6
      %v6137 = vrot.slane %v1119, 6
      %v6138 = vsel %vm1447, %v6135, %v6137
      %v6139 = vrot.slane %v1120, 6
      %v6140 = vsel %vm1447, %v6136, %v6139
      %v6145 = vmul.f32 %v6131, %v6135
      %v6146 = vmul.f32 %v6132, %v6136
      %v6147 = vmul.f32 %v6133, %v6138
      %v6148 = vmul.f32 %v6134, %v6140
      %v6153 = vrot.slane %v6127, 2
      %v6154 = vrot.slane %v6128, 2
      %v6155 = vrot.slane %v6129, 2
      %v6156 = vsel %vm4103, %v6153, %v6155
      %v6157 = vrot.slane %v6130, 2
      %v6158 = vsel %vm4103, %v6154, %v6157
      %v6163 = vmul.f32 %v5374, %v6153
      %v6164 = vmul.f32 %v5375, %v6154
      %v6165 = vmul.f32 %v5376, %v6156
      %v6166 = vmul.f32 %v5377, %v6158
      %v6167 = vadd.f32 %v6145, %v6163
      %v6168 = vadd.f32 %v6146, %v6164
      %v6169 = vadd.f32 %v6147, %v6165
      %v6170 = vadd.f32 %v6148, %v6166
      %v6171 = vadd.f32 %v4905, %v5753
      %v6172 = vadd.f32 %v4907, %v5755
      %v6173 = vadd.f32 %v4911, %v5759
      %v6174 = vadd.f32 %v4913, %v5761
      %v6175 = vtanh.pop %v6171
      %v6176 = vtanh.pop %v6172
      %v6177 = vtanh.pop %v6173
      %v6178 = vtanh.pop %v6174
      %v6179 = vsub.f32 1.0, %v5434
      %v6180 = vsub.f32 1.0, %v5435
      %v6181 = vsub.f32 1.0, %v5436
      %v6182 = vsub.f32 1.0, %v5437
      %v6183 = vrot.slane %v1119, 2
      %v6184 = vrot.slane %v1121, 2
      %v6185 = vsel %vm4103, %v6183, %v6184
      %v6186 = vrot.slane %v1120, 2
      %v6187 = vrot.slane %v1122, 2
      %v6188 = vsel %vm4103, %v6186, %v6187
      %v6193 = vmul.f32 %v6179, %v6185
      %v6194 = vmul.f32 %v6180, %v6188
      %v6195 = vmul.f32 %v6181, %v6184
      %v6196 = vmul.f32 %v6182, %v6187
      %v6201 = vrot.slane %v6175, 2
      %v6202 = vrot.slane %v6177, 2
      %v6203 = vsel %vm4103, %v6201, %v6202
      %v6204 = vrot.slane %v6176, 2
      %v6205 = vrot.slane %v6178, 2
      %v6206 = vsel %vm4103, %v6204, %v6205
      %v6211 = vmul.f32 %v5434, %v6203
      %v6212 = vmul.f32 %v5435, %v6206
      %v6213 = vmul.f32 %v5436, %v6202
      %v6214 = vmul.f32 %v5437, %v6205
      %v6215 = vadd.f32 %v6193, %v6211
      %v6216 = vadd.f32 %v6194, %v6212
      %v6217 = vadd.f32 %v6195, %v6213
      %v6218 = vadd.f32 %v6196, %v6214
      %v6223 = vrot.slane %v5765, 4
      %v6224 = vrot.slane %v5767, 4
      %v6225 = vrot.slane %v5771, 4
      %v6226 = vsel %vm2353, %v6223, %v6225
      %v6227 = vrot.slane %v5773, 4
      %v6228 = vsel %vm2353, %v6224, %v6227
      %v6233 = vadd.f32 %v4929, %v6223
      %v6234 = vadd.f32 %v4931, %v6224
      %v6235 = vadd.f32 %v4935, %v6226
      %v6236 = vadd.f32 %v4937, %v6228
      %v6237 = vtanh.pop %v6233
      %v6238 = vtanh.pop %v6234
      %v6239 = vtanh.pop %v6235
      %v6240 = vtanh.pop %v6236
      %v6241 = vsub.f32 1.0, %v5500
      %v6242 = vsub.f32 1.0, %v5501
      %v6243 = vsub.f32 1.0, %v5502
      %v6244 = vsub.f32 1.0, %v5503
      %v6247 = vrot.slane %v1123, 6
      %v6248 = vrot.slane %v1124, 6
      %v6249 = vrot.slane %v1125, 6
      %v6250 = vsel %vm1447, %v6247, %v6249
      %v6251 = vrot.slane %v1126, 6
      %v6252 = vsel %vm1447, %v6248, %v6251
      %v6257 = vmul.f32 %v6241, %v6247
      %v6258 = vmul.f32 %v6242, %v6248
      %v6259 = vmul.f32 %v6243, %v6250
      %v6260 = vmul.f32 %v6244, %v6252
      %v6265 = vrot.slane %v6237, 2
      %v6266 = vrot.slane %v6239, 2
      %v6267 = vsel %vm4103, %v6265, %v6266
      %v6268 = vrot.slane %v6238, 2
      %v6269 = vrot.slane %v6240, 2
      %v6270 = vsel %vm4103, %v6268, %v6269
      %v6275 = vmul.f32 %v5500, %v6267
      %v6276 = vmul.f32 %v5501, %v6270
      %v6277 = vmul.f32 %v5502, %v6266
      %v6278 = vmul.f32 %v5503, %v6269
      %v6279 = vadd.f32 %v6257, %v6275
      %v6280 = vadd.f32 %v6258, %v6276
      %v6281 = vadd.f32 %v6259, %v6277
      %v6282 = vadd.f32 %v6260, %v6278
      %v6287 = vrot.slane %v5835, 2
      %v6288 = vrot.slane %v5837, 2
      %v6289 = vsel %vm4103, %v6287, %v6288
      %v6290 = vrot.slane %v5836, 2
      %v6291 = vrot.slane %v5838, 2
      %v6292 = vsel %vm4103, %v6290, %v6291
      %6297 = vst [vmem:[%s1071] sm:$0xff] %v6289
      %6298 = vst [vmem:[%s1071 + $0x8] sm:$0xff] %v6292
      %6299 = vst [vmem:[%s1071 + $0x10] sm:$0x3] %v6288
      %6300 = vst [vmem:[%s1071 + $0x18] sm:$0x3] %v6291
      %6301 = vst [vmem:[%s1051] sm:$0xff] %v5883
      %6302 = vst [vmem:[%s1051 + $0x8] sm:$0xff] %v5884
      %6303 = vst [vmem:[%s1051 + $0x10] sm:$0x3] %v5885
      %6304 = vst [vmem:[%s1051 + $0x18] sm:$0x3] %v5886
      %v6309 = vrot.slane %v5945, 6
      %v6310 = vrot.slane %v5947, 6
      %v6311 = vsel %vm1447, %v6309, %v6310
      %v6312 = vrot.slane %v5946, 6
      %v6313 = vrot.slane %v5948, 6
      %v6314 = vsel %vm1447, %v6312, %v6313
      %6319 = vst [vmem:[%s1061] sm:$0xff] %v6311
      %6320 = vst [vmem:[%s1061 + $0x8] sm:$0xff] %v6314
      %6321 = vst [vmem:[%s1061 + $0x10] sm:$0x3] %v6310
      %6322 = vst [vmem:[%s1061 + $0x18] sm:$0x3] %v6313
      %v6327 = vrot.slane %v5993, 4
      %v6328 = vrot.slane %v5995, 4
      %v6329 = vsel %vm2353, %v6327, %v6328
      %v6330 = vrot.slane %v5994, 4
      %v6331 = vrot.slane %v5996, 4
      %v6332 = vsel %vm2353, %v6330, %v6331
      %6337 = vst [vmem:[%s991] sm:$0xff] %v6329
      %6338 = vst [vmem:[%s991 + $0x8] sm:$0xff] %v6332
      %6339 = vst [vmem:[%s991 + $0x10] sm:$0x3] %v6328
      %6340 = vst [vmem:[%s991 + $0x18] sm:$0x3] %v6331
      %v6345 = vrot.slane %v6057, 2
      %v6346 = vrot.slane %v6059, 2
      %v6347 = vsel %vm4103, %v6345, %v6346
      %v6348 = vrot.slane %v6058, 2
      %v6349 = vrot.slane %v6060, 2
      %v6350 = vsel %vm4103, %v6348, %v6349
      %6355 = vst [vmem:[%s1001] sm:$0xff] %v6347
      %6356 = vst [vmem:[%s1001 + $0x8] sm:$0xff] %v6350
      %6357 = vst [vmem:[%s1001 + $0x10] sm:$0x3] %v6346
      %6358 = vst [vmem:[%s1001 + $0x18] sm:$0x3] %v6349
      %6359 = vst [vmem:[%s1011] sm:$0xff] %v6105
      %6360 = vst [vmem:[%s1011 + $0x8] sm:$0xff] %v6106
      %6361 = vst [vmem:[%s1011 + $0x10] sm:$0x3] %v6107
      %6362 = vst [vmem:[%s1011 + $0x18] sm:$0x3] %v6108
      %v6367 = vrot.slane %v6167, 6
      %v6368 = vrot.slane %v6169, 6
      %v6369 = vsel %vm1447, %v6367, %v6368
      %v6370 = vrot.slane %v6168, 6
      %v6371 = vrot.slane %v6170, 6
      %v6372 = vsel %vm1447, %v6370, %v6371
      %6377 = vst [vmem:[%s1021] sm:$0xff] %v6369
      %6378 = vst [vmem:[%s1021 + $0x8] sm:$0xff] %v6372
      %6379 = vst [vmem:[%s1021 + $0x10] sm:$0x3] %v6368
      %6380 = vst [vmem:[%s1021 + $0x18] sm:$0x3] %v6371
      %v6385 = vrot.slane %v6215, 4
      %v6386 = vrot.slane %v6217, 4
      %v6387 = vsel %vm2353, %v6385, %v6386
      %v6388 = vrot.slane %v6216, 4
      %v6389 = vrot.slane %v6218, 4
      %v6390 = vsel %vm2353, %v6388, %v6389
      %6395 = vst [vmem:[%s1031] sm:$0xff] %v6387
      %6396 = vst [vmem:[%s1031 + $0x8] sm:$0xff] %v6390
      %6397 = vst [vmem:[%s1031 + $0x10] sm:$0x3] %v6386
      %6398 = vst [vmem:[%s1031 + $0x18] sm:$0x3] %v6389
      %v6403 = vrot.slane %v6279, 2
      %v6404 = vrot.slane %v6281, 2
      %v6405 = vsel %vm4103, %v6403, %v6404
      %v6406 = vrot.slane %v6280, 2
      %v6407 = vrot.slane %v6282, 2
      %v6408 = vsel %vm4103, %v6406, %v6407
      %6413 = vst [vmem:[%s1041] sm:$0xff] %v6405
      %6414 = vst [vmem:[%s1041 + $0x8] sm:$0xff] %v6408
      %6415 = vst [vmem:[%s1041 + $0x10] sm:$0x3] %v6404
      %6416 = vst [vmem:[%s1041 + $0x18] sm:$0x3] %v6407
      %v6419 = vcombine.high %v2000, %v2001
      %6421 = vst [vmem:[%s1081] sm:$0x77] %v6419
      %v6424 = vrot.slane %v2009, 3
      %v6425 = vrot.slane %v2010, 3
      %6428 = vst [vmem:[%s1091] sm:$0x1f] %v6424
      %6429 = vst [vmem:[%s1091 + $0x8] sm:$0x1f] %v6425
      %v6432 = vcombine.high %v2018, %v2019
      %6434 = vst [vmem:[%s1101] sm:$0x77] %v6432
      %s6435 = smul.u32 2, %s41
      %p6436 = scmp.lt.s32.totalorder %s40, 1
      %s6437 = scalar_select %p6436, %s40, 1
      %p6438 = scmp.lt.s32.totalorder %s6435, 1
      %s6439 = scalar_select %p6438, %s6435, 1
      %s6440 = smul.addr %s6437, 4
      %s6441 = sadd.s32 %s6439, %s6440
      %s6442 = smul.addr %s6441, 8
      %s6443 = scalar_lea.vmem %s13, %s6442
      %s6444 = smul.u32 2, %s41
      %p6445 = scmp.lt.s32.totalorder %s40, 1
      %s6446 = scalar_select %p6445, %s40, 1
      %p6447 = scmp.lt.s32.totalorder %s6444, 1
      %s6448 = scalar_select %p6447, %s6444, 1
      %s6449 = smul.addr %s6446, 4
      %s6450 = sadd.s32 %s6448, %s6449
      %s6451 = smul.addr %s6450, 8
      %s6452 = scalar_lea.vmem %s14, %s6451
      %s6453 = smul.u32 2, %s41
      %p6454 = scmp.lt.s32.totalorder %s40, 1
      %s6455 = scalar_select %p6454, %s40, 1
      %p6456 = scmp.lt.s32.totalorder %s6453, 1
      %s6457 = scalar_select %p6456, %s6453, 1
      %s6458 = smul.addr %s6455, 4
      %s6459 = sadd.s32 %s6457, %s6458
      %s6460 = smul.addr %s6459, 8
      %s6461 = scalar_lea.vmem %s15, %s6460
      %s6462 = smul.u32 2, %s41
      %p6463 = scmp.lt.s32.totalorder %s40, 1
      %s6464 = scalar_select %p6463, %s40, 1
      %p6465 = scmp.lt.s32.totalorder %s6462, 1
      %s6466 = scalar_select %p6465, %s6462, 1
      %s6467 = smul.addr %s6464, 4
      %s6468 = sadd.s32 %s6466, %s6467
      %s6469 = smul.addr %s6468, 8
      %s6470 = scalar_lea.vmem %s16, %s6469
      %s6471 = smul.u32 2, %s41
      %p6472 = scmp.lt.s32.totalorder %s40, 1
      %s6473 = scalar_select %p6472, %s40, 1
      %p6474 = scmp.lt.s32.totalorder %s6471, 1
      %s6475 = scalar_select %p6474, %s6471, 1
      %s6476 = smul.addr %s6473, 4
      %s6477 = sadd.s32 %s6475, %s6476
      %s6478 = smul.addr %s6477, 8
      %s6479 = scalar_lea.vmem %s17, %s6478
      %s6480 = smul.u32 2, %s41
      %p6481 = scmp.lt.s32.totalorder %s40, 1
      %s6482 = scalar_select %p6481, %s40, 1
      %p6483 = scmp.lt.s32.totalorder %s6480, 1
      %s6484 = scalar_select %p6483, %s6480, 1
      %s6485 = smul.addr %s6482, 4
      %s6486 = sadd.s32 %s6484, %s6485
      %s6487 = smul.addr %s6486, 8
      %s6488 = scalar_lea.vmem %s18, %s6487
      %s6489 = smul.u32 2, %s41
      %p6490 = scmp.lt.s32.totalorder %s40, 1
      %s6491 = scalar_select %p6490, %s40, 1
      %p6492 = scmp.lt.s32.totalorder %s6489, 1
      %s6493 = scalar_select %p6492, %s6489, 1
      %s6494 = smul.addr %s6491, 4
      %s6495 = sadd.s32 %s6493, %s6494
      %s6496 = smul.addr %s6495, 8
      %s6497 = scalar_lea.vmem %s19, %s6496
      %s6498 = smul.u32 2, %s41
      %p6499 = scmp.lt.s32.totalorder %s40, 1
      %s6500 = scalar_select %p6499, %s40, 1
      %p6501 = scmp.lt.s32.totalorder %s6498, 1
      %s6502 = scalar_select %p6501, %s6498, 1
      %s6503 = smul.addr %s6500, 4
      %s6504 = sadd.s32 %s6502, %s6503
      %s6505 = smul.addr %s6504, 8
      %s6506 = scalar_lea.vmem %s20, %s6505
      %s6507 = smul.u32 2, %s41
      %p6508 = scmp.lt.s32.totalorder %s40, 1
      %s6509 = scalar_select %p6508, %s40, 1
      %p6510 = scmp.lt.s32.totalorder %s6507, 1
      %s6511 = scalar_select %p6510, %s6507, 1
      %s6512 = smul.addr %s6509, 4
      %s6513 = sadd.s32 %s6511, %s6512
      %s6514 = smul.addr %s6513, 8
      %s6515 = scalar_lea.vmem %s21, %s6514
      %s6516 = smul.u32 2, %s41
      %p6517 = scmp.lt.s32.totalorder %s40, 1
      %s6518 = scalar_select %p6517, %s40, 1
      %p6519 = scmp.lt.s32.totalorder %s6516, 1
      %s6520 = scalar_select %p6519, %s6516, 1
      %s6521 = smul.addr %s6518, 2
      %s6522 = sadd.s32 %s6520, %s6521
      %s6523 = smul.addr %s6522, 4
      %s6524 = scalar_lea.vmem %s22, %s6523
      %s6525 = smul.u32 2, %s41
      %p6526 = scmp.lt.s32.totalorder %s40, 1
      %s6527 = scalar_select %p6526, %s40, 1
      %p6528 = scmp.lt.s32.totalorder %s6525, 1
      %s6529 = scalar_select %p6528, %s6525, 1
      %s6530 = smul.addr %s6527, 2
      %s6531 = sadd.s32 %s6529, %s6530
      %s6532 = smul.addr %s6531, 8
      %s6533 = scalar_lea.vmem %s23, %s6532
      %s6534 = smul.u32 2, %s41
      %p6535 = scmp.lt.s32.totalorder %s40, 1
      %s6536 = scalar_select %p6535, %s40, 1
      %p6537 = scmp.lt.s32.totalorder %s6534, 1
      %s6538 = scalar_select %p6537, %s6534, 1
      %s6539 = smul.addr %s6536, 2
      %s6540 = sadd.s32 %s6538, %s6539
      %s6541 = smul.addr %s6540, 4
      %s6542 = scalar_lea.vmem %s24, %s6541
      // Predicated region
      $region73: #{gnn_forward.1} parent=71 // pred_check
        %p6543 = pneg %p362
      $region74: #{gnn_forward.1} parent=71 // pred_check_branch
        %6545 = sbr.rel (%p6543) target = $region76
      $region75: #{gnn_forward.1} parent=71 // pred_region
        %s6546 = smul.u32 2, %s41
      $region76: #{gnn_forward.1} parent=71 // pred_fallthru
        _
      // Predicated region
      $region77: #{gnn_forward.1} parent=71 // pred_check
        %p6547 = pneg %p390
      $region78: #{gnn_forward.1} parent=71 // pred_check_branch
        %6549 = sbr.rel (%p6547) target = $region80
      $region79: #{gnn_forward.1} parent=71 // pred_region
        %s6550 = smul.u32 2, %s41
      $region80: #{gnn_forward.1} parent=71 // pred_fallthru
        _
      // Predicated region
      $region81: #{gnn_forward.1} parent=71 // pred_check
        %p6551 = pneg %p418
      $region82: #{gnn_forward.1} parent=71 // pred_check_branch
        %6553 = sbr.rel (%p6551) target = $region84
      $region83: #{gnn_forward.1} parent=71 // pred_region
        %s6554 = smul.u32 2, %s41
      $region84: #{gnn_forward.1} parent=71 // pred_fallthru
        _
      // Predicated region
      $region85: #{gnn_forward.1} parent=71 // pred_check
        %p6555 = pneg %p446
      $region86: #{gnn_forward.1} parent=71 // pred_check_branch
        %6557 = sbr.rel (%p6555) target = $region88
      $region87: #{gnn_forward.1} parent=71 // pred_region
        %s6558 = smul.u32 2, %s41
      $region88: #{gnn_forward.1} parent=71 // pred_fallthru
        _
      // Predicated region
      $region89: #{gnn_forward.1} parent=71 // pred_check
        %p6559 = pneg %p474
      $region90: #{gnn_forward.1} parent=71 // pred_check_branch
        %6561 = sbr.rel (%p6559) target = $region92
      $region91: #{gnn_forward.1} parent=71 // pred_region
        %s6562 = smul.u32 2, %s41
      $region92: #{gnn_forward.1} parent=71 // pred_fallthru
        _
      // Predicated region
      $region93: #{gnn_forward.1} parent=71 // pred_check
        %p6563 = pneg %p502
      $region94: #{gnn_forward.1} parent=71 // pred_check_branch
        %6565 = sbr.rel (%p6563) target = $region96
      $region95: #{gnn_forward.1} parent=71 // pred_region
        %s6566 = smul.u32 2, %s41
      $region96: #{gnn_forward.1} parent=71 // pred_fallthru
        _
      // Predicated region
      $region97: #{gnn_forward.1} parent=71 // pred_check
        %p6567 = pneg %p530
      $region98: #{gnn_forward.1} parent=71 // pred_check_branch
        %6569 = sbr.rel (%p6567) target = $region100
      $region99: #{gnn_forward.1} parent=71 // pred_region
        %s6570 = smul.u32 2, %s41
      $region100: #{gnn_forward.1} parent=71 // pred_fallthru
        _
      // Predicated region
      $region101: #{gnn_forward.1} parent=71 // pred_check
        %p6571 = pneg %p558
      $region102: #{gnn_forward.1} parent=71 // pred_check_branch
        %6573 = sbr.rel (%p6571) target = $region104
      $region103: #{gnn_forward.1} parent=71 // pred_region
        %s6574 = smul.u32 2, %s41
      $region104: #{gnn_forward.1} parent=71 // pred_fallthru
        _
      // Predicated region
      $region105: #{gnn_forward.1} parent=71 // pred_check
        %p6575 = pneg %p586
      $region106: #{gnn_forward.1} parent=71 // pred_check_branch
        %6577 = sbr.rel (%p6575) target = $region108
      $region107: #{gnn_forward.1} parent=71 // pred_region
        %s6578 = smul.u32 2, %s41
      $region108: #{gnn_forward.1} parent=71 // pred_fallthru
        _
      // Predicated region
      $region109: #{gnn_forward.1} parent=71 // pred_check
        %p6579 = pneg %p614
      $region110: #{gnn_forward.1} parent=71 // pred_check_branch
        %6581 = sbr.rel (%p6579) target = $region112
      $region111: #{gnn_forward.1} parent=71 // pred_region
        %s6582 = smul.u32 2, %s41
      $region112: #{gnn_forward.1} parent=71 // pred_fallthru
        _
      // Predicated region
      $region113: #{gnn_forward.1} parent=71 // pred_check
        %p6583 = pneg %p642
      $region114: #{gnn_forward.1} parent=71 // pred_check_branch
        %6585 = sbr.rel (%p6583) target = $region116
      $region115: #{gnn_forward.1} parent=71 // pred_region
        %s6586 = smul.u32 2, %s41
      $region116: #{gnn_forward.1} parent=71 // pred_fallthru
        _
      // Predicated region
      $region117: #{gnn_forward.1} parent=71 // pred_check
        %p6587 = pneg %p670
      $region118: #{gnn_forward.1} parent=71 // pred_check_branch
        %6589 = sbr.rel (%p6587) target = $region120
      $region119: #{gnn_forward.1} parent=71 // pred_region
        %s6590 = smul.u32 2, %s41
      $region120: #{gnn_forward.1} parent=71 // pred_fallthru
        _
    $region72: #{gnn_forward.1} parent=5 // pred_fallthru
      _
    %p6591 = scmp.le.s32.totalorder 2, %s31
    // Predicated region
    $region121: #{gnn_forward.1} parent=5 // pred_check
      %p6592 = pneg %p6591
    $region122: #{gnn_forward.1} parent=5 // pred_check_branch
      %6594 = sbr.rel (%p6592) target = $region124
    $region123: #{gnn_forward.1} parent=5 // pred_region
      %s6595 = ssub.s32 %s31, 2
      // Predicated region
      $region125: #{gnn_forward.1} parent=123 // pred_check
        %p6596 = pneg %p368
      $region126: #{gnn_forward.1} parent=123 // pred_check_branch
        %6598 = sbr.rel (%p6596) target = $region128
      $region127: #{gnn_forward.1} parent=123 // pred_region
        %s6599 = smul.u32 2, %s43
        %p6600 = scmp.lt.s32.totalorder %s42, 1
        %s6601 = scalar_select %p6600, %s42, 1
        %p6602 = scmp.lt.s32.totalorder %s6599, 1
        %s6603 = scalar_select %p6602, %s6599, 1
        %s6604 = smul.addr %s6601, 4
        %s6605 = sadd.s32 %s6603, %s6604
        %s6606 = smul.addr %s6605, 8
        %s6607 = scalar_lea.vmem %s13, %s6606
      $region128: #{gnn_forward.1} parent=123 // pred_fallthru
        _
      // Predicated region
      $region129: #{gnn_forward.1} parent=123 // pred_check
        %p6608 = pneg %p396
      $region130: #{gnn_forward.1} parent=123 // pred_check_branch
        %6610 = sbr.rel (%p6608) target = $region132
      $region131: #{gnn_forward.1} parent=123 // pred_region
        %s6611 = smul.u32 2, %s43
        %p6612 = scmp.lt.s32.totalorder %s42, 1
        %s6613 = scalar_select %p6612, %s42, 1
        %p6614 = scmp.lt.s32.totalorder %s6611, 1
        %s6615 = scalar_select %p6614, %s6611, 1
        %s6616 = smul.addr %s6613, 4
        %s6617 = sadd.s32 %s6615, %s6616
        %s6618 = smul.addr %s6617, 8
        %s6619 = scalar_lea.vmem %s14, %s6618
      $region132: #{gnn_forward.1} parent=123 // pred_fallthru
        _
      // Predicated region
      $region133: #{gnn_forward.1} parent=123 // pred_check
        %p6620 = pneg %p424
      $region134: #{gnn_forward.1} parent=123 // pred_check_branch
        %6622 = sbr.rel (%p6620) target = $region136
      $region135: #{gnn_forward.1} parent=123 // pred_region
        %s6623 = smul.u32 2, %s43
        %p6624 = scmp.lt.s32.totalorder %s42, 1
        %s6625 = scalar_select %p6624, %s42, 1
        %p6626 = scmp.lt.s32.totalorder %s6623, 1
        %s6627 = scalar_select %p6626, %s6623, 1
        %s6628 = smul.addr %s6625, 4
        %s6629 = sadd.s32 %s6627, %s6628
        %s6630 = smul.addr %s6629, 8
        %s6631 = scalar_lea.vmem %s15, %s6630
      $region136: #{gnn_forward.1} parent=123 // pred_fallthru
        _
      // Predicated region
      $region137: #{gnn_forward.1} parent=123 // pred_check
        %p6632 = pneg %p452
      $region138: #{gnn_forward.1} parent=123 // pred_check_branch
        %6634 = sbr.rel (%p6632) target = $region140
      $region139: #{gnn_forward.1} parent=123 // pred_region
        %s6635 = smul.u32 2, %s43
        %p6636 = scmp.lt.s32.totalorder %s42, 1
        %s6637 = scalar_select %p6636, %s42, 1
        %p6638 = scmp.lt.s32.totalorder %s6635, 1
        %s6639 = scalar_select %p6638, %s6635, 1
        %s6640 = smul.addr %s6637, 4
        %s6641 = sadd.s32 %s6639, %s6640
        %s6642 = smul.addr %s6641, 8
        %s6643 = scalar_lea.vmem %s16, %s6642
      $region140: #{gnn_forward.1} parent=123 // pred_fallthru
        _
      // Predicated region
      $region141: #{gnn_forward.1} parent=123 // pred_check
        %p6644 = pneg %p480
      $region142: #{gnn_forward.1} parent=123 // pred_check_branch
        %6646 = sbr.rel (%p6644) target = $region144
      $region143: #{gnn_forward.1} parent=123 // pred_region
        %s6647 = smul.u32 2, %s43
        %p6648 = scmp.lt.s32.totalorder %s42, 1
        %s6649 = scalar_select %p6648, %s42, 1
        %p6650 = scmp.lt.s32.totalorder %s6647, 1
        %s6651 = scalar_select %p6650, %s6647, 1
        %s6652 = smul.addr %s6649, 4
        %s6653 = sadd.s32 %s6651, %s6652
        %s6654 = smul.addr %s6653, 8
        %s6655 = scalar_lea.vmem %s17, %s6654
      $region144: #{gnn_forward.1} parent=123 // pred_fallthru
        _
      // Predicated region
      $region145: #{gnn_forward.1} parent=123 // pred_check
        %p6656 = pneg %p508
      $region146: #{gnn_forward.1} parent=123 // pred_check_branch
        %6658 = sbr.rel (%p6656) target = $region148
      $region147: #{gnn_forward.1} parent=123 // pred_region
        %s6659 = smul.u32 2, %s43
        %p6660 = scmp.lt.s32.totalorder %s42, 1
        %s6661 = scalar_select %p6660, %s42, 1
        %p6662 = scmp.lt.s32.totalorder %s6659, 1
        %s6663 = scalar_select %p6662, %s6659, 1
        %s6664 = smul.addr %s6661, 4
        %s6665 = sadd.s32 %s6663, %s6664
        %s6666 = smul.addr %s6665, 8
        %s6667 = scalar_lea.vmem %s18, %s6666
      $region148: #{gnn_forward.1} parent=123 // pred_fallthru
        _
      // Predicated region
      $region149: #{gnn_forward.1} parent=123 // pred_check
        %p6668 = pneg %p536
      $region150: #{gnn_forward.1} parent=123 // pred_check_branch
        %6670 = sbr.rel (%p6668) target = $region152
      $region151: #{gnn_forward.1} parent=123 // pred_region
        %s6671 = smul.u32 2, %s43
        %p6672 = scmp.lt.s32.totalorder %s42, 1
        %s6673 = scalar_select %p6672, %s42, 1
        %p6674 = scmp.lt.s32.totalorder %s6671, 1
        %s6675 = scalar_select %p6674, %s6671, 1
        %s6676 = smul.addr %s6673, 4
        %s6677 = sadd.s32 %s6675, %s6676
        %s6678 = smul.addr %s6677, 8
        %s6679 = scalar_lea.vmem %s19, %s6678
      $region152: #{gnn_forward.1} parent=123 // pred_fallthru
        _
      // Predicated region
      $region153: #{gnn_forward.1} parent=123 // pred_check
        %p6680 = pneg %p564
      $region154: #{gnn_forward.1} parent=123 // pred_check_branch
        %6682 = sbr.rel (%p6680) target = $region156
      $region155: #{gnn_forward.1} parent=123 // pred_region
        %s6683 = smul.u32 2, %s43
        %p6684 = scmp.lt.s32.totalorder %s42, 1
        %s6685 = scalar_select %p6684, %s42, 1
        %p6686 = scmp.lt.s32.totalorder %s6683, 1
        %s6687 = scalar_select %p6686, %s6683, 1
        %s6688 = smul.addr %s6685, 4
        %s6689 = sadd.s32 %s6687, %s6688
        %s6690 = smul.addr %s6689, 8
        %s6691 = scalar_lea.vmem %s20, %s6690
      $region156: #{gnn_forward.1} parent=123 // pred_fallthru
        _
      // Predicated region
      $region157: #{gnn_forward.1} parent=123 // pred_check
        %p6692 = pneg %p592
      $region158: #{gnn_forward.1} parent=123 // pred_check_branch
        %6694 = sbr.rel (%p6692) target = $region160
      $region159: #{gnn_forward.1} parent=123 // pred_region
        %s6695 = smul.u32 2, %s43
        %p6696 = scmp.lt.s32.totalorder %s42, 1
        %s6697 = scalar_select %p6696, %s42, 1
        %p6698 = scmp.lt.s32.totalorder %s6695, 1
        %s6699 = scalar_select %p6698, %s6695, 1
        %s6700 = smul.addr %s6697, 4
        %s6701 = sadd.s32 %s6699, %s6700
        %s6702 = smul.addr %s6701, 8
        %s6703 = scalar_lea.vmem %s21, %s6702
      $region160: #{gnn_forward.1} parent=123 // pred_fallthru
        _
      // Predicated region
      $region161: #{gnn_forward.1} parent=123 // pred_check
        %p6704 = pneg %p620
      $region162: #{gnn_forward.1} parent=123 // pred_check_branch
        %6706 = sbr.rel (%p6704) target = $region164
      $region163: #{gnn_forward.1} parent=123 // pred_region
        %s6707 = smul.u32 2, %s43
        %p6708 = scmp.lt.s32.totalorder %s42, 1
        %s6709 = scalar_select %p6708, %s42, 1
        %p6710 = scmp.lt.s32.totalorder %s6707, 1
        %s6711 = scalar_select %p6710, %s6707, 1
        %s6712 = smul.addr %s6709, 2
        %s6713 = sadd.s32 %s6711, %s6712
        %s6714 = smul.addr %s6713, 4
        %s6715 = scalar_lea.vmem %s22, %s6714
      $region164: #{gnn_forward.1} parent=123 // pred_fallthru
        _
      // Predicated region
      $region165: #{gnn_forward.1} parent=123 // pred_check
        %p6716 = pneg %p648
      $region166: #{gnn_forward.1} parent=123 // pred_check_branch
        %6718 = sbr.rel (%p6716) target = $region168
      $region167: #{gnn_forward.1} parent=123 // pred_region
        %s6719 = smul.u32 2, %s43
        %p6720 = scmp.lt.s32.totalorder %s42, 1
        %s6721 = scalar_select %p6720, %s42, 1
        %p6722 = scmp.lt.s32.totalorder %s6719, 1
        %s6723 = scalar_select %p6722, %s6719, 1
        %s6724 = smul.addr %s6721, 2
        %s6725 = sadd.s32 %s6723, %s6724
        %s6726 = smul.addr %s6725, 8
        %s6727 = scalar_lea.vmem %s23, %s6726
      $region168: #{gnn_forward.1} parent=123 // pred_fallthru
        _
      // Predicated region
      $region169: #{gnn_forward.1} parent=123 // pred_check
        %p6728 = pneg %p676
      $region170: #{gnn_forward.1} parent=123 // pred_check_branch
        %6730 = sbr.rel (%p6728) target = $region172
      $region171: #{gnn_forward.1} parent=123 // pred_region
        %s6731 = smul.u32 2, %s43
        %p6732 = scmp.lt.s32.totalorder %s42, 1
        %s6733 = scalar_select %p6732, %s42, 1
        %p6734 = scmp.lt.s32.totalorder %s6731, 1
        %s6735 = scalar_select %p6734, %s6731, 1
        %s6736 = smul.addr %s6733, 2
        %s6737 = sadd.s32 %s6735, %s6736
        %s6738 = smul.addr %s6737, 4
        %s6739 = scalar_lea.vmem %s24, %s6738
      $region172: #{gnn_forward.1} parent=123 // pred_fallthru
        _
    $region124: #{gnn_forward.1} parent=5 // pred_fallthru
      _
  $region6: #{gnn_forward.1} parent=0 // loop_footer
    %s35 = sadd.s32 1, %s31
  $region7: #{gnn_forward.1} parent=0 // loop_footer_branch
    %30 = sbr.rel target = $region3
  $region8: #{gnn_forward.1} parent=0 // loop_exit
    _

</llo_original>
